<compile_context>
chip_gen: v6e
topology: v6e:2x2x1
jax: 0.10.0
libtpu: 0.0.40
codegen_flags: <defaults>
</compile_context>

<pallas_src>
import math

import jax
import jax.numpy as jnp
from jax.experimental import pallas as pl
from jax.experimental.pallas import tpu as pltpu

d_k = d_v = 64
d_model = 768
n_heads = 8


def _mha_kernel(q_ref, k_ref, v_ref, mask_ref,
                wq_ref, wk_ref, wv_ref, wo_ref,
                out_ref,
                k_sc, v_sc):
    # q_ref   : (1, TQ, d_model) f32   current batch row / q tile
    # k_ref   : (1, S,  d_model) f32   full keys for this batch row (b-only index_map)
    # v_ref   : (1, S,  d_model) f32
    # mask_ref: (1, TQ, S)       int8  1 == masked position
    # wq/wk/wv: (d_model, H*d_k) bf16, VMEM-resident (W_Q^T is pre-scaled by 1/sqrt(d_k))
    # wo      : (H*d_v, d_model) bf16, VMEM-resident
    # out_ref : (1, TQ, d_model) f32
    # k_sc/v_sc: (S, H*d_k) bf16 VMEM scratch, persists across the qi grid axis
    qi = pl.program_id(1)

    # Compute (and cache) the K/V projections once per batch row.
    @pl.when(qi == 0)
    def _():
        x_k = k_ref[0].astype(jnp.bfloat16)            # (S, d_model)
        x_v = v_ref[0].astype(jnp.bfloat16)
        k_sc[...] = jnp.dot(x_k, wk_ref[...],
                            preferred_element_type=jnp.float32).astype(jnp.bfloat16)
        v_sc[...] = jnp.dot(x_v, wv_ref[...],
                            preferred_element_type=jnp.float32).astype(jnp.bfloat16)

    # Fused all-heads Q projection for this q tile (scale already folded into wq).
    x_q = q_ref[0].astype(jnp.bfloat16)                # (TQ, d_model)
    q_all = jnp.dot(x_q, wq_ref[...],
                    preferred_element_type=jnp.float32).astype(jnp.bfloat16)  # (TQ, H*d_k)

    mask = mask_ref[0] != 0                            # (TQ, S) bool

    # Per-head scaled-dot-product attention (statically unrolled over 8 heads).
    # TODO(synk): verify in lowered MLIR that the QK^T dot_general does not emit an
    # explicit XLU transpose; if it does, keep K^T in a (H*d_k, S) scratch instead.
    ctx_heads = []
    for h in range(n_heads):
        sl = slice(h * d_k, (h + 1) * d_k)
        q_h = q_all[:, sl]                             # (TQ, d_k) bf16
        k_h = k_sc[:, sl]                              # (S,  d_k) bf16
        v_h = v_sc[:, sl]                              # (S,  d_v) bf16

        # scores = (Q/sqrt(d_k)) K^T -> (TQ, S), f32 accumulation.
        scores = jax.lax.dot_general(
            q_h, k_h, (((1,), (1,)), ((), ())),
            preferred_element_type=jnp.float32)
        # masked_fill semantics of the reference: replace masked logits with -1e9.
        scores = jnp.where(mask, jnp.float32(-1e9), scores)

        # Numerically stable softmax in f32; denominator via EUP reciprocal.
        scores = scores - jnp.max(scores, axis=-1, keepdims=True)
        p = jnp.exp(scores)
        attn = p * pl.reciprocal(jnp.sum(p, axis=-1, keepdims=True), approx=True)

        # context_h = attn @ V_h -> (TQ, d_v)
        ctx_heads.append(
            jnp.dot(attn.astype(jnp.bfloat16), v_h,
                    preferred_element_type=jnp.float32))

    # Fused output projection across all heads: (TQ, 512) @ (512, 768).
    ctx = jnp.concatenate(ctx_heads, axis=-1).astype(jnp.bfloat16)
    out = jnp.dot(ctx, wo_ref[...], preferred_element_type=jnp.float32)
    out_ref[0] = out.astype(out_ref.dtype)


def prepare_mha_params(W_Q, W_K, W_V, W_fc):
    """One-time weight relayout + bf16 cast, hoisted out of the per-call hot path.

    PyTorch nn.Linear weights are [out, in]; the kernel wants [in, out].
    The attention scale 1/sqrt(d_k) = 0.125 (exact power of two, lossless in
    bf16) is folded into W_Q^T so the kernel never multiplies the scores."""
    scale = 1.0 / math.sqrt(d_k)
    return ((W_Q.T * scale).astype(jnp.bfloat16),   # (d_model, n_heads*d_k), pre-scaled
            W_K.T.astype(jnp.bfloat16),             # (d_model, n_heads*d_k)
            W_V.T.astype(jnp.bfloat16),             # (d_model, n_heads*d_v)
            W_fc.T.astype(jnp.bfloat16))            # (n_heads*d_v, d_model)


@jax.jit
def multi_head_attention(Q, K, V, attn_mask, wq_t, wk_t, wv_t, wo_t):
    """Q, K, V: [B, S, d_model] f32; attn_mask: [B, S, S] bool (True == masked).
    wq_t/wk_t/wv_t/wo_t: outputs of prepare_mha_params."""
    B, S, _ = Q.shape

    # Query tiling keeps the (TQ, S) scores footprint bounded at large S.
    # (On the 128 MiB-VMEM parts, TQ=512 is a cheap extra win for S >= 512.)
    TQ = S if S <= 256 else 256
    assert S % TQ == 0, "seq_len must be a multiple of the q-tile size"
    n_q = S // TQ

    # Mask as int8 (1 B/elt); the -1e9 fill happens inside the kernel.
    mask_i8 = attn_mask.astype(jnp.int8)

    hk = n_heads * d_k
    hv = n_heads * d_v
    grid = (B, n_q)

    out = pl.pallas_call(
        _mha_kernel,
        # TODO(synk): emit bf16 here if the downstream consumer tolerates it
        # (halves the output HBM stream and the double-buffered output block).
        out_shape=jax.ShapeDtypeStruct((B, S, d_model), jnp.float32),
        grid_spec=pltpu.PrefetchScalarGridSpec(
            num_scalar_prefetch=0,
            grid=grid,
            in_specs=[
                pl.BlockSpec((1, TQ, d_model), lambda b, qi: (b, qi, 0)),  # Q tile (f32)
                pl.BlockSpec((1, S, d_model),  lambda b, qi: (b, 0, 0)),   # K, b-only
                pl.BlockSpec((1, S, d_model),  lambda b, qi: (b, 0, 0)),   # V, b-only
                pl.BlockSpec((1, TQ, S),       lambda b, qi: (b, qi, 0)),  # mask (int8)
                # Whole-array weight blocks, constant index_map -> DMA'd once,
                # VMEM-resident across the whole grid.
                pl.BlockSpec((d_model, hk), lambda b, qi: (0, 0)),         # W_Q^T (scaled)
                pl.BlockSpec((d_model, hk), lambda b, qi: (0, 0)),         # W_K^T
                pl.BlockSpec((d_model, hv), lambda b, qi: (0, 0)),         # W_V^T
                pl.BlockSpec((hv, d_model), lambda b, qi: (0, 0)),         # W_fc^T
            ],
            out_specs=pl.BlockSpec((1, TQ, d_model), lambda b, qi: (b, qi, 0)),
            scratch_shapes=[
                pltpu.VMEM((S, hk), jnp.bfloat16),   # cached K projection (per batch row)
                pltpu.VMEM((S, hv), jnp.bfloat16),   # cached V projection (per batch row)
            ],
        ),
        compiler_params=pltpu.CompilerParams(
            # qi must be "arbitrary": the K/V projection scratch carries state
            # across q tiles of the same batch row.  b stays "parallel" (megacore).
            dimension_semantics=("parallel", "arbitrary"),
            vmem_limit_bytes=40 * 1024 * 1024),      # fits v7x's 64 MiB/TC
    )(Q, K, V, mask_i8, wq_t, wk_t, wv_t, wo_t)
    return out


def reference_mha(Q, K, V, attn_mask, W_Q, W_K, W_V, W_fc):
    """Pure-JAX f32 reference mirroring the PyTorch module exactly."""
    B, S, _ = Q.shape
    per_Q = (Q @ W_Q.T).reshape(B, S, n_heads, d_k).transpose(0, 2, 1, 3)
    per_K = (K @ W_K.T).reshape(B, S, n_heads, d_k).transpose(0, 2, 1, 3)
    per_V = (V @ W_V.T).reshape(B, S, n_heads, d_v).transpose(0, 2, 1, 3)
    scores = jnp.einsum('bhqd,bhkd->bhqk', per_Q, per_K) / math.sqrt(d_k)
    scores = jnp.where(attn_mask[:, None, :, :], -1e9, scores)
    attn = jax.nn.softmax(scores, axis=-1)
    ctx = jnp.einsum('bhqk,bhkd->bhqd', attn, per_V)
    ctx = ctx.transpose(0, 2, 1, 3).reshape(B, S, n_heads * d_v)
    return ctx @ W_fc.T


if __name__ == "__main__":
    B, S = 2, 8

    key = jax.random.PRNGKey(0)
    kq, kk, kv, kwq, kwk, kwv, kwo, km = jax.random.split(key, 8)

    Q = jax.random.normal(kq, (B, S, d_model), dtype=jnp.float32)
    K = jax.random.normal(kk, (B, S, d_model), dtype=jnp.float32)
    V = jax.random.normal(kv, (B, S, d_model), dtype=jnp.float32)

    # nn.Linear(..., bias=False) weights: [out, in], ~U(-1/sqrt(in), 1/sqrt(in))
    lim_in = 1.0 / math.sqrt(d_model)
    lim_fc = 1.0 / math.sqrt(n_heads * d_v)
    W_Q = jax.random.uniform(kwq, (n_heads * d_k, d_model), jnp.float32, -lim_in, lim_in)
    W_K = jax.random.uniform(kwk, (n_heads * d_k, d_model), jnp.float32, -lim_in, lim_in)
    W_V = jax.random.uniform(kwv, (n_heads * d_v, d_model), jnp.float32, -lim_in, lim_in)
    W_fc = jax.random.uniform(kwo, (d_model, n_heads * d_v), jnp.float32, -lim_fc, lim_fc)

    # Padding-style boolean mask: True == masked position.
    attn_mask = jax.random.bernoulli(km, 0.2, (B, S, S))

    # One-time weight preparation (relayout + scale-fold + bf16 cast).
    wq_t, wk_t, wv_t, wo_t = prepare_mha_params(W_Q, W_K, W_V, W_fc)

    out = multi_head_attention(Q, K, V, attn_mask, wq_t, wk_t, wv_t, wo_t)
    out = jax.block_until_ready(out)

    ref = reference_mha(Q, K, V, attn_mask, W_Q, W_K, W_V, W_fc)
    assert out.shape == (B, S, d_model)
    # bf16 MXU operands (f32 accumulation) + approx reciprocal loosen the tolerance
    # vs the pure-f32 reference.
    assert jnp.allclose(out, ref, atol=2e-2, rtol=2e-2), "mismatch vs reference"

    print("KERNEL_OK")
</pallas_src>

<mosaic_0001>
module attributes {stable_mosaic.version = 11 : i64} {
  func.func @_mha_kernel(%arg0: i32, %arg1: i32, %arg2: memref<1x8x768xf32, #tpu.memory_space<vmem>>, %arg3: memref<1x8x768xf32, #tpu.memory_space<vmem>>, %arg4: memref<1x8x768xf32, #tpu.memory_space<vmem>>, %arg5: memref<1x8x8xi8, #tpu.memory_space<vmem>>, %arg6: memref<768x512xbf16, #tpu.memory_space<vmem>>, %arg7: memref<768x512xbf16, #tpu.memory_space<vmem>>, %arg8: memref<768x512xbf16, #tpu.memory_space<vmem>>, %arg9: memref<512x768xbf16, #tpu.memory_space<vmem>>, %arg10: memref<1x8x768xf32, #tpu.memory_space<vmem>>, %arg11: memref<8x512xbf16, #tpu.memory_space<vmem>>, %arg12: memref<8x512xbf16, #tpu.memory_space<vmem>>) attributes {dimension_semantics = [#tpu.dimension_semantics<parallel>, #tpu.dimension_semantics<arbitrary>], iteration_bounds = array<i64: 2, 1>, scalar_prefetch = 0 : i64, scratch_operands = 2 : i64, tpu.core_type = #tpu.core_type<tc>, window_params = [{transform_indices = @transform_0, window_bounds = array<i64: 1, 8, 768>}, {transform_indices = @transform_1, window_bounds = array<i64: 1, 8, 768>}, {transform_indices = @transform_2, window_bounds = array<i64: 1, 8, 768>}, {transform_indices = @transform_3, window_bounds = array<i64: 1, 8, 8>}, {pipeline_mode = #tpu.pipeline_mode<synchronous>, transform_indices = @transform_4, window_bounds = array<i64: 768, 512>}, {pipeline_mode = #tpu.pipeline_mode<synchronous>, transform_indices = @transform_5, window_bounds = array<i64: 768, 512>}, {pipeline_mode = #tpu.pipeline_mode<synchronous>, transform_indices = @transform_6, window_bounds = array<i64: 768, 512>}, {pipeline_mode = #tpu.pipeline_mode<synchronous>, transform_indices = @transform_7, window_bounds = array<i64: 512, 768>}, {transform_indices = @transform_8, window_bounds = array<i64: 1, 8, 768>}]} {
    %c0_i32 = arith.constant 0 : i32
    %0 = arith.cmpi eq, %arg1, %c0_i32 : i32
    %1 = arith.extui %0 : i1 to i32
    %c0_i32_0 = arith.constant 0 : i32
    %2 = arith.cmpi ne, %1, %c0_i32_0 : i32
    scf.if %2 {
      %c0_79 = arith.constant 0 : index
      %c0_80 = arith.constant 0 : index
      %c0_81 = arith.constant 0 : index
      %164 = vector.load %arg3[%c0_79, %c0_80, %c0_81] : memref<1x8x768xf32, #tpu.memory_space<vmem>>, vector<1x8x768xf32>
      %165 = vector.shape_cast %164 : vector<1x8x768xf32> to vector<8x768xf32>
      %166 = arith.truncf %165 : vector<8x768xf32> to vector<8x768xbf16>
      %c0_82 = arith.constant 0 : index
      %c0_83 = arith.constant 0 : index
      %c0_84 = arith.constant 0 : index
      %167 = vector.load %arg4[%c0_82, %c0_83, %c0_84] : memref<1x8x768xf32, #tpu.memory_space<vmem>>, vector<1x8x768xf32>
      %168 = vector.shape_cast %167 : vector<1x8x768xf32> to vector<8x768xf32>
      %169 = arith.truncf %168 : vector<8x768xf32> to vector<8x768xbf16>
      %c0_85 = arith.constant 0 : index
      %c0_86 = arith.constant 0 : index
      %170 = vector.load %arg7[%c0_85, %c0_86] : memref<768x512xbf16, #tpu.memory_space<vmem>>, vector<768x512xbf16>
      %cst_87 = arith.constant dense<0.000000e+00> : vector<8x512xf32>
      %171 = tpu.matmul %166, %170, %cst_87 {dimension_numbers = #tpu.dot_dimension_numbers<[1], [0], [0], [1], [0, 0, 1, 1], [], []>} : vector<8x768xbf16>, vector<768x512xbf16>, vector<8x512xf32> -> vector<8x512xf32>
      %172 = arith.truncf %171 : vector<8x512xf32> to vector<8x512xbf16>
      %c0_88 = arith.constant 0 : index
      %c0_89 = arith.constant 0 : index
      %173 = vector.load %arg11[%c0_88, %c0_89] : memref<8x512xbf16, #tpu.memory_space<vmem>>, vector<8x512xbf16>
      tpu.vector_store %arg11[%c0_88, %c0_89], %172 {strides = array<i32>} : memref<8x512xbf16, #tpu.memory_space<vmem>>, vector<8x512xbf16>,
      %c0_90 = arith.constant 0 : index
      %c0_91 = arith.constant 0 : index
      %174 = vector.load %arg8[%c0_90, %c0_91] : memref<768x512xbf16, #tpu.memory_space<vmem>>, vector<768x512xbf16>
      %cst_92 = arith.constant dense<0.000000e+00> : vector<8x512xf32>
      %175 = tpu.matmul %169, %174, %cst_92 {dimension_numbers = #tpu.dot_dimension_numbers<[1], [0], [0], [1], [0, 0, 1, 1], [], []>} : vector<8x768xbf16>, vector<768x512xbf16>, vector<8x512xf32> -> vector<8x512xf32>
      %176 = arith.truncf %175 : vector<8x512xf32> to vector<8x512xbf16>
      %c0_93 = arith.constant 0 : index
      %c0_94 = arith.constant 0 : index
      %177 = vector.load %arg12[%c0_93, %c0_94] : memref<8x512xbf16, #tpu.memory_space<vmem>>, vector<8x512xbf16>
      tpu.vector_store %arg12[%c0_93, %c0_94], %176 {strides = array<i32>} : memref<8x512xbf16, #tpu.memory_space<vmem>>, vector<8x512xbf16>,
    } else {
    }
    %c0 = arith.constant 0 : index
    %c0_1 = arith.constant 0 : index
    %c0_2 = arith.constant 0 : index
    %3 = vector.load %arg2[%c0, %c0_1, %c0_2] : memref<1x8x768xf32, #tpu.memory_space<vmem>>, vector<1x8x768xf32>
    %4 = vector.shape_cast %3 : vector<1x8x768xf32> to vector<8x768xf32>
    %5 = arith.truncf %4 : vector<8x768xf32> to vector<8x768xbf16>
    %c0_3 = arith.constant 0 : index
    %c0_4 = arith.constant 0 : index
    %6 = vector.load %arg6[%c0_3, %c0_4] : memref<768x512xbf16, #tpu.memory_space<vmem>>, vector<768x512xbf16>
    %cst = arith.constant dense<0.000000e+00> : vector<8x512xf32>
    %7 = tpu.matmul %5, %6, %cst {dimension_numbers = #tpu.dot_dimension_numbers<[1], [0], [0], [1], [0, 0, 1, 1], [], []>} : vector<8x768xbf16>, vector<768x512xbf16>, vector<8x512xf32> -> vector<8x512xf32>
    %8 = arith.truncf %7 : vector<8x512xf32> to vector<8x512xbf16>
    %c0_5 = arith.constant 0 : index
    %c0_6 = arith.constant 0 : index
    %c0_7 = arith.constant 0 : index
    %9 = vector.load %arg5[%c0_5, %c0_6, %c0_7] : memref<1x8x8xi8, #tpu.memory_space<vmem>>, vector<1x8x8xi8>
    %10 = vector.shape_cast %9 : vector<1x8x8xi8> to vector<8x8xi8>
    %c0_i8 = arith.constant 0 : i8
    %11 = vector.broadcast %c0_i8 : i8 to vector<8x8xi8>
    %12 = arith.cmpi ne, %10, %11 : vector<8x8xi8>
    %13 = vector.extract_strided_slice %8 {offsets = [0, 0], sizes = [8, 64], strides = [1, 1]} : vector<8x512xbf16> to vector<8x64xbf16>
    %c0_8 = arith.constant 0 : index
    %c0_9 = arith.constant 0 : index
    %14 = vector.load %arg11[%c0_8, %c0_9] : memref<8x512xbf16, #tpu.memory_space<vmem>>, vector<8x64xbf16>
    %c0_10 = arith.constant 0 : index
    %c0_11 = arith.constant 0 : index
    %15 = vector.load %arg12[%c0_10, %c0_11] : memref<8x512xbf16, #tpu.memory_space<vmem>>, vector<8x64xbf16>
    %cst_12 = arith.constant dense<0.000000e+00> : vector<8x8xf32>
    %16 = tpu.matmul %13, %14, %cst_12 {dimension_numbers = #tpu.dot_dimension_numbers<[1], [1], [0], [0], [0, 0, 1, 0], [], []>} : vector<8x64xbf16>, vector<8x64xbf16>, vector<8x8xf32> -> vector<8x8xf32>
    %cst_13 = arith.constant -1.000000e+09 : f32
    %17 = vector.broadcast %cst_13 : f32 to vector<8x8xf32>
    %18 = arith.select %12, %17, %16 : vector<8x8xi1>, vector<8x8xf32>
    %cst_14 = arith.constant dense<0xFF800000> : vector<8xf32>
    %19 = vector.multi_reduction <maximumf>, %18, %cst_14 [1] : vector<8x8xf32> to vector<8xf32>
    %20 = vector.shape_cast %19 : vector<8xf32> to vector<8x1xf32>
    %21 = vector.broadcast %20 : vector<8x1xf32> to vector<8x8xf32>
    %22 = arith.subf %18, %21 : vector<8x8xf32>
    %23 = math.exp %22 : vector<8x8xf32>
    %cst_15 = arith.constant dense<0.000000e+00> : vector<8xf32>
    %24 = vector.multi_reduction <add>, %23, %cst_15 [1] : vector<8x8xf32> to vector<8xf32>
    %25 = vector.shape_cast %24 : vector<8xf32> to vector<8x1xf32>
    %26 = tpu.reciprocal %25 {approx = true} : vector<8x1xf32> -> vector<8x1xf32>
    %27 = vector.broadcast %26 : vector<8x1xf32> to vector<8x8xf32>
    %28 = arith.mulf %23, %27 : vector<8x8xf32>
    %29 = arith.truncf %28 : vector<8x8xf32> to vector<8x8xbf16>
    %cst_16 = arith.constant dense<0.000000e+00> : vector<8x64xf32>
    %30 = tpu.matmul %29, %15, %cst_16 {dimension_numbers = #tpu.dot_dimension_numbers<[1], [0], [0], [1], [0, 0, 1, 1], [], []>} : vector<8x8xbf16>, vector<8x64xbf16>, vector<8x64xf32> -> vector<8x64xf32>
    %31 = vector.extract_strided_slice %8 {offsets = [0, 64], sizes = [8, 64], strides = [1, 1]} : vector<8x512xbf16> to vector<8x64xbf16>
    %c0_17 = arith.constant 0 : index
    %c64 = arith.constant 64 : index
    %32 = vector.load %arg11[%c0_17, %c64] : memref<8x512xbf16, #tpu.memory_space<vmem>>, vector<8x64xbf16>
    %c0_18 = arith.constant 0 : index
    %c64_19 = arith.constant 64 : index
    %33 = vector.load %arg12[%c0_18, %c64_19] : memref<8x512xbf16, #tpu.memory_space<vmem>>, vector<8x64xbf16>
    %cst_20 = arith.constant dense<0.000000e+00> : vector<8x8xf32>
    %34 = tpu.matmul %31, %32, %cst_20 {dimension_numbers = #tpu.dot_dimension_numbers<[1], [1], [0], [0], [0, 0, 1, 0], [], []>} : vector<8x64xbf16>, vector<8x64xbf16>, vector<8x8xf32> -> vector<8x8xf32>
    %cst_21 = arith.constant -1.000000e+09 : f32
    %35 = vector.broadcast %cst_21 : f32 to vector<8x8xf32>
    %36 = arith.select %12, %35, %34 : vector<8x8xi1>, vector<8x8xf32>
    %cst_22 = arith.constant dense<0xFF800000> : vector<8xf32>
    %37 = vector.multi_reduction <maximumf>, %36, %cst_22 [1] : vector<8x8xf32> to vector<8xf32>
    %38 = vector.shape_cast %37 : vector<8xf32> to vector<8x1xf32>
    %39 = vector.broadcast %38 : vector<8x1xf32> to vector<8x8xf32>
    %40 = arith.subf %36, %39 : vector<8x8xf32>
    %41 = math.exp %40 : vector<8x8xf32>
    %cst_23 = arith.constant dense<0.000000e+00> : vector<8xf32>
    %42 = vector.multi_reduction <add>, %41, %cst_23 [1] : vector<8x8xf32> to vector<8xf32>
    %43 = vector.shape_cast %42 : vector<8xf32> to vector<8x1xf32>
    %44 = tpu.reciprocal %43 {approx = true} : vector<8x1xf32> -> vector<8x1xf32>
    %45 = vector.broadcast %44 : vector<8x1xf32> to vector<8x8xf32>
    %46 = arith.mulf %41, %45 : vector<8x8xf32>
    %47 = arith.truncf %46 : vector<8x8xf32> to vector<8x8xbf16>
    %cst_24 = arith.constant dense<0.000000e+00> : vector<8x64xf32>
    %48 = tpu.matmul %47, %33, %cst_24 {dimension_numbers = #tpu.dot_dimension_numbers<[1], [0], [0], [1], [0, 0, 1, 1], [], []>} : vector<8x8xbf16>, vector<8x64xbf16>, vector<8x64xf32> -> vector<8x64xf32>
    %49 = vector.extract_strided_slice %8 {offsets = [0, 128], sizes = [8, 64], strides = [1, 1]} : vector<8x512xbf16> to vector<8x64xbf16>
    %c0_25 = arith.constant 0 : index
    %c128 = arith.constant 128 : index
    %50 = vector.load %arg11[%c0_25, %c128] : memref<8x512xbf16, #tpu.memory_space<vmem>>, vector<8x64xbf16>
    %c0_26 = arith.constant 0 : index
    %c128_27 = arith.constant 128 : index
    %51 = vector.load %arg12[%c0_26, %c128_27] : memref<8x512xbf16, #tpu.memory_space<vmem>>, vector<8x64xbf16>
    %cst_28 = arith.constant dense<0.000000e+00> : vector<8x8xf32>
    %52 = tpu.matmul %49, %50, %cst_28 {dimension_numbers = #tpu.dot_dimension_numbers<[1], [1], [0], [0], [0, 0, 1, 0], [], []>} : vector<8x64xbf16>, vector<8x64xbf16>, vector<8x8xf32> -> vector<8x8xf32>
    %cst_29 = arith.constant -1.000000e+09 : f32
    %53 = vector.broadcast %cst_29 : f32 to vector<8x8xf32>
    %54 = arith.select %12, %53, %52 : vector<8x8xi1>, vector<8x8xf32>
    %cst_30 = arith.constant dense<0xFF800000> : vector<8xf32>
    %55 = vector.multi_reduction <maximumf>, %54, %cst_30 [1] : vector<8x8xf32> to vector<8xf32>
    %56 = vector.shape_cast %55 : vector<8xf32> to vector<8x1xf32>
    %57 = vector.broadcast %56 : vector<8x1xf32> to vector<8x8xf32>
    %58 = arith.subf %54, %57 : vector<8x8xf32>
    %59 = math.exp %58 : vector<8x8xf32>
    %cst_31 = arith.constant dense<0.000000e+00> : vector<8xf32>
    %60 = vector.multi_reduction <add>, %59, %cst_31 [1] : vector<8x8xf32> to vector<8xf32>
    %61 = vector.shape_cast %60 : vector<8xf32> to vector<8x1xf32>
    %62 = tpu.reciprocal %61 {approx = true} : vector<8x1xf32> -> vector<8x1xf32>
    %63 = vector.broadcast %62 : vector<8x1xf32> to vector<8x8xf32>
    %64 = arith.mulf %59, %63 : vector<8x8xf32>
    %65 = arith.truncf %64 : vector<8x8xf32> to vector<8x8xbf16>
    %cst_32 = arith.constant dense<0.000000e+00> : vector<8x64xf32>
    %66 = tpu.matmul %65, %51, %cst_32 {dimension_numbers = #tpu.dot_dimension_numbers<[1], [0], [0], [1], [0, 0, 1, 1], [], []>} : vector<8x8xbf16>, vector<8x64xbf16>, vector<8x64xf32> -> vector<8x64xf32>
    %67 = vector.extract_strided_slice %8 {offsets = [0, 192], sizes = [8, 64], strides = [1, 1]} : vector<8x512xbf16> to vector<8x64xbf16>
    %c0_33 = arith.constant 0 : index
    %c192 = arith.constant 192 : index
    %68 = vector.load %arg11[%c0_33, %c192] : memref<8x512xbf16, #tpu.memory_space<vmem>>, vector<8x64xbf16>
    %c0_34 = arith.constant 0 : index
    %c192_35 = arith.constant 192 : index
    %69 = vector.load %arg12[%c0_34, %c192_35] : memref<8x512xbf16, #tpu.memory_space<vmem>>, vector<8x64xbf16>
    %cst_36 = arith.constant dense<0.000000e+00> : vector<8x8xf32>
    %70 = tpu.matmul %67, %68, %cst_36 {dimension_numbers = #tpu.dot_dimension_numbers<[1], [1], [0], [0], [0, 0, 1, 0], [], []>} : vector<8x64xbf16>, vector<8x64xbf16>, vector<8x8xf32> -> vector<8x8xf32>
    %cst_37 = arith.constant -1.000000e+09 : f32
    %71 = vector.broadcast %cst_37 : f32 to vector<8x8xf32>
    %72 = arith.select %12, %71, %70 : vector<8x8xi1>, vector<8x8xf32>
    %cst_38 = arith.constant dense<0xFF800000> : vector<8xf32>
    %73 = vector.multi_reduction <maximumf>, %72, %cst_38 [1] : vector<8x8xf32> to vector<8xf32>
    %74 = vector.shape_cast %73 : vector<8xf32> to vector<8x1xf32>
    %75 = vector.broadcast %74 : vector<8x1xf32> to vector<8x8xf32>
    %76 = arith.subf %72, %75 : vector<8x8xf32>
    %77 = math.exp %76 : vector<8x8xf32>
    %cst_39 = arith.constant dense<0.000000e+00> : vector<8xf32>
    %78 = vector.multi_reduction <add>, %77, %cst_39 [1] : vector<8x8xf32> to vector<8xf32>
    %79 = vector.shape_cast %78 : vector<8xf32> to vector<8x1xf32>
    %80 = tpu.reciprocal %79 {approx = true} : vector<8x1xf32> -> vector<8x1xf32>
    %81 = vector.broadcast %80 : vector<8x1xf32> to vector<8x8xf32>
    %82 = arith.mulf %77, %81 : vector<8x8xf32>
    %83 = arith.truncf %82 : vector<8x8xf32> to vector<8x8xbf16>
    %cst_40 = arith.constant dense<0.000000e+00> : vector<8x64xf32>
    %84 = tpu.matmul %83, %69, %cst_40 {dimension_numbers = #tpu.dot_dimension_numbers<[1], [0], [0], [1], [0, 0, 1, 1], [], []>} : vector<8x8xbf16>, vector<8x64xbf16>, vector<8x64xf32> -> vector<8x64xf32>
    %85 = vector.extract_strided_slice %8 {offsets = [0, 256], sizes = [8, 64], strides = [1, 1]} : vector<8x512xbf16> to vector<8x64xbf16>
    %c0_41 = arith.constant 0 : index
    %c256 = arith.constant 256 : index
    %86 = vector.load %arg11[%c0_41, %c256] : memref<8x512xbf16, #tpu.memory_space<vmem>>, vector<8x64xbf16>
    %c0_42 = arith.constant 0 : index
    %c256_43 = arith.constant 256 : index
    %87 = vector.load %arg12[%c0_42, %c256_43] : memref<8x512xbf16, #tpu.memory_space<vmem>>, vector<8x64xbf16>
    %cst_44 = arith.constant dense<0.000000e+00> : vector<8x8xf32>
    %88 = tpu.matmul %85, %86, %cst_44 {dimension_numbers = #tpu.dot_dimension_numbers<[1], [1], [0], [0], [0, 0, 1, 0], [], []>} : vector<8x64xbf16>, vector<8x64xbf16>, vector<8x8xf32> -> vector<8x8xf32>
    %cst_45 = arith.constant -1.000000e+09 : f32
    %89 = vector.broadcast %cst_45 : f32 to vector<8x8xf32>
    %90 = arith.select %12, %89, %88 : vector<8x8xi1>, vector<8x8xf32>
    %cst_46 = arith.constant dense<0xFF800000> : vector<8xf32>
    %91 = vector.multi_reduction <maximumf>, %90, %cst_46 [1] : vector<8x8xf32> to vector<8xf32>
    %92 = vector.shape_cast %91 : vector<8xf32> to vector<8x1xf32>
    %93 = vector.broadcast %92 : vector<8x1xf32> to vector<8x8xf32>
    %94 = arith.subf %90, %93 : vector<8x8xf32>
    %95 = math.exp %94 : vector<8x8xf32>
    %cst_47 = arith.constant dense<0.000000e+00> : vector<8xf32>
    %96 = vector.multi_reduction <add>, %95, %cst_47 [1] : vector<8x8xf32> to vector<8xf32>
    %97 = vector.shape_cast %96 : vector<8xf32> to vector<8x1xf32>
    %98 = tpu.reciprocal %97 {approx = true} : vector<8x1xf32> -> vector<8x1xf32>
    %99 = vector.broadcast %98 : vector<8x1xf32> to vector<8x8xf32>
    %100 = arith.mulf %95, %99 : vector<8x8xf32>
    %101 = arith.truncf %100 : vector<8x8xf32> to vector<8x8xbf16>
    %cst_48 = arith.constant dense<0.000000e+00> : vector<8x64xf32>
    %102 = tpu.matmul %101, %87, %cst_48 {dimension_numbers = #tpu.dot_dimension_numbers<[1], [0], [0], [1], [0, 0, 1, 1], [], []>} : vector<8x8xbf16>, vector<8x64xbf16>, vector<8x64xf32> -> vector<8x64xf32>
    %103 = vector.extract_strided_slice %8 {offsets = [0, 320], sizes = [8, 64], strides = [1, 1]} : vector<8x512xbf16> to vector<8x64xbf16>
    %c0_49 = arith.constant 0 : index
    %c320 = arith.constant 320 : index
    %104 = vector.load %arg11[%c0_49, %c320] : memref<8x512xbf16, #tpu.memory_space<vmem>>, vector<8x64xbf16>
    %c0_50 = arith.constant 0 : index
    %c320_51 = arith.constant 320 : index
    %105 = vector.load %arg12[%c0_50, %c320_51] : memref<8x512xbf16, #tpu.memory_space<vmem>>, vector<8x64xbf16>
    %cst_52 = arith.constant dense<0.000000e+00> : vector<8x8xf32>
    %106 = tpu.matmul %103, %104, %cst_52 {dimension_numbers = #tpu.dot_dimension_numbers<[1], [1], [0], [0], [0, 0, 1, 0], [], []>} : vector<8x64xbf16>, vector<8x64xbf16>, vector<8x8xf32> -> vector<8x8xf32>
    %cst_53 = arith.constant -1.000000e+09 : f32
    %107 = vector.broadcast %cst_53 : f32 to vector<8x8xf32>
    %108 = arith.select %12, %107, %106 : vector<8x8xi1>, vector<8x8xf32>
    %cst_54 = arith.constant dense<0xFF800000> : vector<8xf32>
    %109 = vector.multi_reduction <maximumf>, %108, %cst_54 [1] : vector<8x8xf32> to vector<8xf32>
    %110 = vector.shape_cast %109 : vector<8xf32> to vector<8x1xf32>
    %111 = vector.broadcast %110 : vector<8x1xf32> to vector<8x8xf32>
    %112 = arith.subf %108, %111 : vector<8x8xf32>
    %113 = math.exp %112 : vector<8x8xf32>
    %cst_55 = arith.constant dense<0.000000e+00> : vector<8xf32>
    %114 = vector.multi_reduction <add>, %113, %cst_55 [1] : vector<8x8xf32> to vector<8xf32>
    %115 = vector.shape_cast %114 : vector<8xf32> to vector<8x1xf32>
    %116 = tpu.reciprocal %115 {approx = true} : vector<8x1xf32> -> vector<8x1xf32>
    %117 = vector.broadcast %116 : vector<8x1xf32> to vector<8x8xf32>
    %118 = arith.mulf %113, %117 : vector<8x8xf32>
    %119 = arith.truncf %118 : vector<8x8xf32> to vector<8x8xbf16>
    %cst_56 = arith.constant dense<0.000000e+00> : vector<8x64xf32>
    %120 = tpu.matmul %119, %105, %cst_56 {dimension_numbers = #tpu.dot_dimension_numbers<[1], [0], [0], [1], [0, 0, 1, 1], [], []>} : vector<8x8xbf16>, vector<8x64xbf16>, vector<8x64xf32> -> vector<8x64xf32>
    %121 = vector.extract_strided_slice %8 {offsets = [0, 384], sizes = [8, 64], strides = [1, 1]} : vector<8x512xbf16> to vector<8x64xbf16>
    %c0_57 = arith.constant 0 : index
    %c384 = arith.constant 384 : index
    %122 = vector.load %arg11[%c0_57, %c384] : memref<8x512xbf16, #tpu.memory_space<vmem>>, vector<8x64xbf16>
    %c0_58 = arith.constant 0 : index
    %c384_59 = arith.constant 384 : index
    %123 = vector.load %arg12[%c0_58, %c384_59] : memref<8x512xbf16, #tpu.memory_space<vmem>>, vector<8x64xbf16>
    %cst_60 = arith.constant dense<0.000000e+00> : vector<8x8xf32>
    %124 = tpu.matmul %121, %122, %cst_60 {dimension_numbers = #tpu.dot_dimension_numbers<[1], [1], [0], [0], [0, 0, 1, 0], [], []>} : vector<8x64xbf16>, vector<8x64xbf16>, vector<8x8xf32> -> vector<8x8xf32>
    %cst_61 = arith.constant -1.000000e+09 : f32
    %125 = vector.broadcast %cst_61 : f32 to vector<8x8xf32>
    %126 = arith.select %12, %125, %124 : vector<8x8xi1>, vector<8x8xf32>
    %cst_62 = arith.constant dense<0xFF800000> : vector<8xf32>
    %127 = vector.multi_reduction <maximumf>, %126, %cst_62 [1] : vector<8x8xf32> to vector<8xf32>
    %128 = vector.shape_cast %127 : vector<8xf32> to vector<8x1xf32>
    %129 = vector.broadcast %128 : vector<8x1xf32> to vector<8x8xf32>
    %130 = arith.subf %126, %129 : vector<8x8xf32>
    %131 = math.exp %130 : vector<8x8xf32>
    %cst_63 = arith.constant dense<0.000000e+00> : vector<8xf32>
    %132 = vector.multi_reduction <add>, %131, %cst_63 [1] : vector<8x8xf32> to vector<8xf32>
    %133 = vector.shape_cast %132 : vector<8xf32> to vector<8x1xf32>
    %134 = tpu.reciprocal %133 {approx = true} : vector<8x1xf32> -> vector<8x1xf32>
    %135 = vector.broadcast %134 : vector<8x1xf32> to vector<8x8xf32>
    %136 = arith.mulf %131, %135 : vector<8x8xf32>
    %137 = arith.truncf %136 : vector<8x8xf32> to vector<8x8xbf16>
    %cst_64 = arith.constant dense<0.000000e+00> : vector<8x64xf32>
    %138 = tpu.matmul %137, %123, %cst_64 {dimension_numbers = #tpu.dot_dimension_numbers<[1], [0], [0], [1], [0, 0, 1, 1], [], []>} : vector<8x8xbf16>, vector<8x64xbf16>, vector<8x64xf32> -> vector<8x64xf32>
    %139 = vector.extract_strided_slice %8 {offsets = [0, 448], sizes = [8, 64], strides = [1, 1]} : vector<8x512xbf16> to vector<8x64xbf16>
    %c0_65 = arith.constant 0 : index
    %c448 = arith.constant 448 : index
    %140 = vector.load %arg11[%c0_65, %c448] : memref<8x512xbf16, #tpu.memory_space<vmem>>, vector<8x64xbf16>
    %c0_66 = arith.constant 0 : index
    %c448_67 = arith.constant 448 : index
    %141 = vector.load %arg12[%c0_66, %c448_67] : memref<8x512xbf16, #tpu.memory_space<vmem>>, vector<8x64xbf16>
    %cst_68 = arith.constant dense<0.000000e+00> : vector<8x8xf32>
    %142 = tpu.matmul %139, %140, %cst_68 {dimension_numbers = #tpu.dot_dimension_numbers<[1], [1], [0], [0], [0, 0, 1, 0], [], []>} : vector<8x64xbf16>, vector<8x64xbf16>, vector<8x8xf32> -> vector<8x8xf32>
    %cst_69 = arith.constant -1.000000e+09 : f32
    %143 = vector.broadcast %cst_69 : f32 to vector<8x8xf32>
    %144 = arith.select %12, %143, %142 : vector<8x8xi1>, vector<8x8xf32>
    %cst_70 = arith.constant dense<0xFF800000> : vector<8xf32>
    %145 = vector.multi_reduction <maximumf>, %144, %cst_70 [1] : vector<8x8xf32> to vector<8xf32>
    %146 = vector.shape_cast %145 : vector<8xf32> to vector<8x1xf32>
    %147 = vector.broadcast %146 : vector<8x1xf32> to vector<8x8xf32>
    %148 = arith.subf %144, %147 : vector<8x8xf32>
    %149 = math.exp %148 : vector<8x8xf32>
    %cst_71 = arith.constant dense<0.000000e+00> : vector<8xf32>
    %150 = vector.multi_reduction <add>, %149, %cst_71 [1] : vector<8x8xf32> to vector<8xf32>
    %151 = vector.shape_cast %150 : vector<8xf32> to vector<8x1xf32>
    %152 = tpu.reciprocal %151 {approx = true} : vector<8x1xf32> -> vector<8x1xf32>
    %153 = vector.broadcast %152 : vector<8x1xf32> to vector<8x8xf32>
    %154 = arith.mulf %149, %153 : vector<8x8xf32>
    %155 = arith.truncf %154 : vector<8x8xf32> to vector<8x8xbf16>
    %cst_72 = arith.constant dense<0.000000e+00> : vector<8x64xf32>
    %156 = tpu.matmul %155, %141, %cst_72 {dimension_numbers = #tpu.dot_dimension_numbers<[1], [0], [0], [1], [0, 0, 1, 1], [], []>} : vector<8x8xbf16>, vector<8x64xbf16>, vector<8x64xf32> -> vector<8x64xf32>
    %157 = tpu.concatenate %30, %48, %66, %84, %102, %120, %138, %156 in 1 : vector<8x64xf32>, vector<8x64xf32>, vector<8x64xf32>, vector<8x64xf32>, vector<8x64xf32>, vector<8x64xf32>, vector<8x64xf32>, vector<8x64xf32> -> vector<8x512xf32>
    %158 = arith.truncf %157 : vector<8x512xf32> to vector<8x512xbf16>
    %c0_73 = arith.constant 0 : index
    %c0_74 = arith.constant 0 : index
    %159 = vector.load %arg9[%c0_73, %c0_74] : memref<512x768xbf16, #tpu.memory_space<vmem>>, vector<512x768xbf16>
    %cst_75 = arith.constant dense<0.000000e+00> : vector<8x768xf32>
    %160 = tpu.matmul %158, %159, %cst_75 {dimension_numbers = #tpu.dot_dimension_numbers<[1], [0], [0], [1], [0, 0, 1, 1], [], []>} : vector<8x512xbf16>, vector<512x768xbf16>, vector<8x768xf32> -> vector<8x768xf32>
    %c0_76 = arith.constant 0 : index
    %c0_77 = arith.constant 0 : index
    %c0_78 = arith.constant 0 : index
    %161 = vector.load %arg10[%c0_76, %c0_77, %c0_78] : memref<1x8x768xf32, #tpu.memory_space<vmem>>, vector<1x8x768xf32>
    %162 = vector.shape_cast %161 : vector<1x8x768xf32> to vector<8x768xf32>
    %163 = vector.shape_cast %160 : vector<8x768xf32> to vector<1x8x768xf32>
    tpu.vector_store %arg10[%c0_76, %c0_77, %c0_78], %163 {strides = array<i32>} : memref<1x8x768xf32, #tpu.memory_space<vmem>>, vector<1x8x768xf32>,
    return
  }
  func.func @transform_0(%arg0: i32, %arg1: i32) -> (i32, i32, i32) {
    %c0_i32 = arith.constant 0 : i32
    %c0_i32_0 = arith.constant 0 : i32
    return %arg0, %arg1, %c0_i32 : i32, i32, i32
  }
  func.func @transform_1(%arg0: i32, %arg1: i32) -> (i32, i32, i32) {
    %c0_i32 = arith.constant 0 : i32
    %c0_i32_0 = arith.constant 0 : i32
    %c0_i32_1 = arith.constant 0 : i32
    return %arg0, %c0_i32, %c0_i32_0 : i32, i32, i32
  }
  func.func @transform_2(%arg0: i32, %arg1: i32) -> (i32, i32, i32) {
    %c0_i32 = arith.constant 0 : i32
    %c0_i32_0 = arith.constant 0 : i32
    %c0_i32_1 = arith.constant 0 : i32
    return %arg0, %c0_i32, %c0_i32_0 : i32, i32, i32
  }
  func.func @transform_3(%arg0: i32, %arg1: i32) -> (i32, i32, i32) {
    %c0_i32 = arith.constant 0 : i32
    %c0_i32_0 = arith.constant 0 : i32
    return %arg0, %arg1, %c0_i32 : i32, i32, i32
  }
  func.func @transform_4(%arg0: i32, %arg1: i32) -> (i32, i32) {
    %c0_i32 = arith.constant 0 : i32
    %c0_i32_0 = arith.constant 0 : i32
    %c0_i32_1 = arith.constant 0 : i32
    return %c0_i32, %c0_i32_0 : i32, i32
  }
  func.func @transform_5(%arg0: i32, %arg1: i32) -> (i32, i32) {
    %c0_i32 = arith.constant 0 : i32
    %c0_i32_0 = arith.constant 0 : i32
    %c0_i32_1 = arith.constant 0 : i32
    return %c0_i32, %c0_i32_0 : i32, i32
  }
  func.func @transform_6(%arg0: i32, %arg1: i32) -> (i32, i32) {
    %c0_i32 = arith.constant 0 : i32
    %c0_i32_0 = arith.constant 0 : i32
    %c0_i32_1 = arith.constant 0 : i32
    return %c0_i32, %c0_i32_0 : i32, i32
  }
  func.func @transform_7(%arg0: i32, %arg1: i32) -> (i32, i32) {
    %c0_i32 = arith.constant 0 : i32
    %c0_i32_0 = arith.constant 0 : i32
    %c0_i32_1 = arith.constant 0 : i32
    return %c0_i32, %c0_i32_0 : i32, i32
  }
  func.func @transform_8(%arg0: i32, %arg1: i32) -> (i32, i32, i32) {
    %c0_i32 = arith.constant 0 : i32
    %c0_i32_0 = arith.constant 0 : i32
    return %arg0, %arg1, %c0_i32 : i32, i32, i32
  }
}

</mosaic_0001>

<llo_original>
// kernel: multi_head_attention.1
$region0: #{multi_head_attention.1}
  #allocation0 [shape = 'u32[]', space=smem, size = 0x4, offset = 0x4, fixed_abs, tag = 'smem constant byte address 0x4 - core index']
  #allocation1 [shape = 'u32[144,128]{1,0:T(1,128)}', space=vmem, size = 0x12000, scoped, tag = 'internal scratch']
  #allocation2 [shape = 'bf16[8,512]{1,0:T(8,128)(2,1)}', space=vmem, size = 0x2000, scoped, tag = 'scratch operand']
  #allocation3 [shape = 'bf16[8,512]{1,0:T(8,128)(2,1)}', space=vmem, size = 0x2000, scoped, tag = 'scratch operand']
  %s0 = inlined_call_operand.hbm [shape: f32[2,8,768], index: 0, kind: input, shape index: {}]
  %s1 = inlined_call_operand.hbm [shape: f32[2,8,768], index: 1, kind: input, shape index: {}]
  %s2 = inlined_call_operand.hbm [shape: f32[2,8,768], index: 2, kind: input, shape index: {}]
  %s3 = inlined_call_operand.vmem [shape: s8[2,8,8], index: 3, kind: input, shape index: {}]
  %s4 = inlined_call_operand.hbm [shape: bf16[768,512], index: 4, kind: input, shape index: {}]
  %s5 = inlined_call_operand.hbm [shape: bf16[768,512], index: 5, kind: input, shape index: {}]
  %s6 = inlined_call_operand.hbm [shape: bf16[768,512], index: 6, kind: input, shape index: {}]
  %s7 = inlined_call_operand.hbm [shape: bf16[512,768], index: 7, kind: input, shape index: {}]
  %s8 = inlined_call_operand.hbm [shape: f32[2,8,768], index: 8, kind: output, shape index: {}]
  %s9 = sld [smem:[#allocation0]]
  $region97: #{multi_head_attention.1} parent=0
    _
  %s11 = ssub.s32 1, %s9
  %s12 = scalar_select 0, %s11, %s9
  $region1: #{multi_head_attention.1} parent=0
    #allocation4 [shape = 'u8[49152]{0}', space=vmem, size = 0xc000, scoped, tag = 'input window, operand 0']
    #allocation5 [shape = 's32[2]{0}', space=sflag, size = 0x8, scoped, tag = 'scoped memory for multi_head_attention.1']
    #allocation6 [shape = 's32[2]{0}', space=sflag, size = 0x8, scoped, tag = 'scoped memory for multi_head_attention.1']
    #allocation7 [shape = 'u8[49152]{0}', space=vmem, size = 0xc000, scoped, tag = 'input window, operand 1']
    #allocation8 [shape = 's32[2]{0}', space=sflag, size = 0x8, scoped, tag = 'scoped memory for multi_head_attention.1']
    #allocation9 [shape = 'u8[49152]{0}', space=vmem, size = 0xc000, scoped, tag = 'input window, operand 2']
    #allocation10 [shape = 'u8[786432]{0}', space=vmem, size = 0xc0000, scoped, tag = 'input window, operand 4, single buffered']
    #allocation11 [shape = 's32[1]{0}', space=sflag, size = 0x4, scoped, tag = 'scoped memory for multi_head_attention.1']
    #allocation12 [shape = 'u8[786432]{0}', space=vmem, size = 0xc0000, scoped, tag = 'input window, operand 5, single buffered']
    #allocation13 [shape = 'u8[786432]{0}', space=vmem, size = 0xc0000, scoped, tag = 'input window, operand 6, single buffered']
    #allocation14 [shape = 's32[1]{0}', space=sflag, size = 0x4, scoped, tag = 'scoped memory for multi_head_attention.1']
    #allocation15 [shape = 'u8[786432]{0}', space=vmem, size = 0xc0000, scoped, tag = 'input window, operand 7, single buffered']
    #allocation16 [shape = 'u8[49152]{0}', space=vmem, size = 0xc000, scoped, tag = 'output window, operand 0']
    %13 = vsyncpa [#allocation5], 0
    %s14 = scalar_lea.sflag [#allocation5], 1
    %15 = vsyncpa %s14, 0
    %16 = vsyncpa [#allocation8], 0
    %s17 = scalar_lea.sflag [#allocation8], 1
    %18 = vsyncpa %s17, 0
    %19 = vsyncpa [#allocation11], 0
    %20 = vsyncpa [#allocation14], 0
    %21 = vsyncpa [#allocation6], 0
    %s22 = scalar_lea.sflag [#allocation6], 1
    %23 = vsyncpa %s22, 0
    loop: start=0, step=1, limit=4
    $region2: #{multi_head_attention.1} parent=1 // loop_pre_header
      _
    $region3: #{multi_head_attention.1} parent=1 // loop_header
      %s25 = sphi 0, %s29
      %p26 = scmp.ge.s32.totalorder %s25, 4
      %s32 = sphi 0, %s44
      %s33 = sphi 0, %s40
      %s34 = sphi 0, %s32
      %s35 = sphi 0, %s33
      %s36 = sphi 0, %s34
      %s37 = sphi 0, %s35
      %s49 = sphi 0, %s51
      %s52 = sphi 0, %s49
      %s53 = sphi 0, %s52
      %s69 = sphi 0, %s53
      %s75 = sphi 0, %s77
      %s78 = sphi 0, %s75
      %s79 = sphi 0, %s78
      %s95 = sphi 0, %s79
      %s101 = sphi 0, %s103
      %s104 = sphi 0, %s101
      %s105 = sphi 0, %s104
      %s121 = sphi 0, %s105
      %s129 = sphi 0, %s131
      %s132 = sphi 0, %s129
      %s133 = sphi 0, %s132
      %s149 = sphi 0, %s133
      %s153 = sphi 0, %s153
      %s155 = sphi 0, %s153
      %s156 = sphi 0, %s155
      %s170 = sphi 0, %s156
      %s174 = sphi 0, %s174
      %s176 = sphi 0, %s174
      %s177 = sphi 0, %s176
      %s191 = sphi 0, %s177
      %s195 = sphi 0, %s195
      %s197 = sphi 0, %s195
      %s198 = sphi 0, %s197
      %s212 = sphi 0, %s198
      %s216 = sphi 0, %s216
      %s218 = sphi 0, %s216
      %s219 = sphi 0, %s218
      %s233 = sphi 0, %s219
      %s241 = sphi 0, %s243
      %s244 = sphi 0, %s241
      %s245 = sphi 0, %s244
      %s261 = sphi 0, %s245
    $region4: #{multi_head_attention.1} parent=1 // loop_header_branch
      %28 = sbr.rel (%p26) target = $region8
    $region5: #{multi_head_attention.1} parent=1 // loop_body
      %s30 = ssub.s32 %s25, 1
      %s31 = ssub.s32 %s25, 2
      %s38 = sadd.s32 1, %s33
      %p39 = scmp.ge.s32.totalorder %s38, 1
      %s40 = scalar_select %p39, 0, %s38
      %s41 = sadd.s32 1, %s32
      %s42 = scalar_select %p39, %s41, %s32
      %p43 = scmp.ge.s32.totalorder %s42, 2
      %s44 = scalar_select %p43, 0, %s42
      %s45 = ssub.s32 %s32, %s44
      %s46 = ssub.s32 %s33, %s40
      %s47 = sor.u32 %s45, %s46
      %p48 = scmp.eq.s32.totalorder %s47, 0
      %s50 = sadd.s32 %s49, 1
      %s51 = scalar_select %p48, %s49, %s50
      %p54 = pneg %p48
      %p55 = scmp.eq.s32.totalorder %s25, 1
      %p56 = por %p54, %p55
      %p57 = scmp.ne.s32.totalorder %s49, %s52
      %p58 = scmp.eq.s32.totalorder %s25, 0
      %p59 = por %p57, %p58
      %p60 = scmp.ne.s32.totalorder %s49, %s52
      %p61 = scmp.eq.s32.totalorder %s30, 1
      %p62 = por %p60, %p61
      %p63 = scmp.ne.s32.totalorder %s52, %s53
      %p64 = scmp.eq.s32.totalorder %s30, 0
      %p65 = por %p63, %p64
      %p66 = scmp.ne.s32.totalorder %s52, %s53
      %p67 = scmp.eq.s32.totalorder %s31, 1
      %p68 = por %p66, %p67
      %p70 = scmp.ne.s32.totalorder %s53, %s69
      %p71 = scmp.eq.s32.totalorder %s31, 0
      %p72 = por %p70, %p71
      %s73 = ssub.s32 %s32, %s44
      %p74 = scmp.eq.s32.totalorder %s73, 0
      %s76 = sadd.s32 %s75, 1
      %s77 = scalar_select %p74, %s75, %s76
      %p80 = pneg %p74
      %p81 = scmp.eq.s32.totalorder %s25, 1
      %p82 = por %p80, %p81
      %p83 = scmp.ne.s32.totalorder %s75, %s78
      %p84 = scmp.eq.s32.totalorder %s25, 0
      %p85 = por %p83, %p84
      %p86 = scmp.ne.s32.totalorder %s75, %s78
      %p87 = scmp.eq.s32.totalorder %s30, 1
      %p88 = por %p86, %p87
      %p89 = scmp.ne.s32.totalorder %s78, %s79
      %p90 = scmp.eq.s32.totalorder %s30, 0
      %p91 = por %p89, %p90
      %p92 = scmp.ne.s32.totalorder %s78, %s79
      %p93 = scmp.eq.s32.totalorder %s31, 1
      %p94 = por %p92, %p93
      %p96 = scmp.ne.s32.totalorder %s79, %s95
      %p97 = scmp.eq.s32.totalorder %s31, 0
      %p98 = por %p96, %p97
      %s99 = ssub.s32 %s32, %s44
      %p100 = scmp.eq.s32.totalorder %s99, 0
      %s102 = sadd.s32 %s101, 1
      %s103 = scalar_select %p100, %s101, %s102
      %p106 = pneg %p100
      %p107 = scmp.eq.s32.totalorder %s25, 1
      %p108 = por %p106, %p107
      %p109 = scmp.ne.s32.totalorder %s101, %s104
      %p110 = scmp.eq.s32.totalorder %s25, 0
      %p111 = por %p109, %p110
      %p112 = scmp.ne.s32.totalorder %s101, %s104
      %p113 = scmp.eq.s32.totalorder %s30, 1
      %p114 = por %p112, %p113
      %p115 = scmp.ne.s32.totalorder %s104, %s105
      %p116 = scmp.eq.s32.totalorder %s30, 0
      %p117 = por %p115, %p116
      %p118 = scmp.ne.s32.totalorder %s104, %s105
      %p119 = scmp.eq.s32.totalorder %s31, 1
      %p120 = por %p118, %p119
      %p122 = scmp.ne.s32.totalorder %s105, %s121
      %p123 = scmp.eq.s32.totalorder %s31, 0
      %p124 = por %p122, %p123
      %s125 = ssub.s32 %s32, %s44
      %s126 = ssub.s32 %s33, %s40
      %s127 = sor.u32 %s125, %s126
      %p128 = scmp.eq.s32.totalorder %s127, 0
      %s130 = sadd.s32 %s129, 1
      %s131 = scalar_select %p128, %s129, %s130
      %p134 = pneg %p128
      %p135 = scmp.eq.s32.totalorder %s25, 1
      %p136 = por %p134, %p135
      %p137 = scmp.ne.s32.totalorder %s129, %s132
      %p138 = scmp.eq.s32.totalorder %s25, 0
      %p139 = por %p137, %p138
      %p140 = scmp.ne.s32.totalorder %s129, %s132
      %p141 = scmp.eq.s32.totalorder %s30, 1
      %p142 = por %p140, %p141
      %p143 = scmp.ne.s32.totalorder %s132, %s133
      %p144 = scmp.eq.s32.totalorder %s30, 0
      %p145 = por %p143, %p144
      %p146 = scmp.ne.s32.totalorder %s132, %s133
      %p147 = scmp.eq.s32.totalorder %s31, 1
      %p148 = por %p146, %p147
      %p150 = scmp.ne.s32.totalorder %s133, %s149
      %p151 = scmp.eq.s32.totalorder %s31, 0
      %p152 = por %p150, %p151
      %s154 = sadd.s32 %s153, 1
      %p157 = scmp.eq.s32.totalorder %s25, 1
      %p158 = scmp.ne.s32.totalorder %s153, %s155
      %p159 = scmp.eq.s32.totalorder %s25, 0
      %p160 = por %p158, %p159
      %p161 = scmp.ne.s32.totalorder %s153, %s155
      %p162 = scmp.eq.s32.totalorder %s30, 1
      %p163 = por %p161, %p162
      %p164 = scmp.ne.s32.totalorder %s155, %s156
      %p165 = scmp.eq.s32.totalorder %s30, 0
      %p166 = por %p164, %p165
      %p167 = scmp.ne.s32.totalorder %s155, %s156
      %p168 = scmp.eq.s32.totalorder %s31, 1
      %p169 = por %p167, %p168
      %p171 = scmp.ne.s32.totalorder %s156, %s170
      %p172 = scmp.eq.s32.totalorder %s31, 0
      %p173 = por %p171, %p172
      %s175 = sadd.s32 %s174, 1
      %p178 = scmp.eq.s32.totalorder %s25, 1
      %p179 = scmp.ne.s32.totalorder %s174, %s176
      %p180 = scmp.eq.s32.totalorder %s25, 0
      %p181 = por %p179, %p180
      %p182 = scmp.ne.s32.totalorder %s174, %s176
      %p183 = scmp.eq.s32.totalorder %s30, 1
      %p184 = por %p182, %p183
      %p185 = scmp.ne.s32.totalorder %s176, %s177
      %p186 = scmp.eq.s32.totalorder %s30, 0
      %p187 = por %p185, %p186
      %p188 = scmp.ne.s32.totalorder %s176, %s177
      %p189 = scmp.eq.s32.totalorder %s31, 1
      %p190 = por %p188, %p189
      %p192 = scmp.ne.s32.totalorder %s177, %s191
      %p193 = scmp.eq.s32.totalorder %s31, 0
      %p194 = por %p192, %p193
      %s196 = sadd.s32 %s195, 1
      %p199 = scmp.eq.s32.totalorder %s25, 1
      %p200 = scmp.ne.s32.totalorder %s195, %s197
      %p201 = scmp.eq.s32.totalorder %s25, 0
      %p202 = por %p200, %p201
      %p203 = scmp.ne.s32.totalorder %s195, %s197
      %p204 = scmp.eq.s32.totalorder %s30, 1
      %p205 = por %p203, %p204
      %p206 = scmp.ne.s32.totalorder %s197, %s198
      %p207 = scmp.eq.s32.totalorder %s30, 0
      %p208 = por %p206, %p207
      %p209 = scmp.ne.s32.totalorder %s197, %s198
      %p210 = scmp.eq.s32.totalorder %s31, 1
      %p211 = por %p209, %p210
      %p213 = scmp.ne.s32.totalorder %s198, %s212
      %p214 = scmp.eq.s32.totalorder %s31, 0
      %p215 = por %p213, %p214
      %s217 = sadd.s32 %s216, 1
      %p220 = scmp.eq.s32.totalorder %s25, 1
      %p221 = scmp.ne.s32.totalorder %s216, %s218
      %p222 = scmp.eq.s32.totalorder %s25, 0
      %p223 = por %p221, %p222
      %p224 = scmp.ne.s32.totalorder %s216, %s218
      %p225 = scmp.eq.s32.totalorder %s30, 1
      %p226 = por %p224, %p225
      %p227 = scmp.ne.s32.totalorder %s218, %s219
      %p228 = scmp.eq.s32.totalorder %s30, 0
      %p229 = por %p227, %p228
      %p230 = scmp.ne.s32.totalorder %s218, %s219
      %p231 = scmp.eq.s32.totalorder %s31, 1
      %p232 = por %p230, %p231
      %p234 = scmp.ne.s32.totalorder %s219, %s233
      %p235 = scmp.eq.s32.totalorder %s31, 0
      %p236 = por %p234, %p235
      %s237 = ssub.s32 %s32, %s44
      %s238 = ssub.s32 %s33, %s40
      %s239 = sor.u32 %s237, %s238
      %p240 = scmp.eq.s32.totalorder %s239, 0
      %s242 = sadd.s32 %s241, 1
      %s243 = scalar_select %p240, %s241, %s242
      %p246 = pneg %p240
      %p247 = scmp.eq.s32.totalorder %s25, 1
      %p248 = por %p246, %p247
      %p249 = scmp.ne.s32.totalorder %s241, %s244
      %p250 = scmp.eq.s32.totalorder %s25, 0
      %p251 = por %p249, %p250
      %p252 = scmp.ne.s32.totalorder %s241, %s244
      %p253 = scmp.eq.s32.totalorder %s30, 1
      %p254 = por %p252, %p253
      %p255 = scmp.ne.s32.totalorder %s244, %s245
      %p256 = scmp.eq.s32.totalorder %s30, 0
      %p257 = por %p255, %p256
      %p258 = scmp.ne.s32.totalorder %s244, %s245
      %p259 = scmp.eq.s32.totalorder %s31, 1
      %p260 = por %p258, %p259
      %p262 = scmp.ne.s32.totalorder %s245, %s261
      %p263 = scmp.eq.s32.totalorder %s31, 0
      %p264 = por %p262, %p263
      %p265 = scmp.le.s32.totalorder 1, %s25
      %p266 = scmp.lt.s32.totalorder %s25, 3
      %p267 = pnand %p265, %p266
      %p268 = pneg %p267
      // Predicated region
      $region9: #{multi_head_attention.1} parent=5 // pred_check
        _
      $region10: #{multi_head_attention.1} parent=5 // pred_check_branch
        %270 = sbr.rel (%p267) target = $region12
      $region11: #{multi_head_attention.1} parent=5 // pred_region
        %s271 = ssub.s32 %s25, 1
        // Predicated region
        $region13: #{multi_head_attention.1} parent=11 // pred_check
          %p272 = pneg %p166
        $region14: #{multi_head_attention.1} parent=11 // pred_check_branch
          %274 = sbr.rel (%p272) target = $region16
        $region15: #{multi_head_attention.1} parent=11 // pred_region
          %s276 = ssub.s32 24576, 24576
          %277 = vsyncadd [#allocation11], %s276
          %s278 = sshll.u32 [#allocation10], 4
          %s279 = int_to_ptr.vmem [resolvable:$true] %s278
          %284 = dma.hbm_to_vmem [thread:$0]  %s4, 24576, %s279, [#allocation11], 256, 256, 16
        $region16: #{multi_head_attention.1} parent=11 // pred_fallthru
          _
        // Predicated region
        $region17: #{multi_head_attention.1} parent=11 // pred_check
          %p285 = pneg %p187
        $region18: #{multi_head_attention.1} parent=11 // pred_check_branch
          %287 = sbr.rel (%p285) target = $region20
        $region19: #{multi_head_attention.1} parent=11 // pred_region
          %s289 = ssub.s32 24576, 24576
          %290 = vsyncadd [#allocation11], %s289
          %s291 = sshll.u32 [#allocation12], 4
          %s292 = int_to_ptr.vmem [resolvable:$true] %s291
          %297 = dma.hbm_to_vmem [thread:$0]  %s5, 24576, %s292, [#allocation11], 256, 256, 16
        $region20: #{multi_head_attention.1} parent=11 // pred_fallthru
          _
        // Predicated region
        $region21: #{multi_head_attention.1} parent=11 // pred_check
          %p298 = pneg %p208
        $region22: #{multi_head_attention.1} parent=11 // pred_check_branch
          %300 = sbr.rel (%p298) target = $region24
        $region23: #{multi_head_attention.1} parent=11 // pred_region
          %s302 = ssub.s32 24576, 24576
          %303 = vsyncadd [#allocation14], %s302
          %s304 = sshll.u32 [#allocation13], 4
          %s305 = int_to_ptr.vmem [resolvable:$true] %s304
          %310 = dma.hbm_to_vmem [thread:$0]  %s6, 24576, %s305, [#allocation14], 256, 256, 16
        $region24: #{multi_head_attention.1} parent=11 // pred_fallthru
          _
        // Predicated region
        $region25: #{multi_head_attention.1} parent=11 // pred_check
          %p311 = pneg %p229
        $region26: #{multi_head_attention.1} parent=11 // pred_check_branch
          %313 = sbr.rel (%p311) target = $region28
        $region27: #{multi_head_attention.1} parent=11 // pred_region
          %s315 = ssub.s32 24576, 24576
          %316 = vsyncadd [#allocation14], %s315
          %s317 = sshll.u32 [#allocation15], 4
          %s318 = int_to_ptr.vmem [resolvable:$true] %s317
          %323 = dma.hbm_to_vmem [thread:$0]  %s7, 24576, %s318, [#allocation14], 384, 384, 24
        $region28: #{multi_head_attention.1} parent=11 // pred_fallthru
          _
      $region12: #{multi_head_attention.1} parent=5 // pred_fallthru
        _
      %p324 = scmp.lt.s32.totalorder %s25, 2
      // Predicated region
      $region29: #{multi_head_attention.1} parent=5 // pred_check
        %p325 = pneg %p324
      $region30: #{multi_head_attention.1} parent=5 // pred_check_branch
        %327 = sbr.rel (%p325) target = $region32
      $region31: #{multi_head_attention.1} parent=5 // pred_region
        // Predicated region
        $region33: #{multi_head_attention.1} parent=31 // pred_check
          %p328 = pneg %p59
        $region34: #{multi_head_attention.1} parent=31 // pred_check_branch
          %330 = sbr.rel (%p328) target = $region36
        $region35: #{multi_head_attention.1} parent=31 // pred_region
          %s331 = sand.u32 %s49, 1
          %s332 = scalar_lea.sflag [#allocation5], %s331
          %s333 = sand.u32 %s49, 1
          %s334 = smul.addr %s333, 48
          %s335 = scalar_lea.vmem [#allocation4], %s334
          %s337 = ssub.s32 768, 768
          %338 = vsyncadd %s332, %s337
          %s339 = smul.addr %s33, 6
          %s340 = smul.addr %s32, 6
          %s341 = sadd.s32 %s339, %s340
          %s342 = smul.addr %s341, 128
          %s343 = scalar_lea.hbm %s0, %s342
          %s345 = sshll.u32 %s335, 4
          %s346 = int_to_ptr.vmem [resolvable:$true] %s345
          %348 = dma.hbm_to_vmem [thread:$0]  %s343, 768, %s346, %s332
        $region36: #{multi_head_attention.1} parent=31 // pred_fallthru
          _
        // Predicated region
        $region37: #{multi_head_attention.1} parent=31 // pred_check
          %p349 = pneg %p85
        $region38: #{multi_head_attention.1} parent=31 // pred_check_branch
          %351 = sbr.rel (%p349) target = $region40
        $region39: #{multi_head_attention.1} parent=31 // pred_region
          %s352 = sand.u32 %s25, 1
          %s353 = scalar_lea.sflag [#allocation8], %s352
          %s354 = sand.u32 %s75, 1
          %s355 = smul.addr %s354, 48
          %s356 = scalar_lea.vmem [#allocation7], %s355
          %s358 = ssub.s32 768, 768
          %359 = vsyncadd %s353, %s358
          %s360 = smul.addr %s32, 6
          %s361 = smul.addr %s360, 128
          %s362 = scalar_lea.hbm %s1, %s361
          %s364 = sshll.u32 %s356, 4
          %s365 = int_to_ptr.vmem [resolvable:$true] %s364
          %367 = dma.hbm_to_vmem [thread:$0]  %s362, 768, %s365, %s353
        $region40: #{multi_head_attention.1} parent=31 // pred_fallthru
          _
        // Predicated region
        $region41: #{multi_head_attention.1} parent=31 // pred_check
          %p368 = pneg %p111
        $region42: #{multi_head_attention.1} parent=31 // pred_check_branch
          %370 = sbr.rel (%p368) target = $region44
        $region43: #{multi_head_attention.1} parent=31 // pred_region
          %s371 = sand.u32 %s25, 1
          %s372 = scalar_lea.sflag [#allocation8], %s371
          %s373 = sand.u32 %s101, 1
          %s374 = smul.addr %s373, 48
          %s375 = scalar_lea.vmem [#allocation9], %s374
          %s377 = ssub.s32 768, 768
          %378 = vsyncadd %s372, %s377
          %s379 = smul.addr %s32, 6
          %s380 = smul.addr %s379, 128
          %s381 = scalar_lea.hbm %s2, %s380
          %s383 = sshll.u32 %s375, 4
          %s384 = int_to_ptr.vmem [resolvable:$true] %s383
          %386 = dma.hbm_to_vmem [thread:$0]  %s381, 768, %s384, %s372
        $region44: #{multi_head_attention.1} parent=31 // pred_fallthru
          _
        // Predicated region
        $region45: #{multi_head_attention.1} parent=31 // pred_check
          %p387 = pneg %p139
        $region46: #{multi_head_attention.1} parent=31 // pred_check_branch
          %389 = sbr.rel (%p387) target = $region48
        $region47: #{multi_head_attention.1} parent=31 // pred_region
          %p390 = scmp.lt.s32.totalorder %s32, 1
          %s391 = scalar_select %p390, %s32, 1
          %p392 = scmp.lt.s32.totalorder %s33, 0
          %s393 = scalar_select %p392, %s33, 0
          %s394 = sadd.s32 %s393, %s391
          %s395 = smul.addr %s394, 2
          %s396 = scalar_lea.vmem %s3, %s395
        $region48: #{multi_head_attention.1} parent=31 // pred_fallthru
          _
      $region32: #{multi_head_attention.1} parent=5 // pred_fallthru
        _
      %p397 = scmp.le.s32.totalorder 1, %s25
      %p398 = scmp.lt.s32.totalorder %s25, 3
      %p399 = pnand %p397, %p398
      %p400 = pneg %p399
      // Predicated region
      $region49: #{multi_head_attention.1} parent=5 // pred_check
        _
      $region50: #{multi_head_attention.1} parent=5 // pred_check_branch
        %402 = sbr.rel (%p399) target = $region52
      $region51: #{multi_head_attention.1} parent=5 // pred_region
        %s403 = ssub.s32 %s25, 1
        %s404 = sand.u32 %s52, 1
        %s405 = scalar_lea.sflag [#allocation5], %s404
        %s406 = sand.u32 %s52, 1
        %s407 = smul.addr %s406, 48
        %s408 = scalar_lea.vmem [#allocation4], %s407
        // Predicated region
        $region53: #{multi_head_attention.1} parent=51 // pred_check
          %p409 = pneg %p65
        $region54: #{multi_head_attention.1} parent=51 // pred_check_branch
          %411 = sbr.rel (%p409) target = $region56
        $region55: #{multi_head_attention.1} parent=51 // pred_region
          %412 = dma.done %s405, 768
        $region56: #{multi_head_attention.1} parent=51 // pred_fallthru
          _
        %s413 = sand.u32 %s30, 1
        %s414 = scalar_lea.sflag [#allocation8], %s413
        %s415 = sand.u32 %s78, 1
        %s416 = smul.addr %s415, 48
        %s417 = scalar_lea.vmem [#allocation7], %s416
        // Predicated region
        $region57: #{multi_head_attention.1} parent=51 // pred_check
          %p418 = pneg %p91
        $region58: #{multi_head_attention.1} parent=51 // pred_check_branch
          %420 = sbr.rel (%p418) target = $region60
        $region59: #{multi_head_attention.1} parent=51 // pred_region
          %421 = dma.done %s414, 768
        $region60: #{multi_head_attention.1} parent=51 // pred_fallthru
          _
        %s422 = sand.u32 %s30, 1
        %s423 = scalar_lea.sflag [#allocation8], %s422
        %s424 = sand.u32 %s104, 1
        %s425 = smul.addr %s424, 48
        %s426 = scalar_lea.vmem [#allocation9], %s425
        // Predicated region
        $region61: #{multi_head_attention.1} parent=51 // pred_check
          %p427 = pneg %p117
        $region62: #{multi_head_attention.1} parent=51 // pred_check_branch
          %429 = sbr.rel (%p427) target = $region64
        $region63: #{multi_head_attention.1} parent=51 // pred_region
          %430 = dma.done %s423, 768
        $region64: #{multi_head_attention.1} parent=51 // pred_fallthru
          _
        // Predicated region
        $region65: #{multi_head_attention.1} parent=51 // pred_check
          %p431 = pneg %p166
        $region66: #{multi_head_attention.1} parent=51 // pred_check_branch
          %433 = sbr.rel (%p431) target = $region68
        $region67: #{multi_head_attention.1} parent=51 // pred_region
          %434 = dma.done [#allocation11], 24576
        $region68: #{multi_head_attention.1} parent=51 // pred_fallthru
          _
        // Predicated region
        $region69: #{multi_head_attention.1} parent=51 // pred_check
          %p435 = pneg %p187
        $region70: #{multi_head_attention.1} parent=51 // pred_check_branch
          %437 = sbr.rel (%p435) target = $region72
        $region71: #{multi_head_attention.1} parent=51 // pred_region
          %438 = dma.done [#allocation11], 24576
        $region72: #{multi_head_attention.1} parent=51 // pred_fallthru
          _
        // Predicated region
        $region73: #{multi_head_attention.1} parent=51 // pred_check
          %p439 = pneg %p208
        $region74: #{multi_head_attention.1} parent=51 // pred_check_branch
          %441 = sbr.rel (%p439) target = $region76
        $region75: #{multi_head_attention.1} parent=51 // pred_region
          %442 = dma.done [#allocation14], 24576
        $region76: #{multi_head_attention.1} parent=51 // pred_fallthru
          _
        // Predicated region
        $region77: #{multi_head_attention.1} parent=51 // pred_check
          %p443 = pneg %p229
        $region78: #{multi_head_attention.1} parent=51 // pred_check_branch
          %445 = sbr.rel (%p443) target = $region80
        $region79: #{multi_head_attention.1} parent=51 // pred_region
          %446 = dma.done [#allocation14], 24576
        $region80: #{multi_head_attention.1} parent=51 // pred_fallthru
          _
        %s447 = sand.u32 %s52, 1
        %s448 = scalar_lea.sflag [#allocation5], %s447
        %s449 = sand.u32 %s52, 1
        %s450 = smul.addr %s449, 48
        %s451 = scalar_lea.vmem [#allocation4], %s450
        %p452 = pneg %p65
        %p453 = pneg %p62
        %s454 = sand.u32 %s30, 1
        %s455 = scalar_lea.sflag [#allocation8], %s454
        %s456 = sand.u32 %s78, 1
        %s457 = smul.addr %s456, 48
        %s458 = scalar_lea.vmem [#allocation7], %s457
        %p459 = pneg %p91
        %p460 = pneg %p88
        %s461 = sand.u32 %s30, 1
        %s462 = scalar_lea.sflag [#allocation8], %s461
        %s463 = sand.u32 %s104, 1
        %s464 = smul.addr %s463, 48
        %s465 = scalar_lea.vmem [#allocation9], %s464
        %p466 = pneg %p117
        %p467 = pneg %p114
        %p468 = scmp.lt.s32.totalorder %s34, 1
        %s469 = scalar_select %p468, %s34, 1
        %p470 = scmp.lt.s32.totalorder %s35, 0
        %s471 = scalar_select %p470, %s35, 0
        %s472 = sadd.s32 %s471, %s469
        %s473 = smul.addr %s472, 2
        %s474 = scalar_lea.vmem %s3, %s473
        %p475 = pneg %p145
        %p476 = pneg %p142
        %p477 = pneg %p166
        %p478 = pneg %p163
        %p479 = pneg %p187
        %p480 = pneg %p184
        %p481 = pneg %p208
        %p482 = pneg %p205
        %p483 = pneg %p229
        %p484 = pneg %p226
        %p485 = pneg %p257
        %p486 = pneg %p254
        %s487 = sand.u32 %s244, 1
        %s488 = scalar_lea.sflag [#allocation6], %s487
        %s489 = sand.u32 %s244, 1
        %s490 = smul.addr %s489, 48
        %s491 = scalar_lea.vmem [#allocation16], %s490
        %p492 = scmp.lt.s32.totalorder %s34, 1
        %s493 = scalar_select %p492, %s34, 1
        %p494 = scmp.lt.s32.totalorder %s35, 0
        %s495 = scalar_select %p494, %s35, 0
        %s496 = sadd.s32 %s495, %s493
        %s497 = smul.addr %s496, 2
        %s498 = scalar_lea.vmem %s3, %s497
        %p502 = scmp.eq.s32.totalorder %s35, 0
        // Predicated region
        $region81: #{multi_head_attention.1} parent=51 // pred_check
          %p503 = pneg %p502
        $region82: #{multi_head_attention.1} parent=51 // pred_check_branch
          %505 = sbr.rel (%p503) target = $region84
        $region83: #{multi_head_attention.1} parent=51 // pred_region
          %v506 = vld [vmem:[%s417] sm:$0xff]
          %v507 = vld [vmem:[%s417 + $0x8] sm:$0xff]
          %v508 = vld [vmem:[%s417 + $0x10] sm:$0xff]
          %v509 = vld [vmem:[%s417 + $0x18] sm:$0xff]
          %v510 = vld [vmem:[%s417 + $0x20] sm:$0xff]
          %v511 = vld [vmem:[%s417 + $0x28] sm:$0xff]
          %v512 = vpack.c.bf16 %v506, %v506
          %v513 = vpack.c.bf16 %v507, %v507
          %v514 = vpack.c.bf16 %v508, %v508
          %v515 = vpack.c.bf16 %v509, %v509
          %v516 = vpack.c.bf16 %v510, %v510
          %v517 = vpack.c.bf16 %v511, %v511
          %v518 = vld [vmem:[%s426] sm:$0xff]
          %v519 = vld [vmem:[%s426 + $0x8] sm:$0xff]
          %v520 = vld [vmem:[%s426 + $0x10] sm:$0xff]
          %v521 = vld [vmem:[%s426 + $0x18] sm:$0xff]
          %v522 = vld [vmem:[%s426 + $0x20] sm:$0xff]
          %v523 = vld [vmem:[%s426 + $0x28] sm:$0xff]
          %v524 = vpack.c.bf16 %v518, %v518
          %v525 = vpack.c.bf16 %v519, %v519
          %v526 = vpack.c.bf16 %v520, %v520
          %v527 = vpack.c.bf16 %v521, %v521
          %v528 = vpack.c.bf16 %v522, %v522
          %v529 = vpack.c.bf16 %v523, %v523
          %v530 = vld [vmem:[#allocation12] sm:$0xff]
          %v531 = vld [vmem:[#allocation12 + $0x8] sm:$0xff]
          %v532 = vld [vmem:[#allocation12 + $0x10] sm:$0xff]
          %v533 = vld [vmem:[#allocation12 + $0x18] sm:$0xff]
          %v534 = vld [vmem:[#allocation12 + $0x20] sm:$0xff]
          %v535 = vld [vmem:[#allocation12 + $0x28] sm:$0xff]
          %v536 = vld [vmem:[#allocation12 + $0x30] sm:$0xff]
          %v537 = vld [vmem:[#allocation12 + $0x38] sm:$0xff]
          %v538 = vld [vmem:[#allocation12 + $0x40] sm:$0xff]
          %v539 = vld [vmem:[#allocation12 + $0x48] sm:$0xff]
          %v540 = vld [vmem:[#allocation12 + $0x50] sm:$0xff]
          %v541 = vld [vmem:[#allocation12 + $0x58] sm:$0xff]
          %v542 = vld [vmem:[#allocation12 + $0x60] sm:$0xff]
          %v543 = vld [vmem:[#allocation12 + $0x68] sm:$0xff]
          %v544 = vld [vmem:[#allocation12 + $0x70] sm:$0xff]
          %v545 = vld [vmem:[#allocation12 + $0x78] sm:$0xff]
          %v546 = vld [vmem:[#allocation12 + $0x80] sm:$0xff]
          %v547 = vld [vmem:[#allocation12 + $0x88] sm:$0xff]
          %v548 = vld [vmem:[#allocation12 + $0x90] sm:$0xff]
          %v549 = vld [vmem:[#allocation12 + $0x98] sm:$0xff]
          %v550 = vld [vmem:[#allocation12 + $0xa0] sm:$0xff]
          %v551 = vld [vmem:[#allocation12 + $0xa8] sm:$0xff]
          %v552 = vld [vmem:[#allocation12 + $0xb0] sm:$0xff]
          %v553 = vld [vmem:[#allocation12 + $0xb8] sm:$0xff]
          %v554 = vld [vmem:[#allocation12 + $0xc0] sm:$0xff]
          %v555 = vld [vmem:[#allocation12 + $0xc8] sm:$0xff]
          %v556 = vld [vmem:[#allocation12 + $0xd0] sm:$0xff]
          %v557 = vld [vmem:[#allocation12 + $0xd8] sm:$0xff]
          %v558 = vld [vmem:[#allocation12 + $0xe0] sm:$0xff]
          %v559 = vld [vmem:[#allocation12 + $0xe8] sm:$0xff]
          %v560 = vld [vmem:[#allocation12 + $0xf0] sm:$0xff]
          %v561 = vld [vmem:[#allocation12 + $0xf8] sm:$0xff]
          %v562 = vld [vmem:[#allocation12 + $0x100] sm:$0xff]
          %v563 = vld [vmem:[#allocation12 + $0x108] sm:$0xff]
          %v564 = vld [vmem:[#allocation12 + $0x110] sm:$0xff]
          %v565 = vld [vmem:[#allocation12 + $0x118] sm:$0xff]
          %v566 = vld [vmem:[#allocation12 + $0x120] sm:$0xff]
          %v567 = vld [vmem:[#allocation12 + $0x128] sm:$0xff]
          %v568 = vld [vmem:[#allocation12 + $0x130] sm:$0xff]
          %v569 = vld [vmem:[#allocation12 + $0x138] sm:$0xff]
          %v570 = vld [vmem:[#allocation12 + $0x140] sm:$0xff]
          %v571 = vld [vmem:[#allocation12 + $0x148] sm:$0xff]
          %v572 = vld [vmem:[#allocation12 + $0x150] sm:$0xff]
          %v573 = vld [vmem:[#allocation12 + $0x158] sm:$0xff]
          %v574 = vld [vmem:[#allocation12 + $0x160] sm:$0xff]
          %v575 = vld [vmem:[#allocation12 + $0x168] sm:$0xff]
          %v576 = vld [vmem:[#allocation12 + $0x170] sm:$0xff]
          %v577 = vld [vmem:[#allocation12 + $0x178] sm:$0xff]
          %v578 = vld [vmem:[#allocation12 + $0x180] sm:$0xff]
          %v579 = vld [vmem:[#allocation12 + $0x188] sm:$0xff]
          %v580 = vld [vmem:[#allocation12 + $0x190] sm:$0xff]
          %v581 = vld [vmem:[#allocation12 + $0x198] sm:$0xff]
          %v582 = vld [vmem:[#allocation12 + $0x1a0] sm:$0xff]
          %v583 = vld [vmem:[#allocation12 + $0x1a8] sm:$0xff]
          %v584 = vld [vmem:[#allocation12 + $0x1b0] sm:$0xff]
          %v585 = vld [vmem:[#allocation12 + $0x1b8] sm:$0xff]
          %v586 = vld [vmem:[#allocation12 + $0x1c0] sm:$0xff]
          %v587 = vld [vmem:[#allocation12 + $0x1c8] sm:$0xff]
          %v588 = vld [vmem:[#allocation12 + $0x1d0] sm:$0xff]
          %v589 = vld [vmem:[#allocation12 + $0x1d8] sm:$0xff]
          %v590 = vld [vmem:[#allocation12 + $0x1e0] sm:$0xff]
          %v591 = vld [vmem:[#allocation12 + $0x1e8] sm:$0xff]
          %v592 = vld [vmem:[#allocation12 + $0x1f0] sm:$0xff]
          %v593 = vld [vmem:[#allocation12 + $0x1f8] sm:$0xff]
          %v594 = vld [vmem:[#allocation12 + $0x200] sm:$0xff]
          %v595 = vld [vmem:[#allocation12 + $0x208] sm:$0xff]
          %v596 = vld [vmem:[#allocation12 + $0x210] sm:$0xff]
          %v597 = vld [vmem:[#allocation12 + $0x218] sm:$0xff]
          %v598 = vld [vmem:[#allocation12 + $0x220] sm:$0xff]
          %v599 = vld [vmem:[#allocation12 + $0x228] sm:$0xff]
          %v600 = vld [vmem:[#allocation12 + $0x230] sm:$0xff]
          %v601 = vld [vmem:[#allocation12 + $0x238] sm:$0xff]
          %v602 = vld [vmem:[#allocation12 + $0x240] sm:$0xff]
          %v603 = vld [vmem:[#allocation12 + $0x248] sm:$0xff]
          %v604 = vld [vmem:[#allocation12 + $0x250] sm:$0xff]
          %v605 = vld [vmem:[#allocation12 + $0x258] sm:$0xff]
          %v606 = vld [vmem:[#allocation12 + $0x260] sm:$0xff]
          %v607 = vld [vmem:[#allocation12 + $0x268] sm:$0xff]
          %v608 = vld [vmem:[#allocation12 + $0x270] sm:$0xff]
          %v609 = vld [vmem:[#allocation12 + $0x278] sm:$0xff]
          %v610 = vld [vmem:[#allocation12 + $0x280] sm:$0xff]
          %v611 = vld [vmem:[#allocation12 + $0x288] sm:$0xff]
          %v612 = vld [vmem:[#allocation12 + $0x290] sm:$0xff]
          %v613 = vld [vmem:[#allocation12 + $0x298] sm:$0xff]
          %v614 = vld [vmem:[#allocation12 + $0x2a0] sm:$0xff]
          %v615 = vld [vmem:[#allocation12 + $0x2a8] sm:$0xff]
          %v616 = vld [vmem:[#allocation12 + $0x2b0] sm:$0xff]
          %v617 = vld [vmem:[#allocation12 + $0x2b8] sm:$0xff]
          %v618 = vld [vmem:[#allocation12 + $0x2c0] sm:$0xff]
          %v619 = vld [vmem:[#allocation12 + $0x2c8] sm:$0xff]
          %v620 = vld [vmem:[#allocation12 + $0x2d0] sm:$0xff]
          %v621 = vld [vmem:[#allocation12 + $0x2d8] sm:$0xff]
          %v622 = vld [vmem:[#allocation12 + $0x2e0] sm:$0xff]
          %v623 = vld [vmem:[#allocation12 + $0x2e8] sm:$0xff]
          %v624 = vld [vmem:[#allocation12 + $0x2f0] sm:$0xff]
          %v625 = vld [vmem:[#allocation12 + $0x2f8] sm:$0xff]
          %v626 = vld [vmem:[#allocation12 + $0x300] sm:$0xff]
          %v627 = vld [vmem:[#allocation12 + $0x308] sm:$0xff]
          %v628 = vld [vmem:[#allocation12 + $0x310] sm:$0xff]
          %v629 = vld [vmem:[#allocation12 + $0x318] sm:$0xff]
          %v630 = vld [vmem:[#allocation12 + $0x320] sm:$0xff]
          %v631 = vld [vmem:[#allocation12 + $0x328] sm:$0xff]
          %v632 = vld [vmem:[#allocation12 + $0x330] sm:$0xff]
          %v633 = vld [vmem:[#allocation12 + $0x338] sm:$0xff]
          %v634 = vld [vmem:[#allocation12 + $0x340] sm:$0xff]
          %v635 = vld [vmem:[#allocation12 + $0x348] sm:$0xff]
          %v636 = vld [vmem:[#allocation12 + $0x350] sm:$0xff]
          %v637 = vld [vmem:[#allocation12 + $0x358] sm:$0xff]
          %v638 = vld [vmem:[#allocation12 + $0x360] sm:$0xff]
          %v639 = vld [vmem:[#allocation12 + $0x368] sm:$0xff]
          %v640 = vld [vmem:[#allocation12 + $0x370] sm:$0xff]
          %v641 = vld [vmem:[#allocation12 + $0x378] sm:$0xff]
          %v642 = vld [vmem:[#allocation12 + $0x380] sm:$0xff]
          %v643 = vld [vmem:[#allocation12 + $0x388] sm:$0xff]
          %v644 = vld [vmem:[#allocation12 + $0x390] sm:$0xff]
          %v645 = vld [vmem:[#allocation12 + $0x398] sm:$0xff]
          %v646 = vld [vmem:[#allocation12 + $0x3a0] sm:$0xff]
          %v647 = vld [vmem:[#allocation12 + $0x3a8] sm:$0xff]
          %v648 = vld [vmem:[#allocation12 + $0x3b0] sm:$0xff]
          %v649 = vld [vmem:[#allocation12 + $0x3b8] sm:$0xff]
          %v650 = vld [vmem:[#allocation12 + $0x3c0] sm:$0xff]
          %v651 = vld [vmem:[#allocation12 + $0x3c8] sm:$0xff]
          %v652 = vld [vmem:[#allocation12 + $0x3d0] sm:$0xff]
          %v653 = vld [vmem:[#allocation12 + $0x3d8] sm:$0xff]
          %v654 = vld [vmem:[#allocation12 + $0x3e0] sm:$0xff]
          %v655 = vld [vmem:[#allocation12 + $0x3e8] sm:$0xff]
          %v656 = vld [vmem:[#allocation12 + $0x3f0] sm:$0xff]
          %v657 = vld [vmem:[#allocation12 + $0x3f8] sm:$0xff]
          %v658 = vld [vmem:[#allocation12 + $0x400] sm:$0xff]
          %v659 = vld [vmem:[#allocation12 + $0x408] sm:$0xff]
          %v660 = vld [vmem:[#allocation12 + $0x410] sm:$0xff]
          %v661 = vld [vmem:[#allocation12 + $0x418] sm:$0xff]
          %v662 = vld [vmem:[#allocation12 + $0x420] sm:$0xff]
          %v663 = vld [vmem:[#allocation12 + $0x428] sm:$0xff]
          %v664 = vld [vmem:[#allocation12 + $0x430] sm:$0xff]
          %v665 = vld [vmem:[#allocation12 + $0x438] sm:$0xff]
          %v666 = vld [vmem:[#allocation12 + $0x440] sm:$0xff]
          %v667 = vld [vmem:[#allocation12 + $0x448] sm:$0xff]
          %v668 = vld [vmem:[#allocation12 + $0x450] sm:$0xff]
          %v669 = vld [vmem:[#allocation12 + $0x458] sm:$0xff]
          %v670 = vld [vmem:[#allocation12 + $0x460] sm:$0xff]
          %v671 = vld [vmem:[#allocation12 + $0x468] sm:$0xff]
          %v672 = vld [vmem:[#allocation12 + $0x470] sm:$0xff]
          %v673 = vld [vmem:[#allocation12 + $0x478] sm:$0xff]
          %v674 = vld [vmem:[#allocation12 + $0x480] sm:$0xff]
          %v675 = vld [vmem:[#allocation12 + $0x488] sm:$0xff]
          %v676 = vld [vmem:[#allocation12 + $0x490] sm:$0xff]
          %v677 = vld [vmem:[#allocation12 + $0x498] sm:$0xff]
          %v678 = vld [vmem:[#allocation12 + $0x4a0] sm:$0xff]
          %v679 = vld [vmem:[#allocation12 + $0x4a8] sm:$0xff]
          %v680 = vld [vmem:[#allocation12 + $0x4b0] sm:$0xff]
          %v681 = vld [vmem:[#allocation12 + $0x4b8] sm:$0xff]
          %v682 = vld [vmem:[#allocation12 + $0x4c0] sm:$0xff]
          %v683 = vld [vmem:[#allocation12 + $0x4c8] sm:$0xff]
          %v684 = vld [vmem:[#allocation12 + $0x4d0] sm:$0xff]
          %v685 = vld [vmem:[#allocation12 + $0x4d8] sm:$0xff]
          %v686 = vld [vmem:[#allocation12 + $0x4e0] sm:$0xff]
          %v687 = vld [vmem:[#allocation12 + $0x4e8] sm:$0xff]
          %v688 = vld [vmem:[#allocation12 + $0x4f0] sm:$0xff]
          %v689 = vld [vmem:[#allocation12 + $0x4f8] sm:$0xff]
          %v690 = vld [vmem:[#allocation12 + $0x500] sm:$0xff]
          %v691 = vld [vmem:[#allocation12 + $0x508] sm:$0xff]
          %v692 = vld [vmem:[#allocation12 + $0x510] sm:$0xff]
          %v693 = vld [vmem:[#allocation12 + $0x518] sm:$0xff]
          %v694 = vld [vmem:[#allocation12 + $0x520] sm:$0xff]
          %v695 = vld [vmem:[#allocation12 + $0x528] sm:$0xff]
          %v696 = vld [vmem:[#allocation12 + $0x530] sm:$0xff]
          %v697 = vld [vmem:[#allocation12 + $0x538] sm:$0xff]
          %v698 = vld [vmem:[#allocation12 + $0x540] sm:$0xff]
          %v699 = vld [vmem:[#allocation12 + $0x548] sm:$0xff]
          %v700 = vld [vmem:[#allocation12 + $0x550] sm:$0xff]
          %v701 = vld [vmem:[#allocation12 + $0x558] sm:$0xff]
          %v702 = vld [vmem:[#allocation12 + $0x560] sm:$0xff]
          %v703 = vld [vmem:[#allocation12 + $0x568] sm:$0xff]
          %v704 = vld [vmem:[#allocation12 + $0x570] sm:$0xff]
          %v705 = vld [vmem:[#allocation12 + $0x578] sm:$0xff]
          %v706 = vld [vmem:[#allocation12 + $0x580] sm:$0xff]
          %v707 = vld [vmem:[#allocation12 + $0x588] sm:$0xff]
          %v708 = vld [vmem:[#allocation12 + $0x590] sm:$0xff]
          %v709 = vld [vmem:[#allocation12 + $0x598] sm:$0xff]
          %v710 = vld [vmem:[#allocation12 + $0x5a0] sm:$0xff]
          %v711 = vld [vmem:[#allocation12 + $0x5a8] sm:$0xff]
          %v712 = vld [vmem:[#allocation12 + $0x5b0] sm:$0xff]
          %v713 = vld [vmem:[#allocation12 + $0x5b8] sm:$0xff]
          %v714 = vld [vmem:[#allocation12 + $0x5c0] sm:$0xff]
          %v715 = vld [vmem:[#allocation12 + $0x5c8] sm:$0xff]
          %v716 = vld [vmem:[#allocation12 + $0x5d0] sm:$0xff]
          %v717 = vld [vmem:[#allocation12 + $0x5d8] sm:$0xff]
          %v718 = vld [vmem:[#allocation12 + $0x5e0] sm:$0xff]
          %v719 = vld [vmem:[#allocation12 + $0x5e8] sm:$0xff]
          %v720 = vld [vmem:[#allocation12 + $0x5f0] sm:$0xff]
          %v721 = vld [vmem:[#allocation12 + $0x5f8] sm:$0xff]
          %v914 = vunpack.c.l.b16 %v530
          %v915 = vunpack.c.h.b16 %v530
          %v916 = vunpack.c.l.b16 %v531
          %v917 = vunpack.c.h.b16 %v531
          %v918 = vunpack.c.l.b16 %v532
          %v919 = vunpack.c.h.b16 %v532
          %v920 = vunpack.c.l.b16 %v533
          %v921 = vunpack.c.h.b16 %v533
          %v922 = vunpack.c.l.b16 %v534
          %v923 = vunpack.c.h.b16 %v534
          %v924 = vunpack.c.l.b16 %v535
          %v925 = vunpack.c.h.b16 %v535
          %v926 = vunpack.c.l.b16 %v536
          %v927 = vunpack.c.h.b16 %v536
          %v928 = vunpack.c.l.b16 %v537
          %v929 = vunpack.c.h.b16 %v537
          %v930 = vunpack.c.l.b16 %v538
          %v931 = vunpack.c.h.b16 %v538
          %v932 = vunpack.c.l.b16 %v539
          %v933 = vunpack.c.h.b16 %v539
          %v934 = vunpack.c.l.b16 %v540
          %v935 = vunpack.c.h.b16 %v540
          %v936 = vunpack.c.l.b16 %v541
          %v937 = vunpack.c.h.b16 %v541
          %v938 = vunpack.c.l.b16 %v542
          %v939 = vunpack.c.h.b16 %v542
          %v940 = vunpack.c.l.b16 %v543
          %v941 = vunpack.c.h.b16 %v543
          %v942 = vunpack.c.l.b16 %v544
          %v943 = vunpack.c.h.b16 %v544
          %v944 = vunpack.c.l.b16 %v545
          %v945 = vunpack.c.h.b16 %v545
          %v946 = vunpack.c.l.b16 %v546
          %v947 = vunpack.c.h.b16 %v546
          %v948 = vunpack.c.l.b16 %v547
          %v949 = vunpack.c.h.b16 %v547
          %v950 = vunpack.c.l.b16 %v548
          %v951 = vunpack.c.h.b16 %v548
          %v952 = vunpack.c.l.b16 %v549
          %v953 = vunpack.c.h.b16 %v549
          %v954 = vunpack.c.l.b16 %v550
          %v955 = vunpack.c.h.b16 %v550
          %v956 = vunpack.c.l.b16 %v551
          %v957 = vunpack.c.h.b16 %v551
          %v958 = vunpack.c.l.b16 %v552
          %v959 = vunpack.c.h.b16 %v552
          %v960 = vunpack.c.l.b16 %v553
          %v961 = vunpack.c.h.b16 %v553
          %v962 = vunpack.c.l.b16 %v554
          %v963 = vunpack.c.h.b16 %v554
          %v964 = vunpack.c.l.b16 %v555
          %v965 = vunpack.c.h.b16 %v555
          %v966 = vunpack.c.l.b16 %v556
          %v967 = vunpack.c.h.b16 %v556
          %v968 = vunpack.c.l.b16 %v557
          %v969 = vunpack.c.h.b16 %v557
          %v970 = vunpack.c.l.b16 %v558
          %v971 = vunpack.c.h.b16 %v558
          %v972 = vunpack.c.l.b16 %v559
          %v973 = vunpack.c.h.b16 %v559
          %v974 = vunpack.c.l.b16 %v560
          %v975 = vunpack.c.h.b16 %v560
          %v976 = vunpack.c.l.b16 %v561
          %v977 = vunpack.c.h.b16 %v561
          %v978 = vunpack.c.l.b16 %v562
          %v979 = vunpack.c.h.b16 %v562
          %v980 = vunpack.c.l.b16 %v563
          %v981 = vunpack.c.h.b16 %v563
          %v982 = vunpack.c.l.b16 %v564
          %v983 = vunpack.c.h.b16 %v564
          %v984 = vunpack.c.l.b16 %v565
          %v985 = vunpack.c.h.b16 %v565
          %v986 = vunpack.c.l.b16 %v566
          %v987 = vunpack.c.h.b16 %v566
          %v988 = vunpack.c.l.b16 %v567
          %v989 = vunpack.c.h.b16 %v567
          %v990 = vunpack.c.l.b16 %v568
          %v991 = vunpack.c.h.b16 %v568
          %v992 = vunpack.c.l.b16 %v569
          %v993 = vunpack.c.h.b16 %v569
          %v994 = vunpack.c.l.b16 %v570
          %v995 = vunpack.c.h.b16 %v570
          %v996 = vunpack.c.l.b16 %v571
          %v997 = vunpack.c.h.b16 %v571
          %v998 = vunpack.c.l.b16 %v572
          %v999 = vunpack.c.h.b16 %v572
          %v1000 = vunpack.c.l.b16 %v573
          %v1001 = vunpack.c.h.b16 %v573
          %v1002 = vunpack.c.l.b16 %v574
          %v1003 = vunpack.c.h.b16 %v574
          %v1004 = vunpack.c.l.b16 %v575
          %v1005 = vunpack.c.h.b16 %v575
          %v1006 = vunpack.c.l.b16 %v576
          %v1007 = vunpack.c.h.b16 %v576
          %v1008 = vunpack.c.l.b16 %v577
          %v1009 = vunpack.c.h.b16 %v577
          %v1010 = vunpack.c.l.b16 %v578
          %v1011 = vunpack.c.h.b16 %v578
          %v1012 = vunpack.c.l.b16 %v579
          %v1013 = vunpack.c.h.b16 %v579
          %v1014 = vunpack.c.l.b16 %v580
          %v1015 = vunpack.c.h.b16 %v580
          %v1016 = vunpack.c.l.b16 %v581
          %v1017 = vunpack.c.h.b16 %v581
          %v1018 = vunpack.c.l.b16 %v582
          %v1019 = vunpack.c.h.b16 %v582
          %v1020 = vunpack.c.l.b16 %v583
          %v1021 = vunpack.c.h.b16 %v583
          %v1022 = vunpack.c.l.b16 %v584
          %v1023 = vunpack.c.h.b16 %v584
          %v1024 = vunpack.c.l.b16 %v585
          %v1025 = vunpack.c.h.b16 %v585
          %v1026 = vunpack.c.l.b16 %v586
          %v1027 = vunpack.c.h.b16 %v586
          %v1028 = vunpack.c.l.b16 %v587
          %v1029 = vunpack.c.h.b16 %v587
          %v1030 = vunpack.c.l.b16 %v588
          %v1031 = vunpack.c.h.b16 %v588
          %v1032 = vunpack.c.l.b16 %v589
          %v1033 = vunpack.c.h.b16 %v589
          %v1034 = vunpack.c.l.b16 %v590
          %v1035 = vunpack.c.h.b16 %v590
          %v1036 = vunpack.c.l.b16 %v591
          %v1037 = vunpack.c.h.b16 %v591
          %v1038 = vunpack.c.l.b16 %v592
          %v1039 = vunpack.c.h.b16 %v592
          %v1040 = vunpack.c.l.b16 %v593
          %v1041 = vunpack.c.h.b16 %v593
          %v1042 = vunpack.c.l.b16 %v594
          %v1043 = vunpack.c.h.b16 %v594
          %v1044 = vunpack.c.l.b16 %v595
          %v1045 = vunpack.c.h.b16 %v595
          %v1046 = vunpack.c.l.b16 %v596
          %v1047 = vunpack.c.h.b16 %v596
          %v1048 = vunpack.c.l.b16 %v597
          %v1049 = vunpack.c.h.b16 %v597
          %v1050 = vunpack.c.l.b16 %v598
          %v1051 = vunpack.c.h.b16 %v598
          %v1052 = vunpack.c.l.b16 %v599
          %v1053 = vunpack.c.h.b16 %v599
          %v1054 = vunpack.c.l.b16 %v600
          %v1055 = vunpack.c.h.b16 %v600
          %v1056 = vunpack.c.l.b16 %v601
          %v1057 = vunpack.c.h.b16 %v601
          %v1058 = vunpack.c.l.b16 %v602
          %v1059 = vunpack.c.h.b16 %v602
          %v1060 = vunpack.c.l.b16 %v603
          %v1061 = vunpack.c.h.b16 %v603
          %v1062 = vunpack.c.l.b16 %v604
          %v1063 = vunpack.c.h.b16 %v604
          %v1064 = vunpack.c.l.b16 %v605
          %v1065 = vunpack.c.h.b16 %v605
          %v1066 = vunpack.c.l.b16 %v606
          %v1067 = vunpack.c.h.b16 %v606
          %v1068 = vunpack.c.l.b16 %v607
          %v1069 = vunpack.c.h.b16 %v607
          %v1070 = vunpack.c.l.b16 %v608
          %v1071 = vunpack.c.h.b16 %v608
          %v1072 = vunpack.c.l.b16 %v609
          %v1073 = vunpack.c.h.b16 %v609
          %v1074 = vunpack.c.l.b16 %v610
          %v1075 = vunpack.c.h.b16 %v610
          %v1076 = vunpack.c.l.b16 %v611
          %v1077 = vunpack.c.h.b16 %v611
          %v1078 = vunpack.c.l.b16 %v612
          %v1079 = vunpack.c.h.b16 %v612
          %v1080 = vunpack.c.l.b16 %v613
          %v1081 = vunpack.c.h.b16 %v613
          %v1082 = vunpack.c.l.b16 %v614
          %v1083 = vunpack.c.h.b16 %v614
          %v1084 = vunpack.c.l.b16 %v615
          %v1085 = vunpack.c.h.b16 %v615
          %v1086 = vunpack.c.l.b16 %v616
          %v1087 = vunpack.c.h.b16 %v616
          %v1088 = vunpack.c.l.b16 %v617
          %v1089 = vunpack.c.h.b16 %v617
          %v1090 = vunpack.c.l.b16 %v618
          %v1091 = vunpack.c.h.b16 %v618
          %v1092 = vunpack.c.l.b16 %v619
          %v1093 = vunpack.c.h.b16 %v619
          %v1094 = vunpack.c.l.b16 %v620
          %v1095 = vunpack.c.h.b16 %v620
          %v1096 = vunpack.c.l.b16 %v621
          %v1097 = vunpack.c.h.b16 %v621
          %v1098 = vunpack.c.l.b16 %v622
          %v1099 = vunpack.c.h.b16 %v622
          %v1100 = vunpack.c.l.b16 %v623
          %v1101 = vunpack.c.h.b16 %v623
          %v1102 = vunpack.c.l.b16 %v624
          %v1103 = vunpack.c.h.b16 %v624
          %v1104 = vunpack.c.l.b16 %v625
          %v1105 = vunpack.c.h.b16 %v625
          %v1106 = vunpack.c.l.b16 %v626
          %v1107 = vunpack.c.h.b16 %v626
          %v1108 = vunpack.c.l.b16 %v627
          %v1109 = vunpack.c.h.b16 %v627
          %v1110 = vunpack.c.l.b16 %v628
          %v1111 = vunpack.c.h.b16 %v628
          %v1112 = vunpack.c.l.b16 %v629
          %v1113 = vunpack.c.h.b16 %v629
          %v1114 = vunpack.c.l.b16 %v630
          %v1115 = vunpack.c.h.b16 %v630
          %v1116 = vunpack.c.l.b16 %v631
          %v1117 = vunpack.c.h.b16 %v631
          %v1118 = vunpack.c.l.b16 %v632
          %v1119 = vunpack.c.h.b16 %v632
          %v1120 = vunpack.c.l.b16 %v633
          %v1121 = vunpack.c.h.b16 %v633
          %v1122 = vunpack.c.l.b16 %v634
          %v1123 = vunpack.c.h.b16 %v634
          %v1124 = vunpack.c.l.b16 %v635
          %v1125 = vunpack.c.h.b16 %v635
          %v1126 = vunpack.c.l.b16 %v636
          %v1127 = vunpack.c.h.b16 %v636
          %v1128 = vunpack.c.l.b16 %v637
          %v1129 = vunpack.c.h.b16 %v637
          %v1130 = vunpack.c.l.b16 %v638
          %v1131 = vunpack.c.h.b16 %v638
          %v1132 = vunpack.c.l.b16 %v639
          %v1133 = vunpack.c.h.b16 %v639
          %v1134 = vunpack.c.l.b16 %v640
          %v1135 = vunpack.c.h.b16 %v640
          %v1136 = vunpack.c.l.b16 %v641
          %v1137 = vunpack.c.h.b16 %v641
          %v1138 = vunpack.c.l.b16 %v642
          %v1139 = vunpack.c.h.b16 %v642
          %v1140 = vunpack.c.l.b16 %v643
          %v1141 = vunpack.c.h.b16 %v643
          %v1142 = vunpack.c.l.b16 %v644
          %v1143 = vunpack.c.h.b16 %v644
          %v1144 = vunpack.c.l.b16 %v645
          %v1145 = vunpack.c.h.b16 %v645
          %v1146 = vunpack.c.l.b16 %v646
          %v1147 = vunpack.c.h.b16 %v646
          %v1148 = vunpack.c.l.b16 %v647
          %v1149 = vunpack.c.h.b16 %v647
          %v1150 = vunpack.c.l.b16 %v648
          %v1151 = vunpack.c.h.b16 %v648
          %v1152 = vunpack.c.l.b16 %v649
          %v1153 = vunpack.c.h.b16 %v649
          %v1154 = vunpack.c.l.b16 %v650
          %v1155 = vunpack.c.h.b16 %v650
          %v1156 = vunpack.c.l.b16 %v651
          %v1157 = vunpack.c.h.b16 %v651
          %v1158 = vunpack.c.l.b16 %v652
          %v1159 = vunpack.c.h.b16 %v652
          %v1160 = vunpack.c.l.b16 %v653
          %v1161 = vunpack.c.h.b16 %v653
          %v1162 = vunpack.c.l.b16 %v654
          %v1163 = vunpack.c.h.b16 %v654
          %v1164 = vunpack.c.l.b16 %v655
          %v1165 = vunpack.c.h.b16 %v655
          %v1166 = vunpack.c.l.b16 %v656
          %v1167 = vunpack.c.h.b16 %v656
          %v1168 = vunpack.c.l.b16 %v657
          %v1169 = vunpack.c.h.b16 %v657
          %v1170 = vunpack.c.l.b16 %v658
          %v1171 = vunpack.c.h.b16 %v658
          %v1172 = vunpack.c.l.b16 %v659
          %v1173 = vunpack.c.h.b16 %v659
          %v1174 = vunpack.c.l.b16 %v660
          %v1175 = vunpack.c.h.b16 %v660
          %v1176 = vunpack.c.l.b16 %v661
          %v1177 = vunpack.c.h.b16 %v661
          %v1178 = vunpack.c.l.b16 %v662
          %v1179 = vunpack.c.h.b16 %v662
          %v1180 = vunpack.c.l.b16 %v663
          %v1181 = vunpack.c.h.b16 %v663
          %v1182 = vunpack.c.l.b16 %v664
          %v1183 = vunpack.c.h.b16 %v664
          %v1184 = vunpack.c.l.b16 %v665
          %v1185 = vunpack.c.h.b16 %v665
          %v1186 = vunpack.c.l.b16 %v666
          %v1187 = vunpack.c.h.b16 %v666
          %v1188 = vunpack.c.l.b16 %v667
          %v1189 = vunpack.c.h.b16 %v667
          %v1190 = vunpack.c.l.b16 %v668
          %v1191 = vunpack.c.h.b16 %v668
          %v1192 = vunpack.c.l.b16 %v669
          %v1193 = vunpack.c.h.b16 %v669
          %v1194 = vunpack.c.l.b16 %v670
          %v1195 = vunpack.c.h.b16 %v670
          %v1196 = vunpack.c.l.b16 %v671
          %v1197 = vunpack.c.h.b16 %v671
          %v1198 = vunpack.c.l.b16 %v672
          %v1199 = vunpack.c.h.b16 %v672
          %v1200 = vunpack.c.l.b16 %v673
          %v1201 = vunpack.c.h.b16 %v673
          %v1202 = vunpack.c.l.b16 %v674
          %v1203 = vunpack.c.h.b16 %v674
          %v1204 = vunpack.c.l.b16 %v675
          %v1205 = vunpack.c.h.b16 %v675
          %v1206 = vunpack.c.l.b16 %v676
          %v1207 = vunpack.c.h.b16 %v676
          %v1208 = vunpack.c.l.b16 %v677
          %v1209 = vunpack.c.h.b16 %v677
          %v1210 = vunpack.c.l.b16 %v678
          %v1211 = vunpack.c.h.b16 %v678
          %v1212 = vunpack.c.l.b16 %v679
          %v1213 = vunpack.c.h.b16 %v679
          %v1214 = vunpack.c.l.b16 %v680
          %v1215 = vunpack.c.h.b16 %v680
          %v1216 = vunpack.c.l.b16 %v681
          %v1217 = vunpack.c.h.b16 %v681
          %v1218 = vunpack.c.l.b16 %v682
          %v1219 = vunpack.c.h.b16 %v682
          %v1220 = vunpack.c.l.b16 %v683
          %v1221 = vunpack.c.h.b16 %v683
          %v1222 = vunpack.c.l.b16 %v684
          %v1223 = vunpack.c.h.b16 %v684
          %v1224 = vunpack.c.l.b16 %v685
          %v1225 = vunpack.c.h.b16 %v685
          %v1226 = vunpack.c.l.b16 %v686
          %v1227 = vunpack.c.h.b16 %v686
          %v1228 = vunpack.c.l.b16 %v687
          %v1229 = vunpack.c.h.b16 %v687
          %v1230 = vunpack.c.l.b16 %v688
          %v1231 = vunpack.c.h.b16 %v688
          %v1232 = vunpack.c.l.b16 %v689
          %v1233 = vunpack.c.h.b16 %v689
          %v1234 = vunpack.c.l.b16 %v690
          %v1235 = vunpack.c.h.b16 %v690
          %v1236 = vunpack.c.l.b16 %v691
          %v1237 = vunpack.c.h.b16 %v691
          %v1238 = vunpack.c.l.b16 %v692
          %v1239 = vunpack.c.h.b16 %v692
          %v1240 = vunpack.c.l.b16 %v693
          %v1241 = vunpack.c.h.b16 %v693
          %v1242 = vunpack.c.l.b16 %v694
          %v1243 = vunpack.c.h.b16 %v694
          %v1244 = vunpack.c.l.b16 %v695
          %v1245 = vunpack.c.h.b16 %v695
          %v1246 = vunpack.c.l.b16 %v696
          %v1247 = vunpack.c.h.b16 %v696
          %v1248 = vunpack.c.l.b16 %v697
          %v1249 = vunpack.c.h.b16 %v697
          %v1250 = vunpack.c.l.b16 %v698
          %v1251 = vunpack.c.h.b16 %v698
          %v1252 = vunpack.c.l.b16 %v699
          %v1253 = vunpack.c.h.b16 %v699
          %v1254 = vunpack.c.l.b16 %v700
          %v1255 = vunpack.c.h.b16 %v700
          %v1256 = vunpack.c.l.b16 %v701
          %v1257 = vunpack.c.h.b16 %v701
          %v1258 = vunpack.c.l.b16 %v702
          %v1259 = vunpack.c.h.b16 %v702
          %v1260 = vunpack.c.l.b16 %v703
          %v1261 = vunpack.c.h.b16 %v703
          %v1262 = vunpack.c.l.b16 %v704
          %v1263 = vunpack.c.h.b16 %v704
          %v1264 = vunpack.c.l.b16 %v705
          %v1265 = vunpack.c.h.b16 %v705
          %v1266 = vunpack.c.l.b16 %v706
          %v1267 = vunpack.c.h.b16 %v706
          %v1268 = vunpack.c.l.b16 %v707
          %v1269 = vunpack.c.h.b16 %v707
          %v1270 = vunpack.c.l.b16 %v708
          %v1271 = vunpack.c.h.b16 %v708
          %v1272 = vunpack.c.l.b16 %v709
          %v1273 = vunpack.c.h.b16 %v709
          %v1274 = vunpack.c.l.b16 %v710
          %v1275 = vunpack.c.h.b16 %v710
          %v1276 = vunpack.c.l.b16 %v711
          %v1277 = vunpack.c.h.b16 %v711
          %v1278 = vunpack.c.l.b16 %v712
          %v1279 = vunpack.c.h.b16 %v712
          %v1280 = vunpack.c.l.b16 %v713
          %v1281 = vunpack.c.h.b16 %v713
          %v1282 = vunpack.c.l.b16 %v714
          %v1283 = vunpack.c.h.b16 %v714
          %v1284 = vunpack.c.l.b16 %v715
          %v1285 = vunpack.c.h.b16 %v715
          %v1286 = vunpack.c.l.b16 %v716
          %v1287 = vunpack.c.h.b16 %v716
          %v1288 = vunpack.c.l.b16 %v717
          %v1289 = vunpack.c.h.b16 %v717
          %v1290 = vunpack.c.l.b16 %v718
          %v1291 = vunpack.c.h.b16 %v718
          %v1292 = vunpack.c.l.b16 %v719
          %v1293 = vunpack.c.h.b16 %v719
          %v1294 = vunpack.c.l.b16 %v720
          %v1295 = vunpack.c.h.b16 %v720
          %v1296 = vunpack.c.l.b16 %v721
          %v1297 = vunpack.c.h.b16 %v721
          %v1298 = vpack.c.b16 %v918, %v914
          %v1299 = vpack.c.b16 %v919, %v915
          %v1300 = vpack.c.b16 %v920, %v916
          %v1301 = vpack.c.b16 %v921, %v917
          %v1302 = vpack.c.b16 %v926, %v922
          %v1303 = vpack.c.b16 %v927, %v923
          %v1304 = vpack.c.b16 %v928, %v924
          %v1305 = vpack.c.b16 %v929, %v925
          %v1306 = vpack.c.b16 %v934, %v930
          %v1307 = vpack.c.b16 %v935, %v931
          %v1308 = vpack.c.b16 %v936, %v932
          %v1309 = vpack.c.b16 %v937, %v933
          %v1310 = vpack.c.b16 %v942, %v938
          %v1311 = vpack.c.b16 %v943, %v939
          %v1312 = vpack.c.b16 %v944, %v940
          %v1313 = vpack.c.b16 %v945, %v941
          %v1314 = vpack.c.b16 %v950, %v946
          %v1315 = vpack.c.b16 %v951, %v947
          %v1316 = vpack.c.b16 %v952, %v948
          %v1317 = vpack.c.b16 %v953, %v949
          %v1318 = vpack.c.b16 %v958, %v954
          %v1319 = vpack.c.b16 %v959, %v955
          %v1320 = vpack.c.b16 %v960, %v956
          %v1321 = vpack.c.b16 %v961, %v957
          %v1322 = vpack.c.b16 %v966, %v962
          %v1323 = vpack.c.b16 %v967, %v963
          %v1324 = vpack.c.b16 %v968, %v964
          %v1325 = vpack.c.b16 %v969, %v965
          %v1326 = vpack.c.b16 %v974, %v970
          %v1327 = vpack.c.b16 %v975, %v971
          %v1328 = vpack.c.b16 %v976, %v972
          %v1329 = vpack.c.b16 %v977, %v973
          %v1330 = vpack.c.b16 %v982, %v978
          %v1331 = vpack.c.b16 %v983, %v979
          %v1332 = vpack.c.b16 %v984, %v980
          %v1333 = vpack.c.b16 %v985, %v981
          %v1334 = vpack.c.b16 %v990, %v986
          %v1335 = vpack.c.b16 %v991, %v987
          %v1336 = vpack.c.b16 %v992, %v988
          %v1337 = vpack.c.b16 %v993, %v989
          %v1338 = vpack.c.b16 %v998, %v994
          %v1339 = vpack.c.b16 %v999, %v995
          %v1340 = vpack.c.b16 %v1000, %v996
          %v1341 = vpack.c.b16 %v1001, %v997
          %v1342 = vpack.c.b16 %v1006, %v1002
          %v1343 = vpack.c.b16 %v1007, %v1003
          %v1344 = vpack.c.b16 %v1008, %v1004
          %v1345 = vpack.c.b16 %v1009, %v1005
          %v1346 = vpack.c.b16 %v1014, %v1010
          %v1347 = vpack.c.b16 %v1015, %v1011
          %v1348 = vpack.c.b16 %v1016, %v1012
          %v1349 = vpack.c.b16 %v1017, %v1013
          %v1350 = vpack.c.b16 %v1022, %v1018
          %v1351 = vpack.c.b16 %v1023, %v1019
          %v1352 = vpack.c.b16 %v1024, %v1020
          %v1353 = vpack.c.b16 %v1025, %v1021
          %v1354 = vpack.c.b16 %v1030, %v1026
          %v1355 = vpack.c.b16 %v1031, %v1027
          %v1356 = vpack.c.b16 %v1032, %v1028
          %v1357 = vpack.c.b16 %v1033, %v1029
          %v1358 = vpack.c.b16 %v1038, %v1034
          %v1359 = vpack.c.b16 %v1039, %v1035
          %v1360 = vpack.c.b16 %v1040, %v1036
          %v1361 = vpack.c.b16 %v1041, %v1037
          %v1362 = vpack.c.b16 %v1046, %v1042
          %v1363 = vpack.c.b16 %v1047, %v1043
          %v1364 = vpack.c.b16 %v1048, %v1044
          %v1365 = vpack.c.b16 %v1049, %v1045
          %v1366 = vpack.c.b16 %v1054, %v1050
          %v1367 = vpack.c.b16 %v1055, %v1051
          %v1368 = vpack.c.b16 %v1056, %v1052
          %v1369 = vpack.c.b16 %v1057, %v1053
          %v1370 = vpack.c.b16 %v1062, %v1058
          %v1371 = vpack.c.b16 %v1063, %v1059
          %v1372 = vpack.c.b16 %v1064, %v1060
          %v1373 = vpack.c.b16 %v1065, %v1061
          %v1374 = vpack.c.b16 %v1070, %v1066
          %v1375 = vpack.c.b16 %v1071, %v1067
          %v1376 = vpack.c.b16 %v1072, %v1068
          %v1377 = vpack.c.b16 %v1073, %v1069
          %v1378 = vpack.c.b16 %v1078, %v1074
          %v1379 = vpack.c.b16 %v1079, %v1075
          %v1380 = vpack.c.b16 %v1080, %v1076
          %v1381 = vpack.c.b16 %v1081, %v1077
          %v1382 = vpack.c.b16 %v1086, %v1082
          %v1383 = vpack.c.b16 %v1087, %v1083
          %v1384 = vpack.c.b16 %v1088, %v1084
          %v1385 = vpack.c.b16 %v1089, %v1085
          %v1386 = vpack.c.b16 %v1094, %v1090
          %v1387 = vpack.c.b16 %v1095, %v1091
          %v1388 = vpack.c.b16 %v1096, %v1092
          %v1389 = vpack.c.b16 %v1097, %v1093
          %v1390 = vpack.c.b16 %v1102, %v1098
          %v1391 = vpack.c.b16 %v1103, %v1099
          %v1392 = vpack.c.b16 %v1104, %v1100
          %v1393 = vpack.c.b16 %v1105, %v1101
          %v1394 = vpack.c.b16 %v1110, %v1106
          %v1395 = vpack.c.b16 %v1111, %v1107
          %v1396 = vpack.c.b16 %v1112, %v1108
          %v1397 = vpack.c.b16 %v1113, %v1109
          %v1398 = vpack.c.b16 %v1118, %v1114
          %v1399 = vpack.c.b16 %v1119, %v1115
          %v1400 = vpack.c.b16 %v1120, %v1116
          %v1401 = vpack.c.b16 %v1121, %v1117
          %v1402 = vpack.c.b16 %v1126, %v1122
          %v1403 = vpack.c.b16 %v1127, %v1123
          %v1404 = vpack.c.b16 %v1128, %v1124
          %v1405 = vpack.c.b16 %v1129, %v1125
          %v1406 = vpack.c.b16 %v1134, %v1130
          %v1407 = vpack.c.b16 %v1135, %v1131
          %v1408 = vpack.c.b16 %v1136, %v1132
          %v1409 = vpack.c.b16 %v1137, %v1133
          %v1410 = vpack.c.b16 %v1142, %v1138
          %v1411 = vpack.c.b16 %v1143, %v1139
          %v1412 = vpack.c.b16 %v1144, %v1140
          %v1413 = vpack.c.b16 %v1145, %v1141
          %v1414 = vpack.c.b16 %v1150, %v1146
          %v1415 = vpack.c.b16 %v1151, %v1147
          %v1416 = vpack.c.b16 %v1152, %v1148
          %v1417 = vpack.c.b16 %v1153, %v1149
          %v1418 = vpack.c.b16 %v1158, %v1154
          %v1419 = vpack.c.b16 %v1159, %v1155
          %v1420 = vpack.c.b16 %v1160, %v1156
          %v1421 = vpack.c.b16 %v1161, %v1157
          %v1422 = vpack.c.b16 %v1166, %v1162
          %v1423 = vpack.c.b16 %v1167, %v1163
          %v1424 = vpack.c.b16 %v1168, %v1164
          %v1425 = vpack.c.b16 %v1169, %v1165
          %v1426 = vpack.c.b16 %v1174, %v1170
          %v1427 = vpack.c.b16 %v1175, %v1171
          %v1428 = vpack.c.b16 %v1176, %v1172
          %v1429 = vpack.c.b16 %v1177, %v1173
          %v1430 = vpack.c.b16 %v1182, %v1178
          %v1431 = vpack.c.b16 %v1183, %v1179
          %v1432 = vpack.c.b16 %v1184, %v1180
          %v1433 = vpack.c.b16 %v1185, %v1181
          %v1434 = vpack.c.b16 %v1190, %v1186
          %v1435 = vpack.c.b16 %v1191, %v1187
          %v1436 = vpack.c.b16 %v1192, %v1188
          %v1437 = vpack.c.b16 %v1193, %v1189
          %v1438 = vpack.c.b16 %v1198, %v1194
          %v1439 = vpack.c.b16 %v1199, %v1195
          %v1440 = vpack.c.b16 %v1200, %v1196
          %v1441 = vpack.c.b16 %v1201, %v1197
          %v1442 = vpack.c.b16 %v1206, %v1202
          %v1443 = vpack.c.b16 %v1207, %v1203
          %v1444 = vpack.c.b16 %v1208, %v1204
          %v1445 = vpack.c.b16 %v1209, %v1205
          %v1446 = vpack.c.b16 %v1214, %v1210
          %v1447 = vpack.c.b16 %v1215, %v1211
          %v1448 = vpack.c.b16 %v1216, %v1212
          %v1449 = vpack.c.b16 %v1217, %v1213
          %v1450 = vpack.c.b16 %v1222, %v1218
          %v1451 = vpack.c.b16 %v1223, %v1219
          %v1452 = vpack.c.b16 %v1224, %v1220
          %v1453 = vpack.c.b16 %v1225, %v1221
          %v1454 = vpack.c.b16 %v1230, %v1226
          %v1455 = vpack.c.b16 %v1231, %v1227
          %v1456 = vpack.c.b16 %v1232, %v1228
          %v1457 = vpack.c.b16 %v1233, %v1229
          %v1458 = vpack.c.b16 %v1238, %v1234
          %v1459 = vpack.c.b16 %v1239, %v1235
          %v1460 = vpack.c.b16 %v1240, %v1236
          %v1461 = vpack.c.b16 %v1241, %v1237
          %v1462 = vpack.c.b16 %v1246, %v1242
          %v1463 = vpack.c.b16 %v1247, %v1243
          %v1464 = vpack.c.b16 %v1248, %v1244
          %v1465 = vpack.c.b16 %v1249, %v1245
          %v1466 = vpack.c.b16 %v1254, %v1250
          %v1467 = vpack.c.b16 %v1255, %v1251
          %v1468 = vpack.c.b16 %v1256, %v1252
          %v1469 = vpack.c.b16 %v1257, %v1253
          %v1470 = vpack.c.b16 %v1262, %v1258
          %v1471 = vpack.c.b16 %v1263, %v1259
          %v1472 = vpack.c.b16 %v1264, %v1260
          %v1473 = vpack.c.b16 %v1265, %v1261
          %v1474 = vpack.c.b16 %v1270, %v1266
          %v1475 = vpack.c.b16 %v1271, %v1267
          %v1476 = vpack.c.b16 %v1272, %v1268
          %v1477 = vpack.c.b16 %v1273, %v1269
          %v1478 = vpack.c.b16 %v1278, %v1274
          %v1479 = vpack.c.b16 %v1279, %v1275
          %v1480 = vpack.c.b16 %v1280, %v1276
          %v1481 = vpack.c.b16 %v1281, %v1277
          %v1482 = vpack.c.b16 %v1286, %v1282
          %v1483 = vpack.c.b16 %v1287, %v1283
          %v1484 = vpack.c.b16 %v1288, %v1284
          %v1485 = vpack.c.b16 %v1289, %v1285
          %v1486 = vpack.c.b16 %v1294, %v1290
          %v1487 = vpack.c.b16 %v1295, %v1291
          %v1488 = vpack.c.b16 %v1296, %v1292
          %v1489 = vpack.c.b16 %v1297, %v1293
          %1682 = vmatprep.subr.bf16.mxu0 %v1327
          %1683 = vmatpush1.bf16.msra.mxu0 %v1326
          %1684 = vmatprep.subr.bf16.mxu0 %v1323
          %1685 = vmatpush1.bf16.msra.mxu0 %v1322
          %1686 = vmatprep.subr.bf16.mxu0 %v1319
          %1687 = vmatpush1.bf16.msra.mxu0 %v1318
          %1688 = vmatprep.subr.bf16.mxu0 %v1315
          %1689 = vmatpush1.bf16.msra.mxu0 %v1314
          %1690 = vmatprep.subr.bf16.mxu0 %v1311
          %1691 = vmatpush1.bf16.msra.mxu0 %v1310
          %1692 = vmatprep.subr.bf16.mxu0 %v1307
          %1693 = vmatpush1.bf16.msra.mxu0 %v1306
          %1694 = vmatprep.subr.bf16.mxu0 %v1303
          %1695 = vmatpush1.bf16.msra.mxu0 %v1302
          %1696 = vmatprep.subr.bf16.mxu0 %v1299
          %1697 = vmatpush1.bf16.msra.mxu0 %v1298
          %1698 = vmatprep.subr.bf16.mxu0 %v1359
          %1699 = vmatpush2.bf16.msra.mxu0 %v1358
          %1700 = vmatprep.subr.bf16.mxu0 %v1355
          %1701 = vmatpush2.bf16.msra.mxu0 %v1354
          %1702 = vmatprep.subr.bf16.mxu0 %v1351
          %1703 = vmatpush2.bf16.msra.mxu0 %v1350
          %1704 = vmatprep.subr.bf16.mxu0 %v1347
          %1705 = vmatpush2.bf16.msra.mxu0 %v1346
          %1706 = vmatprep.subr.bf16.mxu0 %v1343
          %1707 = vmatpush2.bf16.msra.mxu0 %v1342
          %1708 = vmatprep.subr.bf16.mxu0 %v1339
          %1709 = vmatpush2.bf16.msra.mxu0 %v1338
          %1710 = vmatprep.subr.bf16.mxu0 %v1335
          %1711 = vmatpush2.bf16.msra.mxu0 %v1334
          %1712 = vmatprep.subr.bf16.mxu0 %v1331
          %1713 = vmatpush2.bf16.msra.mxu0 %v1330
          %1714 = vmatprep.mubr.bf16.mxu0 %v513
          %1715 = vmatmul.mubr.bf16.gmra.mxu0 %v512
          %v1716 = vpop.f32.mrf.mxu0
          %v1717 = vadd.f32 0.0, %v1716
          %v1718 = vpop.f32.mrf.mxu0
          %v1719 = vadd.f32 0.0, %v1718
          %v1720 = vpop.f32.mrf.mxu0
          %v1721 = vpop.f32.mrf.mxu0
          %1722 = vdwg.mxu0
          %1723 = vmatprep.subr.bf16.mxu0 %v1391
          %1724 = vmatpush1.bf16.msra.mxu0 %v1390
          %1725 = vmatprep.subr.bf16.mxu0 %v1387
          %1726 = vmatpush1.bf16.msra.mxu0 %v1386
          %1727 = vmatprep.subr.bf16.mxu0 %v1383
          %1728 = vmatpush1.bf16.msra.mxu0 %v1382
          %1729 = vmatprep.subr.bf16.mxu0 %v1379
          %1730 = vmatpush1.bf16.msra.mxu0 %v1378
          %1731 = vmatprep.subr.bf16.mxu0 %v1375
          %1732 = vmatpush1.bf16.msra.mxu0 %v1374
          %1733 = vmatprep.subr.bf16.mxu0 %v1371
          %1734 = vmatpush1.bf16.msra.mxu0 %v1370
          %1735 = vmatprep.subr.bf16.mxu0 %v1367
          %1736 = vmatpush1.bf16.msra.mxu0 %v1366
          %1737 = vmatprep.subr.bf16.mxu0 %v1363
          %1738 = vmatpush1.bf16.msra.mxu0 %v1362
          %1739 = vmatprep.subr.bf16.mxu0 %v1423
          %1740 = vmatpush2.bf16.msra.mxu0 %v1422
          %1741 = vmatprep.subr.bf16.mxu0 %v1419
          %1742 = vmatpush2.bf16.msra.mxu0 %v1418
          %1743 = vmatprep.subr.bf16.mxu0 %v1415
          %1744 = vmatpush2.bf16.msra.mxu0 %v1414
          %1745 = vmatprep.subr.bf16.mxu0 %v1411
          %1746 = vmatpush2.bf16.msra.mxu0 %v1410
          %1747 = vmatprep.subr.bf16.mxu0 %v1407
          %1748 = vmatpush2.bf16.msra.mxu0 %v1406
          %1749 = vmatprep.subr.bf16.mxu0 %v1403
          %1750 = vmatpush2.bf16.msra.mxu0 %v1402
          %1751 = vmatprep.subr.bf16.mxu0 %v1399
          %1752 = vmatpush2.bf16.msra.mxu0 %v1398
          %1753 = vmatprep.subr.bf16.mxu0 %v1395
          %1754 = vmatpush2.bf16.msra.mxu0 %v1394
          %1755 = vmatprep.mubr.bf16.mxu0 %v515
          %1756 = vmatmul.mubr.bf16.gmra.mxu0 %v514
          %v1757 = vpop.f32.mrf.mxu0
          %v1758 = vadd.f32 %v1717, %v1757
          %v1759 = vpop.f32.mrf.mxu0
          %v1760 = vadd.f32 %v1719, %v1759
          %v1761 = vpop.f32.mrf.mxu0
          %v1762 = vpop.f32.mrf.mxu0
          %1763 = vdwg.mxu0
          %1764 = vmatprep.subr.bf16.mxu0 %v1455
          %1765 = vmatpush1.bf16.msra.mxu0 %v1454
          %1766 = vmatprep.subr.bf16.mxu0 %v1451
          %1767 = vmatpush1.bf16.msra.mxu0 %v1450
          %1768 = vmatprep.subr.bf16.mxu0 %v1447
          %1769 = vmatpush1.bf16.msra.mxu0 %v1446
          %1770 = vmatprep.subr.bf16.mxu0 %v1443
          %1771 = vmatpush1.bf16.msra.mxu0 %v1442
          %1772 = vmatprep.subr.bf16.mxu0 %v1439
          %1773 = vmatpush1.bf16.msra.mxu0 %v1438
          %1774 = vmatprep.subr.bf16.mxu0 %v1435
          %1775 = vmatpush1.bf16.msra.mxu0 %v1434
          %1776 = vmatprep.subr.bf16.mxu0 %v1431
          %1777 = vmatpush1.bf16.msra.mxu0 %v1430
          %1778 = vmatprep.subr.bf16.mxu0 %v1427
          %1779 = vmatpush1.bf16.msra.mxu0 %v1426
          %1780 = vmatprep.subr.bf16.mxu0 %v1487
          %1781 = vmatpush2.bf16.msra.mxu0 %v1486
          %1782 = vmatprep.subr.bf16.mxu0 %v1483
          %1783 = vmatpush2.bf16.msra.mxu0 %v1482
          %1784 = vmatprep.subr.bf16.mxu0 %v1479
          %1785 = vmatpush2.bf16.msra.mxu0 %v1478
          %1786 = vmatprep.subr.bf16.mxu0 %v1475
          %1787 = vmatpush2.bf16.msra.mxu0 %v1474
          %1788 = vmatprep.subr.bf16.mxu0 %v1471
          %1789 = vmatpush2.bf16.msra.mxu0 %v1470
          %1790 = vmatprep.subr.bf16.mxu0 %v1467
          %1791 = vmatpush2.bf16.msra.mxu0 %v1466
          %1792 = vmatprep.subr.bf16.mxu0 %v1463
          %1793 = vmatpush2.bf16.msra.mxu0 %v1462
          %1794 = vmatprep.subr.bf16.mxu0 %v1459
          %1795 = vmatpush2.bf16.msra.mxu0 %v1458
          %1796 = vmatprep.mubr.bf16.mxu0 %v517
          %1797 = vmatmul.mubr.bf16.gmra.mxu0 %v516
          %v1798 = vpop.f32.mrf.mxu0
          %v1799 = vadd.f32 %v1758, %v1798
          %v1800 = vpop.f32.mrf.mxu0
          %v1801 = vadd.f32 %v1760, %v1800
          %v1802 = vpop.f32.mrf.mxu0
          %v1803 = vpop.f32.mrf.mxu0
          %1804 = vdwg.mxu0
          %1805 = vmatprep.subr.bf16.mxu0 %v1329
          %1806 = vmatpush1.bf16.msra.mxu0 %v1328
          %1807 = vmatprep.subr.bf16.mxu0 %v1325
          %1808 = vmatpush1.bf16.msra.mxu0 %v1324
          %1809 = vmatprep.subr.bf16.mxu0 %v1321
          %1810 = vmatpush1.bf16.msra.mxu0 %v1320
          %1811 = vmatprep.subr.bf16.mxu0 %v1317
          %1812 = vmatpush1.bf16.msra.mxu0 %v1316
          %1813 = vmatprep.subr.bf16.mxu0 %v1313
          %1814 = vmatpush1.bf16.msra.mxu0 %v1312
          %1815 = vmatprep.subr.bf16.mxu0 %v1309
          %1816 = vmatpush1.bf16.msra.mxu0 %v1308
          %1817 = vmatprep.subr.bf16.mxu0 %v1305
          %1818 = vmatpush1.bf16.msra.mxu0 %v1304
          %1819 = vmatprep.subr.bf16.mxu0 %v1301
          %1820 = vmatpush1.bf16.msra.mxu0 %v1300
          %1821 = vmatprep.subr.bf16.mxu0 %v1361
          %1822 = vmatpush2.bf16.msra.mxu0 %v1360
          %1823 = vmatprep.subr.bf16.mxu0 %v1357
          %1824 = vmatpush2.bf16.msra.mxu0 %v1356
          %1825 = vmatprep.subr.bf16.mxu0 %v1353
          %1826 = vmatpush2.bf16.msra.mxu0 %v1352
          %1827 = vmatprep.subr.bf16.mxu0 %v1349
          %1828 = vmatpush2.bf16.msra.mxu0 %v1348
          %1829 = vmatprep.subr.bf16.mxu0 %v1345
          %1830 = vmatpush2.bf16.msra.mxu0 %v1344
          %1831 = vmatprep.subr.bf16.mxu0 %v1341
          %1832 = vmatpush2.bf16.msra.mxu0 %v1340
          %1833 = vmatprep.subr.bf16.mxu0 %v1337
          %1834 = vmatpush2.bf16.msra.mxu0 %v1336
          %1835 = vmatprep.subr.bf16.mxu0 %v1333
          %1836 = vmatpush2.bf16.msra.mxu0 %v1332
          %1837 = vmatprep.mubr.bf16.mxu0 %v513
          %1838 = vmatmul.mubr.bf16.gmra.mxu0 %v512
          %v1839 = vpop.f32.mrf.mxu0
          %v1840 = vadd.f32 0.0, %v1839
          %v1841 = vpop.f32.mrf.mxu0
          %v1842 = vadd.f32 0.0, %v1841
          %v1843 = vpop.f32.mrf.mxu0
          %v1844 = vpop.f32.mrf.mxu0
          %1845 = vdwg.mxu0
          %1846 = vmatprep.subr.bf16.mxu0 %v1393
          %1847 = vmatpush1.bf16.msra.mxu0 %v1392
          %1848 = vmatprep.subr.bf16.mxu0 %v1389
          %1849 = vmatpush1.bf16.msra.mxu0 %v1388
          %1850 = vmatprep.subr.bf16.mxu0 %v1385
          %1851 = vmatpush1.bf16.msra.mxu0 %v1384
          %1852 = vmatprep.subr.bf16.mxu0 %v1381
          %1853 = vmatpush1.bf16.msra.mxu0 %v1380
          %1854 = vmatprep.subr.bf16.mxu0 %v1377
          %1855 = vmatpush1.bf16.msra.mxu0 %v1376
          %1856 = vmatprep.subr.bf16.mxu0 %v1373
          %1857 = vmatpush1.bf16.msra.mxu0 %v1372
          %1858 = vmatprep.subr.bf16.mxu0 %v1369
          %1859 = vmatpush1.bf16.msra.mxu0 %v1368
          %1860 = vmatprep.subr.bf16.mxu0 %v1365
          %1861 = vmatpush1.bf16.msra.mxu0 %v1364
          %1862 = vmatprep.subr.bf16.mxu0 %v1425
          %1863 = vmatpush2.bf16.msra.mxu0 %v1424
          %1864 = vmatprep.subr.bf16.mxu0 %v1421
          %1865 = vmatpush2.bf16.msra.mxu0 %v1420
          %1866 = vmatprep.subr.bf16.mxu0 %v1417
          %1867 = vmatpush2.bf16.msra.mxu0 %v1416
          %1868 = vmatprep.subr.bf16.mxu0 %v1413
          %1869 = vmatpush2.bf16.msra.mxu0 %v1412
          %1870 = vmatprep.subr.bf16.mxu0 %v1409
          %1871 = vmatpush2.bf16.msra.mxu0 %v1408
          %1872 = vmatprep.subr.bf16.mxu0 %v1405
          %1873 = vmatpush2.bf16.msra.mxu0 %v1404
          %1874 = vmatprep.subr.bf16.mxu0 %v1401
          %1875 = vmatpush2.bf16.msra.mxu0 %v1400
          %1876 = vmatprep.subr.bf16.mxu0 %v1397
          %1877 = vmatpush2.bf16.msra.mxu0 %v1396
          %1878 = vmatprep.mubr.bf16.mxu0 %v515
          %1879 = vmatmul.mubr.bf16.gmra.mxu0 %v514
          %v1880 = vpop.f32.mrf.mxu0
          %v1881 = vadd.f32 %v1840, %v1880
          %v1882 = vpop.f32.mrf.mxu0
          %v1883 = vadd.f32 %v1842, %v1882
          %v1884 = vpop.f32.mrf.mxu0
          %v1885 = vpop.f32.mrf.mxu0
          %1886 = vdwg.mxu0
          %1887 = vmatprep.subr.bf16.mxu0 %v1457
          %1888 = vmatpush1.bf16.msra.mxu0 %v1456
          %1889 = vmatprep.subr.bf16.mxu0 %v1453
          %1890 = vmatpush1.bf16.msra.mxu0 %v1452
          %1891 = vmatprep.subr.bf16.mxu0 %v1449
          %1892 = vmatpush1.bf16.msra.mxu0 %v1448
          %1893 = vmatprep.subr.bf16.mxu0 %v1445
          %1894 = vmatpush1.bf16.msra.mxu0 %v1444
          %1895 = vmatprep.subr.bf16.mxu0 %v1441
          %1896 = vmatpush1.bf16.msra.mxu0 %v1440
          %1897 = vmatprep.subr.bf16.mxu0 %v1437
          %1898 = vmatpush1.bf16.msra.mxu0 %v1436
          %1899 = vmatprep.subr.bf16.mxu0 %v1433
          %1900 = vmatpush1.bf16.msra.mxu0 %v1432
          %1901 = vmatprep.subr.bf16.mxu0 %v1429
          %1902 = vmatpush1.bf16.msra.mxu0 %v1428
          %1903 = vmatprep.subr.bf16.mxu0 %v1489
          %1904 = vmatpush2.bf16.msra.mxu0 %v1488
          %1905 = vmatprep.subr.bf16.mxu0 %v1485
          %1906 = vmatpush2.bf16.msra.mxu0 %v1484
          %1907 = vmatprep.subr.bf16.mxu0 %v1481
          %1908 = vmatpush2.bf16.msra.mxu0 %v1480
          %1909 = vmatprep.subr.bf16.mxu0 %v1477
          %1910 = vmatpush2.bf16.msra.mxu0 %v1476
          %1911 = vmatprep.subr.bf16.mxu0 %v1473
          %1912 = vmatpush2.bf16.msra.mxu0 %v1472
          %1913 = vmatprep.subr.bf16.mxu0 %v1469
          %1914 = vmatpush2.bf16.msra.mxu0 %v1468
          %1915 = vmatprep.subr.bf16.mxu0 %v1465
          %1916 = vmatpush2.bf16.msra.mxu0 %v1464
          %1917 = vmatprep.subr.bf16.mxu0 %v1461
          %1918 = vmatpush2.bf16.msra.mxu0 %v1460
          %1919 = vmatprep.mubr.bf16.mxu0 %v517
          %1920 = vmatmul.mubr.bf16.gmra.mxu0 %v516
          %v1921 = vpop.f32.mrf.mxu0
          %v1922 = vadd.f32 %v1881, %v1921
          %v1923 = vpop.f32.mrf.mxu0
          %v1924 = vadd.f32 %v1883, %v1923
          %v1925 = vpop.f32.mrf.mxu0
          %v1926 = vpop.f32.mrf.mxu0
          %1927 = vdwg.mxu0
          %v1928 = vpack.c.bf16 %v1799, %v1799
          %v1929 = vpack.c.bf16 %v1801, %v1801
          %v1930 = vpack.c.bf16 %v1922, %v1922
          %v1931 = vpack.c.bf16 %v1924, %v1924
          %v1936 = vunpack.c.l.b16 %v1928
          %v1937 = vunpack.c.l.b16 %v1929
          %v1938 = vunpack.c.l.b16 %v1930
          %v1939 = vunpack.c.l.b16 %v1931
          %v1940 = vpack.c.b16 %v1937, %v1936
          %v1941 = vpack.c.b16 %v1939, %v1938
          %1944 = vst [vmem:[#allocation2] sm:$0xff] %v1940
          %1945 = vst [vmem:[#allocation2 + $0x8] sm:$0xff] %v1941
          %v1946 = vld [vmem:[#allocation13] sm:$0xff]
          %v1947 = vld [vmem:[#allocation13 + $0x8] sm:$0xff]
          %v1948 = vld [vmem:[#allocation13 + $0x10] sm:$0xff]
          %v1949 = vld [vmem:[#allocation13 + $0x18] sm:$0xff]
          %v1950 = vld [vmem:[#allocation13 + $0x20] sm:$0xff]
          %v1951 = vld [vmem:[#allocation13 + $0x28] sm:$0xff]
          %v1952 = vld [vmem:[#allocation13 + $0x30] sm:$0xff]
          %v1953 = vld [vmem:[#allocation13 + $0x38] sm:$0xff]
          %v1954 = vld [vmem:[#allocation13 + $0x40] sm:$0xff]
          %v1955 = vld [vmem:[#allocation13 + $0x48] sm:$0xff]
          %v1956 = vld [vmem:[#allocation13 + $0x50] sm:$0xff]
          %v1957 = vld [vmem:[#allocation13 + $0x58] sm:$0xff]
          %v1958 = vld [vmem:[#allocation13 + $0x60] sm:$0xff]
          %v1959 = vld [vmem:[#allocation13 + $0x68] sm:$0xff]
          %v1960 = vld [vmem:[#allocation13 + $0x70] sm:$0xff]
          %v1961 = vld [vmem:[#allocation13 + $0x78] sm:$0xff]
          %v1962 = vld [vmem:[#allocation13 + $0x80] sm:$0xff]
          %v1963 = vld [vmem:[#allocation13 + $0x88] sm:$0xff]
          %v1964 = vld [vmem:[#allocation13 + $0x90] sm:$0xff]
          %v1965 = vld [vmem:[#allocation13 + $0x98] sm:$0xff]
          %v1966 = vld [vmem:[#allocation13 + $0xa0] sm:$0xff]
          %v1967 = vld [vmem:[#allocation13 + $0xa8] sm:$0xff]
          %v1968 = vld [vmem:[#allocation13 + $0xb0] sm:$0xff]
          %v1969 = vld [vmem:[#allocation13 + $0xb8] sm:$0xff]
          %v1970 = vld [vmem:[#allocation13 + $0xc0] sm:$0xff]
          %v1971 = vld [vmem:[#allocation13 + $0xc8] sm:$0xff]
          %v1972 = vld [vmem:[#allocation13 + $0xd0] sm:$0xff]
          %v1973 = vld [vmem:[#allocation13 + $0xd8] sm:$0xff]
          %v1974 = vld [vmem:[#allocation13 + $0xe0] sm:$0xff]
          %v1975 = vld [vmem:[#allocation13 + $0xe8] sm:$0xff]
          %v1976 = vld [vmem:[#allocation13 + $0xf0] sm:$0xff]
          %v1977 = vld [vmem:[#allocation13 + $0xf8] sm:$0xff]
          %v1978 = vld [vmem:[#allocation13 + $0x100] sm:$0xff]
          %v1979 = vld [vmem:[#allocation13 + $0x108] sm:$0xff]
          %v1980 = vld [vmem:[#allocation13 + $0x110] sm:$0xff]
          %v1981 = vld [vmem:[#allocation13 + $0x118] sm:$0xff]
          %v1982 = vld [vmem:[#allocation13 + $0x120] sm:$0xff]
          %v1983 = vld [vmem:[#allocation13 + $0x128] sm:$0xff]
          %v1984 = vld [vmem:[#allocation13 + $0x130] sm:$0xff]
          %v1985 = vld [vmem:[#allocation13 + $0x138] sm:$0xff]
          %v1986 = vld [vmem:[#allocation13 + $0x140] sm:$0xff]
          %v1987 = vld [vmem:[#allocation13 + $0x148] sm:$0xff]
          %v1988 = vld [vmem:[#allocation13 + $0x150] sm:$0xff]
          %v1989 = vld [vmem:[#allocation13 + $0x158] sm:$0xff]
          %v1990 = vld [vmem:[#allocation13 + $0x160] sm:$0xff]
          %v1991 = vld [vmem:[#allocation13 + $0x168] sm:$0xff]
          %v1992 = vld [vmem:[#allocation13 + $0x170] sm:$0xff]
          %v1993 = vld [vmem:[#allocation13 + $0x178] sm:$0xff]
          %v1994 = vld [vmem:[#allocation13 + $0x180] sm:$0xff]
          %v1995 = vld [vmem:[#allocation13 + $0x188] sm:$0xff]
          %v1996 = vld [vmem:[#allocation13 + $0x190] sm:$0xff]
          %v1997 = vld [vmem:[#allocation13 + $0x198] sm:$0xff]
          %v1998 = vld [vmem:[#allocation13 + $0x1a0] sm:$0xff]
          %v1999 = vld [vmem:[#allocation13 + $0x1a8] sm:$0xff]
          %v2000 = vld [vmem:[#allocation13 + $0x1b0] sm:$0xff]
          %v2001 = vld [vmem:[#allocation13 + $0x1b8] sm:$0xff]
          %v2002 = vld [vmem:[#allocation13 + $0x1c0] sm:$0xff]
          %v2003 = vld [vmem:[#allocation13 + $0x1c8] sm:$0xff]
          %v2004 = vld [vmem:[#allocation13 + $0x1d0] sm:$0xff]
          %v2005 = vld [vmem:[#allocation13 + $0x1d8] sm:$0xff]
          %v2006 = vld [vmem:[#allocation13 + $0x1e0] sm:$0xff]
          %v2007 = vld [vmem:[#allocation13 + $0x1e8] sm:$0xff]
          %v2008 = vld [vmem:[#allocation13 + $0x1f0] sm:$0xff]
          %v2009 = vld [vmem:[#allocation13 + $0x1f8] sm:$0xff]
          %v2010 = vld [vmem:[#allocation13 + $0x200] sm:$0xff]
          %v2011 = vld [vmem:[#allocation13 + $0x208] sm:$0xff]
          %v2012 = vld [vmem:[#allocation13 + $0x210] sm:$0xff]
          %v2013 = vld [vmem:[#allocation13 + $0x218] sm:$0xff]
          %v2014 = vld [vmem:[#allocation13 + $0x220] sm:$0xff]
          %v2015 = vld [vmem:[#allocation13 + $0x228] sm:$0xff]
          %v2016 = vld [vmem:[#allocation13 + $0x230] sm:$0xff]
          %v2017 = vld [vmem:[#allocation13 + $0x238] sm:$0xff]
          %v2018 = vld [vmem:[#allocation13 + $0x240] sm:$0xff]
          %v2019 = vld [vmem:[#allocation13 + $0x248] sm:$0xff]
          %v2020 = vld [vmem:[#allocation13 + $0x250] sm:$0xff]
          %v2021 = vld [vmem:[#allocation13 + $0x258] sm:$0xff]
          %v2022 = vld [vmem:[#allocation13 + $0x260] sm:$0xff]
          %v2023 = vld [vmem:[#allocation13 + $0x268] sm:$0xff]
          %v2024 = vld [vmem:[#allocation13 + $0x270] sm:$0xff]
          %v2025 = vld [vmem:[#allocation13 + $0x278] sm:$0xff]
          %v2026 = vld [vmem:[#allocation13 + $0x280] sm:$0xff]
          %v2027 = vld [vmem:[#allocation13 + $0x288] sm:$0xff]
          %v2028 = vld [vmem:[#allocation13 + $0x290] sm:$0xff]
          %v2029 = vld [vmem:[#allocation13 + $0x298] sm:$0xff]
          %v2030 = vld [vmem:[#allocation13 + $0x2a0] sm:$0xff]
          %v2031 = vld [vmem:[#allocation13 + $0x2a8] sm:$0xff]
          %v2032 = vld [vmem:[#allocation13 + $0x2b0] sm:$0xff]
          %v2033 = vld [vmem:[#allocation13 + $0x2b8] sm:$0xff]
          %v2034 = vld [vmem:[#allocation13 + $0x2c0] sm:$0xff]
          %v2035 = vld [vmem:[#allocation13 + $0x2c8] sm:$0xff]
          %v2036 = vld [vmem:[#allocation13 + $0x2d0] sm:$0xff]
          %v2037 = vld [vmem:[#allocation13 + $0x2d8] sm:$0xff]
          %v2038 = vld [vmem:[#allocation13 + $0x2e0] sm:$0xff]
          %v2039 = vld [vmem:[#allocation13 + $0x2e8] sm:$0xff]
          %v2040 = vld [vmem:[#allocation13 + $0x2f0] sm:$0xff]
          %v2041 = vld [vmem:[#allocation13 + $0x2f8] sm:$0xff]
          %v2042 = vld [vmem:[#allocation13 + $0x300] sm:$0xff]
          %v2043 = vld [vmem:[#allocation13 + $0x308] sm:$0xff]
          %v2044 = vld [vmem:[#allocation13 + $0x310] sm:$0xff]
          %v2045 = vld [vmem:[#allocation13 + $0x318] sm:$0xff]
          %v2046 = vld [vmem:[#allocation13 + $0x320] sm:$0xff]
          %v2047 = vld [vmem:[#allocation13 + $0x328] sm:$0xff]
          %v2048 = vld [vmem:[#allocation13 + $0x330] sm:$0xff]
          %v2049 = vld [vmem:[#allocation13 + $0x338] sm:$0xff]
          %v2050 = vld [vmem:[#allocation13 + $0x340] sm:$0xff]
          %v2051 = vld [vmem:[#allocation13 + $0x348] sm:$0xff]
          %v2052 = vld [vmem:[#allocation13 + $0x350] sm:$0xff]
          %v2053 = vld [vmem:[#allocation13 + $0x358] sm:$0xff]
          %v2054 = vld [vmem:[#allocation13 + $0x360] sm:$0xff]
          %v2055 = vld [vmem:[#allocation13 + $0x368] sm:$0xff]
          %v2056 = vld [vmem:[#allocation13 + $0x370] sm:$0xff]
          %v2057 = vld [vmem:[#allocation13 + $0x378] sm:$0xff]
          %v2058 = vld [vmem:[#allocation13 + $0x380] sm:$0xff]
          %v2059 = vld [vmem:[#allocation13 + $0x388] sm:$0xff]
          %v2060 = vld [vmem:[#allocation13 + $0x390] sm:$0xff]
          %v2061 = vld [vmem:[#allocation13 + $0x398] sm:$0xff]
          %v2062 = vld [vmem:[#allocation13 + $0x3a0] sm:$0xff]
          %v2063 = vld [vmem:[#allocation13 + $0x3a8] sm:$0xff]
          %v2064 = vld [vmem:[#allocation13 + $0x3b0] sm:$0xff]
          %v2065 = vld [vmem:[#allocation13 + $0x3b8] sm:$0xff]
          %v2066 = vld [vmem:[#allocation13 + $0x3c0] sm:$0xff]
          %v2067 = vld [vmem:[#allocation13 + $0x3c8] sm:$0xff]
          %v2068 = vld [vmem:[#allocation13 + $0x3d0] sm:$0xff]
          %v2069 = vld [vmem:[#allocation13 + $0x3d8] sm:$0xff]
          %v2070 = vld [vmem:[#allocation13 + $0x3e0] sm:$0xff]
          %v2071 = vld [vmem:[#allocation13 + $0x3e8] sm:$0xff]
          %v2072 = vld [vmem:[#allocation13 + $0x3f0] sm:$0xff]
          %v2073 = vld [vmem:[#allocation13 + $0x3f8] sm:$0xff]
          %v2074 = vld [vmem:[#allocation13 + $0x400] sm:$0xff]
          %v2075 = vld [vmem:[#allocation13 + $0x408] sm:$0xff]
          %v2076 = vld [vmem:[#allocation13 + $0x410] sm:$0xff]
          %v2077 = vld [vmem:[#allocation13 + $0x418] sm:$0xff]
          %v2078 = vld [vmem:[#allocation13 + $0x420] sm:$0xff]
          %v2079 = vld [vmem:[#allocation13 + $0x428] sm:$0xff]
          %v2080 = vld [vmem:[#allocation13 + $0x430] sm:$0xff]
          %v2081 = vld [vmem:[#allocation13 + $0x438] sm:$0xff]
          %v2082 = vld [vmem:[#allocation13 + $0x440] sm:$0xff]
          %v2083 = vld [vmem:[#allocation13 + $0x448] sm:$0xff]
          %v2084 = vld [vmem:[#allocation13 + $0x450] sm:$0xff]
          %v2085 = vld [vmem:[#allocation13 + $0x458] sm:$0xff]
          %v2086 = vld [vmem:[#allocation13 + $0x460] sm:$0xff]
          %v2087 = vld [vmem:[#allocation13 + $0x468] sm:$0xff]
          %v2088 = vld [vmem:[#allocation13 + $0x470] sm:$0xff]
          %v2089 = vld [vmem:[#allocation13 + $0x478] sm:$0xff]
          %v2090 = vld [vmem:[#allocation13 + $0x480] sm:$0xff]
          %v2091 = vld [vmem:[#allocation13 + $0x488] sm:$0xff]
          %v2092 = vld [vmem:[#allocation13 + $0x490] sm:$0xff]
          %v2093 = vld [vmem:[#allocation13 + $0x498] sm:$0xff]
          %v2094 = vld [vmem:[#allocation13 + $0x4a0] sm:$0xff]
          %v2095 = vld [vmem:[#allocation13 + $0x4a8] sm:$0xff]
          %v2096 = vld [vmem:[#allocation13 + $0x4b0] sm:$0xff]
          %v2097 = vld [vmem:[#allocation13 + $0x4b8] sm:$0xff]
          %v2098 = vld [vmem:[#allocation13 + $0x4c0] sm:$0xff]
          %v2099 = vld [vmem:[#allocation13 + $0x4c8] sm:$0xff]
          %v2100 = vld [vmem:[#allocation13 + $0x4d0] sm:$0xff]
          %v2101 = vld [vmem:[#allocation13 + $0x4d8] sm:$0xff]
          %v2102 = vld [vmem:[#allocation13 + $0x4e0] sm:$0xff]
          %v2103 = vld [vmem:[#allocation13 + $0x4e8] sm:$0xff]
          %v2104 = vld [vmem:[#allocation13 + $0x4f0] sm:$0xff]
          %v2105 = vld [vmem:[#allocation13 + $0x4f8] sm:$0xff]
          %v2106 = vld [vmem:[#allocation13 + $0x500] sm:$0xff]
          %v2107 = vld [vmem:[#allocation13 + $0x508] sm:$0xff]
          %v2108 = vld [vmem:[#allocation13 + $0x510] sm:$0xff]
          %v2109 = vld [vmem:[#allocation13 + $0x518] sm:$0xff]
          %v2110 = vld [vmem:[#allocation13 + $0x520] sm:$0xff]
          %v2111 = vld [vmem:[#allocation13 + $0x528] sm:$0xff]
          %v2112 = vld [vmem:[#allocation13 + $0x530] sm:$0xff]
          %v2113 = vld [vmem:[#allocation13 + $0x538] sm:$0xff]
          %v2114 = vld [vmem:[#allocation13 + $0x540] sm:$0xff]
          %v2115 = vld [vmem:[#allocation13 + $0x548] sm:$0xff]
          %v2116 = vld [vmem:[#allocation13 + $0x550] sm:$0xff]
          %v2117 = vld [vmem:[#allocation13 + $0x558] sm:$0xff]
          %v2118 = vld [vmem:[#allocation13 + $0x560] sm:$0xff]
          %v2119 = vld [vmem:[#allocation13 + $0x568] sm:$0xff]
          %v2120 = vld [vmem:[#allocation13 + $0x570] sm:$0xff]
          %v2121 = vld [vmem:[#allocation13 + $0x578] sm:$0xff]
          %v2122 = vld [vmem:[#allocation13 + $0x580] sm:$0xff]
          %v2123 = vld [vmem:[#allocation13 + $0x588] sm:$0xff]
          %v2124 = vld [vmem:[#allocation13 + $0x590] sm:$0xff]
          %v2125 = vld [vmem:[#allocation13 + $0x598] sm:$0xff]
          %v2126 = vld [vmem:[#allocation13 + $0x5a0] sm:$0xff]
          %v2127 = vld [vmem:[#allocation13 + $0x5a8] sm:$0xff]
          %v2128 = vld [vmem:[#allocation13 + $0x5b0] sm:$0xff]
          %v2129 = vld [vmem:[#allocation13 + $0x5b8] sm:$0xff]
          %v2130 = vld [vmem:[#allocation13 + $0x5c0] sm:$0xff]
          %v2131 = vld [vmem:[#allocation13 + $0x5c8] sm:$0xff]
          %v2132 = vld [vmem:[#allocation13 + $0x5d0] sm:$0xff]
          %v2133 = vld [vmem:[#allocation13 + $0x5d8] sm:$0xff]
          %v2134 = vld [vmem:[#allocation13 + $0x5e0] sm:$0xff]
          %v2135 = vld [vmem:[#allocation13 + $0x5e8] sm:$0xff]
          %v2136 = vld [vmem:[#allocation13 + $0x5f0] sm:$0xff]
          %v2137 = vld [vmem:[#allocation13 + $0x5f8] sm:$0xff]
          %v2330 = vunpack.c.l.b16 %v1946
          %v2331 = vunpack.c.h.b16 %v1946
          %v2332 = vunpack.c.l.b16 %v1947
          %v2333 = vunpack.c.h.b16 %v1947
          %v2334 = vunpack.c.l.b16 %v1948
          %v2335 = vunpack.c.h.b16 %v1948
          %v2336 = vunpack.c.l.b16 %v1949
          %v2337 = vunpack.c.h.b16 %v1949
          %v2338 = vunpack.c.l.b16 %v1950
          %v2339 = vunpack.c.h.b16 %v1950
          %v2340 = vunpack.c.l.b16 %v1951
          %v2341 = vunpack.c.h.b16 %v1951
          %v2342 = vunpack.c.l.b16 %v1952
          %v2343 = vunpack.c.h.b16 %v1952
          %v2344 = vunpack.c.l.b16 %v1953
          %v2345 = vunpack.c.h.b16 %v1953
          %v2346 = vunpack.c.l.b16 %v1954
          %v2347 = vunpack.c.h.b16 %v1954
          %v2348 = vunpack.c.l.b16 %v1955
          %v2349 = vunpack.c.h.b16 %v1955
          %v2350 = vunpack.c.l.b16 %v1956
          %v2351 = vunpack.c.h.b16 %v1956
          %v2352 = vunpack.c.l.b16 %v1957
          %v2353 = vunpack.c.h.b16 %v1957
          %v2354 = vunpack.c.l.b16 %v1958
          %v2355 = vunpack.c.h.b16 %v1958
          %v2356 = vunpack.c.l.b16 %v1959
          %v2357 = vunpack.c.h.b16 %v1959
          %v2358 = vunpack.c.l.b16 %v1960
          %v2359 = vunpack.c.h.b16 %v1960
          %v2360 = vunpack.c.l.b16 %v1961
          %v2361 = vunpack.c.h.b16 %v1961
          %v2362 = vunpack.c.l.b16 %v1962
          %v2363 = vunpack.c.h.b16 %v1962
          %v2364 = vunpack.c.l.b16 %v1963
          %v2365 = vunpack.c.h.b16 %v1963
          %v2366 = vunpack.c.l.b16 %v1964
          %v2367 = vunpack.c.h.b16 %v1964
          %v2368 = vunpack.c.l.b16 %v1965
          %v2369 = vunpack.c.h.b16 %v1965
          %v2370 = vunpack.c.l.b16 %v1966
          %v2371 = vunpack.c.h.b16 %v1966
          %v2372 = vunpack.c.l.b16 %v1967
          %v2373 = vunpack.c.h.b16 %v1967
          %v2374 = vunpack.c.l.b16 %v1968
          %v2375 = vunpack.c.h.b16 %v1968
          %v2376 = vunpack.c.l.b16 %v1969
          %v2377 = vunpack.c.h.b16 %v1969
          %v2378 = vunpack.c.l.b16 %v1970
          %v2379 = vunpack.c.h.b16 %v1970
          %v2380 = vunpack.c.l.b16 %v1971
          %v2381 = vunpack.c.h.b16 %v1971
          %v2382 = vunpack.c.l.b16 %v1972
          %v2383 = vunpack.c.h.b16 %v1972
          %v2384 = vunpack.c.l.b16 %v1973
          %v2385 = vunpack.c.h.b16 %v1973
          %v2386 = vunpack.c.l.b16 %v1974
          %v2387 = vunpack.c.h.b16 %v1974
          %v2388 = vunpack.c.l.b16 %v1975
          %v2389 = vunpack.c.h.b16 %v1975
          %v2390 = vunpack.c.l.b16 %v1976
          %v2391 = vunpack.c.h.b16 %v1976
          %v2392 = vunpack.c.l.b16 %v1977
          %v2393 = vunpack.c.h.b16 %v1977
          %v2394 = vunpack.c.l.b16 %v1978
          %v2395 = vunpack.c.h.b16 %v1978
          %v2396 = vunpack.c.l.b16 %v1979
          %v2397 = vunpack.c.h.b16 %v1979
          %v2398 = vunpack.c.l.b16 %v1980
          %v2399 = vunpack.c.h.b16 %v1980
          %v2400 = vunpack.c.l.b16 %v1981
          %v2401 = vunpack.c.h.b16 %v1981
          %v2402 = vunpack.c.l.b16 %v1982
          %v2403 = vunpack.c.h.b16 %v1982
          %v2404 = vunpack.c.l.b16 %v1983
          %v2405 = vunpack.c.h.b16 %v1983
          %v2406 = vunpack.c.l.b16 %v1984
          %v2407 = vunpack.c.h.b16 %v1984
          %v2408 = vunpack.c.l.b16 %v1985
          %v2409 = vunpack.c.h.b16 %v1985
          %v2410 = vunpack.c.l.b16 %v1986
          %v2411 = vunpack.c.h.b16 %v1986
          %v2412 = vunpack.c.l.b16 %v1987
          %v2413 = vunpack.c.h.b16 %v1987
          %v2414 = vunpack.c.l.b16 %v1988
          %v2415 = vunpack.c.h.b16 %v1988
          %v2416 = vunpack.c.l.b16 %v1989
          %v2417 = vunpack.c.h.b16 %v1989
          %v2418 = vunpack.c.l.b16 %v1990
          %v2419 = vunpack.c.h.b16 %v1990
          %v2420 = vunpack.c.l.b16 %v1991
          %v2421 = vunpack.c.h.b16 %v1991
          %v2422 = vunpack.c.l.b16 %v1992
          %v2423 = vunpack.c.h.b16 %v1992
          %v2424 = vunpack.c.l.b16 %v1993
          %v2425 = vunpack.c.h.b16 %v1993
          %v2426 = vunpack.c.l.b16 %v1994
          %v2427 = vunpack.c.h.b16 %v1994
          %v2428 = vunpack.c.l.b16 %v1995
          %v2429 = vunpack.c.h.b16 %v1995
          %v2430 = vunpack.c.l.b16 %v1996
          %v2431 = vunpack.c.h.b16 %v1996
          %v2432 = vunpack.c.l.b16 %v1997
          %v2433 = vunpack.c.h.b16 %v1997
          %v2434 = vunpack.c.l.b16 %v1998
          %v2435 = vunpack.c.h.b16 %v1998
          %v2436 = vunpack.c.l.b16 %v1999
          %v2437 = vunpack.c.h.b16 %v1999
          %v2438 = vunpack.c.l.b16 %v2000
          %v2439 = vunpack.c.h.b16 %v2000
          %v2440 = vunpack.c.l.b16 %v2001
          %v2441 = vunpack.c.h.b16 %v2001
          %v2442 = vunpack.c.l.b16 %v2002
          %v2443 = vunpack.c.h.b16 %v2002
          %v2444 = vunpack.c.l.b16 %v2003
          %v2445 = vunpack.c.h.b16 %v2003
          %v2446 = vunpack.c.l.b16 %v2004
          %v2447 = vunpack.c.h.b16 %v2004
          %v2448 = vunpack.c.l.b16 %v2005
          %v2449 = vunpack.c.h.b16 %v2005
          %v2450 = vunpack.c.l.b16 %v2006
          %v2451 = vunpack.c.h.b16 %v2006
          %v2452 = vunpack.c.l.b16 %v2007
          %v2453 = vunpack.c.h.b16 %v2007
          %v2454 = vunpack.c.l.b16 %v2008
          %v2455 = vunpack.c.h.b16 %v2008
          %v2456 = vunpack.c.l.b16 %v2009
          %v2457 = vunpack.c.h.b16 %v2009
          %v2458 = vunpack.c.l.b16 %v2010
          %v2459 = vunpack.c.h.b16 %v2010
          %v2460 = vunpack.c.l.b16 %v2011
          %v2461 = vunpack.c.h.b16 %v2011
          %v2462 = vunpack.c.l.b16 %v2012
          %v2463 = vunpack.c.h.b16 %v2012
          %v2464 = vunpack.c.l.b16 %v2013
          %v2465 = vunpack.c.h.b16 %v2013
          %v2466 = vunpack.c.l.b16 %v2014
          %v2467 = vunpack.c.h.b16 %v2014
          %v2468 = vunpack.c.l.b16 %v2015
          %v2469 = vunpack.c.h.b16 %v2015
          %v2470 = vunpack.c.l.b16 %v2016
          %v2471 = vunpack.c.h.b16 %v2016
          %v2472 = vunpack.c.l.b16 %v2017
          %v2473 = vunpack.c.h.b16 %v2017
          %v2474 = vunpack.c.l.b16 %v2018
          %v2475 = vunpack.c.h.b16 %v2018
          %v2476 = vunpack.c.l.b16 %v2019
          %v2477 = vunpack.c.h.b16 %v2019
          %v2478 = vunpack.c.l.b16 %v2020
          %v2479 = vunpack.c.h.b16 %v2020
          %v2480 = vunpack.c.l.b16 %v2021
          %v2481 = vunpack.c.h.b16 %v2021
          %v2482 = vunpack.c.l.b16 %v2022
          %v2483 = vunpack.c.h.b16 %v2022
          %v2484 = vunpack.c.l.b16 %v2023
          %v2485 = vunpack.c.h.b16 %v2023
          %v2486 = vunpack.c.l.b16 %v2024
          %v2487 = vunpack.c.h.b16 %v2024
          %v2488 = vunpack.c.l.b16 %v2025
          %v2489 = vunpack.c.h.b16 %v2025
          %v2490 = vunpack.c.l.b16 %v2026
          %v2491 = vunpack.c.h.b16 %v2026
          %v2492 = vunpack.c.l.b16 %v2027
          %v2493 = vunpack.c.h.b16 %v2027
          %v2494 = vunpack.c.l.b16 %v2028
          %v2495 = vunpack.c.h.b16 %v2028
          %v2496 = vunpack.c.l.b16 %v2029
          %v2497 = vunpack.c.h.b16 %v2029
          %v2498 = vunpack.c.l.b16 %v2030
          %v2499 = vunpack.c.h.b16 %v2030
          %v2500 = vunpack.c.l.b16 %v2031
          %v2501 = vunpack.c.h.b16 %v2031
          %v2502 = vunpack.c.l.b16 %v2032
          %v2503 = vunpack.c.h.b16 %v2032
          %v2504 = vunpack.c.l.b16 %v2033
          %v2505 = vunpack.c.h.b16 %v2033
          %v2506 = vunpack.c.l.b16 %v2034
          %v2507 = vunpack.c.h.b16 %v2034
          %v2508 = vunpack.c.l.b16 %v2035
          %v2509 = vunpack.c.h.b16 %v2035
          %v2510 = vunpack.c.l.b16 %v2036
          %v2511 = vunpack.c.h.b16 %v2036
          %v2512 = vunpack.c.l.b16 %v2037
          %v2513 = vunpack.c.h.b16 %v2037
          %v2514 = vunpack.c.l.b16 %v2038
          %v2515 = vunpack.c.h.b16 %v2038
          %v2516 = vunpack.c.l.b16 %v2039
          %v2517 = vunpack.c.h.b16 %v2039
          %v2518 = vunpack.c.l.b16 %v2040
          %v2519 = vunpack.c.h.b16 %v2040
          %v2520 = vunpack.c.l.b16 %v2041
          %v2521 = vunpack.c.h.b16 %v2041
          %v2522 = vunpack.c.l.b16 %v2042
          %v2523 = vunpack.c.h.b16 %v2042
          %v2524 = vunpack.c.l.b16 %v2043
          %v2525 = vunpack.c.h.b16 %v2043
          %v2526 = vunpack.c.l.b16 %v2044
          %v2527 = vunpack.c.h.b16 %v2044
          %v2528 = vunpack.c.l.b16 %v2045
          %v2529 = vunpack.c.h.b16 %v2045
          %v2530 = vunpack.c.l.b16 %v2046
          %v2531 = vunpack.c.h.b16 %v2046
          %v2532 = vunpack.c.l.b16 %v2047
          %v2533 = vunpack.c.h.b16 %v2047
          %v2534 = vunpack.c.l.b16 %v2048
          %v2535 = vunpack.c.h.b16 %v2048
          %v2536 = vunpack.c.l.b16 %v2049
          %v2537 = vunpack.c.h.b16 %v2049
          %v2538 = vunpack.c.l.b16 %v2050
          %v2539 = vunpack.c.h.b16 %v2050
          %v2540 = vunpack.c.l.b16 %v2051
          %v2541 = vunpack.c.h.b16 %v2051
          %v2542 = vunpack.c.l.b16 %v2052
          %v2543 = vunpack.c.h.b16 %v2052
          %v2544 = vunpack.c.l.b16 %v2053
          %v2545 = vunpack.c.h.b16 %v2053
          %v2546 = vunpack.c.l.b16 %v2054
          %v2547 = vunpack.c.h.b16 %v2054
          %v2548 = vunpack.c.l.b16 %v2055
          %v2549 = vunpack.c.h.b16 %v2055
          %v2550 = vunpack.c.l.b16 %v2056
          %v2551 = vunpack.c.h.b16 %v2056
          %v2552 = vunpack.c.l.b16 %v2057
          %v2553 = vunpack.c.h.b16 %v2057
          %v2554 = vunpack.c.l.b16 %v2058
          %v2555 = vunpack.c.h.b16 %v2058
          %v2556 = vunpack.c.l.b16 %v2059
          %v2557 = vunpack.c.h.b16 %v2059
          %v2558 = vunpack.c.l.b16 %v2060
          %v2559 = vunpack.c.h.b16 %v2060
          %v2560 = vunpack.c.l.b16 %v2061
          %v2561 = vunpack.c.h.b16 %v2061
          %v2562 = vunpack.c.l.b16 %v2062
          %v2563 = vunpack.c.h.b16 %v2062
          %v2564 = vunpack.c.l.b16 %v2063
          %v2565 = vunpack.c.h.b16 %v2063
          %v2566 = vunpack.c.l.b16 %v2064
          %v2567 = vunpack.c.h.b16 %v2064
          %v2568 = vunpack.c.l.b16 %v2065
          %v2569 = vunpack.c.h.b16 %v2065
          %v2570 = vunpack.c.l.b16 %v2066
          %v2571 = vunpack.c.h.b16 %v2066
          %v2572 = vunpack.c.l.b16 %v2067
          %v2573 = vunpack.c.h.b16 %v2067
          %v2574 = vunpack.c.l.b16 %v2068
          %v2575 = vunpack.c.h.b16 %v2068
          %v2576 = vunpack.c.l.b16 %v2069
          %v2577 = vunpack.c.h.b16 %v2069
          %v2578 = vunpack.c.l.b16 %v2070
          %v2579 = vunpack.c.h.b16 %v2070
          %v2580 = vunpack.c.l.b16 %v2071
          %v2581 = vunpack.c.h.b16 %v2071
          %v2582 = vunpack.c.l.b16 %v2072
          %v2583 = vunpack.c.h.b16 %v2072
          %v2584 = vunpack.c.l.b16 %v2073
          %v2585 = vunpack.c.h.b16 %v2073
          %v2586 = vunpack.c.l.b16 %v2074
          %v2587 = vunpack.c.h.b16 %v2074
          %v2588 = vunpack.c.l.b16 %v2075
          %v2589 = vunpack.c.h.b16 %v2075
          %v2590 = vunpack.c.l.b16 %v2076
          %v2591 = vunpack.c.h.b16 %v2076
          %v2592 = vunpack.c.l.b16 %v2077
          %v2593 = vunpack.c.h.b16 %v2077
          %v2594 = vunpack.c.l.b16 %v2078
          %v2595 = vunpack.c.h.b16 %v2078
          %v2596 = vunpack.c.l.b16 %v2079
          %v2597 = vunpack.c.h.b16 %v2079
          %v2598 = vunpack.c.l.b16 %v2080
          %v2599 = vunpack.c.h.b16 %v2080
          %v2600 = vunpack.c.l.b16 %v2081
          %v2601 = vunpack.c.h.b16 %v2081
          %v2602 = vunpack.c.l.b16 %v2082
          %v2603 = vunpack.c.h.b16 %v2082
          %v2604 = vunpack.c.l.b16 %v2083
          %v2605 = vunpack.c.h.b16 %v2083
          %v2606 = vunpack.c.l.b16 %v2084
          %v2607 = vunpack.c.h.b16 %v2084
          %v2608 = vunpack.c.l.b16 %v2085
          %v2609 = vunpack.c.h.b16 %v2085
          %v2610 = vunpack.c.l.b16 %v2086
          %v2611 = vunpack.c.h.b16 %v2086
          %v2612 = vunpack.c.l.b16 %v2087
          %v2613 = vunpack.c.h.b16 %v2087
          %v2614 = vunpack.c.l.b16 %v2088
          %v2615 = vunpack.c.h.b16 %v2088
          %v2616 = vunpack.c.l.b16 %v2089
          %v2617 = vunpack.c.h.b16 %v2089
          %v2618 = vunpack.c.l.b16 %v2090
          %v2619 = vunpack.c.h.b16 %v2090
          %v2620 = vunpack.c.l.b16 %v2091
          %v2621 = vunpack.c.h.b16 %v2091
          %v2622 = vunpack.c.l.b16 %v2092
          %v2623 = vunpack.c.h.b16 %v2092
          %v2624 = vunpack.c.l.b16 %v2093
          %v2625 = vunpack.c.h.b16 %v2093
          %v2626 = vunpack.c.l.b16 %v2094
          %v2627 = vunpack.c.h.b16 %v2094
          %v2628 = vunpack.c.l.b16 %v2095
          %v2629 = vunpack.c.h.b16 %v2095
          %v2630 = vunpack.c.l.b16 %v2096
          %v2631 = vunpack.c.h.b16 %v2096
          %v2632 = vunpack.c.l.b16 %v2097
          %v2633 = vunpack.c.h.b16 %v2097
          %v2634 = vunpack.c.l.b16 %v2098
          %v2635 = vunpack.c.h.b16 %v2098
          %v2636 = vunpack.c.l.b16 %v2099
          %v2637 = vunpack.c.h.b16 %v2099
          %v2638 = vunpack.c.l.b16 %v2100
          %v2639 = vunpack.c.h.b16 %v2100
          %v2640 = vunpack.c.l.b16 %v2101
          %v2641 = vunpack.c.h.b16 %v2101
          %v2642 = vunpack.c.l.b16 %v2102
          %v2643 = vunpack.c.h.b16 %v2102
          %v2644 = vunpack.c.l.b16 %v2103
          %v2645 = vunpack.c.h.b16 %v2103
          %v2646 = vunpack.c.l.b16 %v2104
          %v2647 = vunpack.c.h.b16 %v2104
          %v2648 = vunpack.c.l.b16 %v2105
          %v2649 = vunpack.c.h.b16 %v2105
          %v2650 = vunpack.c.l.b16 %v2106
          %v2651 = vunpack.c.h.b16 %v2106
          %v2652 = vunpack.c.l.b16 %v2107
          %v2653 = vunpack.c.h.b16 %v2107
          %v2654 = vunpack.c.l.b16 %v2108
          %v2655 = vunpack.c.h.b16 %v2108
          %v2656 = vunpack.c.l.b16 %v2109
          %v2657 = vunpack.c.h.b16 %v2109
          %v2658 = vunpack.c.l.b16 %v2110
          %v2659 = vunpack.c.h.b16 %v2110
          %v2660 = vunpack.c.l.b16 %v2111
          %v2661 = vunpack.c.h.b16 %v2111
          %v2662 = vunpack.c.l.b16 %v2112
          %v2663 = vunpack.c.h.b16 %v2112
          %v2664 = vunpack.c.l.b16 %v2113
          %v2665 = vunpack.c.h.b16 %v2113
          %v2666 = vunpack.c.l.b16 %v2114
          %v2667 = vunpack.c.h.b16 %v2114
          %v2668 = vunpack.c.l.b16 %v2115
          %v2669 = vunpack.c.h.b16 %v2115
          %v2670 = vunpack.c.l.b16 %v2116
          %v2671 = vunpack.c.h.b16 %v2116
          %v2672 = vunpack.c.l.b16 %v2117
          %v2673 = vunpack.c.h.b16 %v2117
          %v2674 = vunpack.c.l.b16 %v2118
          %v2675 = vunpack.c.h.b16 %v2118
          %v2676 = vunpack.c.l.b16 %v2119
          %v2677 = vunpack.c.h.b16 %v2119
          %v2678 = vunpack.c.l.b16 %v2120
          %v2679 = vunpack.c.h.b16 %v2120
          %v2680 = vunpack.c.l.b16 %v2121
          %v2681 = vunpack.c.h.b16 %v2121
          %v2682 = vunpack.c.l.b16 %v2122
          %v2683 = vunpack.c.h.b16 %v2122
          %v2684 = vunpack.c.l.b16 %v2123
          %v2685 = vunpack.c.h.b16 %v2123
          %v2686 = vunpack.c.l.b16 %v2124
          %v2687 = vunpack.c.h.b16 %v2124
          %v2688 = vunpack.c.l.b16 %v2125
          %v2689 = vunpack.c.h.b16 %v2125
          %v2690 = vunpack.c.l.b16 %v2126
          %v2691 = vunpack.c.h.b16 %v2126
          %v2692 = vunpack.c.l.b16 %v2127
          %v2693 = vunpack.c.h.b16 %v2127
          %v2694 = vunpack.c.l.b16 %v2128
          %v2695 = vunpack.c.h.b16 %v2128
          %v2696 = vunpack.c.l.b16 %v2129
          %v2697 = vunpack.c.h.b16 %v2129
          %v2698 = vunpack.c.l.b16 %v2130
          %v2699 = vunpack.c.h.b16 %v2130
          %v2700 = vunpack.c.l.b16 %v2131
          %v2701 = vunpack.c.h.b16 %v2131
          %v2702 = vunpack.c.l.b16 %v2132
          %v2703 = vunpack.c.h.b16 %v2132
          %v2704 = vunpack.c.l.b16 %v2133
          %v2705 = vunpack.c.h.b16 %v2133
          %v2706 = vunpack.c.l.b16 %v2134
          %v2707 = vunpack.c.h.b16 %v2134
          %v2708 = vunpack.c.l.b16 %v2135
          %v2709 = vunpack.c.h.b16 %v2135
          %v2710 = vunpack.c.l.b16 %v2136
          %v2711 = vunpack.c.h.b16 %v2136
          %v2712 = vunpack.c.l.b16 %v2137
          %v2713 = vunpack.c.h.b16 %v2137
          %v2714 = vpack.c.b16 %v2334, %v2330
          %v2715 = vpack.c.b16 %v2335, %v2331
          %v2716 = vpack.c.b16 %v2336, %v2332
          %v2717 = vpack.c.b16 %v2337, %v2333
          %v2718 = vpack.c.b16 %v2342, %v2338
          %v2719 = vpack.c.b16 %v2343, %v2339
          %v2720 = vpack.c.b16 %v2344, %v2340
          %v2721 = vpack.c.b16 %v2345, %v2341
          %v2722 = vpack.c.b16 %v2350, %v2346
          %v2723 = vpack.c.b16 %v2351, %v2347
          %v2724 = vpack.c.b16 %v2352, %v2348
          %v2725 = vpack.c.b16 %v2353, %v2349
          %v2726 = vpack.c.b16 %v2358, %v2354
          %v2727 = vpack.c.b16 %v2359, %v2355
          %v2728 = vpack.c.b16 %v2360, %v2356
          %v2729 = vpack.c.b16 %v2361, %v2357
          %v2730 = vpack.c.b16 %v2366, %v2362
          %v2731 = vpack.c.b16 %v2367, %v2363
          %v2732 = vpack.c.b16 %v2368, %v2364
          %v2733 = vpack.c.b16 %v2369, %v2365
          %v2734 = vpack.c.b16 %v2374, %v2370
          %v2735 = vpack.c.b16 %v2375, %v2371
          %v2736 = vpack.c.b16 %v2376, %v2372
          %v2737 = vpack.c.b16 %v2377, %v2373
          %v2738 = vpack.c.b16 %v2382, %v2378
          %v2739 = vpack.c.b16 %v2383, %v2379
          %v2740 = vpack.c.b16 %v2384, %v2380
          %v2741 = vpack.c.b16 %v2385, %v2381
          %v2742 = vpack.c.b16 %v2390, %v2386
          %v2743 = vpack.c.b16 %v2391, %v2387
          %v2744 = vpack.c.b16 %v2392, %v2388
          %v2745 = vpack.c.b16 %v2393, %v2389
          %v2746 = vpack.c.b16 %v2398, %v2394
          %v2747 = vpack.c.b16 %v2399, %v2395
          %v2748 = vpack.c.b16 %v2400, %v2396
          %v2749 = vpack.c.b16 %v2401, %v2397
          %v2750 = vpack.c.b16 %v2406, %v2402
          %v2751 = vpack.c.b16 %v2407, %v2403
          %v2752 = vpack.c.b16 %v2408, %v2404
          %v2753 = vpack.c.b16 %v2409, %v2405
          %v2754 = vpack.c.b16 %v2414, %v2410
          %v2755 = vpack.c.b16 %v2415, %v2411
          %v2756 = vpack.c.b16 %v2416, %v2412
          %v2757 = vpack.c.b16 %v2417, %v2413
          %v2758 = vpack.c.b16 %v2422, %v2418
          %v2759 = vpack.c.b16 %v2423, %v2419
          %v2760 = vpack.c.b16 %v2424, %v2420
          %v2761 = vpack.c.b16 %v2425, %v2421
          %v2762 = vpack.c.b16 %v2430, %v2426
          %v2763 = vpack.c.b16 %v2431, %v2427
          %v2764 = vpack.c.b16 %v2432, %v2428
          %v2765 = vpack.c.b16 %v2433, %v2429
          %v2766 = vpack.c.b16 %v2438, %v2434
          %v2767 = vpack.c.b16 %v2439, %v2435
          %v2768 = vpack.c.b16 %v2440, %v2436
          %v2769 = vpack.c.b16 %v2441, %v2437
          %v2770 = vpack.c.b16 %v2446, %v2442
          %v2771 = vpack.c.b16 %v2447, %v2443
          %v2772 = vpack.c.b16 %v2448, %v2444
          %v2773 = vpack.c.b16 %v2449, %v2445
          %v2774 = vpack.c.b16 %v2454, %v2450
          %v2775 = vpack.c.b16 %v2455, %v2451
          %v2776 = vpack.c.b16 %v2456, %v2452
          %v2777 = vpack.c.b16 %v2457, %v2453
          %v2778 = vpack.c.b16 %v2462, %v2458
          %v2779 = vpack.c.b16 %v2463, %v2459
          %v2780 = vpack.c.b16 %v2464, %v2460
          %v2781 = vpack.c.b16 %v2465, %v2461
          %v2782 = vpack.c.b16 %v2470, %v2466
          %v2783 = vpack.c.b16 %v2471, %v2467
          %v2784 = vpack.c.b16 %v2472, %v2468
          %v2785 = vpack.c.b16 %v2473, %v2469
          %v2786 = vpack.c.b16 %v2478, %v2474
          %v2787 = vpack.c.b16 %v2479, %v2475
          %v2788 = vpack.c.b16 %v2480, %v2476
          %v2789 = vpack.c.b16 %v2481, %v2477
          %v2790 = vpack.c.b16 %v2486, %v2482
          %v2791 = vpack.c.b16 %v2487, %v2483
          %v2792 = vpack.c.b16 %v2488, %v2484
          %v2793 = vpack.c.b16 %v2489, %v2485
          %v2794 = vpack.c.b16 %v2494, %v2490
          %v2795 = vpack.c.b16 %v2495, %v2491
          %v2796 = vpack.c.b16 %v2496, %v2492
          %v2797 = vpack.c.b16 %v2497, %v2493
          %v2798 = vpack.c.b16 %v2502, %v2498
          %v2799 = vpack.c.b16 %v2503, %v2499
          %v2800 = vpack.c.b16 %v2504, %v2500
          %v2801 = vpack.c.b16 %v2505, %v2501
          %v2802 = vpack.c.b16 %v2510, %v2506
          %v2803 = vpack.c.b16 %v2511, %v2507
          %v2804 = vpack.c.b16 %v2512, %v2508
          %v2805 = vpack.c.b16 %v2513, %v2509
          %v2806 = vpack.c.b16 %v2518, %v2514
          %v2807 = vpack.c.b16 %v2519, %v2515
          %v2808 = vpack.c.b16 %v2520, %v2516
          %v2809 = vpack.c.b16 %v2521, %v2517
          %v2810 = vpack.c.b16 %v2526, %v2522
          %v2811 = vpack.c.b16 %v2527, %v2523
          %v2812 = vpack.c.b16 %v2528, %v2524
          %v2813 = vpack.c.b16 %v2529, %v2525
          %v2814 = vpack.c.b16 %v2534, %v2530
          %v2815 = vpack.c.b16 %v2535, %v2531
          %v2816 = vpack.c.b16 %v2536, %v2532
          %v2817 = vpack.c.b16 %v2537, %v2533
          %v2818 = vpack.c.b16 %v2542, %v2538
          %v2819 = vpack.c.b16 %v2543, %v2539
          %v2820 = vpack.c.b16 %v2544, %v2540
          %v2821 = vpack.c.b16 %v2545, %v2541
          %v2822 = vpack.c.b16 %v2550, %v2546
          %v2823 = vpack.c.b16 %v2551, %v2547
          %v2824 = vpack.c.b16 %v2552, %v2548
          %v2825 = vpack.c.b16 %v2553, %v2549
          %v2826 = vpack.c.b16 %v2558, %v2554
          %v2827 = vpack.c.b16 %v2559, %v2555
          %v2828 = vpack.c.b16 %v2560, %v2556
          %v2829 = vpack.c.b16 %v2561, %v2557
          %v2830 = vpack.c.b16 %v2566, %v2562
          %v2831 = vpack.c.b16 %v2567, %v2563
          %v2832 = vpack.c.b16 %v2568, %v2564
          %v2833 = vpack.c.b16 %v2569, %v2565
          %v2834 = vpack.c.b16 %v2574, %v2570
          %v2835 = vpack.c.b16 %v2575, %v2571
          %v2836 = vpack.c.b16 %v2576, %v2572
          %v2837 = vpack.c.b16 %v2577, %v2573
          %v2838 = vpack.c.b16 %v2582, %v2578
          %v2839 = vpack.c.b16 %v2583, %v2579
          %v2840 = vpack.c.b16 %v2584, %v2580
          %v2841 = vpack.c.b16 %v2585, %v2581
          %v2842 = vpack.c.b16 %v2590, %v2586
          %v2843 = vpack.c.b16 %v2591, %v2587
          %v2844 = vpack.c.b16 %v2592, %v2588
          %v2845 = vpack.c.b16 %v2593, %v2589
          %v2846 = vpack.c.b16 %v2598, %v2594
          %v2847 = vpack.c.b16 %v2599, %v2595
          %v2848 = vpack.c.b16 %v2600, %v2596
          %v2849 = vpack.c.b16 %v2601, %v2597
          %v2850 = vpack.c.b16 %v2606, %v2602
          %v2851 = vpack.c.b16 %v2607, %v2603
          %v2852 = vpack.c.b16 %v2608, %v2604
          %v2853 = vpack.c.b16 %v2609, %v2605
          %v2854 = vpack.c.b16 %v2614, %v2610
          %v2855 = vpack.c.b16 %v2615, %v2611
          %v2856 = vpack.c.b16 %v2616, %v2612
          %v2857 = vpack.c.b16 %v2617, %v2613
          %v2858 = vpack.c.b16 %v2622, %v2618
          %v2859 = vpack.c.b16 %v2623, %v2619
          %v2860 = vpack.c.b16 %v2624, %v2620
          %v2861 = vpack.c.b16 %v2625, %v2621
          %v2862 = vpack.c.b16 %v2630, %v2626
          %v2863 = vpack.c.b16 %v2631, %v2627
          %v2864 = vpack.c.b16 %v2632, %v2628
          %v2865 = vpack.c.b16 %v2633, %v2629
          %v2866 = vpack.c.b16 %v2638, %v2634
          %v2867 = vpack.c.b16 %v2639, %v2635
          %v2868 = vpack.c.b16 %v2640, %v2636
          %v2869 = vpack.c.b16 %v2641, %v2637
          %v2870 = vpack.c.b16 %v2646, %v2642
          %v2871 = vpack.c.b16 %v2647, %v2643
          %v2872 = vpack.c.b16 %v2648, %v2644
          %v2873 = vpack.c.b16 %v2649, %v2645
          %v2874 = vpack.c.b16 %v2654, %v2650
          %v2875 = vpack.c.b16 %v2655, %v2651
          %v2876 = vpack.c.b16 %v2656, %v2652
          %v2877 = vpack.c.b16 %v2657, %v2653
          %v2878 = vpack.c.b16 %v2662, %v2658
          %v2879 = vpack.c.b16 %v2663, %v2659
          %v2880 = vpack.c.b16 %v2664, %v2660
          %v2881 = vpack.c.b16 %v2665, %v2661
          %v2882 = vpack.c.b16 %v2670, %v2666
          %v2883 = vpack.c.b16 %v2671, %v2667
          %v2884 = vpack.c.b16 %v2672, %v2668
          %v2885 = vpack.c.b16 %v2673, %v2669
          %v2886 = vpack.c.b16 %v2678, %v2674
          %v2887 = vpack.c.b16 %v2679, %v2675
          %v2888 = vpack.c.b16 %v2680, %v2676
          %v2889 = vpack.c.b16 %v2681, %v2677
          %v2890 = vpack.c.b16 %v2686, %v2682
          %v2891 = vpack.c.b16 %v2687, %v2683
          %v2892 = vpack.c.b16 %v2688, %v2684
          %v2893 = vpack.c.b16 %v2689, %v2685
          %v2894 = vpack.c.b16 %v2694, %v2690
          %v2895 = vpack.c.b16 %v2695, %v2691
          %v2896 = vpack.c.b16 %v2696, %v2692
          %v2897 = vpack.c.b16 %v2697, %v2693
          %v2898 = vpack.c.b16 %v2702, %v2698
          %v2899 = vpack.c.b16 %v2703, %v2699
          %v2900 = vpack.c.b16 %v2704, %v2700
          %v2901 = vpack.c.b16 %v2705, %v2701
          %v2902 = vpack.c.b16 %v2710, %v2706
          %v2903 = vpack.c.b16 %v2711, %v2707
          %v2904 = vpack.c.b16 %v2712, %v2708
          %v2905 = vpack.c.b16 %v2713, %v2709
          %3098 = vmatprep.subr.bf16.mxu0 %v2743
          %3099 = vmatpush1.bf16.msra.mxu0 %v2742
          %3100 = vmatprep.subr.bf16.mxu0 %v2739
          %3101 = vmatpush1.bf16.msra.mxu0 %v2738
          %3102 = vmatprep.subr.bf16.mxu0 %v2735
          %3103 = vmatpush1.bf16.msra.mxu0 %v2734
          %3104 = vmatprep.subr.bf16.mxu0 %v2731
          %3105 = vmatpush1.bf16.msra.mxu0 %v2730
          %3106 = vmatprep.subr.bf16.mxu0 %v2727
          %3107 = vmatpush1.bf16.msra.mxu0 %v2726
          %3108 = vmatprep.subr.bf16.mxu0 %v2723
          %3109 = vmatpush1.bf16.msra.mxu0 %v2722
          %3110 = vmatprep.subr.bf16.mxu0 %v2719
          %3111 = vmatpush1.bf16.msra.mxu0 %v2718
          %3112 = vmatprep.subr.bf16.mxu0 %v2715
          %3113 = vmatpush1.bf16.msra.mxu0 %v2714
          %3114 = vmatprep.subr.bf16.mxu0 %v2775
          %3115 = vmatpush2.bf16.msra.mxu0 %v2774
          %3116 = vmatprep.subr.bf16.mxu0 %v2771
          %3117 = vmatpush2.bf16.msra.mxu0 %v2770
          %3118 = vmatprep.subr.bf16.mxu0 %v2767
          %3119 = vmatpush2.bf16.msra.mxu0 %v2766
          %3120 = vmatprep.subr.bf16.mxu0 %v2763
          %3121 = vmatpush2.bf16.msra.mxu0 %v2762
          %3122 = vmatprep.subr.bf16.mxu0 %v2759
          %3123 = vmatpush2.bf16.msra.mxu0 %v2758
          %3124 = vmatprep.subr.bf16.mxu0 %v2755
          %3125 = vmatpush2.bf16.msra.mxu0 %v2754
          %3126 = vmatprep.subr.bf16.mxu0 %v2751
          %3127 = vmatpush2.bf16.msra.mxu0 %v2750
          %3128 = vmatprep.subr.bf16.mxu0 %v2747
          %3129 = vmatpush2.bf16.msra.mxu0 %v2746
          %3130 = vmatprep.mubr.bf16.mxu0 %v525
          %3131 = vmatmul.mubr.bf16.gmra.mxu0 %v524
          %v3132 = vpop.f32.mrf.mxu0
          %v3133 = vadd.f32 0.0, %v3132
          %v3134 = vpop.f32.mrf.mxu0
          %v3135 = vadd.f32 0.0, %v3134
          %v3136 = vpop.f32.mrf.mxu0
          %v3137 = vpop.f32.mrf.mxu0
          %3138 = vdwg.mxu0
          %3139 = vmatprep.subr.bf16.mxu0 %v2807
          %3140 = vmatpush1.bf16.msra.mxu0 %v2806
          %3141 = vmatprep.subr.bf16.mxu0 %v2803
          %3142 = vmatpush1.bf16.msra.mxu0 %v2802
          %3143 = vmatprep.subr.bf16.mxu0 %v2799
          %3144 = vmatpush1.bf16.msra.mxu0 %v2798
          %3145 = vmatprep.subr.bf16.mxu0 %v2795
          %3146 = vmatpush1.bf16.msra.mxu0 %v2794
          %3147 = vmatprep.subr.bf16.mxu0 %v2791
          %3148 = vmatpush1.bf16.msra.mxu0 %v2790
          %3149 = vmatprep.subr.bf16.mxu0 %v2787
          %3150 = vmatpush1.bf16.msra.mxu0 %v2786
          %3151 = vmatprep.subr.bf16.mxu0 %v2783
          %3152 = vmatpush1.bf16.msra.mxu0 %v2782
          %3153 = vmatprep.subr.bf16.mxu0 %v2779
          %3154 = vmatpush1.bf16.msra.mxu0 %v2778
          %3155 = vmatprep.subr.bf16.mxu0 %v2839
          %3156 = vmatpush2.bf16.msra.mxu0 %v2838
          %3157 = vmatprep.subr.bf16.mxu0 %v2835
          %3158 = vmatpush2.bf16.msra.mxu0 %v2834
          %3159 = vmatprep.subr.bf16.mxu0 %v2831
          %3160 = vmatpush2.bf16.msra.mxu0 %v2830
          %3161 = vmatprep.subr.bf16.mxu0 %v2827
          %3162 = vmatpush2.bf16.msra.mxu0 %v2826
          %3163 = vmatprep.subr.bf16.mxu0 %v2823
          %3164 = vmatpush2.bf16.msra.mxu0 %v2822
          %3165 = vmatprep.subr.bf16.mxu0 %v2819
          %3166 = vmatpush2.bf16.msra.mxu0 %v2818
          %3167 = vmatprep.subr.bf16.mxu0 %v2815
          %3168 = vmatpush2.bf16.msra.mxu0 %v2814
          %3169 = vmatprep.subr.bf16.mxu0 %v2811
          %3170 = vmatpush2.bf16.msra.mxu0 %v2810
          %3171 = vmatprep.mubr.bf16.mxu0 %v527
          %3172 = vmatmul.mubr.bf16.gmra.mxu0 %v526
          %v3173 = vpop.f32.mrf.mxu0
          %v3174 = vadd.f32 %v3133, %v3173
          %v3175 = vpop.f32.mrf.mxu0
          %v3176 = vadd.f32 %v3135, %v3175
          %v3177 = vpop.f32.mrf.mxu0
          %v3178 = vpop.f32.mrf.mxu0
          %3179 = vdwg.mxu0
          %3180 = vmatprep.subr.bf16.mxu0 %v2871
          %3181 = vmatpush1.bf16.msra.mxu0 %v2870
          %3182 = vmatprep.subr.bf16.mxu0 %v2867
          %3183 = vmatpush1.bf16.msra.mxu0 %v2866
          %3184 = vmatprep.subr.bf16.mxu0 %v2863
          %3185 = vmatpush1.bf16.msra.mxu0 %v2862
          %3186 = vmatprep.subr.bf16.mxu0 %v2859
          %3187 = vmatpush1.bf16.msra.mxu0 %v2858
          %3188 = vmatprep.subr.bf16.mxu0 %v2855
          %3189 = vmatpush1.bf16.msra.mxu0 %v2854
          %3190 = vmatprep.subr.bf16.mxu0 %v2851
          %3191 = vmatpush1.bf16.msra.mxu0 %v2850
          %3192 = vmatprep.subr.bf16.mxu0 %v2847
          %3193 = vmatpush1.bf16.msra.mxu0 %v2846
          %3194 = vmatprep.subr.bf16.mxu0 %v2843
          %3195 = vmatpush1.bf16.msra.mxu0 %v2842
          %3196 = vmatprep.subr.bf16.mxu0 %v2903
          %3197 = vmatpush2.bf16.msra.mxu0 %v2902
          %3198 = vmatprep.subr.bf16.mxu0 %v2899
          %3199 = vmatpush2.bf16.msra.mxu0 %v2898
          %3200 = vmatprep.subr.bf16.mxu0 %v2895
          %3201 = vmatpush2.bf16.msra.mxu0 %v2894
          %3202 = vmatprep.subr.bf16.mxu0 %v2891
          %3203 = vmatpush2.bf16.msra.mxu0 %v2890
          %3204 = vmatprep.subr.bf16.mxu0 %v2887
          %3205 = vmatpush2.bf16.msra.mxu0 %v2886
          %3206 = vmatprep.subr.bf16.mxu0 %v2883
          %3207 = vmatpush2.bf16.msra.mxu0 %v2882
          %3208 = vmatprep.subr.bf16.mxu0 %v2879
          %3209 = vmatpush2.bf16.msra.mxu0 %v2878
          %3210 = vmatprep.subr.bf16.mxu0 %v2875
          %3211 = vmatpush2.bf16.msra.mxu0 %v2874
          %3212 = vmatprep.mubr.bf16.mxu0 %v529
          %3213 = vmatmul.mubr.bf16.gmra.mxu0 %v528
          %v3214 = vpop.f32.mrf.mxu0
          %v3215 = vadd.f32 %v3174, %v3214
          %v3216 = vpop.f32.mrf.mxu0
          %v3217 = vadd.f32 %v3176, %v3216
          %v3218 = vpop.f32.mrf.mxu0
          %v3219 = vpop.f32.mrf.mxu0
          %3220 = vdwg.mxu0
          %3221 = vmatprep.subr.bf16.mxu0 %v2745
          %3222 = vmatpush1.bf16.msra.mxu0 %v2744
          %3223 = vmatprep.subr.bf16.mxu0 %v2741
          %3224 = vmatpush1.bf16.msra.mxu0 %v2740
          %3225 = vmatprep.subr.bf16.mxu0 %v2737
          %3226 = vmatpush1.bf16.msra.mxu0 %v2736
          %3227 = vmatprep.subr.bf16.mxu0 %v2733
          %3228 = vmatpush1.bf16.msra.mxu0 %v2732
          %3229 = vmatprep.subr.bf16.mxu0 %v2729
          %3230 = vmatpush1.bf16.msra.mxu0 %v2728
          %3231 = vmatprep.subr.bf16.mxu0 %v2725
          %3232 = vmatpush1.bf16.msra.mxu0 %v2724
          %3233 = vmatprep.subr.bf16.mxu0 %v2721
          %3234 = vmatpush1.bf16.msra.mxu0 %v2720
          %3235 = vmatprep.subr.bf16.mxu0 %v2717
          %3236 = vmatpush1.bf16.msra.mxu0 %v2716
          %3237 = vmatprep.subr.bf16.mxu0 %v2777
          %3238 = vmatpush2.bf16.msra.mxu0 %v2776
          %3239 = vmatprep.subr.bf16.mxu0 %v2773
          %3240 = vmatpush2.bf16.msra.mxu0 %v2772
          %3241 = vmatprep.subr.bf16.mxu0 %v2769
          %3242 = vmatpush2.bf16.msra.mxu0 %v2768
          %3243 = vmatprep.subr.bf16.mxu0 %v2765
          %3244 = vmatpush2.bf16.msra.mxu0 %v2764
          %3245 = vmatprep.subr.bf16.mxu0 %v2761
          %3246 = vmatpush2.bf16.msra.mxu0 %v2760
          %3247 = vmatprep.subr.bf16.mxu0 %v2757
          %3248 = vmatpush2.bf16.msra.mxu0 %v2756
          %3249 = vmatprep.subr.bf16.mxu0 %v2753
          %3250 = vmatpush2.bf16.msra.mxu0 %v2752
          %3251 = vmatprep.subr.bf16.mxu0 %v2749
          %3252 = vmatpush2.bf16.msra.mxu0 %v2748
          %3253 = vmatprep.mubr.bf16.mxu0 %v525
          %3254 = vmatmul.mubr.bf16.gmra.mxu0 %v524
          %v3255 = vpop.f32.mrf.mxu0
          %v3256 = vadd.f32 0.0, %v3255
          %v3257 = vpop.f32.mrf.mxu0
          %v3258 = vadd.f32 0.0, %v3257
          %v3259 = vpop.f32.mrf.mxu0
          %v3260 = vpop.f32.mrf.mxu0
          %3261 = vdwg.mxu0
          %3262 = vmatprep.subr.bf16.mxu0 %v2809
          %3263 = vmatpush1.bf16.msra.mxu0 %v2808
          %3264 = vmatprep.subr.bf16.mxu0 %v2805
          %3265 = vmatpush1.bf16.msra.mxu0 %v2804
          %3266 = vmatprep.subr.bf16.mxu0 %v2801
          %3267 = vmatpush1.bf16.msra.mxu0 %v2800
          %3268 = vmatprep.subr.bf16.mxu0 %v2797
          %3269 = vmatpush1.bf16.msra.mxu0 %v2796
          %3270 = vmatprep.subr.bf16.mxu0 %v2793
          %3271 = vmatpush1.bf16.msra.mxu0 %v2792
          %3272 = vmatprep.subr.bf16.mxu0 %v2789
          %3273 = vmatpush1.bf16.msra.mxu0 %v2788
          %3274 = vmatprep.subr.bf16.mxu0 %v2785
          %3275 = vmatpush1.bf16.msra.mxu0 %v2784
          %3276 = vmatprep.subr.bf16.mxu0 %v2781
          %3277 = vmatpush1.bf16.msra.mxu0 %v2780
          %3278 = vmatprep.subr.bf16.mxu0 %v2841
          %3279 = vmatpush2.bf16.msra.mxu0 %v2840
          %3280 = vmatprep.subr.bf16.mxu0 %v2837
          %3281 = vmatpush2.bf16.msra.mxu0 %v2836
          %3282 = vmatprep.subr.bf16.mxu0 %v2833
          %3283 = vmatpush2.bf16.msra.mxu0 %v2832
          %3284 = vmatprep.subr.bf16.mxu0 %v2829
          %3285 = vmatpush2.bf16.msra.mxu0 %v2828
          %3286 = vmatprep.subr.bf16.mxu0 %v2825
          %3287 = vmatpush2.bf16.msra.mxu0 %v2824
          %3288 = vmatprep.subr.bf16.mxu0 %v2821
          %3289 = vmatpush2.bf16.msra.mxu0 %v2820
          %3290 = vmatprep.subr.bf16.mxu0 %v2817
          %3291 = vmatpush2.bf16.msra.mxu0 %v2816
          %3292 = vmatprep.subr.bf16.mxu0 %v2813
          %3293 = vmatpush2.bf16.msra.mxu0 %v2812
          %3294 = vmatprep.mubr.bf16.mxu0 %v527
          %3295 = vmatmul.mubr.bf16.gmra.mxu0 %v526
          %v3296 = vpop.f32.mrf.mxu0
          %v3297 = vadd.f32 %v3256, %v3296
          %v3298 = vpop.f32.mrf.mxu0
          %v3299 = vadd.f32 %v3258, %v3298
          %v3300 = vpop.f32.mrf.mxu0
          %v3301 = vpop.f32.mrf.mxu0
          %3302 = vdwg.mxu0
          %3303 = vmatprep.subr.bf16.mxu0 %v2873
          %3304 = vmatpush1.bf16.msra.mxu0 %v2872
          %3305 = vmatprep.subr.bf16.mxu0 %v2869
          %3306 = vmatpush1.bf16.msra.mxu0 %v2868
          %3307 = vmatprep.subr.bf16.mxu0 %v2865
          %3308 = vmatpush1.bf16.msra.mxu0 %v2864
          %3309 = vmatprep.subr.bf16.mxu0 %v2861
          %3310 = vmatpush1.bf16.msra.mxu0 %v2860
          %3311 = vmatprep.subr.bf16.mxu0 %v2857
          %3312 = vmatpush1.bf16.msra.mxu0 %v2856
          %3313 = vmatprep.subr.bf16.mxu0 %v2853
          %3314 = vmatpush1.bf16.msra.mxu0 %v2852
          %3315 = vmatprep.subr.bf16.mxu0 %v2849
          %3316 = vmatpush1.bf16.msra.mxu0 %v2848
          %3317 = vmatprep.subr.bf16.mxu0 %v2845
          %3318 = vmatpush1.bf16.msra.mxu0 %v2844
          %3319 = vmatprep.subr.bf16.mxu0 %v2905
          %3320 = vmatpush2.bf16.msra.mxu0 %v2904
          %3321 = vmatprep.subr.bf16.mxu0 %v2901
          %3322 = vmatpush2.bf16.msra.mxu0 %v2900
          %3323 = vmatprep.subr.bf16.mxu0 %v2897
          %3324 = vmatpush2.bf16.msra.mxu0 %v2896
          %3325 = vmatprep.subr.bf16.mxu0 %v2893
          %3326 = vmatpush2.bf16.msra.mxu0 %v2892
          %3327 = vmatprep.subr.bf16.mxu0 %v2889
          %3328 = vmatpush2.bf16.msra.mxu0 %v2888
          %3329 = vmatprep.subr.bf16.mxu0 %v2885
          %3330 = vmatpush2.bf16.msra.mxu0 %v2884
          %3331 = vmatprep.subr.bf16.mxu0 %v2881
          %3332 = vmatpush2.bf16.msra.mxu0 %v2880
          %3333 = vmatprep.subr.bf16.mxu0 %v2877
          %3334 = vmatpush2.bf16.msra.mxu0 %v2876
          %3335 = vmatprep.mubr.bf16.mxu0 %v529
          %3336 = vmatmul.mubr.bf16.gmra.mxu0 %v528
          %v3337 = vpop.f32.mrf.mxu0
          %v3338 = vadd.f32 %v3297, %v3337
          %v3339 = vpop.f32.mrf.mxu0
          %v3340 = vadd.f32 %v3299, %v3339
          %v3341 = vpop.f32.mrf.mxu0
          %v3342 = vpop.f32.mrf.mxu0
          %3343 = vdwg.mxu0
          %v3344 = vpack.c.bf16 %v3215, %v3215
          %v3345 = vpack.c.bf16 %v3217, %v3217
          %v3346 = vpack.c.bf16 %v3338, %v3338
          %v3347 = vpack.c.bf16 %v3340, %v3340
          %v3352 = vunpack.c.l.b16 %v3344
          %v3353 = vunpack.c.l.b16 %v3345
          %v3354 = vunpack.c.l.b16 %v3346
          %v3355 = vunpack.c.l.b16 %v3347
          %v3356 = vpack.c.b16 %v3353, %v3352
          %v3357 = vpack.c.b16 %v3355, %v3354
          %3360 = vst [vmem:[#allocation3] sm:$0xff] %v3356
          %3361 = vst [vmem:[#allocation3 + $0x8] sm:$0xff] %v3357
        $region84: #{multi_head_attention.1} parent=51 // pred_fallthru
          _
        %v3362 = vld [vmem:[%s408] sm:$0xff]
        %v3363 = vld [vmem:[%s408 + $0x8] sm:$0xff]
        %v3364 = vld [vmem:[%s408 + $0x10] sm:$0xff]
        %v3365 = vld [vmem:[%s408 + $0x18] sm:$0xff]
        %v3366 = vld [vmem:[%s408 + $0x20] sm:$0xff]
        %v3367 = vld [vmem:[%s408 + $0x28] sm:$0xff]
        %v3368 = vpack.c.bf16 %v3362, %v3362
        %v3369 = vpack.c.bf16 %v3363, %v3363
        %v3370 = vpack.c.bf16 %v3364, %v3364
        %v3371 = vpack.c.bf16 %v3365, %v3365
        %v3372 = vpack.c.bf16 %v3366, %v3366
        %v3373 = vpack.c.bf16 %v3367, %v3367
        %v3374 = vld [vmem:[#allocation10] sm:$0xff]
        %v3375 = vld [vmem:[#allocation10 + $0x8] sm:$0xff]
        %v3376 = vld [vmem:[#allocation10 + $0x10] sm:$0xff]
        %v3377 = vld [vmem:[#allocation10 + $0x18] sm:$0xff]
        %v3378 = vld [vmem:[#allocation10 + $0x20] sm:$0xff]
        %v3379 = vld [vmem:[#allocation10 + $0x28] sm:$0xff]
        %v3380 = vld [vmem:[#allocation10 + $0x30] sm:$0xff]
        %v3381 = vld [vmem:[#allocation10 + $0x38] sm:$0xff]
        %v3382 = vld [vmem:[#allocation10 + $0x40] sm:$0xff]
        %v3383 = vld [vmem:[#allocation10 + $0x48] sm:$0xff]
        %v3384 = vld [vmem:[#allocation10 + $0x50] sm:$0xff]
        %v3385 = vld [vmem:[#allocation10 + $0x58] sm:$0xff]
        %v3386 = vld [vmem:[#allocation10 + $0x60] sm:$0xff]
        %v3387 = vld [vmem:[#allocation10 + $0x68] sm:$0xff]
        %v3388 = vld [vmem:[#allocation10 + $0x70] sm:$0xff]
        %v3389 = vld [vmem:[#allocation10 + $0x78] sm:$0xff]
        %v3390 = vld [vmem:[#allocation10 + $0x80] sm:$0xff]
        %v3391 = vld [vmem:[#allocation10 + $0x88] sm:$0xff]
        %v3392 = vld [vmem:[#allocation10 + $0x90] sm:$0xff]
        %v3393 = vld [vmem:[#allocation10 + $0x98] sm:$0xff]
        %v3394 = vld [vmem:[#allocation10 + $0xa0] sm:$0xff]
        %v3395 = vld [vmem:[#allocation10 + $0xa8] sm:$0xff]
        %v3396 = vld [vmem:[#allocation10 + $0xb0] sm:$0xff]
        %v3397 = vld [vmem:[#allocation10 + $0xb8] sm:$0xff]
        %v3398 = vld [vmem:[#allocation10 + $0xc0] sm:$0xff]
        %v3399 = vld [vmem:[#allocation10 + $0xc8] sm:$0xff]
        %v3400 = vld [vmem:[#allocation10 + $0xd0] sm:$0xff]
        %v3401 = vld [vmem:[#allocation10 + $0xd8] sm:$0xff]
        %v3402 = vld [vmem:[#allocation10 + $0xe0] sm:$0xff]
        %v3403 = vld [vmem:[#allocation10 + $0xe8] sm:$0xff]
        %v3404 = vld [vmem:[#allocation10 + $0xf0] sm:$0xff]
        %v3405 = vld [vmem:[#allocation10 + $0xf8] sm:$0xff]
        %v3406 = vld [vmem:[#allocation10 + $0x100] sm:$0xff]
        %v3407 = vld [vmem:[#allocation10 + $0x108] sm:$0xff]
        %v3408 = vld [vmem:[#allocation10 + $0x110] sm:$0xff]
        %v3409 = vld [vmem:[#allocation10 + $0x118] sm:$0xff]
        %v3410 = vld [vmem:[#allocation10 + $0x120] sm:$0xff]
        %v3411 = vld [vmem:[#allocation10 + $0x128] sm:$0xff]
        %v3412 = vld [vmem:[#allocation10 + $0x130] sm:$0xff]
        %v3413 = vld [vmem:[#allocation10 + $0x138] sm:$0xff]
        %v3414 = vld [vmem:[#allocation10 + $0x140] sm:$0xff]
        %v3415 = vld [vmem:[#allocation10 + $0x148] sm:$0xff]
        %v3416 = vld [vmem:[#allocation10 + $0x150] sm:$0xff]
        %v3417 = vld [vmem:[#allocation10 + $0x158] sm:$0xff]
        %v3418 = vld [vmem:[#allocation10 + $0x160] sm:$0xff]
        %v3419 = vld [vmem:[#allocation10 + $0x168] sm:$0xff]
        %v3420 = vld [vmem:[#allocation10 + $0x170] sm:$0xff]
        %v3421 = vld [vmem:[#allocation10 + $0x178] sm:$0xff]
        %v3422 = vld [vmem:[#allocation10 + $0x180] sm:$0xff]
        %v3423 = vld [vmem:[#allocation10 + $0x188] sm:$0xff]
        %v3424 = vld [vmem:[#allocation10 + $0x190] sm:$0xff]
        %v3425 = vld [vmem:[#allocation10 + $0x198] sm:$0xff]
        %v3426 = vld [vmem:[#allocation10 + $0x1a0] sm:$0xff]
        %v3427 = vld [vmem:[#allocation10 + $0x1a8] sm:$0xff]
        %v3428 = vld [vmem:[#allocation10 + $0x1b0] sm:$0xff]
        %v3429 = vld [vmem:[#allocation10 + $0x1b8] sm:$0xff]
        %v3430 = vld [vmem:[#allocation10 + $0x1c0] sm:$0xff]
        %v3431 = vld [vmem:[#allocation10 + $0x1c8] sm:$0xff]
        %v3432 = vld [vmem:[#allocation10 + $0x1d0] sm:$0xff]
        %v3433 = vld [vmem:[#allocation10 + $0x1d8] sm:$0xff]
        %v3434 = vld [vmem:[#allocation10 + $0x1e0] sm:$0xff]
        %v3435 = vld [vmem:[#allocation10 + $0x1e8] sm:$0xff]
        %v3436 = vld [vmem:[#allocation10 + $0x1f0] sm:$0xff]
        %v3437 = vld [vmem:[#allocation10 + $0x1f8] sm:$0xff]
        %v3438 = vld [vmem:[#allocation10 + $0x200] sm:$0xff]
        %v3439 = vld [vmem:[#allocation10 + $0x208] sm:$0xff]
        %v3440 = vld [vmem:[#allocation10 + $0x210] sm:$0xff]
        %v3441 = vld [vmem:[#allocation10 + $0x218] sm:$0xff]
        %v3442 = vld [vmem:[#allocation10 + $0x220] sm:$0xff]
        %v3443 = vld [vmem:[#allocation10 + $0x228] sm:$0xff]
        %v3444 = vld [vmem:[#allocation10 + $0x230] sm:$0xff]
        %v3445 = vld [vmem:[#allocation10 + $0x238] sm:$0xff]
        %v3446 = vld [vmem:[#allocation10 + $0x240] sm:$0xff]
        %v3447 = vld [vmem:[#allocation10 + $0x248] sm:$0xff]
        %v3448 = vld [vmem:[#allocation10 + $0x250] sm:$0xff]
        %v3449 = vld [vmem:[#allocation10 + $0x258] sm:$0xff]
        %v3450 = vld [vmem:[#allocation10 + $0x260] sm:$0xff]
        %v3451 = vld [vmem:[#allocation10 + $0x268] sm:$0xff]
        %v3452 = vld [vmem:[#allocation10 + $0x270] sm:$0xff]
        %v3453 = vld [vmem:[#allocation10 + $0x278] sm:$0xff]
        %v3454 = vld [vmem:[#allocation10 + $0x280] sm:$0xff]
        %v3455 = vld [vmem:[#allocation10 + $0x288] sm:$0xff]
        %v3456 = vld [vmem:[#allocation10 + $0x290] sm:$0xff]
        %v3457 = vld [vmem:[#allocation10 + $0x298] sm:$0xff]
        %v3458 = vld [vmem:[#allocation10 + $0x2a0] sm:$0xff]
        %v3459 = vld [vmem:[#allocation10 + $0x2a8] sm:$0xff]
        %v3460 = vld [vmem:[#allocation10 + $0x2b0] sm:$0xff]
        %v3461 = vld [vmem:[#allocation10 + $0x2b8] sm:$0xff]
        %v3462 = vld [vmem:[#allocation10 + $0x2c0] sm:$0xff]
        %v3463 = vld [vmem:[#allocation10 + $0x2c8] sm:$0xff]
        %v3464 = vld [vmem:[#allocation10 + $0x2d0] sm:$0xff]
        %v3465 = vld [vmem:[#allocation10 + $0x2d8] sm:$0xff]
        %v3466 = vld [vmem:[#allocation10 + $0x2e0] sm:$0xff]
        %v3467 = vld [vmem:[#allocation10 + $0x2e8] sm:$0xff]
        %v3468 = vld [vmem:[#allocation10 + $0x2f0] sm:$0xff]
        %v3469 = vld [vmem:[#allocation10 + $0x2f8] sm:$0xff]
        %v3470 = vld [vmem:[#allocation10 + $0x300] sm:$0xff]
        %v3471 = vld [vmem:[#allocation10 + $0x308] sm:$0xff]
        %v3472 = vld [vmem:[#allocation10 + $0x310] sm:$0xff]
        %v3473 = vld [vmem:[#allocation10 + $0x318] sm:$0xff]
        %v3474 = vld [vmem:[#allocation10 + $0x320] sm:$0xff]
        %v3475 = vld [vmem:[#allocation10 + $0x328] sm:$0xff]
        %v3476 = vld [vmem:[#allocation10 + $0x330] sm:$0xff]
        %v3477 = vld [vmem:[#allocation10 + $0x338] sm:$0xff]
        %v3478 = vld [vmem:[#allocation10 + $0x340] sm:$0xff]
        %v3479 = vld [vmem:[#allocation10 + $0x348] sm:$0xff]
        %v3480 = vld [vmem:[#allocation10 + $0x350] sm:$0xff]
        %v3481 = vld [vmem:[#allocation10 + $0x358] sm:$0xff]
        %v3482 = vld [vmem:[#allocation10 + $0x360] sm:$0xff]
        %v3483 = vld [vmem:[#allocation10 + $0x368] sm:$0xff]
        %v3484 = vld [vmem:[#allocation10 + $0x370] sm:$0xff]
        %v3485 = vld [vmem:[#allocation10 + $0x378] sm:$0xff]
        %v3486 = vld [vmem:[#allocation10 + $0x380] sm:$0xff]
        %v3487 = vld [vmem:[#allocation10 + $0x388] sm:$0xff]
        %v3488 = vld [vmem:[#allocation10 + $0x390] sm:$0xff]
        %v3489 = vld [vmem:[#allocation10 + $0x398] sm:$0xff]
        %v3490 = vld [vmem:[#allocation10 + $0x3a0] sm:$0xff]
        %v3491 = vld [vmem:[#allocation10 + $0x3a8] sm:$0xff]
        %v3492 = vld [vmem:[#allocation10 + $0x3b0] sm:$0xff]
        %v3493 = vld [vmem:[#allocation10 + $0x3b8] sm:$0xff]
        %v3494 = vld [vmem:[#allocation10 + $0x3c0] sm:$0xff]
        %v3495 = vld [vmem:[#allocation10 + $0x3c8] sm:$0xff]
        %v3496 = vld [vmem:[#allocation10 + $0x3d0] sm:$0xff]
        %v3497 = vld [vmem:[#allocation10 + $0x3d8] sm:$0xff]
        %v3498 = vld [vmem:[#allocation10 + $0x3e0] sm:$0xff]
        %v3499 = vld [vmem:[#allocation10 + $0x3e8] sm:$0xff]
        %v3500 = vld [vmem:[#allocation10 + $0x3f0] sm:$0xff]
        %v3501 = vld [vmem:[#allocation10 + $0x3f8] sm:$0xff]
        %v3502 = vld [vmem:[#allocation10 + $0x400] sm:$0xff]
        %v3503 = vld [vmem:[#allocation10 + $0x408] sm:$0xff]
        %v3504 = vld [vmem:[#allocation10 + $0x410] sm:$0xff]
        %v3505 = vld [vmem:[#allocation10 + $0x418] sm:$0xff]
        %v3506 = vld [vmem:[#allocation10 + $0x420] sm:$0xff]
        %v3507 = vld [vmem:[#allocation10 + $0x428] sm:$0xff]
        %v3508 = vld [vmem:[#allocation10 + $0x430] sm:$0xff]
        %v3509 = vld [vmem:[#allocation10 + $0x438] sm:$0xff]
        %v3510 = vld [vmem:[#allocation10 + $0x440] sm:$0xff]
        %v3511 = vld [vmem:[#allocation10 + $0x448] sm:$0xff]
        %v3512 = vld [vmem:[#allocation10 + $0x450] sm:$0xff]
        %v3513 = vld [vmem:[#allocation10 + $0x458] sm:$0xff]
        %v3514 = vld [vmem:[#allocation10 + $0x460] sm:$0xff]
        %v3515 = vld [vmem:[#allocation10 + $0x468] sm:$0xff]
        %v3516 = vld [vmem:[#allocation10 + $0x470] sm:$0xff]
        %v3517 = vld [vmem:[#allocation10 + $0x478] sm:$0xff]
        %v3518 = vld [vmem:[#allocation10 + $0x480] sm:$0xff]
        %v3519 = vld [vmem:[#allocation10 + $0x488] sm:$0xff]
        %v3520 = vld [vmem:[#allocation10 + $0x490] sm:$0xff]
        %v3521 = vld [vmem:[#allocation10 + $0x498] sm:$0xff]
        %v3522 = vld [vmem:[#allocation10 + $0x4a0] sm:$0xff]
        %v3523 = vld [vmem:[#allocation10 + $0x4a8] sm:$0xff]
        %v3524 = vld [vmem:[#allocation10 + $0x4b0] sm:$0xff]
        %v3525 = vld [vmem:[#allocation10 + $0x4b8] sm:$0xff]
        %v3526 = vld [vmem:[#allocation10 + $0x4c0] sm:$0xff]
        %v3527 = vld [vmem:[#allocation10 + $0x4c8] sm:$0xff]
        %v3528 = vld [vmem:[#allocation10 + $0x4d0] sm:$0xff]
        %v3529 = vld [vmem:[#allocation10 + $0x4d8] sm:$0xff]
        %v3530 = vld [vmem:[#allocation10 + $0x4e0] sm:$0xff]
        %v3531 = vld [vmem:[#allocation10 + $0x4e8] sm:$0xff]
        %v3532 = vld [vmem:[#allocation10 + $0x4f0] sm:$0xff]
        %v3533 = vld [vmem:[#allocation10 + $0x4f8] sm:$0xff]
        %v3534 = vld [vmem:[#allocation10 + $0x500] sm:$0xff]
        %v3535 = vld [vmem:[#allocation10 + $0x508] sm:$0xff]
        %v3536 = vld [vmem:[#allocation10 + $0x510] sm:$0xff]
        %v3537 = vld [vmem:[#allocation10 + $0x518] sm:$0xff]
        %v3538 = vld [vmem:[#allocation10 + $0x520] sm:$0xff]
        %v3539 = vld [vmem:[#allocation10 + $0x528] sm:$0xff]
        %v3540 = vld [vmem:[#allocation10 + $0x530] sm:$0xff]
        %v3541 = vld [vmem:[#allocation10 + $0x538] sm:$0xff]
        %v3542 = vld [vmem:[#allocation10 + $0x540] sm:$0xff]
        %v3543 = vld [vmem:[#allocation10 + $0x548] sm:$0xff]
        %v3544 = vld [vmem:[#allocation10 + $0x550] sm:$0xff]
        %v3545 = vld [vmem:[#allocation10 + $0x558] sm:$0xff]
        %v3546 = vld [vmem:[#allocation10 + $0x560] sm:$0xff]
        %v3547 = vld [vmem:[#allocation10 + $0x568] sm:$0xff]
        %v3548 = vld [vmem:[#allocation10 + $0x570] sm:$0xff]
        %v3549 = vld [vmem:[#allocation10 + $0x578] sm:$0xff]
        %v3550 = vld [vmem:[#allocation10 + $0x580] sm:$0xff]
        %v3551 = vld [vmem:[#allocation10 + $0x588] sm:$0xff]
        %v3552 = vld [vmem:[#allocation10 + $0x590] sm:$0xff]
        %v3553 = vld [vmem:[#allocation10 + $0x598] sm:$0xff]
        %v3554 = vld [vmem:[#allocation10 + $0x5a0] sm:$0xff]
        %v3555 = vld [vmem:[#allocation10 + $0x5a8] sm:$0xff]
        %v3556 = vld [vmem:[#allocation10 + $0x5b0] sm:$0xff]
        %v3557 = vld [vmem:[#allocation10 + $0x5b8] sm:$0xff]
        %v3558 = vld [vmem:[#allocation10 + $0x5c0] sm:$0xff]
        %v3559 = vld [vmem:[#allocation10 + $0x5c8] sm:$0xff]
        %v3560 = vld [vmem:[#allocation10 + $0x5d0] sm:$0xff]
        %v3561 = vld [vmem:[#allocation10 + $0x5d8] sm:$0xff]
        %v3562 = vld [vmem:[#allocation10 + $0x5e0] sm:$0xff]
        %v3563 = vld [vmem:[#allocation10 + $0x5e8] sm:$0xff]
        %v3564 = vld [vmem:[#allocation10 + $0x5f0] sm:$0xff]
        %v3565 = vld [vmem:[#allocation10 + $0x5f8] sm:$0xff]
        %v3758 = vunpack.c.l.b16 %v3374
        %v3759 = vunpack.c.h.b16 %v3374
        %v3760 = vunpack.c.l.b16 %v3375
        %v3761 = vunpack.c.h.b16 %v3375
        %v3762 = vunpack.c.l.b16 %v3376
        %v3763 = vunpack.c.h.b16 %v3376
        %v3764 = vunpack.c.l.b16 %v3377
        %v3765 = vunpack.c.h.b16 %v3377
        %v3766 = vunpack.c.l.b16 %v3378
        %v3767 = vunpack.c.h.b16 %v3378
        %v3768 = vunpack.c.l.b16 %v3379
        %v3769 = vunpack.c.h.b16 %v3379
        %v3770 = vunpack.c.l.b16 %v3380
        %v3771 = vunpack.c.h.b16 %v3380
        %v3772 = vunpack.c.l.b16 %v3381
        %v3773 = vunpack.c.h.b16 %v3381
        %v3774 = vunpack.c.l.b16 %v3382
        %v3775 = vunpack.c.h.b16 %v3382
        %v3776 = vunpack.c.l.b16 %v3383
        %v3777 = vunpack.c.h.b16 %v3383
        %v3778 = vunpack.c.l.b16 %v3384
        %v3779 = vunpack.c.h.b16 %v3384
        %v3780 = vunpack.c.l.b16 %v3385
        %v3781 = vunpack.c.h.b16 %v3385
        %v3782 = vunpack.c.l.b16 %v3386
        %v3783 = vunpack.c.h.b16 %v3386
        %v3784 = vunpack.c.l.b16 %v3387
        %v3785 = vunpack.c.h.b16 %v3387
        %v3786 = vunpack.c.l.b16 %v3388
        %v3787 = vunpack.c.h.b16 %v3388
        %v3788 = vunpack.c.l.b16 %v3389
        %v3789 = vunpack.c.h.b16 %v3389
        %v3790 = vunpack.c.l.b16 %v3390
        %v3791 = vunpack.c.h.b16 %v3390
        %v3792 = vunpack.c.l.b16 %v3391
        %v3793 = vunpack.c.h.b16 %v3391
        %v3794 = vunpack.c.l.b16 %v3392
        %v3795 = vunpack.c.h.b16 %v3392
        %v3796 = vunpack.c.l.b16 %v3393
        %v3797 = vunpack.c.h.b16 %v3393
        %v3798 = vunpack.c.l.b16 %v3394
        %v3799 = vunpack.c.h.b16 %v3394
        %v3800 = vunpack.c.l.b16 %v3395
        %v3801 = vunpack.c.h.b16 %v3395
        %v3802 = vunpack.c.l.b16 %v3396
        %v3803 = vunpack.c.h.b16 %v3396
        %v3804 = vunpack.c.l.b16 %v3397
        %v3805 = vunpack.c.h.b16 %v3397
        %v3806 = vunpack.c.l.b16 %v3398
        %v3807 = vunpack.c.h.b16 %v3398
        %v3808 = vunpack.c.l.b16 %v3399
        %v3809 = vunpack.c.h.b16 %v3399
        %v3810 = vunpack.c.l.b16 %v3400
        %v3811 = vunpack.c.h.b16 %v3400
        %v3812 = vunpack.c.l.b16 %v3401
        %v3813 = vunpack.c.h.b16 %v3401
        %v3814 = vunpack.c.l.b16 %v3402
        %v3815 = vunpack.c.h.b16 %v3402
        %v3816 = vunpack.c.l.b16 %v3403
        %v3817 = vunpack.c.h.b16 %v3403
        %v3818 = vunpack.c.l.b16 %v3404
        %v3819 = vunpack.c.h.b16 %v3404
        %v3820 = vunpack.c.l.b16 %v3405
        %v3821 = vunpack.c.h.b16 %v3405
        %v3822 = vunpack.c.l.b16 %v3406
        %v3823 = vunpack.c.h.b16 %v3406
        %v3824 = vunpack.c.l.b16 %v3407
        %v3825 = vunpack.c.h.b16 %v3407
        %v3826 = vunpack.c.l.b16 %v3408
        %v3827 = vunpack.c.h.b16 %v3408
        %v3828 = vunpack.c.l.b16 %v3409
        %v3829 = vunpack.c.h.b16 %v3409
        %v3830 = vunpack.c.l.b16 %v3410
        %v3831 = vunpack.c.h.b16 %v3410
        %v3832 = vunpack.c.l.b16 %v3411
        %v3833 = vunpack.c.h.b16 %v3411
        %v3834 = vunpack.c.l.b16 %v3412
        %v3835 = vunpack.c.h.b16 %v3412
        %v3836 = vunpack.c.l.b16 %v3413
        %v3837 = vunpack.c.h.b16 %v3413
        %v3838 = vunpack.c.l.b16 %v3414
        %v3839 = vunpack.c.h.b16 %v3414
        %v3840 = vunpack.c.l.b16 %v3415
        %v3841 = vunpack.c.h.b16 %v3415
        %v3842 = vunpack.c.l.b16 %v3416
        %v3843 = vunpack.c.h.b16 %v3416
        %v3844 = vunpack.c.l.b16 %v3417
        %v3845 = vunpack.c.h.b16 %v3417
        %v3846 = vunpack.c.l.b16 %v3418
        %v3847 = vunpack.c.h.b16 %v3418
        %v3848 = vunpack.c.l.b16 %v3419
        %v3849 = vunpack.c.h.b16 %v3419
        %v3850 = vunpack.c.l.b16 %v3420
        %v3851 = vunpack.c.h.b16 %v3420
        %v3852 = vunpack.c.l.b16 %v3421
        %v3853 = vunpack.c.h.b16 %v3421
        %v3854 = vunpack.c.l.b16 %v3422
        %v3855 = vunpack.c.h.b16 %v3422
        %v3856 = vunpack.c.l.b16 %v3423
        %v3857 = vunpack.c.h.b16 %v3423
        %v3858 = vunpack.c.l.b16 %v3424
        %v3859 = vunpack.c.h.b16 %v3424
        %v3860 = vunpack.c.l.b16 %v3425
        %v3861 = vunpack.c.h.b16 %v3425
        %v3862 = vunpack.c.l.b16 %v3426
        %v3863 = vunpack.c.h.b16 %v3426
        %v3864 = vunpack.c.l.b16 %v3427
        %v3865 = vunpack.c.h.b16 %v3427
        %v3866 = vunpack.c.l.b16 %v3428
        %v3867 = vunpack.c.h.b16 %v3428
        %v3868 = vunpack.c.l.b16 %v3429
        %v3869 = vunpack.c.h.b16 %v3429
        %v3870 = vunpack.c.l.b16 %v3430
        %v3871 = vunpack.c.h.b16 %v3430
        %v3872 = vunpack.c.l.b16 %v3431
        %v3873 = vunpack.c.h.b16 %v3431
        %v3874 = vunpack.c.l.b16 %v3432
        %v3875 = vunpack.c.h.b16 %v3432
        %v3876 = vunpack.c.l.b16 %v3433
        %v3877 = vunpack.c.h.b16 %v3433
        %v3878 = vunpack.c.l.b16 %v3434
        %v3879 = vunpack.c.h.b16 %v3434
        %v3880 = vunpack.c.l.b16 %v3435
        %v3881 = vunpack.c.h.b16 %v3435
        %v3882 = vunpack.c.l.b16 %v3436
        %v3883 = vunpack.c.h.b16 %v3436
        %v3884 = vunpack.c.l.b16 %v3437
        %v3885 = vunpack.c.h.b16 %v3437
        %v3886 = vunpack.c.l.b16 %v3438
        %v3887 = vunpack.c.h.b16 %v3438
        %v3888 = vunpack.c.l.b16 %v3439
        %v3889 = vunpack.c.h.b16 %v3439
        %v3890 = vunpack.c.l.b16 %v3440
        %v3891 = vunpack.c.h.b16 %v3440
        %v3892 = vunpack.c.l.b16 %v3441
        %v3893 = vunpack.c.h.b16 %v3441
        %v3894 = vunpack.c.l.b16 %v3442
        %v3895 = vunpack.c.h.b16 %v3442
        %v3896 = vunpack.c.l.b16 %v3443
        %v3897 = vunpack.c.h.b16 %v3443
        %v3898 = vunpack.c.l.b16 %v3444
        %v3899 = vunpack.c.h.b16 %v3444
        %v3900 = vunpack.c.l.b16 %v3445
        %v3901 = vunpack.c.h.b16 %v3445
        %v3902 = vunpack.c.l.b16 %v3446
        %v3903 = vunpack.c.h.b16 %v3446
        %v3904 = vunpack.c.l.b16 %v3447
        %v3905 = vunpack.c.h.b16 %v3447
        %v3906 = vunpack.c.l.b16 %v3448
        %v3907 = vunpack.c.h.b16 %v3448
        %v3908 = vunpack.c.l.b16 %v3449
        %v3909 = vunpack.c.h.b16 %v3449
        %v3910 = vunpack.c.l.b16 %v3450
        %v3911 = vunpack.c.h.b16 %v3450
        %v3912 = vunpack.c.l.b16 %v3451
        %v3913 = vunpack.c.h.b16 %v3451
        %v3914 = vunpack.c.l.b16 %v3452
        %v3915 = vunpack.c.h.b16 %v3452
        %v3916 = vunpack.c.l.b16 %v3453
        %v3917 = vunpack.c.h.b16 %v3453
        %v3918 = vunpack.c.l.b16 %v3454
        %v3919 = vunpack.c.h.b16 %v3454
        %v3920 = vunpack.c.l.b16 %v3455
        %v3921 = vunpack.c.h.b16 %v3455
        %v3922 = vunpack.c.l.b16 %v3456
        %v3923 = vunpack.c.h.b16 %v3456
        %v3924 = vunpack.c.l.b16 %v3457
        %v3925 = vunpack.c.h.b16 %v3457
        %v3926 = vunpack.c.l.b16 %v3458
        %v3927 = vunpack.c.h.b16 %v3458
        %v3928 = vunpack.c.l.b16 %v3459
        %v3929 = vunpack.c.h.b16 %v3459
        %v3930 = vunpack.c.l.b16 %v3460
        %v3931 = vunpack.c.h.b16 %v3460
        %v3932 = vunpack.c.l.b16 %v3461
        %v3933 = vunpack.c.h.b16 %v3461
        %v3934 = vunpack.c.l.b16 %v3462
        %v3935 = vunpack.c.h.b16 %v3462
        %v3936 = vunpack.c.l.b16 %v3463
        %v3937 = vunpack.c.h.b16 %v3463
        %v3938 = vunpack.c.l.b16 %v3464
        %v3939 = vunpack.c.h.b16 %v3464
        %v3940 = vunpack.c.l.b16 %v3465
        %v3941 = vunpack.c.h.b16 %v3465
        %v3942 = vunpack.c.l.b16 %v3466
        %v3943 = vunpack.c.h.b16 %v3466
        %v3944 = vunpack.c.l.b16 %v3467
        %v3945 = vunpack.c.h.b16 %v3467
        %v3946 = vunpack.c.l.b16 %v3468
        %v3947 = vunpack.c.h.b16 %v3468
        %v3948 = vunpack.c.l.b16 %v3469
        %v3949 = vunpack.c.h.b16 %v3469
        %v3950 = vunpack.c.l.b16 %v3470
        %v3951 = vunpack.c.h.b16 %v3470
        %v3952 = vunpack.c.l.b16 %v3471
        %v3953 = vunpack.c.h.b16 %v3471
        %v3954 = vunpack.c.l.b16 %v3472
        %v3955 = vunpack.c.h.b16 %v3472
        %v3956 = vunpack.c.l.b16 %v3473
        %v3957 = vunpack.c.h.b16 %v3473
        %v3958 = vunpack.c.l.b16 %v3474
        %v3959 = vunpack.c.h.b16 %v3474
        %v3960 = vunpack.c.l.b16 %v3475
        %v3961 = vunpack.c.h.b16 %v3475
        %v3962 = vunpack.c.l.b16 %v3476
        %v3963 = vunpack.c.h.b16 %v3476
        %v3964 = vunpack.c.l.b16 %v3477
        %v3965 = vunpack.c.h.b16 %v3477
        %v3966 = vunpack.c.l.b16 %v3478
        %v3967 = vunpack.c.h.b16 %v3478
        %v3968 = vunpack.c.l.b16 %v3479
        %v3969 = vunpack.c.h.b16 %v3479
        %v3970 = vunpack.c.l.b16 %v3480
        %v3971 = vunpack.c.h.b16 %v3480
        %v3972 = vunpack.c.l.b16 %v3481
        %v3973 = vunpack.c.h.b16 %v3481
        %v3974 = vunpack.c.l.b16 %v3482
        %v3975 = vunpack.c.h.b16 %v3482
        %v3976 = vunpack.c.l.b16 %v3483
        %v3977 = vunpack.c.h.b16 %v3483
        %v3978 = vunpack.c.l.b16 %v3484
        %v3979 = vunpack.c.h.b16 %v3484
        %v3980 = vunpack.c.l.b16 %v3485
        %v3981 = vunpack.c.h.b16 %v3485
        %v3982 = vunpack.c.l.b16 %v3486
        %v3983 = vunpack.c.h.b16 %v3486
        %v3984 = vunpack.c.l.b16 %v3487
        %v3985 = vunpack.c.h.b16 %v3487
        %v3986 = vunpack.c.l.b16 %v3488
        %v3987 = vunpack.c.h.b16 %v3488
        %v3988 = vunpack.c.l.b16 %v3489
        %v3989 = vunpack.c.h.b16 %v3489
        %v3990 = vunpack.c.l.b16 %v3490
        %v3991 = vunpack.c.h.b16 %v3490
        %v3992 = vunpack.c.l.b16 %v3491
        %v3993 = vunpack.c.h.b16 %v3491
        %v3994 = vunpack.c.l.b16 %v3492
        %v3995 = vunpack.c.h.b16 %v3492
        %v3996 = vunpack.c.l.b16 %v3493
        %v3997 = vunpack.c.h.b16 %v3493
        %v3998 = vunpack.c.l.b16 %v3494
        %v3999 = vunpack.c.h.b16 %v3494
        %v4000 = vunpack.c.l.b16 %v3495
        %v4001 = vunpack.c.h.b16 %v3495
        %v4002 = vunpack.c.l.b16 %v3496
        %v4003 = vunpack.c.h.b16 %v3496
        %v4004 = vunpack.c.l.b16 %v3497
        %v4005 = vunpack.c.h.b16 %v3497
        %v4006 = vunpack.c.l.b16 %v3498
        %v4007 = vunpack.c.h.b16 %v3498
        %v4008 = vunpack.c.l.b16 %v3499
        %v4009 = vunpack.c.h.b16 %v3499
        %v4010 = vunpack.c.l.b16 %v3500
        %v4011 = vunpack.c.h.b16 %v3500
        %v4012 = vunpack.c.l.b16 %v3501
        %v4013 = vunpack.c.h.b16 %v3501
        %v4014 = vunpack.c.l.b16 %v3502
        %v4015 = vunpack.c.h.b16 %v3502
        %v4016 = vunpack.c.l.b16 %v3503
        %v4017 = vunpack.c.h.b16 %v3503
        %v4018 = vunpack.c.l.b16 %v3504
        %v4019 = vunpack.c.h.b16 %v3504
        %v4020 = vunpack.c.l.b16 %v3505
        %v4021 = vunpack.c.h.b16 %v3505
        %v4022 = vunpack.c.l.b16 %v3506
        %v4023 = vunpack.c.h.b16 %v3506
        %v4024 = vunpack.c.l.b16 %v3507
        %v4025 = vunpack.c.h.b16 %v3507
        %v4026 = vunpack.c.l.b16 %v3508
        %v4027 = vunpack.c.h.b16 %v3508
        %v4028 = vunpack.c.l.b16 %v3509
        %v4029 = vunpack.c.h.b16 %v3509
        %v4030 = vunpack.c.l.b16 %v3510
        %v4031 = vunpack.c.h.b16 %v3510
        %v4032 = vunpack.c.l.b16 %v3511
        %v4033 = vunpack.c.h.b16 %v3511
        %v4034 = vunpack.c.l.b16 %v3512
        %v4035 = vunpack.c.h.b16 %v3512
        %v4036 = vunpack.c.l.b16 %v3513
        %v4037 = vunpack.c.h.b16 %v3513
        %v4038 = vunpack.c.l.b16 %v3514
        %v4039 = vunpack.c.h.b16 %v3514
        %v4040 = vunpack.c.l.b16 %v3515
        %v4041 = vunpack.c.h.b16 %v3515
        %v4042 = vunpack.c.l.b16 %v3516
        %v4043 = vunpack.c.h.b16 %v3516
        %v4044 = vunpack.c.l.b16 %v3517
        %v4045 = vunpack.c.h.b16 %v3517
        %v4046 = vunpack.c.l.b16 %v3518
        %v4047 = vunpack.c.h.b16 %v3518
        %v4048 = vunpack.c.l.b16 %v3519
        %v4049 = vunpack.c.h.b16 %v3519
        %v4050 = vunpack.c.l.b16 %v3520
        %v4051 = vunpack.c.h.b16 %v3520
        %v4052 = vunpack.c.l.b16 %v3521
        %v4053 = vunpack.c.h.b16 %v3521
        %v4054 = vunpack.c.l.b16 %v3522
        %v4055 = vunpack.c.h.b16 %v3522
        %v4056 = vunpack.c.l.b16 %v3523
        %v4057 = vunpack.c.h.b16 %v3523
        %v4058 = vunpack.c.l.b16 %v3524
        %v4059 = vunpack.c.h.b16 %v3524
        %v4060 = vunpack.c.l.b16 %v3525
        %v4061 = vunpack.c.h.b16 %v3525
        %v4062 = vunpack.c.l.b16 %v3526
        %v4063 = vunpack.c.h.b16 %v3526
        %v4064 = vunpack.c.l.b16 %v3527
        %v4065 = vunpack.c.h.b16 %v3527
        %v4066 = vunpack.c.l.b16 %v3528
        %v4067 = vunpack.c.h.b16 %v3528
        %v4068 = vunpack.c.l.b16 %v3529
        %v4069 = vunpack.c.h.b16 %v3529
        %v4070 = vunpack.c.l.b16 %v3530
        %v4071 = vunpack.c.h.b16 %v3530
        %v4072 = vunpack.c.l.b16 %v3531
        %v4073 = vunpack.c.h.b16 %v3531
        %v4074 = vunpack.c.l.b16 %v3532
        %v4075 = vunpack.c.h.b16 %v3532
        %v4076 = vunpack.c.l.b16 %v3533
        %v4077 = vunpack.c.h.b16 %v3533
        %v4078 = vunpack.c.l.b16 %v3534
        %v4079 = vunpack.c.h.b16 %v3534
        %v4080 = vunpack.c.l.b16 %v3535
        %v4081 = vunpack.c.h.b16 %v3535
        %v4082 = vunpack.c.l.b16 %v3536
        %v4083 = vunpack.c.h.b16 %v3536
        %v4084 = vunpack.c.l.b16 %v3537
        %v4085 = vunpack.c.h.b16 %v3537
        %v4086 = vunpack.c.l.b16 %v3538
        %v4087 = vunpack.c.h.b16 %v3538
        %v4088 = vunpack.c.l.b16 %v3539
        %v4089 = vunpack.c.h.b16 %v3539
        %v4090 = vunpack.c.l.b16 %v3540
        %v4091 = vunpack.c.h.b16 %v3540
        %v4092 = vunpack.c.l.b16 %v3541
        %v4093 = vunpack.c.h.b16 %v3541
        %v4094 = vunpack.c.l.b16 %v3542
        %v4095 = vunpack.c.h.b16 %v3542
        %v4096 = vunpack.c.l.b16 %v3543
        %v4097 = vunpack.c.h.b16 %v3543
        %v4098 = vunpack.c.l.b16 %v3544
        %v4099 = vunpack.c.h.b16 %v3544
        %v4100 = vunpack.c.l.b16 %v3545
        %v4101 = vunpack.c.h.b16 %v3545
        %v4102 = vunpack.c.l.b16 %v3546
        %v4103 = vunpack.c.h.b16 %v3546
        %v4104 = vunpack.c.l.b16 %v3547
        %v4105 = vunpack.c.h.b16 %v3547
        %v4106 = vunpack.c.l.b16 %v3548
        %v4107 = vunpack.c.h.b16 %v3548
        %v4108 = vunpack.c.l.b16 %v3549
        %v4109 = vunpack.c.h.b16 %v3549
        %v4110 = vunpack.c.l.b16 %v3550
        %v4111 = vunpack.c.h.b16 %v3550
        %v4112 = vunpack.c.l.b16 %v3551
        %v4113 = vunpack.c.h.b16 %v3551
        %v4114 = vunpack.c.l.b16 %v3552
        %v4115 = vunpack.c.h.b16 %v3552
        %v4116 = vunpack.c.l.b16 %v3553
        %v4117 = vunpack.c.h.b16 %v3553
        %v4118 = vunpack.c.l.b16 %v3554
        %v4119 = vunpack.c.h.b16 %v3554
        %v4120 = vunpack.c.l.b16 %v3555
        %v4121 = vunpack.c.h.b16 %v3555
        %v4122 = vunpack.c.l.b16 %v3556
        %v4123 = vunpack.c.h.b16 %v3556
        %v4124 = vunpack.c.l.b16 %v3557
        %v4125 = vunpack.c.h.b16 %v3557
        %v4126 = vunpack.c.l.b16 %v3558
        %v4127 = vunpack.c.h.b16 %v3558
        %v4128 = vunpack.c.l.b16 %v3559
        %v4129 = vunpack.c.h.b16 %v3559
        %v4130 = vunpack.c.l.b16 %v3560
        %v4131 = vunpack.c.h.b16 %v3560
        %v4132 = vunpack.c.l.b16 %v3561
        %v4133 = vunpack.c.h.b16 %v3561
        %v4134 = vunpack.c.l.b16 %v3562
        %v4135 = vunpack.c.h.b16 %v3562
        %v4136 = vunpack.c.l.b16 %v3563
        %v4137 = vunpack.c.h.b16 %v3563
        %v4138 = vunpack.c.l.b16 %v3564
        %v4139 = vunpack.c.h.b16 %v3564
        %v4140 = vunpack.c.l.b16 %v3565
        %v4141 = vunpack.c.h.b16 %v3565
        %v4142 = vpack.c.b16 %v3762, %v3758
        %v4143 = vpack.c.b16 %v3763, %v3759
        %v4144 = vpack.c.b16 %v3764, %v3760
        %v4145 = vpack.c.b16 %v3765, %v3761
        %v4146 = vpack.c.b16 %v3770, %v3766
        %v4147 = vpack.c.b16 %v3771, %v3767
        %v4148 = vpack.c.b16 %v3772, %v3768
        %v4149 = vpack.c.b16 %v3773, %v3769
        %v4150 = vpack.c.b16 %v3778, %v3774
        %v4151 = vpack.c.b16 %v3779, %v3775
        %v4152 = vpack.c.b16 %v3780, %v3776
        %v4153 = vpack.c.b16 %v3781, %v3777
        %v4154 = vpack.c.b16 %v3786, %v3782
        %v4155 = vpack.c.b16 %v3787, %v3783
        %v4156 = vpack.c.b16 %v3788, %v3784
        %v4157 = vpack.c.b16 %v3789, %v3785
        %v4158 = vpack.c.b16 %v3794, %v3790
        %v4159 = vpack.c.b16 %v3795, %v3791
        %v4160 = vpack.c.b16 %v3796, %v3792
        %v4161 = vpack.c.b16 %v3797, %v3793
        %v4162 = vpack.c.b16 %v3802, %v3798
        %v4163 = vpack.c.b16 %v3803, %v3799
        %v4164 = vpack.c.b16 %v3804, %v3800
        %v4165 = vpack.c.b16 %v3805, %v3801
        %v4166 = vpack.c.b16 %v3810, %v3806
        %v4167 = vpack.c.b16 %v3811, %v3807
        %v4168 = vpack.c.b16 %v3812, %v3808
        %v4169 = vpack.c.b16 %v3813, %v3809
        %v4170 = vpack.c.b16 %v3818, %v3814
        %v4171 = vpack.c.b16 %v3819, %v3815
        %v4172 = vpack.c.b16 %v3820, %v3816
        %v4173 = vpack.c.b16 %v3821, %v3817
        %v4174 = vpack.c.b16 %v3826, %v3822
        %v4175 = vpack.c.b16 %v3827, %v3823
        %v4176 = vpack.c.b16 %v3828, %v3824
        %v4177 = vpack.c.b16 %v3829, %v3825
        %v4178 = vpack.c.b16 %v3834, %v3830
        %v4179 = vpack.c.b16 %v3835, %v3831
        %v4180 = vpack.c.b16 %v3836, %v3832
        %v4181 = vpack.c.b16 %v3837, %v3833
        %v4182 = vpack.c.b16 %v3842, %v3838
        %v4183 = vpack.c.b16 %v3843, %v3839
        %v4184 = vpack.c.b16 %v3844, %v3840
        %v4185 = vpack.c.b16 %v3845, %v3841
        %v4186 = vpack.c.b16 %v3850, %v3846
        %v4187 = vpack.c.b16 %v3851, %v3847
        %v4188 = vpack.c.b16 %v3852, %v3848
        %v4189 = vpack.c.b16 %v3853, %v3849
        %v4190 = vpack.c.b16 %v3858, %v3854
        %v4191 = vpack.c.b16 %v3859, %v3855
        %v4192 = vpack.c.b16 %v3860, %v3856
        %v4193 = vpack.c.b16 %v3861, %v3857
        %v4194 = vpack.c.b16 %v3866, %v3862
        %v4195 = vpack.c.b16 %v3867, %v3863
        %v4196 = vpack.c.b16 %v3868, %v3864
        %v4197 = vpack.c.b16 %v3869, %v3865
        %v4198 = vpack.c.b16 %v3874, %v3870
        %v4199 = vpack.c.b16 %v3875, %v3871
        %v4200 = vpack.c.b16 %v3876, %v3872
        %v4201 = vpack.c.b16 %v3877, %v3873
        %v4202 = vpack.c.b16 %v3882, %v3878
        %v4203 = vpack.c.b16 %v3883, %v3879
        %v4204 = vpack.c.b16 %v3884, %v3880
        %v4205 = vpack.c.b16 %v3885, %v3881
        %v4206 = vpack.c.b16 %v3890, %v3886
        %v4207 = vpack.c.b16 %v3891, %v3887
        %v4208 = vpack.c.b16 %v3892, %v3888
        %v4209 = vpack.c.b16 %v3893, %v3889
        %v4210 = vpack.c.b16 %v3898, %v3894
        %v4211 = vpack.c.b16 %v3899, %v3895
        %v4212 = vpack.c.b16 %v3900, %v3896
        %v4213 = vpack.c.b16 %v3901, %v3897
        %v4214 = vpack.c.b16 %v3906, %v3902
        %v4215 = vpack.c.b16 %v3907, %v3903
        %v4216 = vpack.c.b16 %v3908, %v3904
        %v4217 = vpack.c.b16 %v3909, %v3905
        %v4218 = vpack.c.b16 %v3914, %v3910
        %v4219 = vpack.c.b16 %v3915, %v3911
        %v4220 = vpack.c.b16 %v3916, %v3912
        %v4221 = vpack.c.b16 %v3917, %v3913
        %v4222 = vpack.c.b16 %v3922, %v3918
        %v4223 = vpack.c.b16 %v3923, %v3919
        %v4224 = vpack.c.b16 %v3924, %v3920
        %v4225 = vpack.c.b16 %v3925, %v3921
        %v4226 = vpack.c.b16 %v3930, %v3926
        %v4227 = vpack.c.b16 %v3931, %v3927
        %v4228 = vpack.c.b16 %v3932, %v3928
        %v4229 = vpack.c.b16 %v3933, %v3929
        %v4230 = vpack.c.b16 %v3938, %v3934
        %v4231 = vpack.c.b16 %v3939, %v3935
        %v4232 = vpack.c.b16 %v3940, %v3936
        %v4233 = vpack.c.b16 %v3941, %v3937
        %v4234 = vpack.c.b16 %v3946, %v3942
        %v4235 = vpack.c.b16 %v3947, %v3943
        %v4236 = vpack.c.b16 %v3948, %v3944
        %v4237 = vpack.c.b16 %v3949, %v3945
        %v4238 = vpack.c.b16 %v3954, %v3950
        %v4239 = vpack.c.b16 %v3955, %v3951
        %v4240 = vpack.c.b16 %v3956, %v3952
        %v4241 = vpack.c.b16 %v3957, %v3953
        %v4242 = vpack.c.b16 %v3962, %v3958
        %v4243 = vpack.c.b16 %v3963, %v3959
        %v4244 = vpack.c.b16 %v3964, %v3960
        %v4245 = vpack.c.b16 %v3965, %v3961
        %v4246 = vpack.c.b16 %v3970, %v3966
        %v4247 = vpack.c.b16 %v3971, %v3967
        %v4248 = vpack.c.b16 %v3972, %v3968
        %v4249 = vpack.c.b16 %v3973, %v3969
        %v4250 = vpack.c.b16 %v3978, %v3974
        %v4251 = vpack.c.b16 %v3979, %v3975
        %v4252 = vpack.c.b16 %v3980, %v3976
        %v4253 = vpack.c.b16 %v3981, %v3977
        %v4254 = vpack.c.b16 %v3986, %v3982
        %v4255 = vpack.c.b16 %v3987, %v3983
        %v4256 = vpack.c.b16 %v3988, %v3984
        %v4257 = vpack.c.b16 %v3989, %v3985
        %v4258 = vpack.c.b16 %v3994, %v3990
        %v4259 = vpack.c.b16 %v3995, %v3991
        %v4260 = vpack.c.b16 %v3996, %v3992
        %v4261 = vpack.c.b16 %v3997, %v3993
        %v4262 = vpack.c.b16 %v4002, %v3998
        %v4263 = vpack.c.b16 %v4003, %v3999
        %v4264 = vpack.c.b16 %v4004, %v4000
        %v4265 = vpack.c.b16 %v4005, %v4001
        %v4266 = vpack.c.b16 %v4010, %v4006
        %v4267 = vpack.c.b16 %v4011, %v4007
        %v4268 = vpack.c.b16 %v4012, %v4008
        %v4269 = vpack.c.b16 %v4013, %v4009
        %v4270 = vpack.c.b16 %v4018, %v4014
        %v4271 = vpack.c.b16 %v4019, %v4015
        %v4272 = vpack.c.b16 %v4020, %v4016
        %v4273 = vpack.c.b16 %v4021, %v4017
        %v4274 = vpack.c.b16 %v4026, %v4022
        %v4275 = vpack.c.b16 %v4027, %v4023
        %v4276 = vpack.c.b16 %v4028, %v4024
        %v4277 = vpack.c.b16 %v4029, %v4025
        %v4278 = vpack.c.b16 %v4034, %v4030
        %v4279 = vpack.c.b16 %v4035, %v4031
        %v4280 = vpack.c.b16 %v4036, %v4032
        %v4281 = vpack.c.b16 %v4037, %v4033
        %v4282 = vpack.c.b16 %v4042, %v4038
        %v4283 = vpack.c.b16 %v4043, %v4039
        %v4284 = vpack.c.b16 %v4044, %v4040
        %v4285 = vpack.c.b16 %v4045, %v4041
        %v4286 = vpack.c.b16 %v4050, %v4046
        %v4287 = vpack.c.b16 %v4051, %v4047
        %v4288 = vpack.c.b16 %v4052, %v4048
        %v4289 = vpack.c.b16 %v4053, %v4049
        %v4290 = vpack.c.b16 %v4058, %v4054
        %v4291 = vpack.c.b16 %v4059, %v4055
        %v4292 = vpack.c.b16 %v4060, %v4056
        %v4293 = vpack.c.b16 %v4061, %v4057
        %v4294 = vpack.c.b16 %v4066, %v4062
        %v4295 = vpack.c.b16 %v4067, %v4063
        %v4296 = vpack.c.b16 %v4068, %v4064
        %v4297 = vpack.c.b16 %v4069, %v4065
        %v4298 = vpack.c.b16 %v4074, %v4070
        %v4299 = vpack.c.b16 %v4075, %v4071
        %v4300 = vpack.c.b16 %v4076, %v4072
        %v4301 = vpack.c.b16 %v4077, %v4073
        %v4302 = vpack.c.b16 %v4082, %v4078
        %v4303 = vpack.c.b16 %v4083, %v4079
        %v4304 = vpack.c.b16 %v4084, %v4080
        %v4305 = vpack.c.b16 %v4085, %v4081
        %v4306 = vpack.c.b16 %v4090, %v4086
        %v4307 = vpack.c.b16 %v4091, %v4087
        %v4308 = vpack.c.b16 %v4092, %v4088
        %v4309 = vpack.c.b16 %v4093, %v4089
        %v4310 = vpack.c.b16 %v4098, %v4094
        %v4311 = vpack.c.b16 %v4099, %v4095
        %v4312 = vpack.c.b16 %v4100, %v4096
        %v4313 = vpack.c.b16 %v4101, %v4097
        %v4314 = vpack.c.b16 %v4106, %v4102
        %v4315 = vpack.c.b16 %v4107, %v4103
        %v4316 = vpack.c.b16 %v4108, %v4104
        %v4317 = vpack.c.b16 %v4109, %v4105
        %v4318 = vpack.c.b16 %v4114, %v4110
        %v4319 = vpack.c.b16 %v4115, %v4111
        %v4320 = vpack.c.b16 %v4116, %v4112
        %v4321 = vpack.c.b16 %v4117, %v4113
        %v4322 = vpack.c.b16 %v4122, %v4118
        %v4323 = vpack.c.b16 %v4123, %v4119
        %v4324 = vpack.c.b16 %v4124, %v4120
        %v4325 = vpack.c.b16 %v4125, %v4121
        %v4326 = vpack.c.b16 %v4130, %v4126
        %v4327 = vpack.c.b16 %v4131, %v4127
        %v4328 = vpack.c.b16 %v4132, %v4128
        %v4329 = vpack.c.b16 %v4133, %v4129
        %v4330 = vpack.c.b16 %v4138, %v4134
        %v4331 = vpack.c.b16 %v4139, %v4135
        %v4332 = vpack.c.b16 %v4140, %v4136
        %v4333 = vpack.c.b16 %v4141, %v4137
        %4526 = vmatprep.subr.bf16.mxu0 %v4171
        %4527 = vmatpush1.bf16.msra.mxu0 %v4170
        %4528 = vmatprep.subr.bf16.mxu0 %v4167
        %4529 = vmatpush1.bf16.msra.mxu0 %v4166
        %4530 = vmatprep.subr.bf16.mxu0 %v4163
        %4531 = vmatpush1.bf16.msra.mxu0 %v4162
        %4532 = vmatprep.subr.bf16.mxu0 %v4159
        %4533 = vmatpush1.bf16.msra.mxu0 %v4158
        %4534 = vmatprep.subr.bf16.mxu0 %v4155
        %4535 = vmatpush1.bf16.msra.mxu0 %v4154
        %4536 = vmatprep.subr.bf16.mxu0 %v4151
        %4537 = vmatpush1.bf16.msra.mxu0 %v4150
        %4538 = vmatprep.subr.bf16.mxu0 %v4147
        %4539 = vmatpush1.bf16.msra.mxu0 %v4146
        %4540 = vmatprep.subr.bf16.mxu0 %v4143
        %4541 = vmatpush1.bf16.msra.mxu0 %v4142
        %4542 = vmatprep.subr.bf16.mxu0 %v4203
        %4543 = vmatpush2.bf16.msra.mxu0 %v4202
        %4544 = vmatprep.subr.bf16.mxu0 %v4199
        %4545 = vmatpush2.bf16.msra.mxu0 %v4198
        %4546 = vmatprep.subr.bf16.mxu0 %v4195
        %4547 = vmatpush2.bf16.msra.mxu0 %v4194
        %4548 = vmatprep.subr.bf16.mxu0 %v4191
        %4549 = vmatpush2.bf16.msra.mxu0 %v4190
        %4550 = vmatprep.subr.bf16.mxu0 %v4187
        %4551 = vmatpush2.bf16.msra.mxu0 %v4186
        %4552 = vmatprep.subr.bf16.mxu0 %v4183
        %4553 = vmatpush2.bf16.msra.mxu0 %v4182
        %4554 = vmatprep.subr.bf16.mxu0 %v4179
        %4555 = vmatpush2.bf16.msra.mxu0 %v4178
        %4556 = vmatprep.subr.bf16.mxu0 %v4175
        %4557 = vmatpush2.bf16.msra.mxu0 %v4174
        %4558 = vmatprep.mubr.bf16.mxu0 %v3369
        %4559 = vmatmul.mubr.bf16.gmra.mxu0 %v3368
        %v4560 = vpop.f32.mrf.mxu0
        %v4561 = vadd.f32 0.0, %v4560
        %v4562 = vpop.f32.mrf.mxu0
        %v4563 = vadd.f32 0.0, %v4562
        %v4564 = vpop.f32.mrf.mxu0
        %v4565 = vpop.f32.mrf.mxu0
        %4566 = vdwg.mxu0
        %4567 = vmatprep.subr.bf16.mxu0 %v4235
        %4568 = vmatpush1.bf16.msra.mxu0 %v4234
        %4569 = vmatprep.subr.bf16.mxu0 %v4231
        %4570 = vmatpush1.bf16.msra.mxu0 %v4230
        %4571 = vmatprep.subr.bf16.mxu0 %v4227
        %4572 = vmatpush1.bf16.msra.mxu0 %v4226
        %4573 = vmatprep.subr.bf16.mxu0 %v4223
        %4574 = vmatpush1.bf16.msra.mxu0 %v4222
        %4575 = vmatprep.subr.bf16.mxu0 %v4219
        %4576 = vmatpush1.bf16.msra.mxu0 %v4218
        %4577 = vmatprep.subr.bf16.mxu0 %v4215
        %4578 = vmatpush1.bf16.msra.mxu0 %v4214
        %4579 = vmatprep.subr.bf16.mxu0 %v4211
        %4580 = vmatpush1.bf16.msra.mxu0 %v4210
        %4581 = vmatprep.subr.bf16.mxu0 %v4207
        %4582 = vmatpush1.bf16.msra.mxu0 %v4206
        %4583 = vmatprep.subr.bf16.mxu0 %v4267
        %4584 = vmatpush2.bf16.msra.mxu0 %v4266
        %4585 = vmatprep.subr.bf16.mxu0 %v4263
        %4586 = vmatpush2.bf16.msra.mxu0 %v4262
        %4587 = vmatprep.subr.bf16.mxu0 %v4259
        %4588 = vmatpush2.bf16.msra.mxu0 %v4258
        %4589 = vmatprep.subr.bf16.mxu0 %v4255
        %4590 = vmatpush2.bf16.msra.mxu0 %v4254
        %4591 = vmatprep.subr.bf16.mxu0 %v4251
        %4592 = vmatpush2.bf16.msra.mxu0 %v4250
        %4593 = vmatprep.subr.bf16.mxu0 %v4247
        %4594 = vmatpush2.bf16.msra.mxu0 %v4246
        %4595 = vmatprep.subr.bf16.mxu0 %v4243
        %4596 = vmatpush2.bf16.msra.mxu0 %v4242
        %4597 = vmatprep.subr.bf16.mxu0 %v4239
        %4598 = vmatpush2.bf16.msra.mxu0 %v4238
        %4599 = vmatprep.mubr.bf16.mxu0 %v3371
        %4600 = vmatmul.mubr.bf16.gmra.mxu0 %v3370
        %v4601 = vpop.f32.mrf.mxu0
        %v4602 = vadd.f32 %v4561, %v4601
        %v4603 = vpop.f32.mrf.mxu0
        %v4604 = vadd.f32 %v4563, %v4603
        %v4605 = vpop.f32.mrf.mxu0
        %v4606 = vpop.f32.mrf.mxu0
        %4607 = vdwg.mxu0
        %4608 = vmatprep.subr.bf16.mxu0 %v4299
        %4609 = vmatpush1.bf16.msra.mxu0 %v4298
        %4610 = vmatprep.subr.bf16.mxu0 %v4295
        %4611 = vmatpush1.bf16.msra.mxu0 %v4294
        %4612 = vmatprep.subr.bf16.mxu0 %v4291
        %4613 = vmatpush1.bf16.msra.mxu0 %v4290
        %4614 = vmatprep.subr.bf16.mxu0 %v4287
        %4615 = vmatpush1.bf16.msra.mxu0 %v4286
        %4616 = vmatprep.subr.bf16.mxu0 %v4283
        %4617 = vmatpush1.bf16.msra.mxu0 %v4282
        %4618 = vmatprep.subr.bf16.mxu0 %v4279
        %4619 = vmatpush1.bf16.msra.mxu0 %v4278
        %4620 = vmatprep.subr.bf16.mxu0 %v4275
        %4621 = vmatpush1.bf16.msra.mxu0 %v4274
        %4622 = vmatprep.subr.bf16.mxu0 %v4271
        %4623 = vmatpush1.bf16.msra.mxu0 %v4270
        %4624 = vmatprep.subr.bf16.mxu0 %v4331
        %4625 = vmatpush2.bf16.msra.mxu0 %v4330
        %4626 = vmatprep.subr.bf16.mxu0 %v4327
        %4627 = vmatpush2.bf16.msra.mxu0 %v4326
        %4628 = vmatprep.subr.bf16.mxu0 %v4323
        %4629 = vmatpush2.bf16.msra.mxu0 %v4322
        %4630 = vmatprep.subr.bf16.mxu0 %v4319
        %4631 = vmatpush2.bf16.msra.mxu0 %v4318
        %4632 = vmatprep.subr.bf16.mxu0 %v4315
        %4633 = vmatpush2.bf16.msra.mxu0 %v4314
        %4634 = vmatprep.subr.bf16.mxu0 %v4311
        %4635 = vmatpush2.bf16.msra.mxu0 %v4310
        %4636 = vmatprep.subr.bf16.mxu0 %v4307
        %4637 = vmatpush2.bf16.msra.mxu0 %v4306
        %4638 = vmatprep.subr.bf16.mxu0 %v4303
        %4639 = vmatpush2.bf16.msra.mxu0 %v4302
        %4640 = vmatprep.mubr.bf16.mxu0 %v3373
        %4641 = vmatmul.mubr.bf16.gmra.mxu0 %v3372
        %v4642 = vpop.f32.mrf.mxu0
        %v4643 = vadd.f32 %v4602, %v4642
        %v4644 = vpop.f32.mrf.mxu0
        %v4645 = vadd.f32 %v4604, %v4644
        %v4646 = vpop.f32.mrf.mxu0
        %v4647 = vpop.f32.mrf.mxu0
        %4648 = vdwg.mxu0
        %4649 = vmatprep.subr.bf16.mxu0 %v4173
        %4650 = vmatpush1.bf16.msra.mxu0 %v4172
        %4651 = vmatprep.subr.bf16.mxu0 %v4169
        %4652 = vmatpush1.bf16.msra.mxu0 %v4168
        %4653 = vmatprep.subr.bf16.mxu0 %v4165
        %4654 = vmatpush1.bf16.msra.mxu0 %v4164
        %4655 = vmatprep.subr.bf16.mxu0 %v4161
        %4656 = vmatpush1.bf16.msra.mxu0 %v4160
        %4657 = vmatprep.subr.bf16.mxu0 %v4157
        %4658 = vmatpush1.bf16.msra.mxu0 %v4156
        %4659 = vmatprep.subr.bf16.mxu0 %v4153
        %4660 = vmatpush1.bf16.msra.mxu0 %v4152
        %4661 = vmatprep.subr.bf16.mxu0 %v4149
        %4662 = vmatpush1.bf16.msra.mxu0 %v4148
        %4663 = vmatprep.subr.bf16.mxu0 %v4145
        %4664 = vmatpush1.bf16.msra.mxu0 %v4144
        %4665 = vmatprep.subr.bf16.mxu0 %v4205
        %4666 = vmatpush2.bf16.msra.mxu0 %v4204
        %4667 = vmatprep.subr.bf16.mxu0 %v4201
        %4668 = vmatpush2.bf16.msra.mxu0 %v4200
        %4669 = vmatprep.subr.bf16.mxu0 %v4197
        %4670 = vmatpush2.bf16.msra.mxu0 %v4196
        %4671 = vmatprep.subr.bf16.mxu0 %v4193
        %4672 = vmatpush2.bf16.msra.mxu0 %v4192
        %4673 = vmatprep.subr.bf16.mxu0 %v4189
        %4674 = vmatpush2.bf16.msra.mxu0 %v4188
        %4675 = vmatprep.subr.bf16.mxu0 %v4185
        %4676 = vmatpush2.bf16.msra.mxu0 %v4184
        %4677 = vmatprep.subr.bf16.mxu0 %v4181
        %4678 = vmatpush2.bf16.msra.mxu0 %v4180
        %4679 = vmatprep.subr.bf16.mxu0 %v4177
        %4680 = vmatpush2.bf16.msra.mxu0 %v4176
        %4681 = vmatprep.mubr.bf16.mxu0 %v3369
        %4682 = vmatmul.mubr.bf16.gmra.mxu0 %v3368
        %v4683 = vpop.f32.mrf.mxu0
        %v4684 = vadd.f32 0.0, %v4683
        %v4685 = vpop.f32.mrf.mxu0
        %v4686 = vadd.f32 0.0, %v4685
        %v4687 = vpop.f32.mrf.mxu0
        %v4688 = vpop.f32.mrf.mxu0
        %4689 = vdwg.mxu0
        %4690 = vmatprep.subr.bf16.mxu0 %v4237
        %4691 = vmatpush1.bf16.msra.mxu0 %v4236
        %4692 = vmatprep.subr.bf16.mxu0 %v4233
        %4693 = vmatpush1.bf16.msra.mxu0 %v4232
        %4694 = vmatprep.subr.bf16.mxu0 %v4229
        %4695 = vmatpush1.bf16.msra.mxu0 %v4228
        %4696 = vmatprep.subr.bf16.mxu0 %v4225
        %4697 = vmatpush1.bf16.msra.mxu0 %v4224
        %4698 = vmatprep.subr.bf16.mxu0 %v4221
        %4699 = vmatpush1.bf16.msra.mxu0 %v4220
        %4700 = vmatprep.subr.bf16.mxu0 %v4217
        %4701 = vmatpush1.bf16.msra.mxu0 %v4216
        %4702 = vmatprep.subr.bf16.mxu0 %v4213
        %4703 = vmatpush1.bf16.msra.mxu0 %v4212
        %4704 = vmatprep.subr.bf16.mxu0 %v4209
        %4705 = vmatpush1.bf16.msra.mxu0 %v4208
        %4706 = vmatprep.subr.bf16.mxu0 %v4269
        %4707 = vmatpush2.bf16.msra.mxu0 %v4268
        %4708 = vmatprep.subr.bf16.mxu0 %v4265
        %4709 = vmatpush2.bf16.msra.mxu0 %v4264
        %4710 = vmatprep.subr.bf16.mxu0 %v4261
        %4711 = vmatpush2.bf16.msra.mxu0 %v4260
        %4712 = vmatprep.subr.bf16.mxu0 %v4257
        %4713 = vmatpush2.bf16.msra.mxu0 %v4256
        %4714 = vmatprep.subr.bf16.mxu0 %v4253
        %4715 = vmatpush2.bf16.msra.mxu0 %v4252
        %4716 = vmatprep.subr.bf16.mxu0 %v4249
        %4717 = vmatpush2.bf16.msra.mxu0 %v4248
        %4718 = vmatprep.subr.bf16.mxu0 %v4245
        %4719 = vmatpush2.bf16.msra.mxu0 %v4244
        %4720 = vmatprep.subr.bf16.mxu0 %v4241
        %4721 = vmatpush2.bf16.msra.mxu0 %v4240
        %4722 = vmatprep.mubr.bf16.mxu0 %v3371
        %4723 = vmatmul.mubr.bf16.gmra.mxu0 %v3370
        %v4724 = vpop.f32.mrf.mxu0
        %v4725 = vadd.f32 %v4684, %v4724
        %v4726 = vpop.f32.mrf.mxu0
        %v4727 = vadd.f32 %v4686, %v4726
        %v4728 = vpop.f32.mrf.mxu0
        %v4729 = vpop.f32.mrf.mxu0
        %4730 = vdwg.mxu0
        %4731 = vmatprep.subr.bf16.mxu0 %v4301
        %4732 = vmatpush1.bf16.msra.mxu0 %v4300
        %4733 = vmatprep.subr.bf16.mxu0 %v4297
        %4734 = vmatpush1.bf16.msra.mxu0 %v4296
        %4735 = vmatprep.subr.bf16.mxu0 %v4293
        %4736 = vmatpush1.bf16.msra.mxu0 %v4292
        %4737 = vmatprep.subr.bf16.mxu0 %v4289
        %4738 = vmatpush1.bf16.msra.mxu0 %v4288
        %4739 = vmatprep.subr.bf16.mxu0 %v4285
        %4740 = vmatpush1.bf16.msra.mxu0 %v4284
        %4741 = vmatprep.subr.bf16.mxu0 %v4281
        %4742 = vmatpush1.bf16.msra.mxu0 %v4280
        %4743 = vmatprep.subr.bf16.mxu0 %v4277
        %4744 = vmatpush1.bf16.msra.mxu0 %v4276
        %4745 = vmatprep.subr.bf16.mxu0 %v4273
        %4746 = vmatpush1.bf16.msra.mxu0 %v4272
        %4747 = vmatprep.subr.bf16.mxu0 %v4333
        %4748 = vmatpush2.bf16.msra.mxu0 %v4332
        %4749 = vmatprep.subr.bf16.mxu0 %v4329
        %4750 = vmatpush2.bf16.msra.mxu0 %v4328
        %4751 = vmatprep.subr.bf16.mxu0 %v4325
        %4752 = vmatpush2.bf16.msra.mxu0 %v4324
        %4753 = vmatprep.subr.bf16.mxu0 %v4321
        %4754 = vmatpush2.bf16.msra.mxu0 %v4320
        %4755 = vmatprep.subr.bf16.mxu0 %v4317
        %4756 = vmatpush2.bf16.msra.mxu0 %v4316
        %4757 = vmatprep.subr.bf16.mxu0 %v4313
        %4758 = vmatpush2.bf16.msra.mxu0 %v4312
        %4759 = vmatprep.subr.bf16.mxu0 %v4309
        %4760 = vmatpush2.bf16.msra.mxu0 %v4308
        %4761 = vmatprep.subr.bf16.mxu0 %v4305
        %4762 = vmatpush2.bf16.msra.mxu0 %v4304
        %4763 = vmatprep.mubr.bf16.mxu0 %v3373
        %4764 = vmatmul.mubr.bf16.gmra.mxu0 %v3372
        %v4765 = vpop.f32.mrf.mxu0
        %v4766 = vadd.f32 %v4725, %v4765
        %v4767 = vpop.f32.mrf.mxu0
        %v4768 = vadd.f32 %v4727, %v4767
        %v4769 = vpop.f32.mrf.mxu0
        %v4770 = vpop.f32.mrf.mxu0
        %4771 = vdwg.mxu0
        %v4772 = vpack.c.bf16 %v4643, %v4643
        %v4773 = vpack.c.bf16 %v4645, %v4645
        %v4774 = vpack.c.bf16 %v4766, %v4766
        %v4775 = vpack.c.bf16 %v4768, %v4768
        %v4776 = vld [vmem:[%s498] sm:$0x3]
        %vm4777 = vnez %v4776
        %v4778 = vld [vmem:[#allocation2] sm:$0xf]
        %v4779 = vld [vmem:[#allocation3] sm:$0xf]
        %vm4780 = vcmask 523264
        %v4782 = vsel %vm4780, %v4772, 0
        %v4785 = vsel %vm4780, %v4778, 0
        %4787 = vmatprep.subr.bf16.mxu0 0
        %4788 = vmatpush1.bf16.xpose.msra.mxu0 0
        %4789 = vmatprep.subr.bf16.mxu0 0
        %4790 = vmatpush1.bf16.xpose.msra.mxu0 0
        %4791 = vmatprep.subr.bf16.mxu0 0
        %4792 = vmatpush1.bf16.xpose.msra.mxu0 0
        %4793 = vmatprep.subr.bf16.mxu0 0
        %4794 = vmatpush1.bf16.xpose.msra.mxu0 0
        %4795 = vmatprep.subr.bf16.mxu0 0
        %4796 = vmatpush1.bf16.xpose.msra.mxu0 0
        %4797 = vmatprep.subr.bf16.mxu0 0
        %4798 = vmatpush1.bf16.xpose.msra.mxu0 0
        %4799 = vmatprep.subr.bf16.mxu0 0
        %4800 = vmatpush1.bf16.xpose.msra.mxu0 0
        %4801 = vmatprep.subr.bf16.mxu0 0
        %4802 = vmatpush1.bf16.xpose.msra.mxu0 %v4785
        %4803 = vmatprep.subr.bf16.mxu0 0
        %4804 = vmatpush2.bf16.xpose.msra.mxu0 0
        %4805 = vmatprep.subr.bf16.mxu0 0
        %4806 = vmatpush2.bf16.xpose.msra.mxu0 0
        %4807 = vmatprep.subr.bf16.mxu0 0
        %4808 = vmatpush2.bf16.xpose.msra.mxu0 0
        %4809 = vmatprep.subr.bf16.mxu0 0
        %4810 = vmatpush2.bf16.xpose.msra.mxu0 0
        %4811 = vmatprep.subr.bf16.mxu0 0
        %4812 = vmatpush2.bf16.xpose.msra.mxu0 0
        %4813 = vmatprep.subr.bf16.mxu0 0
        %4814 = vmatpush2.bf16.xpose.msra.mxu0 0
        %4815 = vmatprep.subr.bf16.mxu0 0
        %4816 = vmatpush2.bf16.xpose.msra.mxu0 0
        %4817 = vmatprep.subr.bf16.mxu0 0
        %4818 = vmatpush2.bf16.xpose.msra.mxu0 0
        %4819 = vmatprep.mubr.bf16.mxu0 0
        %4820 = vmatmul.mubr.bf16.gmra.mxu0 %v4782
        %v4821 = vpop.f32.mrf.mxu0
        %v4822 = vadd.f32 0.0, %v4821
        %v4823 = vpop.f32.mrf.mxu0
        %v4824 = vpop.f32.mrf.mxu0
        %v4825 = vpop.f32.mrf.mxu0
        %4826 = vdwg.mxu0
        %v4827 = vsel %vm4777, 16843009, 0
        %v4828 = vunpack.c.0.s8 %v4827
        %vm4829 = vcmp.ne.s32.totalorder %v4828, 0
        %v4830 = vsel %vm4829, -1e+09, %v4822
        %vm4831 = vcmask 64512
        %v4832 = vsel %vm4831, %v4830, -inf
        %4833 = vmax.xlane.f32.xlu0 %v4832
        %v4834 = vpop.xlane.xlu0 %4833
        %v4835 = vsub.f32 %v4830, %v4834
        %v4836 = vmul.f32 %v4835, 1.442695
        %v4837 = vpow.pop %v4836
        %v4838 = vsel %vm4831, %v4837, 0.0
        %4839 = vadd.xlane.f32.xlu0 %v4838
        %v4840 = vpop.xlane.xlu0 %4839
        %v4841 = vrcp.pop %v4840
        %v4842 = vmul.f32 %v4837, %v4841
        %v4843 = vpack.c.bf16 %v4842, %v4842
        %v4845 = vsel %vm4831, %v4843, 0
        %vm4847 = vcmask 1043456
        %v4849 = vsel %vm4847, %v4779, 0
        %4851 = vmatprep.subr.bf16.mxu0 0
        %4852 = vmatpush1.bf16.msra.mxu0 0
        %4853 = vmatprep.subr.bf16.mxu0 0
        %4854 = vmatpush1.bf16.msra.mxu0 0
        %4855 = vmatprep.subr.bf16.mxu0 0
        %4856 = vmatpush1.bf16.msra.mxu0 0
        %4857 = vmatprep.subr.bf16.mxu0 0
        %4858 = vmatpush1.bf16.msra.mxu0 0
        %4859 = vmatprep.subr.bf16.mxu0 0
        %4860 = vmatpush1.bf16.msra.mxu0 0
        %4861 = vmatprep.subr.bf16.mxu0 0
        %4862 = vmatpush1.bf16.msra.mxu0 0
        %4863 = vmatprep.subr.bf16.mxu0 0
        %4864 = vmatpush1.bf16.msra.mxu0 0
        %4865 = vmatprep.subr.bf16.mxu0 0
        %4866 = vmatpush1.bf16.msra.mxu0 %v4849
        %4867 = vmatprep.subr.bf16.mxu0 0
        %4868 = vmatpush2.bf16.msra.mxu0 0
        %4869 = vmatprep.subr.bf16.mxu0 0
        %4870 = vmatpush2.bf16.msra.mxu0 0
        %4871 = vmatprep.subr.bf16.mxu0 0
        %4872 = vmatpush2.bf16.msra.mxu0 0
        %4873 = vmatprep.subr.bf16.mxu0 0
        %4874 = vmatpush2.bf16.msra.mxu0 0
        %4875 = vmatprep.subr.bf16.mxu0 0
        %4876 = vmatpush2.bf16.msra.mxu0 0
        %4877 = vmatprep.subr.bf16.mxu0 0
        %4878 = vmatpush2.bf16.msra.mxu0 0
        %4879 = vmatprep.subr.bf16.mxu0 0
        %4880 = vmatpush2.bf16.msra.mxu0 0
        %4881 = vmatprep.subr.bf16.mxu0 0
        %4882 = vmatpush2.bf16.msra.mxu0 0
        %4883 = vmatprep.mubr.bf16.mxu0 0
        %4884 = vmatmul.mubr.bf16.gmra.mxu0 %v4845
        %v4885 = vpop.f32.mrf.mxu0
        %v4886 = vadd.f32 0.0, %v4885
        %v4887 = vpop.f32.mrf.mxu0
        %v4888 = vpop.f32.mrf.mxu0
        %v4889 = vpop.f32.mrf.mxu0
        %4890 = vdwg.mxu0
        %4892 = vrot.lane.b32.xlu0 %v4772, 64
        %v4893 = vpop.permute.xlu0 %4892
        %v4895 = vunpack.c.l.b16 %v4778
        %v4896 = vpack.c.b16 %v4895, %v4895
        %4897 = vrot.lane.b32.xlu0 %v4896, 64
        %v4898 = vpop.permute.xlu0 %4897
        %v4900 = vsel %vm4780, %v4893, 0
        %v4903 = vsel %vm4780, %v4898, 0
        %4905 = vmatprep.subr.bf16.mxu0 0
        %4906 = vmatpush1.bf16.xpose.msra.mxu0 0
        %4907 = vmatprep.subr.bf16.mxu0 0
        %4908 = vmatpush1.bf16.xpose.msra.mxu0 0
        %4909 = vmatprep.subr.bf16.mxu0 0
        %4910 = vmatpush1.bf16.xpose.msra.mxu0 0
        %4911 = vmatprep.subr.bf16.mxu0 0
        %4912 = vmatpush1.bf16.xpose.msra.mxu0 0
        %4913 = vmatprep.subr.bf16.mxu0 0
        %4914 = vmatpush1.bf16.xpose.msra.mxu0 0
        %4915 = vmatprep.subr.bf16.mxu0 0
        %4916 = vmatpush1.bf16.xpose.msra.mxu0 0
        %4917 = vmatprep.subr.bf16.mxu0 0
        %4918 = vmatpush1.bf16.xpose.msra.mxu0 0
        %4919 = vmatprep.subr.bf16.mxu0 0
        %4920 = vmatpush1.bf16.xpose.msra.mxu0 %v4903
        %4921 = vmatprep.subr.bf16.mxu0 0
        %4922 = vmatpush2.bf16.xpose.msra.mxu0 0
        %4923 = vmatprep.subr.bf16.mxu0 0
        %4924 = vmatpush2.bf16.xpose.msra.mxu0 0
        %4925 = vmatprep.subr.bf16.mxu0 0
        %4926 = vmatpush2.bf16.xpose.msra.mxu0 0
        %4927 = vmatprep.subr.bf16.mxu0 0
        %4928 = vmatpush2.bf16.xpose.msra.mxu0 0
        %4929 = vmatprep.subr.bf16.mxu0 0
        %4930 = vmatpush2.bf16.xpose.msra.mxu0 0
        %4931 = vmatprep.subr.bf16.mxu0 0
        %4932 = vmatpush2.bf16.xpose.msra.mxu0 0
        %4933 = vmatprep.subr.bf16.mxu0 0
        %4934 = vmatpush2.bf16.xpose.msra.mxu0 0
        %4935 = vmatprep.subr.bf16.mxu0 0
        %4936 = vmatpush2.bf16.xpose.msra.mxu0 0
        %4937 = vmatprep.mubr.bf16.mxu0 0
        %4938 = vmatmul.mubr.bf16.gmra.mxu0 %v4900
        %v4939 = vpop.f32.mrf.mxu0
        %v4940 = vadd.f32 0.0, %v4939
        %v4941 = vpop.f32.mrf.mxu0
        %v4942 = vpop.f32.mrf.mxu0
        %v4943 = vpop.f32.mrf.mxu0
        %4944 = vdwg.mxu0
        %v4945 = vsel %vm4829, -1e+09, %v4940
        %v4946 = vsel %vm4831, %v4945, -inf
        %4947 = vmax.xlane.f32.xlu0 %v4946
        %v4948 = vpop.xlane.xlu0 %4947
        %v4949 = vsub.f32 %v4945, %v4948
        %v4950 = vmul.f32 %v4949, 1.442695
        %v4951 = vpow.pop %v4950
        %v4952 = vsel %vm4831, %v4951, 0.0
        %4953 = vadd.xlane.f32.xlu0 %v4952
        %v4954 = vpop.xlane.xlu0 %4953
        %v4955 = vrcp.pop %v4954
        %v4956 = vmul.f32 %v4951, %v4955
        %v4957 = vpack.c.bf16 %v4956, %v4956
        %v4959 = vunpack.c.l.b16 %v4779
        %v4960 = vpack.c.b16 %v4959, %v4959
        %4961 = vrot.lane.b32.xlu0 %v4960, 64
        %v4962 = vpop.permute.xlu0 %4961
        %v4964 = vsel %vm4831, %v4957, 0
        %v4967 = vsel %vm4847, %v4962, 0
        %4969 = vmatprep.subr.bf16.mxu0 0
        %4970 = vmatpush1.bf16.msra.mxu0 0
        %4971 = vmatprep.subr.bf16.mxu0 0
        %4972 = vmatpush1.bf16.msra.mxu0 0
        %4973 = vmatprep.subr.bf16.mxu0 0
        %4974 = vmatpush1.bf16.msra.mxu0 0
        %4975 = vmatprep.subr.bf16.mxu0 0
        %4976 = vmatpush1.bf16.msra.mxu0 0
        %4977 = vmatprep.subr.bf16.mxu0 0
        %4978 = vmatpush1.bf16.msra.mxu0 0
        %4979 = vmatprep.subr.bf16.mxu0 0
        %4980 = vmatpush1.bf16.msra.mxu0 0
        %4981 = vmatprep.subr.bf16.mxu0 0
        %4982 = vmatpush1.bf16.msra.mxu0 0
        %4983 = vmatprep.subr.bf16.mxu0 0
        %4984 = vmatpush1.bf16.msra.mxu0 %v4967
        %4985 = vmatprep.subr.bf16.mxu0 0
        %4986 = vmatpush2.bf16.msra.mxu0 0
        %4987 = vmatprep.subr.bf16.mxu0 0
        %4988 = vmatpush2.bf16.msra.mxu0 0
        %4989 = vmatprep.subr.bf16.mxu0 0
        %4990 = vmatpush2.bf16.msra.mxu0 0
        %4991 = vmatprep.subr.bf16.mxu0 0
        %4992 = vmatpush2.bf16.msra.mxu0 0
        %4993 = vmatprep.subr.bf16.mxu0 0
        %4994 = vmatpush2.bf16.msra.mxu0 0
        %4995 = vmatprep.subr.bf16.mxu0 0
        %4996 = vmatpush2.bf16.msra.mxu0 0
        %4997 = vmatprep.subr.bf16.mxu0 0
        %4998 = vmatpush2.bf16.msra.mxu0 0
        %4999 = vmatprep.subr.bf16.mxu0 0
        %5000 = vmatpush2.bf16.msra.mxu0 0
        %5001 = vmatprep.mubr.bf16.mxu0 0
        %5002 = vmatmul.mubr.bf16.gmra.mxu0 %v4964
        %v5003 = vpop.f32.mrf.mxu0
        %v5004 = vadd.f32 0.0, %v5003
        %v5005 = vpop.f32.mrf.mxu0
        %v5006 = vpop.f32.mrf.mxu0
        %v5007 = vpop.f32.mrf.mxu0
        %5008 = vdwg.mxu0
        %v5009 = vld [vmem:[#allocation2 + $0x4] sm:$0xf]
        %v5010 = vld [vmem:[#allocation3 + $0x4] sm:$0xf]
        %v5012 = vsel %vm4780, %v4773, 0
        %v5015 = vsel %vm4780, %v5009, 0
        %5017 = vmatprep.subr.bf16.mxu0 0
        %5018 = vmatpush1.bf16.xpose.msra.mxu0 0
        %5019 = vmatprep.subr.bf16.mxu0 0
        %5020 = vmatpush1.bf16.xpose.msra.mxu0 0
        %5021 = vmatprep.subr.bf16.mxu0 0
        %5022 = vmatpush1.bf16.xpose.msra.mxu0 0
        %5023 = vmatprep.subr.bf16.mxu0 0
        %5024 = vmatpush1.bf16.xpose.msra.mxu0 0
        %5025 = vmatprep.subr.bf16.mxu0 0
        %5026 = vmatpush1.bf16.xpose.msra.mxu0 0
        %5027 = vmatprep.subr.bf16.mxu0 0
        %5028 = vmatpush1.bf16.xpose.msra.mxu0 0
        %5029 = vmatprep.subr.bf16.mxu0 0
        %5030 = vmatpush1.bf16.xpose.msra.mxu0 0
        %5031 = vmatprep.subr.bf16.mxu0 0
        %5032 = vmatpush1.bf16.xpose.msra.mxu0 %v5015
        %5033 = vmatprep.subr.bf16.mxu0 0
        %5034 = vmatpush2.bf16.xpose.msra.mxu0 0
        %5035 = vmatprep.subr.bf16.mxu0 0
        %5036 = vmatpush2.bf16.xpose.msra.mxu0 0
        %5037 = vmatprep.subr.bf16.mxu0 0
        %5038 = vmatpush2.bf16.xpose.msra.mxu0 0
        %5039 = vmatprep.subr.bf16.mxu0 0
        %5040 = vmatpush2.bf16.xpose.msra.mxu0 0
        %5041 = vmatprep.subr.bf16.mxu0 0
        %5042 = vmatpush2.bf16.xpose.msra.mxu0 0
        %5043 = vmatprep.subr.bf16.mxu0 0
        %5044 = vmatpush2.bf16.xpose.msra.mxu0 0
        %5045 = vmatprep.subr.bf16.mxu0 0
        %5046 = vmatpush2.bf16.xpose.msra.mxu0 0
        %5047 = vmatprep.subr.bf16.mxu0 0
        %5048 = vmatpush2.bf16.xpose.msra.mxu0 0
        %5049 = vmatprep.mubr.bf16.mxu0 0
        %5050 = vmatmul.mubr.bf16.gmra.mxu0 %v5012
        %v5051 = vpop.f32.mrf.mxu0
        %v5052 = vadd.f32 0.0, %v5051
        %v5053 = vpop.f32.mrf.mxu0
        %v5054 = vpop.f32.mrf.mxu0
        %v5055 = vpop.f32.mrf.mxu0
        %5056 = vdwg.mxu0
        %v5057 = vsel %vm4829, -1e+09, %v5052
        %v5058 = vsel %vm4831, %v5057, -inf
        %5059 = vmax.xlane.f32.xlu0 %v5058
        %v5060 = vpop.xlane.xlu0 %5059
        %v5061 = vsub.f32 %v5057, %v5060
        %v5062 = vmul.f32 %v5061, 1.442695
        %v5063 = vpow.pop %v5062
        %v5064 = vsel %vm4831, %v5063, 0.0
        %5065 = vadd.xlane.f32.xlu0 %v5064
        %v5066 = vpop.xlane.xlu0 %5065
        %v5067 = vrcp.pop %v5066
        %v5068 = vmul.f32 %v5063, %v5067
        %v5069 = vpack.c.bf16 %v5068, %v5068
        %v5071 = vsel %vm4831, %v5069, 0
        %v5074 = vsel %vm4847, %v5010, 0
        %5076 = vmatprep.subr.bf16.mxu0 0
        %5077 = vmatpush1.bf16.msra.mxu0 0
        %5078 = vmatprep.subr.bf16.mxu0 0
        %5079 = vmatpush1.bf16.msra.mxu0 0
        %5080 = vmatprep.subr.bf16.mxu0 0
        %5081 = vmatpush1.bf16.msra.mxu0 0
        %5082 = vmatprep.subr.bf16.mxu0 0
        %5083 = vmatpush1.bf16.msra.mxu0 0
        %5084 = vmatprep.subr.bf16.mxu0 0
        %5085 = vmatpush1.bf16.msra.mxu0 0
        %5086 = vmatprep.subr.bf16.mxu0 0
        %5087 = vmatpush1.bf16.msra.mxu0 0
        %5088 = vmatprep.subr.bf16.mxu0 0
        %5089 = vmatpush1.bf16.msra.mxu0 0
        %5090 = vmatprep.subr.bf16.mxu0 0
        %5091 = vmatpush1.bf16.msra.mxu0 %v5074
        %5092 = vmatprep.subr.bf16.mxu0 0
        %5093 = vmatpush2.bf16.msra.mxu0 0
        %5094 = vmatprep.subr.bf16.mxu0 0
        %5095 = vmatpush2.bf16.msra.mxu0 0
        %5096 = vmatprep.subr.bf16.mxu0 0
        %5097 = vmatpush2.bf16.msra.mxu0 0
        %5098 = vmatprep.subr.bf16.mxu0 0
        %5099 = vmatpush2.bf16.msra.mxu0 0
        %5100 = vmatprep.subr.bf16.mxu0 0
        %5101 = vmatpush2.bf16.msra.mxu0 0
        %5102 = vmatprep.subr.bf16.mxu0 0
        %5103 = vmatpush2.bf16.msra.mxu0 0
        %5104 = vmatprep.subr.bf16.mxu0 0
        %5105 = vmatpush2.bf16.msra.mxu0 0
        %5106 = vmatprep.subr.bf16.mxu0 0
        %5107 = vmatpush2.bf16.msra.mxu0 0
        %5108 = vmatprep.mubr.bf16.mxu0 0
        %5109 = vmatmul.mubr.bf16.gmra.mxu0 %v5071
        %v5110 = vpop.f32.mrf.mxu0
        %v5111 = vadd.f32 0.0, %v5110
        %v5112 = vpop.f32.mrf.mxu0
        %v5113 = vpop.f32.mrf.mxu0
        %v5114 = vpop.f32.mrf.mxu0
        %5115 = vdwg.mxu0
        %5117 = vrot.lane.b32.xlu0 %v4773, 64
        %v5118 = vpop.permute.xlu0 %5117
        %v5120 = vunpack.c.l.b16 %v5009
        %v5121 = vpack.c.b16 %v5120, %v5120
        %5122 = vrot.lane.b32.xlu0 %v5121, 64
        %v5123 = vpop.permute.xlu0 %5122
        %v5125 = vsel %vm4780, %v5118, 0
        %v5128 = vsel %vm4780, %v5123, 0
        %5130 = vmatprep.subr.bf16.mxu0 0
        %5131 = vmatpush1.bf16.xpose.msra.mxu0 0
        %5132 = vmatprep.subr.bf16.mxu0 0
        %5133 = vmatpush1.bf16.xpose.msra.mxu0 0
        %5134 = vmatprep.subr.bf16.mxu0 0
        %5135 = vmatpush1.bf16.xpose.msra.mxu0 0
        %5136 = vmatprep.subr.bf16.mxu0 0
        %5137 = vmatpush1.bf16.xpose.msra.mxu0 0
        %5138 = vmatprep.subr.bf16.mxu0 0
        %5139 = vmatpush1.bf16.xpose.msra.mxu0 0
        %5140 = vmatprep.subr.bf16.mxu0 0
        %5141 = vmatpush1.bf16.xpose.msra.mxu0 0
        %5142 = vmatprep.subr.bf16.mxu0 0
        %5143 = vmatpush1.bf16.xpose.msra.mxu0 0
        %5144 = vmatprep.subr.bf16.mxu0 0
        %5145 = vmatpush1.bf16.xpose.msra.mxu0 %v5128
        %5146 = vmatprep.subr.bf16.mxu0 0
        %5147 = vmatpush2.bf16.xpose.msra.mxu0 0
        %5148 = vmatprep.subr.bf16.mxu0 0
        %5149 = vmatpush2.bf16.xpose.msra.mxu0 0
        %5150 = vmatprep.subr.bf16.mxu0 0
        %5151 = vmatpush2.bf16.xpose.msra.mxu0 0
        %5152 = vmatprep.subr.bf16.mxu0 0
        %5153 = vmatpush2.bf16.xpose.msra.mxu0 0
        %5154 = vmatprep.subr.bf16.mxu0 0
        %5155 = vmatpush2.bf16.xpose.msra.mxu0 0
        %5156 = vmatprep.subr.bf16.mxu0 0
        %5157 = vmatpush2.bf16.xpose.msra.mxu0 0
        %5158 = vmatprep.subr.bf16.mxu0 0
        %5159 = vmatpush2.bf16.xpose.msra.mxu0 0
        %5160 = vmatprep.subr.bf16.mxu0 0
        %5161 = vmatpush2.bf16.xpose.msra.mxu0 0
        %5162 = vmatprep.mubr.bf16.mxu0 0
        %5163 = vmatmul.mubr.bf16.gmra.mxu0 %v5125
        %v5164 = vpop.f32.mrf.mxu0
        %v5165 = vadd.f32 0.0, %v5164
        %v5166 = vpop.f32.mrf.mxu0
        %v5167 = vpop.f32.mrf.mxu0
        %v5168 = vpop.f32.mrf.mxu0
        %5169 = vdwg.mxu0
        %v5170 = vsel %vm4829, -1e+09, %v5165
        %v5171 = vsel %vm4831, %v5170, -inf
        %5172 = vmax.xlane.f32.xlu0 %v5171
        %v5173 = vpop.xlane.xlu0 %5172
        %v5174 = vsub.f32 %v5170, %v5173
        %v5175 = vmul.f32 %v5174, 1.442695
        %v5176 = vpow.pop %v5175
        %v5177 = vsel %vm4831, %v5176, 0.0
        %5178 = vadd.xlane.f32.xlu0 %v5177
        %v5179 = vpop.xlane.xlu0 %5178
        %v5180 = vrcp.pop %v5179
        %v5181 = vmul.f32 %v5176, %v5180
        %v5182 = vpack.c.bf16 %v5181, %v5181
        %v5184 = vunpack.c.l.b16 %v5010
        %v5185 = vpack.c.b16 %v5184, %v5184
        %5186 = vrot.lane.b32.xlu0 %v5185, 64
        %v5187 = vpop.permute.xlu0 %5186
        %v5189 = vsel %vm4831, %v5182, 0
        %v5192 = vsel %vm4847, %v5187, 0
        %5194 = vmatprep.subr.bf16.mxu0 0
        %5195 = vmatpush1.bf16.msra.mxu0 0
        %5196 = vmatprep.subr.bf16.mxu0 0
        %5197 = vmatpush1.bf16.msra.mxu0 0
        %5198 = vmatprep.subr.bf16.mxu0 0
        %5199 = vmatpush1.bf16.msra.mxu0 0
        %5200 = vmatprep.subr.bf16.mxu0 0
        %5201 = vmatpush1.bf16.msra.mxu0 0
        %5202 = vmatprep.subr.bf16.mxu0 0
        %5203 = vmatpush1.bf16.msra.mxu0 0
        %5204 = vmatprep.subr.bf16.mxu0 0
        %5205 = vmatpush1.bf16.msra.mxu0 0
        %5206 = vmatprep.subr.bf16.mxu0 0
        %5207 = vmatpush1.bf16.msra.mxu0 0
        %5208 = vmatprep.subr.bf16.mxu0 0
        %5209 = vmatpush1.bf16.msra.mxu0 %v5192
        %5210 = vmatprep.subr.bf16.mxu0 0
        %5211 = vmatpush2.bf16.msra.mxu0 0
        %5212 = vmatprep.subr.bf16.mxu0 0
        %5213 = vmatpush2.bf16.msra.mxu0 0
        %5214 = vmatprep.subr.bf16.mxu0 0
        %5215 = vmatpush2.bf16.msra.mxu0 0
        %5216 = vmatprep.subr.bf16.mxu0 0
        %5217 = vmatpush2.bf16.msra.mxu0 0
        %5218 = vmatprep.subr.bf16.mxu0 0
        %5219 = vmatpush2.bf16.msra.mxu0 0
        %5220 = vmatprep.subr.bf16.mxu0 0
        %5221 = vmatpush2.bf16.msra.mxu0 0
        %5222 = vmatprep.subr.bf16.mxu0 0
        %5223 = vmatpush2.bf16.msra.mxu0 0
        %5224 = vmatprep.subr.bf16.mxu0 0
        %5225 = vmatpush2.bf16.msra.mxu0 0
        %5226 = vmatprep.mubr.bf16.mxu0 0
        %5227 = vmatmul.mubr.bf16.gmra.mxu0 %v5189
        %v5228 = vpop.f32.mrf.mxu0
        %v5229 = vadd.f32 0.0, %v5228
        %v5230 = vpop.f32.mrf.mxu0
        %v5231 = vpop.f32.mrf.mxu0
        %v5232 = vpop.f32.mrf.mxu0
        %5233 = vdwg.mxu0
        %v5234 = vld [vmem:[#allocation2 + $0x8] sm:$0xf]
        %v5235 = vld [vmem:[#allocation3 + $0x8] sm:$0xf]
        %v5237 = vsel %vm4780, %v4774, 0
        %v5240 = vsel %vm4780, %v5234, 0
        %5242 = vmatprep.subr.bf16.mxu0 0
        %5243 = vmatpush1.bf16.xpose.msra.mxu0 0
        %5244 = vmatprep.subr.bf16.mxu0 0
        %5245 = vmatpush1.bf16.xpose.msra.mxu0 0
        %5246 = vmatprep.subr.bf16.mxu0 0
        %5247 = vmatpush1.bf16.xpose.msra.mxu0 0
        %5248 = vmatprep.subr.bf16.mxu0 0
        %5249 = vmatpush1.bf16.xpose.msra.mxu0 0
        %5250 = vmatprep.subr.bf16.mxu0 0
        %5251 = vmatpush1.bf16.xpose.msra.mxu0 0
        %5252 = vmatprep.subr.bf16.mxu0 0
        %5253 = vmatpush1.bf16.xpose.msra.mxu0 0
        %5254 = vmatprep.subr.bf16.mxu0 0
        %5255 = vmatpush1.bf16.xpose.msra.mxu0 0
        %5256 = vmatprep.subr.bf16.mxu0 0
        %5257 = vmatpush1.bf16.xpose.msra.mxu0 %v5240
        %5258 = vmatprep.subr.bf16.mxu0 0
        %5259 = vmatpush2.bf16.xpose.msra.mxu0 0
        %5260 = vmatprep.subr.bf16.mxu0 0
        %5261 = vmatpush2.bf16.xpose.msra.mxu0 0
        %5262 = vmatprep.subr.bf16.mxu0 0
        %5263 = vmatpush2.bf16.xpose.msra.mxu0 0
        %5264 = vmatprep.subr.bf16.mxu0 0
        %5265 = vmatpush2.bf16.xpose.msra.mxu0 0
        %5266 = vmatprep.subr.bf16.mxu0 0
        %5267 = vmatpush2.bf16.xpose.msra.mxu0 0
        %5268 = vmatprep.subr.bf16.mxu0 0
        %5269 = vmatpush2.bf16.xpose.msra.mxu0 0
        %5270 = vmatprep.subr.bf16.mxu0 0
        %5271 = vmatpush2.bf16.xpose.msra.mxu0 0
        %5272 = vmatprep.subr.bf16.mxu0 0
        %5273 = vmatpush2.bf16.xpose.msra.mxu0 0
        %5274 = vmatprep.mubr.bf16.mxu0 0
        %5275 = vmatmul.mubr.bf16.gmra.mxu0 %v5237
        %v5276 = vpop.f32.mrf.mxu0
        %v5277 = vadd.f32 0.0, %v5276
        %v5278 = vpop.f32.mrf.mxu0
        %v5279 = vpop.f32.mrf.mxu0
        %v5280 = vpop.f32.mrf.mxu0
        %5281 = vdwg.mxu0
        %v5282 = vsel %vm4829, -1e+09, %v5277
        %v5283 = vsel %vm4831, %v5282, -inf
        %5284 = vmax.xlane.f32.xlu0 %v5283
        %v5285 = vpop.xlane.xlu0 %5284
        %v5286 = vsub.f32 %v5282, %v5285
        %v5287 = vmul.f32 %v5286, 1.442695
        %v5288 = vpow.pop %v5287
        %v5289 = vsel %vm4831, %v5288, 0.0
        %5290 = vadd.xlane.f32.xlu0 %v5289
        %v5291 = vpop.xlane.xlu0 %5290
        %v5292 = vrcp.pop %v5291
        %v5293 = vmul.f32 %v5288, %v5292
        %v5294 = vpack.c.bf16 %v5293, %v5293
        %v5296 = vsel %vm4831, %v5294, 0
        %v5299 = vsel %vm4847, %v5235, 0
        %5301 = vmatprep.subr.bf16.mxu0 0
        %5302 = vmatpush1.bf16.msra.mxu0 0
        %5303 = vmatprep.subr.bf16.mxu0 0
        %5304 = vmatpush1.bf16.msra.mxu0 0
        %5305 = vmatprep.subr.bf16.mxu0 0
        %5306 = vmatpush1.bf16.msra.mxu0 0
        %5307 = vmatprep.subr.bf16.mxu0 0
        %5308 = vmatpush1.bf16.msra.mxu0 0
        %5309 = vmatprep.subr.bf16.mxu0 0
        %5310 = vmatpush1.bf16.msra.mxu0 0
        %5311 = vmatprep.subr.bf16.mxu0 0
        %5312 = vmatpush1.bf16.msra.mxu0 0
        %5313 = vmatprep.subr.bf16.mxu0 0
        %5314 = vmatpush1.bf16.msra.mxu0 0
        %5315 = vmatprep.subr.bf16.mxu0 0
        %5316 = vmatpush1.bf16.msra.mxu0 %v5299
        %5317 = vmatprep.subr.bf16.mxu0 0
        %5318 = vmatpush2.bf16.msra.mxu0 0
        %5319 = vmatprep.subr.bf16.mxu0 0
        %5320 = vmatpush2.bf16.msra.mxu0 0
        %5321 = vmatprep.subr.bf16.mxu0 0
        %5322 = vmatpush2.bf16.msra.mxu0 0
        %5323 = vmatprep.subr.bf16.mxu0 0
        %5324 = vmatpush2.bf16.msra.mxu0 0
        %5325 = vmatprep.subr.bf16.mxu0 0
        %5326 = vmatpush2.bf16.msra.mxu0 0
        %5327 = vmatprep.subr.bf16.mxu0 0
        %5328 = vmatpush2.bf16.msra.mxu0 0
        %5329 = vmatprep.subr.bf16.mxu0 0
        %5330 = vmatpush2.bf16.msra.mxu0 0
        %5331 = vmatprep.subr.bf16.mxu0 0
        %5332 = vmatpush2.bf16.msra.mxu0 0
        %5333 = vmatprep.mubr.bf16.mxu0 0
        %5334 = vmatmul.mubr.bf16.gmra.mxu0 %v5296
        %v5335 = vpop.f32.mrf.mxu0
        %v5336 = vadd.f32 0.0, %v5335
        %v5337 = vpop.f32.mrf.mxu0
        %v5338 = vpop.f32.mrf.mxu0
        %v5339 = vpop.f32.mrf.mxu0
        %5340 = vdwg.mxu0
        %5342 = vrot.lane.b32.xlu0 %v4774, 64
        %v5343 = vpop.permute.xlu0 %5342
        %v5345 = vunpack.c.l.b16 %v5234
        %v5346 = vpack.c.b16 %v5345, %v5345
        %5347 = vrot.lane.b32.xlu0 %v5346, 64
        %v5348 = vpop.permute.xlu0 %5347
        %v5350 = vsel %vm4780, %v5343, 0
        %v5353 = vsel %vm4780, %v5348, 0
        %5355 = vmatprep.subr.bf16.mxu0 0
        %5356 = vmatpush1.bf16.xpose.msra.mxu0 0
        %5357 = vmatprep.subr.bf16.mxu0 0
        %5358 = vmatpush1.bf16.xpose.msra.mxu0 0
        %5359 = vmatprep.subr.bf16.mxu0 0
        %5360 = vmatpush1.bf16.xpose.msra.mxu0 0
        %5361 = vmatprep.subr.bf16.mxu0 0
        %5362 = vmatpush1.bf16.xpose.msra.mxu0 0
        %5363 = vmatprep.subr.bf16.mxu0 0
        %5364 = vmatpush1.bf16.xpose.msra.mxu0 0
        %5365 = vmatprep.subr.bf16.mxu0 0
        %5366 = vmatpush1.bf16.xpose.msra.mxu0 0
        %5367 = vmatprep.subr.bf16.mxu0 0
        %5368 = vmatpush1.bf16.xpose.msra.mxu0 0
        %5369 = vmatprep.subr.bf16.mxu0 0
        %5370 = vmatpush1.bf16.xpose.msra.mxu0 %v5353
        %5371 = vmatprep.subr.bf16.mxu0 0
        %5372 = vmatpush2.bf16.xpose.msra.mxu0 0
        %5373 = vmatprep.subr.bf16.mxu0 0
        %5374 = vmatpush2.bf16.xpose.msra.mxu0 0
        %5375 = vmatprep.subr.bf16.mxu0 0
        %5376 = vmatpush2.bf16.xpose.msra.mxu0 0
        %5377 = vmatprep.subr.bf16.mxu0 0
        %5378 = vmatpush2.bf16.xpose.msra.mxu0 0
        %5379 = vmatprep.subr.bf16.mxu0 0
        %5380 = vmatpush2.bf16.xpose.msra.mxu0 0
        %5381 = vmatprep.subr.bf16.mxu0 0
        %5382 = vmatpush2.bf16.xpose.msra.mxu0 0
        %5383 = vmatprep.subr.bf16.mxu0 0
        %5384 = vmatpush2.bf16.xpose.msra.mxu0 0
        %5385 = vmatprep.subr.bf16.mxu0 0
        %5386 = vmatpush2.bf16.xpose.msra.mxu0 0
        %5387 = vmatprep.mubr.bf16.mxu0 0
        %5388 = vmatmul.mubr.bf16.gmra.mxu0 %v5350
        %v5389 = vpop.f32.mrf.mxu0
        %v5390 = vadd.f32 0.0, %v5389
        %v5391 = vpop.f32.mrf.mxu0
        %v5392 = vpop.f32.mrf.mxu0
        %v5393 = vpop.f32.mrf.mxu0
        %5394 = vdwg.mxu0
        %v5395 = vsel %vm4829, -1e+09, %v5390
        %v5396 = vsel %vm4831, %v5395, -inf
        %5397 = vmax.xlane.f32.xlu0 %v5396
        %v5398 = vpop.xlane.xlu0 %5397
        %v5399 = vsub.f32 %v5395, %v5398
        %v5400 = vmul.f32 %v5399, 1.442695
        %v5401 = vpow.pop %v5400
        %v5402 = vsel %vm4831, %v5401, 0.0
        %5403 = vadd.xlane.f32.xlu0 %v5402
        %v5404 = vpop.xlane.xlu0 %5403
        %v5405 = vrcp.pop %v5404
        %v5406 = vmul.f32 %v5401, %v5405
        %v5407 = vpack.c.bf16 %v5406, %v5406
        %v5409 = vunpack.c.l.b16 %v5235
        %v5410 = vpack.c.b16 %v5409, %v5409
        %5411 = vrot.lane.b32.xlu0 %v5410, 64
        %v5412 = vpop.permute.xlu0 %5411
        %v5414 = vsel %vm4831, %v5407, 0
        %v5417 = vsel %vm4847, %v5412, 0
        %5419 = vmatprep.subr.bf16.mxu0 0
        %5420 = vmatpush1.bf16.msra.mxu0 0
        %5421 = vmatprep.subr.bf16.mxu0 0
        %5422 = vmatpush1.bf16.msra.mxu0 0
        %5423 = vmatprep.subr.bf16.mxu0 0
        %5424 = vmatpush1.bf16.msra.mxu0 0
        %5425 = vmatprep.subr.bf16.mxu0 0
        %5426 = vmatpush1.bf16.msra.mxu0 0
        %5427 = vmatprep.subr.bf16.mxu0 0
        %5428 = vmatpush1.bf16.msra.mxu0 0
        %5429 = vmatprep.subr.bf16.mxu0 0
        %5430 = vmatpush1.bf16.msra.mxu0 0
        %5431 = vmatprep.subr.bf16.mxu0 0
        %5432 = vmatpush1.bf16.msra.mxu0 0
        %5433 = vmatprep.subr.bf16.mxu0 0
        %5434 = vmatpush1.bf16.msra.mxu0 %v5417
        %5435 = vmatprep.subr.bf16.mxu0 0
        %5436 = vmatpush2.bf16.msra.mxu0 0
        %5437 = vmatprep.subr.bf16.mxu0 0
        %5438 = vmatpush2.bf16.msra.mxu0 0
        %5439 = vmatprep.subr.bf16.mxu0 0
        %5440 = vmatpush2.bf16.msra.mxu0 0
        %5441 = vmatprep.subr.bf16.mxu0 0
        %5442 = vmatpush2.bf16.msra.mxu0 0
        %5443 = vmatprep.subr.bf16.mxu0 0
        %5444 = vmatpush2.bf16.msra.mxu0 0
        %5445 = vmatprep.subr.bf16.mxu0 0
        %5446 = vmatpush2.bf16.msra.mxu0 0
        %5447 = vmatprep.subr.bf16.mxu0 0
        %5448 = vmatpush2.bf16.msra.mxu0 0
        %5449 = vmatprep.subr.bf16.mxu0 0
        %5450 = vmatpush2.bf16.msra.mxu0 0
        %5451 = vmatprep.mubr.bf16.mxu0 0
        %5452 = vmatmul.mubr.bf16.gmra.mxu0 %v5414
        %v5453 = vpop.f32.mrf.mxu0
        %v5454 = vadd.f32 0.0, %v5453
        %v5455 = vpop.f32.mrf.mxu0
        %v5456 = vpop.f32.mrf.mxu0
        %v5457 = vpop.f32.mrf.mxu0
        %5458 = vdwg.mxu0
        %v5459 = vld [vmem:[#allocation2 + $0xc] sm:$0xf]
        %v5460 = vld [vmem:[#allocation3 + $0xc] sm:$0xf]
        %v5462 = vsel %vm4780, %v4775, 0
        %v5465 = vsel %vm4780, %v5459, 0
        %5467 = vmatprep.subr.bf16.mxu0 0
        %5468 = vmatpush1.bf16.xpose.msra.mxu0 0
        %5469 = vmatprep.subr.bf16.mxu0 0
        %5470 = vmatpush1.bf16.xpose.msra.mxu0 0
        %5471 = vmatprep.subr.bf16.mxu0 0
        %5472 = vmatpush1.bf16.xpose.msra.mxu0 0
        %5473 = vmatprep.subr.bf16.mxu0 0
        %5474 = vmatpush1.bf16.xpose.msra.mxu0 0
        %5475 = vmatprep.subr.bf16.mxu0 0
        %5476 = vmatpush1.bf16.xpose.msra.mxu0 0
        %5477 = vmatprep.subr.bf16.mxu0 0
        %5478 = vmatpush1.bf16.xpose.msra.mxu0 0
        %5479 = vmatprep.subr.bf16.mxu0 0
        %5480 = vmatpush1.bf16.xpose.msra.mxu0 0
        %5481 = vmatprep.subr.bf16.mxu0 0
        %5482 = vmatpush1.bf16.xpose.msra.mxu0 %v5465
        %5483 = vmatprep.subr.bf16.mxu0 0
        %5484 = vmatpush2.bf16.xpose.msra.mxu0 0
        %5485 = vmatprep.subr.bf16.mxu0 0
        %5486 = vmatpush2.bf16.xpose.msra.mxu0 0
        %5487 = vmatprep.subr.bf16.mxu0 0
        %5488 = vmatpush2.bf16.xpose.msra.mxu0 0
        %5489 = vmatprep.subr.bf16.mxu0 0
        %5490 = vmatpush2.bf16.xpose.msra.mxu0 0
        %5491 = vmatprep.subr.bf16.mxu0 0
        %5492 = vmatpush2.bf16.xpose.msra.mxu0 0
        %5493 = vmatprep.subr.bf16.mxu0 0
        %5494 = vmatpush2.bf16.xpose.msra.mxu0 0
        %5495 = vmatprep.subr.bf16.mxu0 0
        %5496 = vmatpush2.bf16.xpose.msra.mxu0 0
        %5497 = vmatprep.subr.bf16.mxu0 0
        %5498 = vmatpush2.bf16.xpose.msra.mxu0 0
        %5499 = vmatprep.mubr.bf16.mxu0 0
        %5500 = vmatmul.mubr.bf16.gmra.mxu0 %v5462
        %v5501 = vpop.f32.mrf.mxu0
        %v5502 = vadd.f32 0.0, %v5501
        %v5503 = vpop.f32.mrf.mxu0
        %v5504 = vpop.f32.mrf.mxu0
        %v5505 = vpop.f32.mrf.mxu0
        %5506 = vdwg.mxu0
        %v5507 = vsel %vm4829, -1e+09, %v5502
        %v5508 = vsel %vm4831, %v5507, -inf
        %5509 = vmax.xlane.f32.xlu0 %v5508
        %v5510 = vpop.xlane.xlu0 %5509
        %v5511 = vsub.f32 %v5507, %v5510
        %v5512 = vmul.f32 %v5511, 1.442695
        %v5513 = vpow.pop %v5512
        %v5514 = vsel %vm4831, %v5513, 0.0
        %5515 = vadd.xlane.f32.xlu0 %v5514
        %v5516 = vpop.xlane.xlu0 %5515
        %v5517 = vrcp.pop %v5516
        %v5518 = vmul.f32 %v5513, %v5517
        %v5519 = vpack.c.bf16 %v5518, %v5518
        %v5521 = vsel %vm4831, %v5519, 0
        %v5524 = vsel %vm4847, %v5460, 0
        %5526 = vmatprep.subr.bf16.mxu0 0
        %5527 = vmatpush1.bf16.msra.mxu0 0
        %5528 = vmatprep.subr.bf16.mxu0 0
        %5529 = vmatpush1.bf16.msra.mxu0 0
        %5530 = vmatprep.subr.bf16.mxu0 0
        %5531 = vmatpush1.bf16.msra.mxu0 0
        %5532 = vmatprep.subr.bf16.mxu0 0
        %5533 = vmatpush1.bf16.msra.mxu0 0
        %5534 = vmatprep.subr.bf16.mxu0 0
        %5535 = vmatpush1.bf16.msra.mxu0 0
        %5536 = vmatprep.subr.bf16.mxu0 0
        %5537 = vmatpush1.bf16.msra.mxu0 0
        %5538 = vmatprep.subr.bf16.mxu0 0
        %5539 = vmatpush1.bf16.msra.mxu0 0
        %5540 = vmatprep.subr.bf16.mxu0 0
        %5541 = vmatpush1.bf16.msra.mxu0 %v5524
        %5542 = vmatprep.subr.bf16.mxu0 0
        %5543 = vmatpush2.bf16.msra.mxu0 0
        %5544 = vmatprep.subr.bf16.mxu0 0
        %5545 = vmatpush2.bf16.msra.mxu0 0
        %5546 = vmatprep.subr.bf16.mxu0 0
        %5547 = vmatpush2.bf16.msra.mxu0 0
        %5548 = vmatprep.subr.bf16.mxu0 0
        %5549 = vmatpush2.bf16.msra.mxu0 0
        %5550 = vmatprep.subr.bf16.mxu0 0
        %5551 = vmatpush2.bf16.msra.mxu0 0
        %5552 = vmatprep.subr.bf16.mxu0 0
        %5553 = vmatpush2.bf16.msra.mxu0 0
        %5554 = vmatprep.subr.bf16.mxu0 0
        %5555 = vmatpush2.bf16.msra.mxu0 0
        %5556 = vmatprep.subr.bf16.mxu0 0
        %5557 = vmatpush2.bf16.msra.mxu0 0
        %5558 = vmatprep.mubr.bf16.mxu0 0
        %5559 = vmatmul.mubr.bf16.gmra.mxu0 %v5521
        %v5560 = vpop.f32.mrf.mxu0
        %v5561 = vadd.f32 0.0, %v5560
        %v5562 = vpop.f32.mrf.mxu0
        %v5563 = vpop.f32.mrf.mxu0
        %v5564 = vpop.f32.mrf.mxu0
        %5565 = vdwg.mxu0
        %5567 = vrot.lane.b32.xlu0 %v4775, 64
        %v5568 = vpop.permute.xlu0 %5567
        %v5570 = vunpack.c.l.b16 %v5459
        %v5571 = vpack.c.b16 %v5570, %v5570
        %5572 = vrot.lane.b32.xlu0 %v5571, 64
        %v5573 = vpop.permute.xlu0 %5572
        %v5575 = vsel %vm4780, %v5568, 0
        %v5578 = vsel %vm4780, %v5573, 0
        %5580 = vmatprep.subr.bf16.mxu0 0
        %5581 = vmatpush1.bf16.xpose.msra.mxu0 0
        %5582 = vmatprep.subr.bf16.mxu0 0
        %5583 = vmatpush1.bf16.xpose.msra.mxu0 0
        %5584 = vmatprep.subr.bf16.mxu0 0
        %5585 = vmatpush1.bf16.xpose.msra.mxu0 0
        %5586 = vmatprep.subr.bf16.mxu0 0
        %5587 = vmatpush1.bf16.xpose.msra.mxu0 0
        %5588 = vmatprep.subr.bf16.mxu0 0
        %5589 = vmatpush1.bf16.xpose.msra.mxu0 0
        %5590 = vmatprep.subr.bf16.mxu0 0
        %5591 = vmatpush1.bf16.xpose.msra.mxu0 0
        %5592 = vmatprep.subr.bf16.mxu0 0
        %5593 = vmatpush1.bf16.xpose.msra.mxu0 0
        %5594 = vmatprep.subr.bf16.mxu0 0
        %5595 = vmatpush1.bf16.xpose.msra.mxu0 %v5578
        %5596 = vmatprep.subr.bf16.mxu0 0
        %5597 = vmatpush2.bf16.xpose.msra.mxu0 0
        %5598 = vmatprep.subr.bf16.mxu0 0
        %5599 = vmatpush2.bf16.xpose.msra.mxu0 0
        %5600 = vmatprep.subr.bf16.mxu0 0
        %5601 = vmatpush2.bf16.xpose.msra.mxu0 0
        %5602 = vmatprep.subr.bf16.mxu0 0
        %5603 = vmatpush2.bf16.xpose.msra.mxu0 0
        %5604 = vmatprep.subr.bf16.mxu0 0
        %5605 = vmatpush2.bf16.xpose.msra.mxu0 0
        %5606 = vmatprep.subr.bf16.mxu0 0
        %5607 = vmatpush2.bf16.xpose.msra.mxu0 0
        %5608 = vmatprep.subr.bf16.mxu0 0
        %5609 = vmatpush2.bf16.xpose.msra.mxu0 0
        %5610 = vmatprep.subr.bf16.mxu0 0
        %5611 = vmatpush2.bf16.xpose.msra.mxu0 0
        %5612 = vmatprep.mubr.bf16.mxu0 0
        %5613 = vmatmul.mubr.bf16.gmra.mxu0 %v5575
        %v5614 = vpop.f32.mrf.mxu0
        %v5615 = vadd.f32 0.0, %v5614
        %v5616 = vpop.f32.mrf.mxu0
        %v5617 = vpop.f32.mrf.mxu0
        %v5618 = vpop.f32.mrf.mxu0
        %5619 = vdwg.mxu0
        %v5620 = vsel %vm4829, -1e+09, %v5615
        %v5621 = vsel %vm4831, %v5620, -inf
        %5622 = vmax.xlane.f32.xlu0 %v5621
        %v5623 = vpop.xlane.xlu0 %5622
        %v5624 = vsub.f32 %v5620, %v5623
        %v5625 = vmul.f32 %v5624, 1.442695
        %v5626 = vpow.pop %v5625
        %v5627 = vsel %vm4831, %v5626, 0.0
        %5628 = vadd.xlane.f32.xlu0 %v5627
        %v5629 = vpop.xlane.xlu0 %5628
        %v5630 = vrcp.pop %v5629
        %v5631 = vmul.f32 %v5626, %v5630
        %v5632 = vpack.c.bf16 %v5631, %v5631
        %v5634 = vunpack.c.l.b16 %v5460
        %v5635 = vpack.c.b16 %v5634, %v5634
        %5636 = vrot.lane.b32.xlu0 %v5635, 64
        %v5637 = vpop.permute.xlu0 %5636
        %v5639 = vsel %vm4831, %v5632, 0
        %v5642 = vsel %vm4847, %v5637, 0
        %5644 = vmatprep.subr.bf16.mxu0 0
        %5645 = vmatpush1.bf16.msra.mxu0 0
        %5646 = vmatprep.subr.bf16.mxu0 0
        %5647 = vmatpush1.bf16.msra.mxu0 0
        %5648 = vmatprep.subr.bf16.mxu0 0
        %5649 = vmatpush1.bf16.msra.mxu0 0
        %5650 = vmatprep.subr.bf16.mxu0 0
        %5651 = vmatpush1.bf16.msra.mxu0 0
        %5652 = vmatprep.subr.bf16.mxu0 0
        %5653 = vmatpush1.bf16.msra.mxu0 0
        %5654 = vmatprep.subr.bf16.mxu0 0
        %5655 = vmatpush1.bf16.msra.mxu0 0
        %5656 = vmatprep.subr.bf16.mxu0 0
        %5657 = vmatpush1.bf16.msra.mxu0 0
        %5658 = vmatprep.subr.bf16.mxu0 0
        %5659 = vmatpush1.bf16.msra.mxu0 %v5642
        %5660 = vmatprep.subr.bf16.mxu0 0
        %5661 = vmatpush2.bf16.msra.mxu0 0
        %5662 = vmatprep.subr.bf16.mxu0 0
        %5663 = vmatpush2.bf16.msra.mxu0 0
        %5664 = vmatprep.subr.bf16.mxu0 0
        %5665 = vmatpush2.bf16.msra.mxu0 0
        %5666 = vmatprep.subr.bf16.mxu0 0
        %5667 = vmatpush2.bf16.msra.mxu0 0
        %5668 = vmatprep.subr.bf16.mxu0 0
        %5669 = vmatpush2.bf16.msra.mxu0 0
        %5670 = vmatprep.subr.bf16.mxu0 0
        %5671 = vmatpush2.bf16.msra.mxu0 0
        %5672 = vmatprep.subr.bf16.mxu0 0
        %5673 = vmatpush2.bf16.msra.mxu0 0
        %5674 = vmatprep.subr.bf16.mxu0 0
        %5675 = vmatpush2.bf16.msra.mxu0 0
        %5676 = vmatprep.mubr.bf16.mxu0 0
        %5677 = vmatmul.mubr.bf16.gmra.mxu0 %v5639
        %v5678 = vpop.f32.mrf.mxu0
        %v5679 = vadd.f32 0.0, %v5678
        %v5680 = vpop.f32.mrf.mxu0
        %v5681 = vpop.f32.mrf.mxu0
        %v5682 = vpop.f32.mrf.mxu0
        %5683 = vdwg.mxu0
        %5685 = vrot.lane.b32.xlu0 %v5004, 64
        %v5686 = vpop.permute.xlu0 %5685
        %5689 = vrot.lane.b32.xlu0 %v5229, 64
        %v5690 = vpop.permute.xlu0 %5689
        %5693 = vrot.lane.b32.xlu0 %v5454, 64
        %v5694 = vpop.permute.xlu0 %5693
        %5697 = vrot.lane.b32.xlu0 %v5679, 64
        %v5698 = vpop.permute.xlu0 %5697
        %v5700 = vsel %vm4780, %v4886, %v5686
        %v5701 = vsel %vm4780, %v5111, %v5690
        %v5702 = vsel %vm4780, %v5336, %v5694
        %v5703 = vsel %vm4780, %v5561, %v5698
        %v5704 = vpack.c.bf16 %v5700, %v5700
        %v5705 = vpack.c.bf16 %v5701, %v5701
        %v5706 = vpack.c.bf16 %v5702, %v5702
        %v5707 = vpack.c.bf16 %v5703, %v5703
        %v5708 = vld [vmem:[#allocation15] sm:$0xff]
        %v5709 = vld [vmem:[#allocation15 + $0x8] sm:$0xff]
        %v5710 = vld [vmem:[#allocation15 + $0x10] sm:$0xff]
        %v5711 = vld [vmem:[#allocation15 + $0x18] sm:$0xff]
        %v5712 = vld [vmem:[#allocation15 + $0x20] sm:$0xff]
        %v5713 = vld [vmem:[#allocation15 + $0x28] sm:$0xff]
        %v5714 = vld [vmem:[#allocation15 + $0x30] sm:$0xff]
        %v5715 = vld [vmem:[#allocation15 + $0x38] sm:$0xff]
        %v5716 = vld [vmem:[#allocation15 + $0x40] sm:$0xff]
        %v5717 = vld [vmem:[#allocation15 + $0x48] sm:$0xff]
        %v5718 = vld [vmem:[#allocation15 + $0x50] sm:$0xff]
        %v5719 = vld [vmem:[#allocation15 + $0x58] sm:$0xff]
        %v5720 = vld [vmem:[#allocation15 + $0x60] sm:$0xff]
        %v5721 = vld [vmem:[#allocation15 + $0x68] sm:$0xff]
        %v5722 = vld [vmem:[#allocation15 + $0x70] sm:$0xff]
        %v5723 = vld [vmem:[#allocation15 + $0x78] sm:$0xff]
        %v5724 = vld [vmem:[#allocation15 + $0x80] sm:$0xff]
        %v5725 = vld [vmem:[#allocation15 + $0x88] sm:$0xff]
        %v5726 = vld [vmem:[#allocation15 + $0x90] sm:$0xff]
        %v5727 = vld [vmem:[#allocation15 + $0x98] sm:$0xff]
        %v5728 = vld [vmem:[#allocation15 + $0xa0] sm:$0xff]
        %v5729 = vld [vmem:[#allocation15 + $0xa8] sm:$0xff]
        %v5730 = vld [vmem:[#allocation15 + $0xb0] sm:$0xff]
        %v5731 = vld [vmem:[#allocation15 + $0xb8] sm:$0xff]
        %v5732 = vld [vmem:[#allocation15 + $0xc0] sm:$0xff]
        %v5733 = vld [vmem:[#allocation15 + $0xc8] sm:$0xff]
        %v5734 = vld [vmem:[#allocation15 + $0xd0] sm:$0xff]
        %v5735 = vld [vmem:[#allocation15 + $0xd8] sm:$0xff]
        %v5736 = vld [vmem:[#allocation15 + $0xe0] sm:$0xff]
        %v5737 = vld [vmem:[#allocation15 + $0xe8] sm:$0xff]
        %v5738 = vld [vmem:[#allocation15 + $0xf0] sm:$0xff]
        %v5739 = vld [vmem:[#allocation15 + $0xf8] sm:$0xff]
        %v5740 = vld [vmem:[#allocation15 + $0x100] sm:$0xff]
        %v5741 = vld [vmem:[#allocation15 + $0x108] sm:$0xff]
        %v5742 = vld [vmem:[#allocation15 + $0x110] sm:$0xff]
        %v5743 = vld [vmem:[#allocation15 + $0x118] sm:$0xff]
        %v5744 = vld [vmem:[#allocation15 + $0x120] sm:$0xff]
        %v5745 = vld [vmem:[#allocation15 + $0x128] sm:$0xff]
        %v5746 = vld [vmem:[#allocation15 + $0x130] sm:$0xff]
        %v5747 = vld [vmem:[#allocation15 + $0x138] sm:$0xff]
        %v5748 = vld [vmem:[#allocation15 + $0x140] sm:$0xff]
        %v5749 = vld [vmem:[#allocation15 + $0x148] sm:$0xff]
        %v5750 = vld [vmem:[#allocation15 + $0x150] sm:$0xff]
        %v5751 = vld [vmem:[#allocation15 + $0x158] sm:$0xff]
        %v5752 = vld [vmem:[#allocation15 + $0x160] sm:$0xff]
        %v5753 = vld [vmem:[#allocation15 + $0x168] sm:$0xff]
        %v5754 = vld [vmem:[#allocation15 + $0x170] sm:$0xff]
        %v5755 = vld [vmem:[#allocation15 + $0x178] sm:$0xff]
        %v5756 = vld [vmem:[#allocation15 + $0x180] sm:$0xff]
        %v5757 = vld [vmem:[#allocation15 + $0x188] sm:$0xff]
        %v5758 = vld [vmem:[#allocation15 + $0x190] sm:$0xff]
        %v5759 = vld [vmem:[#allocation15 + $0x198] sm:$0xff]
        %v5760 = vld [vmem:[#allocation15 + $0x1a0] sm:$0xff]
        %v5761 = vld [vmem:[#allocation15 + $0x1a8] sm:$0xff]
        %v5762 = vld [vmem:[#allocation15 + $0x1b0] sm:$0xff]
        %v5763 = vld [vmem:[#allocation15 + $0x1b8] sm:$0xff]
        %v5764 = vld [vmem:[#allocation15 + $0x1c0] sm:$0xff]
        %v5765 = vld [vmem:[#allocation15 + $0x1c8] sm:$0xff]
        %v5766 = vld [vmem:[#allocation15 + $0x1d0] sm:$0xff]
        %v5767 = vld [vmem:[#allocation15 + $0x1d8] sm:$0xff]
        %v5768 = vld [vmem:[#allocation15 + $0x1e0] sm:$0xff]
        %v5769 = vld [vmem:[#allocation15 + $0x1e8] sm:$0xff]
        %v5770 = vld [vmem:[#allocation15 + $0x1f0] sm:$0xff]
        %v5771 = vld [vmem:[#allocation15 + $0x1f8] sm:$0xff]
        %v5772 = vld [vmem:[#allocation15 + $0x200] sm:$0xff]
        %v5773 = vld [vmem:[#allocation15 + $0x208] sm:$0xff]
        %v5774 = vld [vmem:[#allocation15 + $0x210] sm:$0xff]
        %v5775 = vld [vmem:[#allocation15 + $0x218] sm:$0xff]
        %v5776 = vld [vmem:[#allocation15 + $0x220] sm:$0xff]
        %v5777 = vld [vmem:[#allocation15 + $0x228] sm:$0xff]
        %v5778 = vld [vmem:[#allocation15 + $0x230] sm:$0xff]
        %v5779 = vld [vmem:[#allocation15 + $0x238] sm:$0xff]
        %v5780 = vld [vmem:[#allocation15 + $0x240] sm:$0xff]
        %v5781 = vld [vmem:[#allocation15 + $0x248] sm:$0xff]
        %v5782 = vld [vmem:[#allocation15 + $0x250] sm:$0xff]
        %v5783 = vld [vmem:[#allocation15 + $0x258] sm:$0xff]
        %v5784 = vld [vmem:[#allocation15 + $0x260] sm:$0xff]
        %v5785 = vld [vmem:[#allocation15 + $0x268] sm:$0xff]
        %v5786 = vld [vmem:[#allocation15 + $0x270] sm:$0xff]
        %v5787 = vld [vmem:[#allocation15 + $0x278] sm:$0xff]
        %v5788 = vld [vmem:[#allocation15 + $0x280] sm:$0xff]
        %v5789 = vld [vmem:[#allocation15 + $0x288] sm:$0xff]
        %v5790 = vld [vmem:[#allocation15 + $0x290] sm:$0xff]
        %v5791 = vld [vmem:[#allocation15 + $0x298] sm:$0xff]
        %v5792 = vld [vmem:[#allocation15 + $0x2a0] sm:$0xff]
        %v5793 = vld [vmem:[#allocation15 + $0x2a8] sm:$0xff]
        %v5794 = vld [vmem:[#allocation15 + $0x2b0] sm:$0xff]
        %v5795 = vld [vmem:[#allocation15 + $0x2b8] sm:$0xff]
        %v5796 = vld [vmem:[#allocation15 + $0x2c0] sm:$0xff]
        %v5797 = vld [vmem:[#allocation15 + $0x2c8] sm:$0xff]
        %v5798 = vld [vmem:[#allocation15 + $0x2d0] sm:$0xff]
        %v5799 = vld [vmem:[#allocation15 + $0x2d8] sm:$0xff]
        %v5800 = vld [vmem:[#allocation15 + $0x2e0] sm:$0xff]
        %v5801 = vld [vmem:[#allocation15 + $0x2e8] sm:$0xff]
        %v5802 = vld [vmem:[#allocation15 + $0x2f0] sm:$0xff]
        %v5803 = vld [vmem:[#allocation15 + $0x2f8] sm:$0xff]
        %v5804 = vld [vmem:[#allocation15 + $0x300] sm:$0xff]
        %v5805 = vld [vmem:[#allocation15 + $0x308] sm:$0xff]
        %v5806 = vld [vmem:[#allocation15 + $0x310] sm:$0xff]
        %v5807 = vld [vmem:[#allocation15 + $0x318] sm:$0xff]
        %v5808 = vld [vmem:[#allocation15 + $0x320] sm:$0xff]
        %v5809 = vld [vmem:[#allocation15 + $0x328] sm:$0xff]
        %v5810 = vld [vmem:[#allocation15 + $0x330] sm:$0xff]
        %v5811 = vld [vmem:[#allocation15 + $0x338] sm:$0xff]
        %v5812 = vld [vmem:[#allocation15 + $0x340] sm:$0xff]
        %v5813 = vld [vmem:[#allocation15 + $0x348] sm:$0xff]
        %v5814 = vld [vmem:[#allocation15 + $0x350] sm:$0xff]
        %v5815 = vld [vmem:[#allocation15 + $0x358] sm:$0xff]
        %v5816 = vld [vmem:[#allocation15 + $0x360] sm:$0xff]
        %v5817 = vld [vmem:[#allocation15 + $0x368] sm:$0xff]
        %v5818 = vld [vmem:[#allocation15 + $0x370] sm:$0xff]
        %v5819 = vld [vmem:[#allocation15 + $0x378] sm:$0xff]
        %v5820 = vld [vmem:[#allocation15 + $0x380] sm:$0xff]
        %v5821 = vld [vmem:[#allocation15 + $0x388] sm:$0xff]
        %v5822 = vld [vmem:[#allocation15 + $0x390] sm:$0xff]
        %v5823 = vld [vmem:[#allocation15 + $0x398] sm:$0xff]
        %v5824 = vld [vmem:[#allocation15 + $0x3a0] sm:$0xff]
        %v5825 = vld [vmem:[#allocation15 + $0x3a8] sm:$0xff]
        %v5826 = vld [vmem:[#allocation15 + $0x3b0] sm:$0xff]
        %v5827 = vld [vmem:[#allocation15 + $0x3b8] sm:$0xff]
        %v5828 = vld [vmem:[#allocation15 + $0x3c0] sm:$0xff]
        %v5829 = vld [vmem:[#allocation15 + $0x3c8] sm:$0xff]
        %v5830 = vld [vmem:[#allocation15 + $0x3d0] sm:$0xff]
        %v5831 = vld [vmem:[#allocation15 + $0x3d8] sm:$0xff]
        %v5832 = vld [vmem:[#allocation15 + $0x3e0] sm:$0xff]
        %v5833 = vld [vmem:[#allocation15 + $0x3e8] sm:$0xff]
        %v5834 = vld [vmem:[#allocation15 + $0x3f0] sm:$0xff]
        %v5835 = vld [vmem:[#allocation15 + $0x3f8] sm:$0xff]
        %v5836 = vld [vmem:[#allocation15 + $0x400] sm:$0xff]
        %v5837 = vld [vmem:[#allocation15 + $0x408] sm:$0xff]
        %v5838 = vld [vmem:[#allocation15 + $0x410] sm:$0xff]
        %v5839 = vld [vmem:[#allocation15 + $0x418] sm:$0xff]
        %v5840 = vld [vmem:[#allocation15 + $0x420] sm:$0xff]
        %v5841 = vld [vmem:[#allocation15 + $0x428] sm:$0xff]
        %v5842 = vld [vmem:[#allocation15 + $0x430] sm:$0xff]
        %v5843 = vld [vmem:[#allocation15 + $0x438] sm:$0xff]
        %v5844 = vld [vmem:[#allocation15 + $0x440] sm:$0xff]
        %v5845 = vld [vmem:[#allocation15 + $0x448] sm:$0xff]
        %v5846 = vld [vmem:[#allocation15 + $0x450] sm:$0xff]
        %v5847 = vld [vmem:[#allocation15 + $0x458] sm:$0xff]
        %v5848 = vld [vmem:[#allocation15 + $0x460] sm:$0xff]
        %v5849 = vld [vmem:[#allocation15 + $0x468] sm:$0xff]
        %v5850 = vld [vmem:[#allocation15 + $0x470] sm:$0xff]
        %v5851 = vld [vmem:[#allocation15 + $0x478] sm:$0xff]
        %v5852 = vld [vmem:[#allocation15 + $0x480] sm:$0xff]
        %v5853 = vld [vmem:[#allocation15 + $0x488] sm:$0xff]
        %v5854 = vld [vmem:[#allocation15 + $0x490] sm:$0xff]
        %v5855 = vld [vmem:[#allocation15 + $0x498] sm:$0xff]
        %v5856 = vld [vmem:[#allocation15 + $0x4a0] sm:$0xff]
        %v5857 = vld [vmem:[#allocation15 + $0x4a8] sm:$0xff]
        %v5858 = vld [vmem:[#allocation15 + $0x4b0] sm:$0xff]
        %v5859 = vld [vmem:[#allocation15 + $0x4b8] sm:$0xff]
        %v5860 = vld [vmem:[#allocation15 + $0x4c0] sm:$0xff]
        %v5861 = vld [vmem:[#allocation15 + $0x4c8] sm:$0xff]
        %v5862 = vld [vmem:[#allocation15 + $0x4d0] sm:$0xff]
        %v5863 = vld [vmem:[#allocation15 + $0x4d8] sm:$0xff]
        %v5864 = vld [vmem:[#allocation15 + $0x4e0] sm:$0xff]
        %v5865 = vld [vmem:[#allocation15 + $0x4e8] sm:$0xff]
        %v5866 = vld [vmem:[#allocation15 + $0x4f0] sm:$0xff]
        %v5867 = vld [vmem:[#allocation15 + $0x4f8] sm:$0xff]
        %v5868 = vld [vmem:[#allocation15 + $0x500] sm:$0xff]
        %v5869 = vld [vmem:[#allocation15 + $0x508] sm:$0xff]
        %v5870 = vld [vmem:[#allocation15 + $0x510] sm:$0xff]
        %v5871 = vld [vmem:[#allocation15 + $0x518] sm:$0xff]
        %v5872 = vld [vmem:[#allocation15 + $0x520] sm:$0xff]
        %v5873 = vld [vmem:[#allocation15 + $0x528] sm:$0xff]
        %v5874 = vld [vmem:[#allocation15 + $0x530] sm:$0xff]
        %v5875 = vld [vmem:[#allocation15 + $0x538] sm:$0xff]
        %v5876 = vld [vmem:[#allocation15 + $0x540] sm:$0xff]
        %v5877 = vld [vmem:[#allocation15 + $0x548] sm:$0xff]
        %v5878 = vld [vmem:[#allocation15 + $0x550] sm:$0xff]
        %v5879 = vld [vmem:[#allocation15 + $0x558] sm:$0xff]
        %v5880 = vld [vmem:[#allocation15 + $0x560] sm:$0xff]
        %v5881 = vld [vmem:[#allocation15 + $0x568] sm:$0xff]
        %v5882 = vld [vmem:[#allocation15 + $0x570] sm:$0xff]
        %v5883 = vld [vmem:[#allocation15 + $0x578] sm:$0xff]
        %v5884 = vld [vmem:[#allocation15 + $0x580] sm:$0xff]
        %v5885 = vld [vmem:[#allocation15 + $0x588] sm:$0xff]
        %v5886 = vld [vmem:[#allocation15 + $0x590] sm:$0xff]
        %v5887 = vld [vmem:[#allocation15 + $0x598] sm:$0xff]
        %v5888 = vld [vmem:[#allocation15 + $0x5a0] sm:$0xff]
        %v5889 = vld [vmem:[#allocation15 + $0x5a8] sm:$0xff]
        %v5890 = vld [vmem:[#allocation15 + $0x5b0] sm:$0xff]
        %v5891 = vld [vmem:[#allocation15 + $0x5b8] sm:$0xff]
        %v5892 = vld [vmem:[#allocation15 + $0x5c0] sm:$0xff]
        %v5893 = vld [vmem:[#allocation15 + $0x5c8] sm:$0xff]
        %v5894 = vld [vmem:[#allocation15 + $0x5d0] sm:$0xff]
        %v5895 = vld [vmem:[#allocation15 + $0x5d8] sm:$0xff]
        %v5896 = vld [vmem:[#allocation15 + $0x5e0] sm:$0xff]
        %v5897 = vld [vmem:[#allocation15 + $0x5e8] sm:$0xff]
        %v5898 = vld [vmem:[#allocation15 + $0x5f0] sm:$0xff]
        %v5899 = vld [vmem:[#allocation15 + $0x5f8] sm:$0xff]
        %v6092 = vunpack.c.l.b16 %v5708
        %v6093 = vunpack.c.h.b16 %v5708
        %v6094 = vunpack.c.l.b16 %v5709
        %v6095 = vunpack.c.h.b16 %v5709
        %v6096 = vunpack.c.l.b16 %v5710
        %v6097 = vunpack.c.h.b16 %v5710
        %v6098 = vunpack.c.l.b16 %v5711
        %v6099 = vunpack.c.h.b16 %v5711
        %v6100 = vunpack.c.l.b16 %v5712
        %v6101 = vunpack.c.h.b16 %v5712
        %v6102 = vunpack.c.l.b16 %v5713
        %v6103 = vunpack.c.h.b16 %v5713
        %v6104 = vunpack.c.l.b16 %v5714
        %v6105 = vunpack.c.h.b16 %v5714
        %v6106 = vunpack.c.l.b16 %v5715
        %v6107 = vunpack.c.h.b16 %v5715
        %v6108 = vunpack.c.l.b16 %v5716
        %v6109 = vunpack.c.h.b16 %v5716
        %v6110 = vunpack.c.l.b16 %v5717
        %v6111 = vunpack.c.h.b16 %v5717
        %v6112 = vunpack.c.l.b16 %v5718
        %v6113 = vunpack.c.h.b16 %v5718
        %v6114 = vunpack.c.l.b16 %v5719
        %v6115 = vunpack.c.h.b16 %v5719
        %v6116 = vunpack.c.l.b16 %v5720
        %v6117 = vunpack.c.h.b16 %v5720
        %v6118 = vunpack.c.l.b16 %v5721
        %v6119 = vunpack.c.h.b16 %v5721
        %v6120 = vunpack.c.l.b16 %v5722
        %v6121 = vunpack.c.h.b16 %v5722
        %v6122 = vunpack.c.l.b16 %v5723
        %v6123 = vunpack.c.h.b16 %v5723
        %v6124 = vunpack.c.l.b16 %v5724
        %v6125 = vunpack.c.h.b16 %v5724
        %v6126 = vunpack.c.l.b16 %v5725
        %v6127 = vunpack.c.h.b16 %v5725
        %v6128 = vunpack.c.l.b16 %v5726
        %v6129 = vunpack.c.h.b16 %v5726
        %v6130 = vunpack.c.l.b16 %v5727
        %v6131 = vunpack.c.h.b16 %v5727
        %v6132 = vunpack.c.l.b16 %v5728
        %v6133 = vunpack.c.h.b16 %v5728
        %v6134 = vunpack.c.l.b16 %v5729
        %v6135 = vunpack.c.h.b16 %v5729
        %v6136 = vunpack.c.l.b16 %v5730
        %v6137 = vunpack.c.h.b16 %v5730
        %v6138 = vunpack.c.l.b16 %v5731
        %v6139 = vunpack.c.h.b16 %v5731
        %v6140 = vunpack.c.l.b16 %v5732
        %v6141 = vunpack.c.h.b16 %v5732
        %v6142 = vunpack.c.l.b16 %v5733
        %v6143 = vunpack.c.h.b16 %v5733
        %v6144 = vunpack.c.l.b16 %v5734
        %v6145 = vunpack.c.h.b16 %v5734
        %v6146 = vunpack.c.l.b16 %v5735
        %v6147 = vunpack.c.h.b16 %v5735
        %v6148 = vunpack.c.l.b16 %v5736
        %v6149 = vunpack.c.h.b16 %v5736
        %v6150 = vunpack.c.l.b16 %v5737
        %v6151 = vunpack.c.h.b16 %v5737
        %v6152 = vunpack.c.l.b16 %v5738
        %v6153 = vunpack.c.h.b16 %v5738
        %v6154 = vunpack.c.l.b16 %v5739
        %v6155 = vunpack.c.h.b16 %v5739
        %v6156 = vunpack.c.l.b16 %v5740
        %v6157 = vunpack.c.h.b16 %v5740
        %v6158 = vunpack.c.l.b16 %v5741
        %v6159 = vunpack.c.h.b16 %v5741
        %v6160 = vunpack.c.l.b16 %v5742
        %v6161 = vunpack.c.h.b16 %v5742
        %v6162 = vunpack.c.l.b16 %v5743
        %v6163 = vunpack.c.h.b16 %v5743
        %v6164 = vunpack.c.l.b16 %v5744
        %v6165 = vunpack.c.h.b16 %v5744
        %v6166 = vunpack.c.l.b16 %v5745
        %v6167 = vunpack.c.h.b16 %v5745
        %v6168 = vunpack.c.l.b16 %v5746
        %v6169 = vunpack.c.h.b16 %v5746
        %v6170 = vunpack.c.l.b16 %v5747
        %v6171 = vunpack.c.h.b16 %v5747
        %v6172 = vunpack.c.l.b16 %v5748
        %v6173 = vunpack.c.h.b16 %v5748
        %v6174 = vunpack.c.l.b16 %v5749
        %v6175 = vunpack.c.h.b16 %v5749
        %v6176 = vunpack.c.l.b16 %v5750
        %v6177 = vunpack.c.h.b16 %v5750
        %v6178 = vunpack.c.l.b16 %v5751
        %v6179 = vunpack.c.h.b16 %v5751
        %v6180 = vunpack.c.l.b16 %v5752
        %v6181 = vunpack.c.h.b16 %v5752
        %v6182 = vunpack.c.l.b16 %v5753
        %v6183 = vunpack.c.h.b16 %v5753
        %v6184 = vunpack.c.l.b16 %v5754
        %v6185 = vunpack.c.h.b16 %v5754
        %v6186 = vunpack.c.l.b16 %v5755
        %v6187 = vunpack.c.h.b16 %v5755
        %v6188 = vunpack.c.l.b16 %v5756
        %v6189 = vunpack.c.h.b16 %v5756
        %v6190 = vunpack.c.l.b16 %v5757
        %v6191 = vunpack.c.h.b16 %v5757
        %v6192 = vunpack.c.l.b16 %v5758
        %v6193 = vunpack.c.h.b16 %v5758
        %v6194 = vunpack.c.l.b16 %v5759
        %v6195 = vunpack.c.h.b16 %v5759
        %v6196 = vunpack.c.l.b16 %v5760
        %v6197 = vunpack.c.h.b16 %v5760
        %v6198 = vunpack.c.l.b16 %v5761
        %v6199 = vunpack.c.h.b16 %v5761
        %v6200 = vunpack.c.l.b16 %v5762
        %v6201 = vunpack.c.h.b16 %v5762
        %v6202 = vunpack.c.l.b16 %v5763
        %v6203 = vunpack.c.h.b16 %v5763
        %v6204 = vunpack.c.l.b16 %v5764
        %v6205 = vunpack.c.h.b16 %v5764
        %v6206 = vunpack.c.l.b16 %v5765
        %v6207 = vunpack.c.h.b16 %v5765
        %v6208 = vunpack.c.l.b16 %v5766
        %v6209 = vunpack.c.h.b16 %v5766
        %v6210 = vunpack.c.l.b16 %v5767
        %v6211 = vunpack.c.h.b16 %v5767
        %v6212 = vunpack.c.l.b16 %v5768
        %v6213 = vunpack.c.h.b16 %v5768
        %v6214 = vunpack.c.l.b16 %v5769
        %v6215 = vunpack.c.h.b16 %v5769
        %v6216 = vunpack.c.l.b16 %v5770
        %v6217 = vunpack.c.h.b16 %v5770
        %v6218 = vunpack.c.l.b16 %v5771
        %v6219 = vunpack.c.h.b16 %v5771
        %v6220 = vunpack.c.l.b16 %v5772
        %v6221 = vunpack.c.h.b16 %v5772
        %v6222 = vunpack.c.l.b16 %v5773
        %v6223 = vunpack.c.h.b16 %v5773
        %v6224 = vunpack.c.l.b16 %v5774
        %v6225 = vunpack.c.h.b16 %v5774
        %v6226 = vunpack.c.l.b16 %v5775
        %v6227 = vunpack.c.h.b16 %v5775
        %v6228 = vunpack.c.l.b16 %v5776
        %v6229 = vunpack.c.h.b16 %v5776
        %v6230 = vunpack.c.l.b16 %v5777
        %v6231 = vunpack.c.h.b16 %v5777
        %v6232 = vunpack.c.l.b16 %v5778
        %v6233 = vunpack.c.h.b16 %v5778
        %v6234 = vunpack.c.l.b16 %v5779
        %v6235 = vunpack.c.h.b16 %v5779
        %v6236 = vunpack.c.l.b16 %v5780
        %v6237 = vunpack.c.h.b16 %v5780
        %v6238 = vunpack.c.l.b16 %v5781
        %v6239 = vunpack.c.h.b16 %v5781
        %v6240 = vunpack.c.l.b16 %v5782
        %v6241 = vunpack.c.h.b16 %v5782
        %v6242 = vunpack.c.l.b16 %v5783
        %v6243 = vunpack.c.h.b16 %v5783
        %v6244 = vunpack.c.l.b16 %v5784
        %v6245 = vunpack.c.h.b16 %v5784
        %v6246 = vunpack.c.l.b16 %v5785
        %v6247 = vunpack.c.h.b16 %v5785
        %v6248 = vunpack.c.l.b16 %v5786
        %v6249 = vunpack.c.h.b16 %v5786
        %v6250 = vunpack.c.l.b16 %v5787
        %v6251 = vunpack.c.h.b16 %v5787
        %v6252 = vunpack.c.l.b16 %v5788
        %v6253 = vunpack.c.h.b16 %v5788
        %v6254 = vunpack.c.l.b16 %v5789
        %v6255 = vunpack.c.h.b16 %v5789
        %v6256 = vunpack.c.l.b16 %v5790
        %v6257 = vunpack.c.h.b16 %v5790
        %v6258 = vunpack.c.l.b16 %v5791
        %v6259 = vunpack.c.h.b16 %v5791
        %v6260 = vunpack.c.l.b16 %v5792
        %v6261 = vunpack.c.h.b16 %v5792
        %v6262 = vunpack.c.l.b16 %v5793
        %v6263 = vunpack.c.h.b16 %v5793
        %v6264 = vunpack.c.l.b16 %v5794
        %v6265 = vunpack.c.h.b16 %v5794
        %v6266 = vunpack.c.l.b16 %v5795
        %v6267 = vunpack.c.h.b16 %v5795
        %v6268 = vunpack.c.l.b16 %v5796
        %v6269 = vunpack.c.h.b16 %v5796
        %v6270 = vunpack.c.l.b16 %v5797
        %v6271 = vunpack.c.h.b16 %v5797
        %v6272 = vunpack.c.l.b16 %v5798
        %v6273 = vunpack.c.h.b16 %v5798
        %v6274 = vunpack.c.l.b16 %v5799
        %v6275 = vunpack.c.h.b16 %v5799
        %v6276 = vunpack.c.l.b16 %v5800
        %v6277 = vunpack.c.h.b16 %v5800
        %v6278 = vunpack.c.l.b16 %v5801
        %v6279 = vunpack.c.h.b16 %v5801
        %v6280 = vunpack.c.l.b16 %v5802
        %v6281 = vunpack.c.h.b16 %v5802
        %v6282 = vunpack.c.l.b16 %v5803
        %v6283 = vunpack.c.h.b16 %v5803
        %v6284 = vunpack.c.l.b16 %v5804
        %v6285 = vunpack.c.h.b16 %v5804
        %v6286 = vunpack.c.l.b16 %v5805
        %v6287 = vunpack.c.h.b16 %v5805
        %v6288 = vunpack.c.l.b16 %v5806
        %v6289 = vunpack.c.h.b16 %v5806
        %v6290 = vunpack.c.l.b16 %v5807
        %v6291 = vunpack.c.h.b16 %v5807
        %v6292 = vunpack.c.l.b16 %v5808
        %v6293 = vunpack.c.h.b16 %v5808
        %v6294 = vunpack.c.l.b16 %v5809
        %v6295 = vunpack.c.h.b16 %v5809
        %v6296 = vunpack.c.l.b16 %v5810
        %v6297 = vunpack.c.h.b16 %v5810
        %v6298 = vunpack.c.l.b16 %v5811
        %v6299 = vunpack.c.h.b16 %v5811
        %v6300 = vunpack.c.l.b16 %v5812
        %v6301 = vunpack.c.h.b16 %v5812
        %v6302 = vunpack.c.l.b16 %v5813
        %v6303 = vunpack.c.h.b16 %v5813
        %v6304 = vunpack.c.l.b16 %v5814
        %v6305 = vunpack.c.h.b16 %v5814
        %v6306 = vunpack.c.l.b16 %v5815
        %v6307 = vunpack.c.h.b16 %v5815
        %v6308 = vunpack.c.l.b16 %v5816
        %v6309 = vunpack.c.h.b16 %v5816
        %v6310 = vunpack.c.l.b16 %v5817
        %v6311 = vunpack.c.h.b16 %v5817
        %v6312 = vunpack.c.l.b16 %v5818
        %v6313 = vunpack.c.h.b16 %v5818
        %v6314 = vunpack.c.l.b16 %v5819
        %v6315 = vunpack.c.h.b16 %v5819
        %v6316 = vunpack.c.l.b16 %v5820
        %v6317 = vunpack.c.h.b16 %v5820
        %v6318 = vunpack.c.l.b16 %v5821
        %v6319 = vunpack.c.h.b16 %v5821
        %v6320 = vunpack.c.l.b16 %v5822
        %v6321 = vunpack.c.h.b16 %v5822
        %v6322 = vunpack.c.l.b16 %v5823
        %v6323 = vunpack.c.h.b16 %v5823
        %v6324 = vunpack.c.l.b16 %v5824
        %v6325 = vunpack.c.h.b16 %v5824
        %v6326 = vunpack.c.l.b16 %v5825
        %v6327 = vunpack.c.h.b16 %v5825
        %v6328 = vunpack.c.l.b16 %v5826
        %v6329 = vunpack.c.h.b16 %v5826
        %v6330 = vunpack.c.l.b16 %v5827
        %v6331 = vunpack.c.h.b16 %v5827
        %v6332 = vunpack.c.l.b16 %v5828
        %v6333 = vunpack.c.h.b16 %v5828
        %v6334 = vunpack.c.l.b16 %v5829
        %v6335 = vunpack.c.h.b16 %v5829
        %v6336 = vunpack.c.l.b16 %v5830
        %v6337 = vunpack.c.h.b16 %v5830
        %v6338 = vunpack.c.l.b16 %v5831
        %v6339 = vunpack.c.h.b16 %v5831
        %v6340 = vunpack.c.l.b16 %v5832
        %v6341 = vunpack.c.h.b16 %v5832
        %v6342 = vunpack.c.l.b16 %v5833
        %v6343 = vunpack.c.h.b16 %v5833
        %v6344 = vunpack.c.l.b16 %v5834
        %v6345 = vunpack.c.h.b16 %v5834
        %v6346 = vunpack.c.l.b16 %v5835
        %v6347 = vunpack.c.h.b16 %v5835
        %v6348 = vunpack.c.l.b16 %v5836
        %v6349 = vunpack.c.h.b16 %v5836
        %v6350 = vunpack.c.l.b16 %v5837
        %v6351 = vunpack.c.h.b16 %v5837
        %v6352 = vunpack.c.l.b16 %v5838
        %v6353 = vunpack.c.h.b16 %v5838
        %v6354 = vunpack.c.l.b16 %v5839
        %v6355 = vunpack.c.h.b16 %v5839
        %v6356 = vunpack.c.l.b16 %v5840
        %v6357 = vunpack.c.h.b16 %v5840
        %v6358 = vunpack.c.l.b16 %v5841
        %v6359 = vunpack.c.h.b16 %v5841
        %v6360 = vunpack.c.l.b16 %v5842
        %v6361 = vunpack.c.h.b16 %v5842
        %v6362 = vunpack.c.l.b16 %v5843
        %v6363 = vunpack.c.h.b16 %v5843
        %v6364 = vunpack.c.l.b16 %v5844
        %v6365 = vunpack.c.h.b16 %v5844
        %v6366 = vunpack.c.l.b16 %v5845
        %v6367 = vunpack.c.h.b16 %v5845
        %v6368 = vunpack.c.l.b16 %v5846
        %v6369 = vunpack.c.h.b16 %v5846
        %v6370 = vunpack.c.l.b16 %v5847
        %v6371 = vunpack.c.h.b16 %v5847
        %v6372 = vunpack.c.l.b16 %v5848
        %v6373 = vunpack.c.h.b16 %v5848
        %v6374 = vunpack.c.l.b16 %v5849
        %v6375 = vunpack.c.h.b16 %v5849
        %v6376 = vunpack.c.l.b16 %v5850
        %v6377 = vunpack.c.h.b16 %v5850
        %v6378 = vunpack.c.l.b16 %v5851
        %v6379 = vunpack.c.h.b16 %v5851
        %v6380 = vunpack.c.l.b16 %v5852
        %v6381 = vunpack.c.h.b16 %v5852
        %v6382 = vunpack.c.l.b16 %v5853
        %v6383 = vunpack.c.h.b16 %v5853
        %v6384 = vunpack.c.l.b16 %v5854
        %v6385 = vunpack.c.h.b16 %v5854
        %v6386 = vunpack.c.l.b16 %v5855
        %v6387 = vunpack.c.h.b16 %v5855
        %v6388 = vunpack.c.l.b16 %v5856
        %v6389 = vunpack.c.h.b16 %v5856
        %v6390 = vunpack.c.l.b16 %v5857
        %v6391 = vunpack.c.h.b16 %v5857
        %v6392 = vunpack.c.l.b16 %v5858
        %v6393 = vunpack.c.h.b16 %v5858
        %v6394 = vunpack.c.l.b16 %v5859
        %v6395 = vunpack.c.h.b16 %v5859
        %v6396 = vunpack.c.l.b16 %v5860
        %v6397 = vunpack.c.h.b16 %v5860
        %v6398 = vunpack.c.l.b16 %v5861
        %v6399 = vunpack.c.h.b16 %v5861
        %v6400 = vunpack.c.l.b16 %v5862
        %v6401 = vunpack.c.h.b16 %v5862
        %v6402 = vunpack.c.l.b16 %v5863
        %v6403 = vunpack.c.h.b16 %v5863
        %v6404 = vunpack.c.l.b16 %v5864
        %v6405 = vunpack.c.h.b16 %v5864
        %v6406 = vunpack.c.l.b16 %v5865
        %v6407 = vunpack.c.h.b16 %v5865
        %v6408 = vunpack.c.l.b16 %v5866
        %v6409 = vunpack.c.h.b16 %v5866
        %v6410 = vunpack.c.l.b16 %v5867
        %v6411 = vunpack.c.h.b16 %v5867
        %v6412 = vunpack.c.l.b16 %v5868
        %v6413 = vunpack.c.h.b16 %v5868
        %v6414 = vunpack.c.l.b16 %v5869
        %v6415 = vunpack.c.h.b16 %v5869
        %v6416 = vunpack.c.l.b16 %v5870
        %v6417 = vunpack.c.h.b16 %v5870
        %v6418 = vunpack.c.l.b16 %v5871
        %v6419 = vunpack.c.h.b16 %v5871
        %v6420 = vunpack.c.l.b16 %v5872
        %v6421 = vunpack.c.h.b16 %v5872
        %v6422 = vunpack.c.l.b16 %v5873
        %v6423 = vunpack.c.h.b16 %v5873
        %v6424 = vunpack.c.l.b16 %v5874
        %v6425 = vunpack.c.h.b16 %v5874
        %v6426 = vunpack.c.l.b16 %v5875
        %v6427 = vunpack.c.h.b16 %v5875
        %v6428 = vunpack.c.l.b16 %v5876
        %v6429 = vunpack.c.h.b16 %v5876
        %v6430 = vunpack.c.l.b16 %v5877
        %v6431 = vunpack.c.h.b16 %v5877
        %v6432 = vunpack.c.l.b16 %v5878
        %v6433 = vunpack.c.h.b16 %v5878
        %v6434 = vunpack.c.l.b16 %v5879
        %v6435 = vunpack.c.h.b16 %v5879
        %v6436 = vunpack.c.l.b16 %v5880
        %v6437 = vunpack.c.h.b16 %v5880
        %v6438 = vunpack.c.l.b16 %v5881
        %v6439 = vunpack.c.h.b16 %v5881
        %v6440 = vunpack.c.l.b16 %v5882
        %v6441 = vunpack.c.h.b16 %v5882
        %v6442 = vunpack.c.l.b16 %v5883
        %v6443 = vunpack.c.h.b16 %v5883
        %v6444 = vunpack.c.l.b16 %v5884
        %v6445 = vunpack.c.h.b16 %v5884
        %v6446 = vunpack.c.l.b16 %v5885
        %v6447 = vunpack.c.h.b16 %v5885
        %v6448 = vunpack.c.l.b16 %v5886
        %v6449 = vunpack.c.h.b16 %v5886
        %v6450 = vunpack.c.l.b16 %v5887
        %v6451 = vunpack.c.h.b16 %v5887
        %v6452 = vunpack.c.l.b16 %v5888
        %v6453 = vunpack.c.h.b16 %v5888
        %v6454 = vunpack.c.l.b16 %v5889
        %v6455 = vunpack.c.h.b16 %v5889
        %v6456 = vunpack.c.l.b16 %v5890
        %v6457 = vunpack.c.h.b16 %v5890
        %v6458 = vunpack.c.l.b16 %v5891
        %v6459 = vunpack.c.h.b16 %v5891
        %v6460 = vunpack.c.l.b16 %v5892
        %v6461 = vunpack.c.h.b16 %v5892
        %v6462 = vunpack.c.l.b16 %v5893
        %v6463 = vunpack.c.h.b16 %v5893
        %v6464 = vunpack.c.l.b16 %v5894
        %v6465 = vunpack.c.h.b16 %v5894
        %v6466 = vunpack.c.l.b16 %v5895
        %v6467 = vunpack.c.h.b16 %v5895
        %v6468 = vunpack.c.l.b16 %v5896
        %v6469 = vunpack.c.h.b16 %v5896
        %v6470 = vunpack.c.l.b16 %v5897
        %v6471 = vunpack.c.h.b16 %v5897
        %v6472 = vunpack.c.l.b16 %v5898
        %v6473 = vunpack.c.h.b16 %v5898
        %v6474 = vunpack.c.l.b16 %v5899
        %v6475 = vunpack.c.h.b16 %v5899
        %v6476 = vpack.c.b16 %v6098, %v6092
        %v6477 = vpack.c.b16 %v6099, %v6093
        %v6478 = vpack.c.b16 %v6100, %v6094
        %v6479 = vpack.c.b16 %v6101, %v6095
        %v6480 = vpack.c.b16 %v6102, %v6096
        %v6481 = vpack.c.b16 %v6103, %v6097
        %v6482 = vpack.c.b16 %v6110, %v6104
        %v6483 = vpack.c.b16 %v6111, %v6105
        %v6484 = vpack.c.b16 %v6112, %v6106
        %v6485 = vpack.c.b16 %v6113, %v6107
        %v6486 = vpack.c.b16 %v6114, %v6108
        %v6487 = vpack.c.b16 %v6115, %v6109
        %v6488 = vpack.c.b16 %v6122, %v6116
        %v6489 = vpack.c.b16 %v6123, %v6117
        %v6490 = vpack.c.b16 %v6124, %v6118
        %v6491 = vpack.c.b16 %v6125, %v6119
        %v6492 = vpack.c.b16 %v6126, %v6120
        %v6493 = vpack.c.b16 %v6127, %v6121
        %v6494 = vpack.c.b16 %v6134, %v6128
        %v6495 = vpack.c.b16 %v6135, %v6129
        %v6496 = vpack.c.b16 %v6136, %v6130
        %v6497 = vpack.c.b16 %v6137, %v6131
        %v6498 = vpack.c.b16 %v6138, %v6132
        %v6499 = vpack.c.b16 %v6139, %v6133
        %v6500 = vpack.c.b16 %v6146, %v6140
        %v6501 = vpack.c.b16 %v6147, %v6141
        %v6502 = vpack.c.b16 %v6148, %v6142
        %v6503 = vpack.c.b16 %v6149, %v6143
        %v6504 = vpack.c.b16 %v6150, %v6144
        %v6505 = vpack.c.b16 %v6151, %v6145
        %v6506 = vpack.c.b16 %v6158, %v6152
        %v6507 = vpack.c.b16 %v6159, %v6153
        %v6508 = vpack.c.b16 %v6160, %v6154
        %v6509 = vpack.c.b16 %v6161, %v6155
        %v6510 = vpack.c.b16 %v6162, %v6156
        %v6511 = vpack.c.b16 %v6163, %v6157
        %v6512 = vpack.c.b16 %v6170, %v6164
        %v6513 = vpack.c.b16 %v6171, %v6165
        %v6514 = vpack.c.b16 %v6172, %v6166
        %v6515 = vpack.c.b16 %v6173, %v6167
        %v6516 = vpack.c.b16 %v6174, %v6168
        %v6517 = vpack.c.b16 %v6175, %v6169
        %v6518 = vpack.c.b16 %v6182, %v6176
        %v6519 = vpack.c.b16 %v6183, %v6177
        %v6520 = vpack.c.b16 %v6184, %v6178
        %v6521 = vpack.c.b16 %v6185, %v6179
        %v6522 = vpack.c.b16 %v6186, %v6180
        %v6523 = vpack.c.b16 %v6187, %v6181
        %v6524 = vpack.c.b16 %v6194, %v6188
        %v6525 = vpack.c.b16 %v6195, %v6189
        %v6526 = vpack.c.b16 %v6196, %v6190
        %v6527 = vpack.c.b16 %v6197, %v6191
        %v6528 = vpack.c.b16 %v6198, %v6192
        %v6529 = vpack.c.b16 %v6199, %v6193
        %v6530 = vpack.c.b16 %v6206, %v6200
        %v6531 = vpack.c.b16 %v6207, %v6201
        %v6532 = vpack.c.b16 %v6208, %v6202
        %v6533 = vpack.c.b16 %v6209, %v6203
        %v6534 = vpack.c.b16 %v6210, %v6204
        %v6535 = vpack.c.b16 %v6211, %v6205
        %v6536 = vpack.c.b16 %v6218, %v6212
        %v6537 = vpack.c.b16 %v6219, %v6213
        %v6538 = vpack.c.b16 %v6220, %v6214
        %v6539 = vpack.c.b16 %v6221, %v6215
        %v6540 = vpack.c.b16 %v6222, %v6216
        %v6541 = vpack.c.b16 %v6223, %v6217
        %v6542 = vpack.c.b16 %v6230, %v6224
        %v6543 = vpack.c.b16 %v6231, %v6225
        %v6544 = vpack.c.b16 %v6232, %v6226
        %v6545 = vpack.c.b16 %v6233, %v6227
        %v6546 = vpack.c.b16 %v6234, %v6228
        %v6547 = vpack.c.b16 %v6235, %v6229
        %v6548 = vpack.c.b16 %v6242, %v6236
        %v6549 = vpack.c.b16 %v6243, %v6237
        %v6550 = vpack.c.b16 %v6244, %v6238
        %v6551 = vpack.c.b16 %v6245, %v6239
        %v6552 = vpack.c.b16 %v6246, %v6240
        %v6553 = vpack.c.b16 %v6247, %v6241
        %v6554 = vpack.c.b16 %v6254, %v6248
        %v6555 = vpack.c.b16 %v6255, %v6249
        %v6556 = vpack.c.b16 %v6256, %v6250
        %v6557 = vpack.c.b16 %v6257, %v6251
        %v6558 = vpack.c.b16 %v6258, %v6252
        %v6559 = vpack.c.b16 %v6259, %v6253
        %v6560 = vpack.c.b16 %v6266, %v6260
        %v6561 = vpack.c.b16 %v6267, %v6261
        %v6562 = vpack.c.b16 %v6268, %v6262
        %v6563 = vpack.c.b16 %v6269, %v6263
        %v6564 = vpack.c.b16 %v6270, %v6264
        %v6565 = vpack.c.b16 %v6271, %v6265
        %v6566 = vpack.c.b16 %v6278, %v6272
        %v6567 = vpack.c.b16 %v6279, %v6273
        %v6568 = vpack.c.b16 %v6280, %v6274
        %v6569 = vpack.c.b16 %v6281, %v6275
        %v6570 = vpack.c.b16 %v6282, %v6276
        %v6571 = vpack.c.b16 %v6283, %v6277
        %v6572 = vpack.c.b16 %v6290, %v6284
        %v6573 = vpack.c.b16 %v6291, %v6285
        %v6574 = vpack.c.b16 %v6292, %v6286
        %v6575 = vpack.c.b16 %v6293, %v6287
        %v6576 = vpack.c.b16 %v6294, %v6288
        %v6577 = vpack.c.b16 %v6295, %v6289
        %v6578 = vpack.c.b16 %v6302, %v6296
        %v6579 = vpack.c.b16 %v6303, %v6297
        %v6580 = vpack.c.b16 %v6304, %v6298
        %v6581 = vpack.c.b16 %v6305, %v6299
        %v6582 = vpack.c.b16 %v6306, %v6300
        %v6583 = vpack.c.b16 %v6307, %v6301
        %v6584 = vpack.c.b16 %v6314, %v6308
        %v6585 = vpack.c.b16 %v6315, %v6309
        %v6586 = vpack.c.b16 %v6316, %v6310
        %v6587 = vpack.c.b16 %v6317, %v6311
        %v6588 = vpack.c.b16 %v6318, %v6312
        %v6589 = vpack.c.b16 %v6319, %v6313
        %v6590 = vpack.c.b16 %v6326, %v6320
        %v6591 = vpack.c.b16 %v6327, %v6321
        %v6592 = vpack.c.b16 %v6328, %v6322
        %v6593 = vpack.c.b16 %v6329, %v6323
        %v6594 = vpack.c.b16 %v6330, %v6324
        %v6595 = vpack.c.b16 %v6331, %v6325
        %v6596 = vpack.c.b16 %v6338, %v6332
        %v6597 = vpack.c.b16 %v6339, %v6333
        %v6598 = vpack.c.b16 %v6340, %v6334
        %v6599 = vpack.c.b16 %v6341, %v6335
        %v6600 = vpack.c.b16 %v6342, %v6336
        %v6601 = vpack.c.b16 %v6343, %v6337
        %v6602 = vpack.c.b16 %v6350, %v6344
        %v6603 = vpack.c.b16 %v6351, %v6345
        %v6604 = vpack.c.b16 %v6352, %v6346
        %v6605 = vpack.c.b16 %v6353, %v6347
        %v6606 = vpack.c.b16 %v6354, %v6348
        %v6607 = vpack.c.b16 %v6355, %v6349
        %v6608 = vpack.c.b16 %v6362, %v6356
        %v6609 = vpack.c.b16 %v6363, %v6357
        %v6610 = vpack.c.b16 %v6364, %v6358
        %v6611 = vpack.c.b16 %v6365, %v6359
        %v6612 = vpack.c.b16 %v6366, %v6360
        %v6613 = vpack.c.b16 %v6367, %v6361
        %v6614 = vpack.c.b16 %v6374, %v6368
        %v6615 = vpack.c.b16 %v6375, %v6369
        %v6616 = vpack.c.b16 %v6376, %v6370
        %v6617 = vpack.c.b16 %v6377, %v6371
        %v6618 = vpack.c.b16 %v6378, %v6372
        %v6619 = vpack.c.b16 %v6379, %v6373
        %v6620 = vpack.c.b16 %v6386, %v6380
        %v6621 = vpack.c.b16 %v6387, %v6381
        %v6622 = vpack.c.b16 %v6388, %v6382
        %v6623 = vpack.c.b16 %v6389, %v6383
        %v6624 = vpack.c.b16 %v6390, %v6384
        %v6625 = vpack.c.b16 %v6391, %v6385
        %v6626 = vpack.c.b16 %v6398, %v6392
        %v6627 = vpack.c.b16 %v6399, %v6393
        %v6628 = vpack.c.b16 %v6400, %v6394
        %v6629 = vpack.c.b16 %v6401, %v6395
        %v6630 = vpack.c.b16 %v6402, %v6396
        %v6631 = vpack.c.b16 %v6403, %v6397
        %v6632 = vpack.c.b16 %v6410, %v6404
        %v6633 = vpack.c.b16 %v6411, %v6405
        %v6634 = vpack.c.b16 %v6412, %v6406
        %v6635 = vpack.c.b16 %v6413, %v6407
        %v6636 = vpack.c.b16 %v6414, %v6408
        %v6637 = vpack.c.b16 %v6415, %v6409
        %v6638 = vpack.c.b16 %v6422, %v6416
        %v6639 = vpack.c.b16 %v6423, %v6417
        %v6640 = vpack.c.b16 %v6424, %v6418
        %v6641 = vpack.c.b16 %v6425, %v6419
        %v6642 = vpack.c.b16 %v6426, %v6420
        %v6643 = vpack.c.b16 %v6427, %v6421
        %v6644 = vpack.c.b16 %v6434, %v6428
        %v6645 = vpack.c.b16 %v6435, %v6429
        %v6646 = vpack.c.b16 %v6436, %v6430
        %v6647 = vpack.c.b16 %v6437, %v6431
        %v6648 = vpack.c.b16 %v6438, %v6432
        %v6649 = vpack.c.b16 %v6439, %v6433
        %v6650 = vpack.c.b16 %v6446, %v6440
        %v6651 = vpack.c.b16 %v6447, %v6441
        %v6652 = vpack.c.b16 %v6448, %v6442
        %v6653 = vpack.c.b16 %v6449, %v6443
        %v6654 = vpack.c.b16 %v6450, %v6444
        %v6655 = vpack.c.b16 %v6451, %v6445
        %v6656 = vpack.c.b16 %v6458, %v6452
        %v6657 = vpack.c.b16 %v6459, %v6453
        %v6658 = vpack.c.b16 %v6460, %v6454
        %v6659 = vpack.c.b16 %v6461, %v6455
        %v6660 = vpack.c.b16 %v6462, %v6456
        %v6661 = vpack.c.b16 %v6463, %v6457
        %v6662 = vpack.c.b16 %v6470, %v6464
        %v6663 = vpack.c.b16 %v6471, %v6465
        %v6664 = vpack.c.b16 %v6472, %v6466
        %v6665 = vpack.c.b16 %v6473, %v6467
        %v6666 = vpack.c.b16 %v6474, %v6468
        %v6667 = vpack.c.b16 %v6475, %v6469
        %6860 = vmatprep.subr.bf16.mxu0 %v6519
        %6861 = vmatpush1.bf16.msra.mxu0 %v6518
        %6862 = vmatprep.subr.bf16.mxu0 %v6513
        %6863 = vmatpush1.bf16.msra.mxu0 %v6512
        %6864 = vmatprep.subr.bf16.mxu0 %v6507
        %6865 = vmatpush1.bf16.msra.mxu0 %v6506
        %6866 = vmatprep.subr.bf16.mxu0 %v6501
        %6867 = vmatpush1.bf16.msra.mxu0 %v6500
        %6868 = vmatprep.subr.bf16.mxu0 %v6495
        %6869 = vmatpush1.bf16.msra.mxu0 %v6494
        %6870 = vmatprep.subr.bf16.mxu0 %v6489
        %6871 = vmatpush1.bf16.msra.mxu0 %v6488
        %6872 = vmatprep.subr.bf16.mxu0 %v6483
        %6873 = vmatpush1.bf16.msra.mxu0 %v6482
        %6874 = vmatprep.subr.bf16.mxu0 %v6477
        %6875 = vmatpush1.bf16.msra.mxu0 %v6476
        %6876 = vmatprep.subr.bf16.mxu0 %v6567
        %6877 = vmatpush2.bf16.msra.mxu0 %v6566
        %6878 = vmatprep.subr.bf16.mxu0 %v6561
        %6879 = vmatpush2.bf16.msra.mxu0 %v6560
        %6880 = vmatprep.subr.bf16.mxu0 %v6555
        %6881 = vmatpush2.bf16.msra.mxu0 %v6554
        %6882 = vmatprep.subr.bf16.mxu0 %v6549
        %6883 = vmatpush2.bf16.msra.mxu0 %v6548
        %6884 = vmatprep.subr.bf16.mxu0 %v6543
        %6885 = vmatpush2.bf16.msra.mxu0 %v6542
        %6886 = vmatprep.subr.bf16.mxu0 %v6537
        %6887 = vmatpush2.bf16.msra.mxu0 %v6536
        %6888 = vmatprep.subr.bf16.mxu0 %v6531
        %6889 = vmatpush2.bf16.msra.mxu0 %v6530
        %6890 = vmatprep.subr.bf16.mxu0 %v6525
        %6891 = vmatpush2.bf16.msra.mxu0 %v6524
        %6892 = vmatprep.mubr.bf16.mxu0 %v5705
        %6893 = vmatmul.mubr.bf16.gmra.mxu0 %v5704
        %v6894 = vpop.f32.mrf.mxu0
        %v6895 = vadd.f32 0.0, %v6894
        %v6896 = vpop.f32.mrf.mxu0
        %v6897 = vadd.f32 0.0, %v6896
        %v6898 = vpop.f32.mrf.mxu0
        %v6899 = vpop.f32.mrf.mxu0
        %6900 = vdwg.mxu0
        %6901 = vmatprep.subr.bf16.mxu0 %v6615
        %6902 = vmatpush1.bf16.msra.mxu0 %v6614
        %6903 = vmatprep.subr.bf16.mxu0 %v6609
        %6904 = vmatpush1.bf16.msra.mxu0 %v6608
        %6905 = vmatprep.subr.bf16.mxu0 %v6603
        %6906 = vmatpush1.bf16.msra.mxu0 %v6602
        %6907 = vmatprep.subr.bf16.mxu0 %v6597
        %6908 = vmatpush1.bf16.msra.mxu0 %v6596
        %6909 = vmatprep.subr.bf16.mxu0 %v6591
        %6910 = vmatpush1.bf16.msra.mxu0 %v6590
        %6911 = vmatprep.subr.bf16.mxu0 %v6585
        %6912 = vmatpush1.bf16.msra.mxu0 %v6584
        %6913 = vmatprep.subr.bf16.mxu0 %v6579
        %6914 = vmatpush1.bf16.msra.mxu0 %v6578
        %6915 = vmatprep.subr.bf16.mxu0 %v6573
        %6916 = vmatpush1.bf16.msra.mxu0 %v6572
        %6917 = vmatprep.subr.bf16.mxu0 %v6663
        %6918 = vmatpush2.bf16.msra.mxu0 %v6662
        %6919 = vmatprep.subr.bf16.mxu0 %v6657
        %6920 = vmatpush2.bf16.msra.mxu0 %v6656
        %6921 = vmatprep.subr.bf16.mxu0 %v6651
        %6922 = vmatpush2.bf16.msra.mxu0 %v6650
        %6923 = vmatprep.subr.bf16.mxu0 %v6645
        %6924 = vmatpush2.bf16.msra.mxu0 %v6644
        %6925 = vmatprep.subr.bf16.mxu0 %v6639
        %6926 = vmatpush2.bf16.msra.mxu0 %v6638
        %6927 = vmatprep.subr.bf16.mxu0 %v6633
        %6928 = vmatpush2.bf16.msra.mxu0 %v6632
        %6929 = vmatprep.subr.bf16.mxu0 %v6627
        %6930 = vmatpush2.bf16.msra.mxu0 %v6626
        %6931 = vmatprep.subr.bf16.mxu0 %v6621
        %6932 = vmatpush2.bf16.msra.mxu0 %v6620
        %6933 = vmatprep.mubr.bf16.mxu0 %v5707
        %6934 = vmatmul.mubr.bf16.gmra.mxu0 %v5706
        %v6935 = vpop.f32.mrf.mxu0
        %v6936 = vadd.f32 %v6895, %v6935
        %v6937 = vpop.f32.mrf.mxu0
        %v6938 = vadd.f32 %v6897, %v6937
        %v6939 = vpop.f32.mrf.mxu0
        %v6940 = vpop.f32.mrf.mxu0
        %6941 = vdwg.mxu0
        %6942 = vmatprep.subr.bf16.mxu0 %v6521
        %6943 = vmatpush1.bf16.msra.mxu0 %v6520
        %6944 = vmatprep.subr.bf16.mxu0 %v6515
        %6945 = vmatpush1.bf16.msra.mxu0 %v6514
        %6946 = vmatprep.subr.bf16.mxu0 %v6509
        %6947 = vmatpush1.bf16.msra.mxu0 %v6508
        %6948 = vmatprep.subr.bf16.mxu0 %v6503
        %6949 = vmatpush1.bf16.msra.mxu0 %v6502
        %6950 = vmatprep.subr.bf16.mxu0 %v6497
        %6951 = vmatpush1.bf16.msra.mxu0 %v6496
        %6952 = vmatprep.subr.bf16.mxu0 %v6491
        %6953 = vmatpush1.bf16.msra.mxu0 %v6490
        %6954 = vmatprep.subr.bf16.mxu0 %v6485
        %6955 = vmatpush1.bf16.msra.mxu0 %v6484
        %6956 = vmatprep.subr.bf16.mxu0 %v6479
        %6957 = vmatpush1.bf16.msra.mxu0 %v6478
        %6958 = vmatprep.subr.bf16.mxu0 %v6569
        %6959 = vmatpush2.bf16.msra.mxu0 %v6568
        %6960 = vmatprep.subr.bf16.mxu0 %v6563
        %6961 = vmatpush2.bf16.msra.mxu0 %v6562
        %6962 = vmatprep.subr.bf16.mxu0 %v6557
        %6963 = vmatpush2.bf16.msra.mxu0 %v6556
        %6964 = vmatprep.subr.bf16.mxu0 %v6551
        %6965 = vmatpush2.bf16.msra.mxu0 %v6550
        %6966 = vmatprep.subr.bf16.mxu0 %v6545
        %6967 = vmatpush2.bf16.msra.mxu0 %v6544
        %6968 = vmatprep.subr.bf16.mxu0 %v6539
        %6969 = vmatpush2.bf16.msra.mxu0 %v6538
        %6970 = vmatprep.subr.bf16.mxu0 %v6533
        %6971 = vmatpush2.bf16.msra.mxu0 %v6532
        %6972 = vmatprep.subr.bf16.mxu0 %v6527
        %6973 = vmatpush2.bf16.msra.mxu0 %v6526
        %6974 = vmatprep.mubr.bf16.mxu0 %v5705
        %6975 = vmatmul.mubr.bf16.gmra.mxu0 %v5704
        %v6976 = vpop.f32.mrf.mxu0
        %v6977 = vadd.f32 0.0, %v6976
        %v6978 = vpop.f32.mrf.mxu0
        %v6979 = vadd.f32 0.0, %v6978
        %v6980 = vpop.f32.mrf.mxu0
        %v6981 = vpop.f32.mrf.mxu0
        %6982 = vdwg.mxu0
        %6983 = vmatprep.subr.bf16.mxu0 %v6617
        %6984 = vmatpush1.bf16.msra.mxu0 %v6616
        %6985 = vmatprep.subr.bf16.mxu0 %v6611
        %6986 = vmatpush1.bf16.msra.mxu0 %v6610
        %6987 = vmatprep.subr.bf16.mxu0 %v6605
        %6988 = vmatpush1.bf16.msra.mxu0 %v6604
        %6989 = vmatprep.subr.bf16.mxu0 %v6599
        %6990 = vmatpush1.bf16.msra.mxu0 %v6598
        %6991 = vmatprep.subr.bf16.mxu0 %v6593
        %6992 = vmatpush1.bf16.msra.mxu0 %v6592
        %6993 = vmatprep.subr.bf16.mxu0 %v6587
        %6994 = vmatpush1.bf16.msra.mxu0 %v6586
        %6995 = vmatprep.subr.bf16.mxu0 %v6581
        %6996 = vmatpush1.bf16.msra.mxu0 %v6580
        %6997 = vmatprep.subr.bf16.mxu0 %v6575
        %6998 = vmatpush1.bf16.msra.mxu0 %v6574
        %6999 = vmatprep.subr.bf16.mxu0 %v6665
        %7000 = vmatpush2.bf16.msra.mxu0 %v6664
        %7001 = vmatprep.subr.bf16.mxu0 %v6659
        %7002 = vmatpush2.bf16.msra.mxu0 %v6658
        %7003 = vmatprep.subr.bf16.mxu0 %v6653
        %7004 = vmatpush2.bf16.msra.mxu0 %v6652
        %7005 = vmatprep.subr.bf16.mxu0 %v6647
        %7006 = vmatpush2.bf16.msra.mxu0 %v6646
        %7007 = vmatprep.subr.bf16.mxu0 %v6641
        %7008 = vmatpush2.bf16.msra.mxu0 %v6640
        %7009 = vmatprep.subr.bf16.mxu0 %v6635
        %7010 = vmatpush2.bf16.msra.mxu0 %v6634
        %7011 = vmatprep.subr.bf16.mxu0 %v6629
        %7012 = vmatpush2.bf16.msra.mxu0 %v6628
        %7013 = vmatprep.subr.bf16.mxu0 %v6623
        %7014 = vmatpush2.bf16.msra.mxu0 %v6622
        %7015 = vmatprep.mubr.bf16.mxu0 %v5707
        %7016 = vmatmul.mubr.bf16.gmra.mxu0 %v5706
        %v7017 = vpop.f32.mrf.mxu0
        %v7018 = vadd.f32 %v6977, %v7017
        %v7019 = vpop.f32.mrf.mxu0
        %v7020 = vadd.f32 %v6979, %v7019
        %v7021 = vpop.f32.mrf.mxu0
        %v7022 = vpop.f32.mrf.mxu0
        %7023 = vdwg.mxu0
        %7024 = vmatprep.subr.bf16.mxu0 %v6523
        %7025 = vmatpush1.bf16.msra.mxu0 %v6522
        %7026 = vmatprep.subr.bf16.mxu0 %v6517
        %7027 = vmatpush1.bf16.msra.mxu0 %v6516
        %7028 = vmatprep.subr.bf16.mxu0 %v6511
        %7029 = vmatpush1.bf16.msra.mxu0 %v6510
        %7030 = vmatprep.subr.bf16.mxu0 %v6505
        %7031 = vmatpush1.bf16.msra.mxu0 %v6504
        %7032 = vmatprep.subr.bf16.mxu0 %v6499
        %7033 = vmatpush1.bf16.msra.mxu0 %v6498
        %7034 = vmatprep.subr.bf16.mxu0 %v6493
        %7035 = vmatpush1.bf16.msra.mxu0 %v6492
        %7036 = vmatprep.subr.bf16.mxu0 %v6487
        %7037 = vmatpush1.bf16.msra.mxu0 %v6486
        %7038 = vmatprep.subr.bf16.mxu0 %v6481
        %7039 = vmatpush1.bf16.msra.mxu0 %v6480
        %7040 = vmatprep.subr.bf16.mxu0 %v6571
        %7041 = vmatpush2.bf16.msra.mxu0 %v6570
        %7042 = vmatprep.subr.bf16.mxu0 %v6565
        %7043 = vmatpush2.bf16.msra.mxu0 %v6564
        %7044 = vmatprep.subr.bf16.mxu0 %v6559
        %7045 = vmatpush2.bf16.msra.mxu0 %v6558
        %7046 = vmatprep.subr.bf16.mxu0 %v6553
        %7047 = vmatpush2.bf16.msra.mxu0 %v6552
        %7048 = vmatprep.subr.bf16.mxu0 %v6547
        %7049 = vmatpush2.bf16.msra.mxu0 %v6546
        %7050 = vmatprep.subr.bf16.mxu0 %v6541
        %7051 = vmatpush2.bf16.msra.mxu0 %v6540
        %7052 = vmatprep.subr.bf16.mxu0 %v6535
        %7053 = vmatpush2.bf16.msra.mxu0 %v6534
        %7054 = vmatprep.subr.bf16.mxu0 %v6529
        %7055 = vmatpush2.bf16.msra.mxu0 %v6528
        %7056 = vmatprep.mubr.bf16.mxu0 %v5705
        %7057 = vmatmul.mubr.bf16.gmra.mxu0 %v5704
        %v7058 = vpop.f32.mrf.mxu0
        %v7059 = vadd.f32 0.0, %v7058
        %v7060 = vpop.f32.mrf.mxu0
        %v7061 = vadd.f32 0.0, %v7060
        %v7062 = vpop.f32.mrf.mxu0
        %v7063 = vpop.f32.mrf.mxu0
        %7064 = vdwg.mxu0
        %7065 = vmatprep.subr.bf16.mxu0 %v6619
        %7066 = vmatpush1.bf16.msra.mxu0 %v6618
        %7067 = vmatprep.subr.bf16.mxu0 %v6613
        %7068 = vmatpush1.bf16.msra.mxu0 %v6612
        %7069 = vmatprep.subr.bf16.mxu0 %v6607
        %7070 = vmatpush1.bf16.msra.mxu0 %v6606
        %7071 = vmatprep.subr.bf16.mxu0 %v6601
        %7072 = vmatpush1.bf16.msra.mxu0 %v6600
        %7073 = vmatprep.subr.bf16.mxu0 %v6595
        %7074 = vmatpush1.bf16.msra.mxu0 %v6594
        %7075 = vmatprep.subr.bf16.mxu0 %v6589
        %7076 = vmatpush1.bf16.msra.mxu0 %v6588
        %7077 = vmatprep.subr.bf16.mxu0 %v6583
        %7078 = vmatpush1.bf16.msra.mxu0 %v6582
        %7079 = vmatprep.subr.bf16.mxu0 %v6577
        %7080 = vmatpush1.bf16.msra.mxu0 %v6576
        %7081 = vmatprep.subr.bf16.mxu0 %v6667
        %7082 = vmatpush2.bf16.msra.mxu0 %v6666
        %7083 = vmatprep.subr.bf16.mxu0 %v6661
        %7084 = vmatpush2.bf16.msra.mxu0 %v6660
        %7085 = vmatprep.subr.bf16.mxu0 %v6655
        %7086 = vmatpush2.bf16.msra.mxu0 %v6654
        %7087 = vmatprep.subr.bf16.mxu0 %v6649
        %7088 = vmatpush2.bf16.msra.mxu0 %v6648
        %7089 = vmatprep.subr.bf16.mxu0 %v6643
        %7090 = vmatpush2.bf16.msra.mxu0 %v6642
        %7091 = vmatprep.subr.bf16.mxu0 %v6637
        %7092 = vmatpush2.bf16.msra.mxu0 %v6636
        %7093 = vmatprep.subr.bf16.mxu0 %v6631
        %7094 = vmatpush2.bf16.msra.mxu0 %v6630
        %7095 = vmatprep.subr.bf16.mxu0 %v6625
        %7096 = vmatpush2.bf16.msra.mxu0 %v6624
        %7097 = vmatprep.mubr.bf16.mxu0 %v5707
        %7098 = vmatmul.mubr.bf16.gmra.mxu0 %v5706
        %v7099 = vpop.f32.mrf.mxu0
        %v7100 = vadd.f32 %v7059, %v7099
        %v7101 = vpop.f32.mrf.mxu0
        %v7102 = vadd.f32 %v7061, %v7101
        %v7103 = vpop.f32.mrf.mxu0
        %v7104 = vpop.f32.mrf.mxu0
        %7105 = vdwg.mxu0
        %7106 = vst [vmem:[%s491] sm:$0xff] %v6936
        %7107 = vst [vmem:[%s491 + $0x8] sm:$0xff] %v6938
        %7108 = vst [vmem:[%s491 + $0x10] sm:$0xff] %v7018
        %7109 = vst [vmem:[%s491 + $0x18] sm:$0xff] %v7020
        %7110 = vst [vmem:[%s491 + $0x20] sm:$0xff] %v7100
        %7111 = vst [vmem:[%s491 + $0x28] sm:$0xff] %v7102
        %s7112 = sand.u32 %s244, 1
        %s7113 = scalar_lea.sflag [#allocation6], %s7112
        %s7114 = sand.u32 %s244, 1
        %s7115 = smul.addr %s7114, 48
        %s7116 = scalar_lea.vmem [#allocation16], %s7115
        // Predicated region
        $region85: #{multi_head_attention.1} parent=51 // pred_check
          %p7117 = pneg %p254
        $region86: #{multi_head_attention.1} parent=51 // pred_check_branch
          %7119 = sbr.rel (%p7117) target = $region88
        $region87: #{multi_head_attention.1} parent=51 // pred_region
          %s7121 = ssub.s32 768, 768
          %7122 = vsyncadd %s7113, %s7121
          %s7123 = smul.addr %s35, 6
          %s7124 = smul.addr %s34, 6
          %s7125 = sadd.s32 %s7123, %s7124
          %s7126 = smul.addr %s7125, 128
          %s7127 = scalar_lea.hbm %s8, %s7126
          %s7129 = sshll.u32 %s7116, 4
          %s7130 = int_to_ptr.vmem [resolvable:$true] %s7129
          %7132 = dma.vmem_to_hbm [thread:$0]  %s7130, 768, %s7127, %s7113
        $region88: #{multi_head_attention.1} parent=51 // pred_fallthru
          _
      $region52: #{multi_head_attention.1} parent=5 // pred_fallthru
        _
      %p7133 = scmp.le.s32.totalorder 2, %s25
      // Predicated region
      $region89: #{multi_head_attention.1} parent=5 // pred_check
        %p7134 = pneg %p7133
      $region90: #{multi_head_attention.1} parent=5 // pred_check_branch
        %7136 = sbr.rel (%p7134) target = $region92
      $region91: #{multi_head_attention.1} parent=5 // pred_region
        %s7137 = ssub.s32 %s25, 2
        // Predicated region
        $region93: #{multi_head_attention.1} parent=91 // pred_check
          %p7138 = pneg %p260
        $region94: #{multi_head_attention.1} parent=91 // pred_check_branch
          %7140 = sbr.rel (%p7138) target = $region96
        $region95: #{multi_head_attention.1} parent=91 // pred_region
          %s7141 = sand.u32 %s245, 1
          %s7142 = scalar_lea.sflag [#allocation6], %s7141
          %s7143 = sand.u32 %s245, 1
          %s7144 = smul.addr %s7143, 48
          %s7145 = scalar_lea.vmem [#allocation16], %s7144
          %7146 = dma.done %s7142, 768
        $region96: #{multi_head_attention.1} parent=91 // pred_fallthru
          _
      $region92: #{multi_head_attention.1} parent=5 // pred_fallthru
        _
    $region6: #{multi_head_attention.1} parent=1 // loop_footer
      %s29 = sadd.s32 1, %s25
    $region7: #{multi_head_attention.1} parent=1 // loop_footer_branch
      %24 = sbr.rel target = $region3
    $region8: #{multi_head_attention.1} parent=1 // loop_exit
      _
    %7147 = vsyncpa [#allocation5], 1
    %s7148 = scalar_lea.sflag [#allocation5], 1
    %7149 = vsyncpa %s7148, 1
    %7150 = vsyncpa [#allocation8], 1
    %s7151 = scalar_lea.sflag [#allocation8], 1
    %7152 = vsyncpa %s7151, 1
    %7153 = vsyncpa [#allocation11], 1
    %7154 = vsyncpa [#allocation14], 1
    %7155 = vsyncpa [#allocation6], 1
    %s7156 = scalar_lea.sflag [#allocation6], 1
    %7157 = vsyncpa %s7156, 1

</llo_original>
